<compile_context>
chip_gen: v7x
topology: tpu7x:2x2x1
jax: 0.10.0
libtpu: 0.0.40
codegen_flags: <defaults>
</compile_context>

<pallas_src>
import jax
import jax.numpy as jnp
from jax import lax
from jax.experimental import pallas as pl
from jax.experimental.pallas import tpu as pltpu


def _eye(n, dtype):
    r = lax.broadcasted_iota(jnp.int32, (n, n), 0)
    c = lax.broadcasted_iota(jnp.int32, (n, n), 1)
    return (r == c).astype(dtype)


def residual_block_kernel(x_ref, w1_ref, b1_ref, w2_ref, b2_ref,
                          wd_ref, bd_ref, wu_ref, bu_ref,
                          out_ref, xpad_ref):
    Bt, C, HW = x_ref.shape
    _, Hp, Wp, _ = xpad_ref.shape
    H, W = Hp - 2, Wp - 2

    # Identity matrices for MXU-based layout changes.  With bf16 operands the
    # products are exactly 1.0*v or 0.0 and accumulation is f32, so these
    # "transpose" matmuls are exact on bf16-rounded values.
    eye_hw = _eye(HW, jnp.bfloat16)
    eye_c = _eye(C, jnp.bfloat16)
    nt = (((1,), (1,)), ((), ()))        # contract last dim of both operands

    # Zero the whole padded scratch once per step (single store statement,
    # megacore-safe).  Only the 1-pixel halo border actually needs to be zero;
    # the interior is fully rewritten before each conv.
    xpad_ref[...] = jnp.zeros_like(xpad_ref)

    # ---- NCHW -> spatial-major layout, in-kernel, via one MXU matmul -------
    # x_ref is the raw NCHW block (Bt, C, HW); x_t[p, b*C + c] = x[b, c, p].
    x_bcp = x_ref[...].reshape(Bt * C, HW).astype(jnp.bfloat16)
    x_t = lax.dot_general(eye_hw, x_bcp, nt,
                          preferred_element_type=jnp.float32)    # (HW, Bt*C)

    for b in range(Bt):
        img = x_t[:, b * C:(b + 1) * C].reshape(1, H, W, C)
        xpad_ref[pl.ds(b, 1), pl.ds(1, H), pl.ds(1, W), :] = img

    def conv3x3(w_ref, b_ref):
        # im2col built fully in registers: 9 shifted (Bt*HW, C) bf16 slabs,
        # one lane-concat, one wide-K MXU matmul with f32 accumulation.
        taps = []
        for dy in range(3):
            rows = xpad_ref[:, pl.ds(dy, H), :, :].astype(jnp.bfloat16)
            for dx in range(3):
                taps.append(rows[:, :, dx:dx + W, :].reshape(Bt * HW, C))
        col = jnp.concatenate(taps, axis=-1)                     # (Bt*HW, 9C)
        acc = jnp.dot(col, w_ref[...], preferred_element_type=jnp.float32)
        return acc + b_ref[...]                                  # (Bt*HW, C)

    # conv1 + relu
    h1 = jnp.maximum(conv3x3(w1_ref, b1_ref), 0.0)

    # conv2 + relu (reuse the padded scratch; halo border is still zero)
    for b in range(Bt):
        img = h1[b * HW:(b + 1) * HW, :].reshape(1, H, W, C)
        xpad_ref[pl.ds(b, 1), pl.ds(1, H), pl.ds(1, W), :] = img
    h2 = jnp.maximum(conv3x3(w2_ref, b2_ref), 0.0)               # (Bt*HW, C)

    # CALayer gate + residual, per batch element (tiny f32 matmuls).
    for b in range(Bt):
        h2_b = h2[b * HW:(b + 1) * HW, :]                        # (HW, C)
        y = jnp.mean(h2_b, axis=0, keepdims=True)                # (1, C)
        z = jnp.maximum(
            jnp.dot(y, wd_ref[...], preferred_element_type=jnp.float32)
            + bd_ref[...], 0.0)                                  # (1, C//r)
        s = jax.nn.sigmoid(
            jnp.dot(z, wu_ref[...], preferred_element_type=jnp.float32)
            + bu_ref[...])                                       # (1, C)
        scaled = h2_b * s                                        # (HW, C) f32

        # (HW, C) -> (C, HW) on the MXU.  hi/lo split keeps ~full f32
        # precision through the bf16 identity matmuls.
        hi = scaled.astype(jnp.bfloat16)
        lo = (scaled - hi.astype(jnp.float32)).astype(jnp.bfloat16)
        scaled_t = (
            lax.dot_general(eye_c, hi, nt, preferred_element_type=jnp.float32)
            + lax.dot_general(eye_c, lo, nt,
                              preferred_element_type=jnp.float32))  # (C, HW)

        # Residual add in the native NCHW block layout, direct store.
        out_ref[pl.ds(b, 1), :, :] = x_ref[pl.ds(b, 1), :, :] + scaled_t


def residual_block(x_nchw, params, *, batch_tile=4):
    """x_nchw: (B, C, H, W) float32. Returns (B, C, H, W) float32."""
    w1, b1, w2, b2, wd, bd, wu, bu = params
    B, C, H, W = x_nchw.shape
    Cr = wd.shape[1]
    HW = H * W
    Bt = min(batch_tile, B)
    assert B % Bt == 0, "batch must be divisible by the batch tile"

    # Free views only -- no HBM round-trip transposes in the wrapper.
    x_flat = x_nchw.reshape(B, C, HW)

    # 3x3 HWIO weights flattened to the im2col layout (9*Cin, Cout), bf16.
    w1c = w1.reshape(9 * C, C).astype(jnp.bfloat16)
    w2c = w2.reshape(9 * C, C).astype(jnp.bfloat16)

    grid_spec = pltpu.PrefetchScalarGridSpec(
        num_scalar_prefetch=0,
        grid=(B // Bt,),
        in_specs=[
            pl.BlockSpec((Bt, C, HW), lambda g: (g, 0, 0)),   # x (raw NCHW)
            pl.BlockSpec((9 * C, C), lambda g: (0, 0)),       # conv1 weight
            pl.BlockSpec((1, C), lambda g: (0, 0)),           # conv1 bias
            pl.BlockSpec((9 * C, C), lambda g: (0, 0)),       # conv2 weight
            pl.BlockSpec((1, C), lambda g: (0, 0)),           # conv2 bias
            pl.BlockSpec((C, Cr), lambda g: (0, 0)),          # CA down weight
            pl.BlockSpec((1, Cr), lambda g: (0, 0)),          # CA down bias
            pl.BlockSpec((Cr, C), lambda g: (0, 0)),          # CA up weight
            pl.BlockSpec((1, C), lambda g: (0, 0)),           # CA up bias
        ],
        out_specs=pl.BlockSpec((Bt, C, HW), lambda g: (g, 0, 0)),
        scratch_shapes=[
            pltpu.VMEM((Bt, H + 2, W + 2, C), jnp.float32),   # zero-halo image
        ],
    )

    out_flat = pl.pallas_call(
        residual_block_kernel,
        out_shape=jax.ShapeDtypeStruct((B, C, HW), jnp.float32),
        grid_spec=grid_spec,
        compiler_params=pltpu.CompilerParams(
            # Independent batch tiles: shard over v7x's 2 TensorCores
            # (grid length is even so neither core idles on the tail).
            dimension_semantics=("parallel",),
            vmem_limit_bytes=32 * 1024 * 1024,
        ),
    )(x_flat, w1c, b1, w2c, b2, wd, bd, wu, bu)

    return out_flat.reshape(B, C, H, W)


def residual_block_ref(x_nchw, params, conv_dtype=jnp.float32):
    """Pure-JAX reference. conv_dtype=bfloat16 mirrors the kernel's MXU precision."""
    w1, b1, w2, b2, wd, bd, wu, bu = params
    x = jnp.transpose(x_nchw, (0, 2, 3, 1))

    def conv(inp, w, b):  # w: (3, 3, Cin, Cout) HWIO
        return lax.conv_general_dilated(
            inp.astype(conv_dtype), w.astype(conv_dtype), (1, 1), 'SAME',
            dimension_numbers=('NHWC', 'HWIO', 'NHWC'),
            preferred_element_type=jnp.float32) + b.reshape(1, 1, 1, -1)

    h1 = jax.nn.relu(conv(x, w1, b1))
    h2 = jax.nn.relu(conv(h1, w2, b2))
    y = jnp.mean(h2, axis=(1, 2), keepdims=True)
    z = jax.nn.relu(jnp.einsum('bhwc,cd->bhwd', y, wd) + bd.reshape(1, 1, 1, -1))
    s = jax.nn.sigmoid(jnp.einsum('bhwd,dc->bhwc', z, wu) + bu.reshape(1, 1, 1, -1))
    out = h2 * s + x
    return jnp.transpose(out, (0, 3, 1, 2))


def init_params(key, C, reduction=16):
    Cr = max(C // reduction, 1)
    ks = jax.random.split(key, 8)
    w1 = 0.1 * jax.random.normal(ks[0], (3, 3, C, C), jnp.float32)
    b1 = 0.1 * jax.random.normal(ks[1], (1, C), jnp.float32)
    w2 = 0.1 * jax.random.normal(ks[2], (3, 3, C, C), jnp.float32)
    b2 = 0.1 * jax.random.normal(ks[3], (1, C), jnp.float32)
    wd = 0.1 * jax.random.normal(ks[4], (C, Cr), jnp.float32)
    bd = 0.1 * jax.random.normal(ks[5], (1, Cr), jnp.float32)
    wu = 0.1 * jax.random.normal(ks[6], (Cr, C), jnp.float32)
    bu = 0.1 * jax.random.normal(ks[7], (1, C), jnp.float32)
    return (w1, b1, w2, b2, wd, bd, wu, bu)


if __name__ == "__main__":
    B, C, H, W = 8, 32, 8, 8      # num_feats=32, reduction=16 -> hidden=2
    key = jax.random.PRNGKey(0)
    kx, kp = jax.random.split(key)
    x = jax.random.normal(kx, (B, C, H, W), jnp.float32)
    params = init_params(kp, C, reduction=16)

    out = jax.block_until_ready(residual_block(x, params, batch_tile=4))

    # Matched-precision reference (bf16 conv operands, f32 accumulation).
    ref_bf16 = jax.block_until_ready(
        residual_block_ref(x, params, conv_dtype=jnp.bfloat16))
    # Full-f32 reference: sanity check that bf16 MXU error stays small.
    ref_f32 = jax.block_until_ready(residual_block_ref(x, params))

    assert out.shape == (B, C, H, W)
    assert jnp.allclose(out, ref_bf16, atol=2e-3, rtol=2e-3), \
        "mismatch vs matched-precision reference"
    assert jnp.allclose(out, ref_f32, atol=2.5e-1, rtol=5e-2), \
        "bf16 matmul deviation vs f32 reference unexpectedly large"
    print("KERNEL_OK")
</pallas_src>

<mosaic_0001>
module attributes {stable_mosaic.version = 11 : i64} {
  func.func @residual_block_kernel(%arg0: i32, %arg1: memref<4x32x64xf32, #tpu.memory_space<vmem>>, %arg2: memref<288x32xbf16, #tpu.memory_space<vmem>>, %arg3: memref<1x32xf32, #tpu.memory_space<vmem>>, %arg4: memref<288x32xbf16, #tpu.memory_space<vmem>>, %arg5: memref<1x32xf32, #tpu.memory_space<vmem>>, %arg6: memref<32x2xf32, #tpu.memory_space<vmem>>, %arg7: memref<1x2xf32, #tpu.memory_space<vmem>>, %arg8: memref<2x32xf32, #tpu.memory_space<vmem>>, %arg9: memref<1x32xf32, #tpu.memory_space<vmem>>, %arg10: memref<4x32x64xf32, #tpu.memory_space<vmem>>, %arg11: memref<4x10x10x32xf32, #tpu.memory_space<vmem>>) attributes {dimension_semantics = [#tpu.dimension_semantics<parallel>], iteration_bounds = array<i64: 2>, scalar_prefetch = 0 : i64, scratch_operands = 1 : i64, tpu.core_type = #tpu.core_type<tc>, window_params = [{transform_indices = @transform_0, window_bounds = array<i64: 4, 32, 64>}, {pipeline_mode = #tpu.pipeline_mode<synchronous>, transform_indices = @transform_1, window_bounds = array<i64: 288, 32>}, {pipeline_mode = #tpu.pipeline_mode<synchronous>, transform_indices = @transform_2, window_bounds = array<i64: 1, 32>}, {pipeline_mode = #tpu.pipeline_mode<synchronous>, transform_indices = @transform_3, window_bounds = array<i64: 288, 32>}, {pipeline_mode = #tpu.pipeline_mode<synchronous>, transform_indices = @transform_4, window_bounds = array<i64: 1, 32>}, {pipeline_mode = #tpu.pipeline_mode<synchronous>, transform_indices = @transform_5, window_bounds = array<i64: 32, 2>}, {pipeline_mode = #tpu.pipeline_mode<synchronous>, transform_indices = @transform_6, window_bounds = array<i64: 1, 2>}, {pipeline_mode = #tpu.pipeline_mode<synchronous>, transform_indices = @transform_7, window_bounds = array<i64: 2, 32>}, {pipeline_mode = #tpu.pipeline_mode<synchronous>, transform_indices = @transform_8, window_bounds = array<i64: 1, 32>}, {transform_indices = @transform_9, window_bounds = array<i64: 4, 32, 64>}]} {
    %0 = tpu.iota {dimensions = array<i32: 0>} : vector<64x64xi32>
    %1 = tpu.iota {dimensions = array<i32: 1>} : vector<64x64xi32>
    %2 = arith.cmpi eq, %0, %1 : vector<64x64xi32>
    %3 = arith.extui %2 : vector<64x64xi1> to vector<64x64xi32>
    %4 = arith.sitofp %3 : vector<64x64xi32> to vector<64x64xf32>
    %5 = arith.truncf %4 : vector<64x64xf32> to vector<64x64xbf16>
    %6 = tpu.iota {dimensions = array<i32: 0>} : vector<32x32xi32>
    %7 = tpu.iota {dimensions = array<i32: 1>} : vector<32x32xi32>
    %8 = arith.cmpi eq, %6, %7 : vector<32x32xi32>
    %9 = arith.extui %8 : vector<32x32xi1> to vector<32x32xi32>
    %10 = arith.sitofp %9 : vector<32x32xi32> to vector<32x32xf32>
    %11 = arith.truncf %10 : vector<32x32xf32> to vector<32x32xbf16>
    %cst = arith.constant 0.000000e+00 : f32
    %12 = vector.broadcast %cst : f32 to vector<4x10x10x32xf32>
    %c0 = arith.constant 0 : index
    %c0_0 = arith.constant 0 : index
    %c0_1 = arith.constant 0 : index
    %c0_2 = arith.constant 0 : index
    %13 = vector.load %arg11[%c0, %c0_0, %c0_1, %c0_2] : memref<4x10x10x32xf32, #tpu.memory_space<vmem>>, vector<4x10x10x32xf32>
    tpu.vector_store %arg11[%c0, %c0_0, %c0_1, %c0_2], %12 {strides = array<i32>} : memref<4x10x10x32xf32, #tpu.memory_space<vmem>>, vector<4x10x10x32xf32>,
    %c0_3 = arith.constant 0 : index
    %c0_4 = arith.constant 0 : index
    %c0_5 = arith.constant 0 : index
    %14 = vector.load %arg1[%c0_3, %c0_4, %c0_5] : memref<4x32x64xf32, #tpu.memory_space<vmem>>, vector<4x32x64xf32>
    %15 = vector.shape_cast %14 : vector<4x32x64xf32> to vector<128x64xf32>
    %16 = arith.truncf %15 : vector<128x64xf32> to vector<128x64xbf16>
    %cst_6 = arith.constant dense<0.000000e+00> : vector<64x128xf32>
    %17 = tpu.matmul %5, %16, %cst_6 {dimension_numbers = #tpu.dot_dimension_numbers<[1], [1], [0], [0], [0, 0, 1, 0], [], []>} : vector<64x64xbf16>, vector<128x64xbf16>, vector<64x128xf32> -> vector<64x128xf32>
    %18 = vector.extract_strided_slice %17 {offsets = [0, 0], sizes = [64, 32], strides = [1, 1]} : vector<64x128xf32> to vector<64x32xf32>
    %19 = vector.shape_cast %18 : vector<64x32xf32> to vector<1x8x8x32xf32>
    %c0_7 = arith.constant 0 : index
    %c1 = arith.constant 1 : index
    %c1_8 = arith.constant 1 : index
    %c0_9 = arith.constant 0 : index
    %20 = vector.load %arg11[%c0_7, %c1, %c1_8, %c0_9] : memref<4x10x10x32xf32, #tpu.memory_space<vmem>>, vector<1x8x8x32xf32>
    tpu.vector_store %arg11[%c0_7, %c1, %c1_8, %c0_9], %19 {strides = array<i32>} : memref<4x10x10x32xf32, #tpu.memory_space<vmem>>, vector<1x8x8x32xf32>,
    %21 = vector.extract_strided_slice %17 {offsets = [0, 32], sizes = [64, 32], strides = [1, 1]} : vector<64x128xf32> to vector<64x32xf32>
    %22 = vector.shape_cast %21 : vector<64x32xf32> to vector<1x8x8x32xf32>
    %c1_10 = arith.constant 1 : index
    %c1_11 = arith.constant 1 : index
    %c1_12 = arith.constant 1 : index
    %c0_13 = arith.constant 0 : index
    %23 = vector.load %arg11[%c1_10, %c1_11, %c1_12, %c0_13] : memref<4x10x10x32xf32, #tpu.memory_space<vmem>>, vector<1x8x8x32xf32>
    tpu.vector_store %arg11[%c1_10, %c1_11, %c1_12, %c0_13], %22 {strides = array<i32>} : memref<4x10x10x32xf32, #tpu.memory_space<vmem>>, vector<1x8x8x32xf32>,
    %24 = vector.extract_strided_slice %17 {offsets = [0, 64], sizes = [64, 32], strides = [1, 1]} : vector<64x128xf32> to vector<64x32xf32>
    %25 = vector.shape_cast %24 : vector<64x32xf32> to vector<1x8x8x32xf32>
    %c2 = arith.constant 2 : index
    %c1_14 = arith.constant 1 : index
    %c1_15 = arith.constant 1 : index
    %c0_16 = arith.constant 0 : index
    %26 = vector.load %arg11[%c2, %c1_14, %c1_15, %c0_16] : memref<4x10x10x32xf32, #tpu.memory_space<vmem>>, vector<1x8x8x32xf32>
    tpu.vector_store %arg11[%c2, %c1_14, %c1_15, %c0_16], %25 {strides = array<i32>} : memref<4x10x10x32xf32, #tpu.memory_space<vmem>>, vector<1x8x8x32xf32>,
    %27 = vector.extract_strided_slice %17 {offsets = [0, 96], sizes = [64, 32], strides = [1, 1]} : vector<64x128xf32> to vector<64x32xf32>
    %28 = vector.shape_cast %27 : vector<64x32xf32> to vector<1x8x8x32xf32>
    %c3 = arith.constant 3 : index
    %c1_17 = arith.constant 1 : index
    %c1_18 = arith.constant 1 : index
    %c0_19 = arith.constant 0 : index
    %29 = vector.load %arg11[%c3, %c1_17, %c1_18, %c0_19] : memref<4x10x10x32xf32, #tpu.memory_space<vmem>>, vector<1x8x8x32xf32>
    tpu.vector_store %arg11[%c3, %c1_17, %c1_18, %c0_19], %28 {strides = array<i32>} : memref<4x10x10x32xf32, #tpu.memory_space<vmem>>, vector<1x8x8x32xf32>,
    %c0_20 = arith.constant 0 : index
    %c0_21 = arith.constant 0 : index
    %c0_22 = arith.constant 0 : index
    %c0_23 = arith.constant 0 : index
    %30 = vector.load %arg11[%c0_20, %c0_21, %c0_22, %c0_23] : memref<4x10x10x32xf32, #tpu.memory_space<vmem>>, vector<4x8x10x32xf32>
    %31 = arith.truncf %30 : vector<4x8x10x32xf32> to vector<4x8x10x32xbf16>
    %32 = vector.extract_strided_slice %31 {offsets = [0, 0, 0, 0], sizes = [4, 8, 8, 32], strides = [1, 1, 1, 1]} : vector<4x8x10x32xbf16> to vector<4x8x8x32xbf16>
    %33 = vector.shape_cast %32 : vector<4x8x8x32xbf16> to vector<256x32xbf16>
    %34 = vector.extract_strided_slice %31 {offsets = [0, 0, 1, 0], sizes = [4, 8, 8, 32], strides = [1, 1, 1, 1]} : vector<4x8x10x32xbf16> to vector<4x8x8x32xbf16>
    %35 = vector.shape_cast %34 : vector<4x8x8x32xbf16> to vector<256x32xbf16>
    %36 = vector.extract_strided_slice %31 {offsets = [0, 0, 2, 0], sizes = [4, 8, 8, 32], strides = [1, 1, 1, 1]} : vector<4x8x10x32xbf16> to vector<4x8x8x32xbf16>
    %37 = vector.shape_cast %36 : vector<4x8x8x32xbf16> to vector<256x32xbf16>
    %c0_24 = arith.constant 0 : index
    %c1_25 = arith.constant 1 : index
    %c0_26 = arith.constant 0 : index
    %c0_27 = arith.constant 0 : index
    %38 = vector.load %arg11[%c0_24, %c1_25, %c0_26, %c0_27] : memref<4x10x10x32xf32, #tpu.memory_space<vmem>>, vector<4x8x10x32xf32>
    %39 = arith.truncf %38 : vector<4x8x10x32xf32> to vector<4x8x10x32xbf16>
    %40 = vector.extract_strided_slice %39 {offsets = [0, 0, 0, 0], sizes = [4, 8, 8, 32], strides = [1, 1, 1, 1]} : vector<4x8x10x32xbf16> to vector<4x8x8x32xbf16>
    %41 = vector.shape_cast %40 : vector<4x8x8x32xbf16> to vector<256x32xbf16>
    %42 = vector.extract_strided_slice %39 {offsets = [0, 0, 1, 0], sizes = [4, 8, 8, 32], strides = [1, 1, 1, 1]} : vector<4x8x10x32xbf16> to vector<4x8x8x32xbf16>
    %43 = vector.shape_cast %42 : vector<4x8x8x32xbf16> to vector<256x32xbf16>
    %44 = vector.extract_strided_slice %39 {offsets = [0, 0, 2, 0], sizes = [4, 8, 8, 32], strides = [1, 1, 1, 1]} : vector<4x8x10x32xbf16> to vector<4x8x8x32xbf16>
    %45 = vector.shape_cast %44 : vector<4x8x8x32xbf16> to vector<256x32xbf16>
    %c0_28 = arith.constant 0 : index
    %c2_29 = arith.constant 2 : index
    %c0_30 = arith.constant 0 : index
    %c0_31 = arith.constant 0 : index
    %46 = vector.load %arg11[%c0_28, %c2_29, %c0_30, %c0_31] : memref<4x10x10x32xf32, #tpu.memory_space<vmem>>, vector<4x8x10x32xf32>
    %47 = arith.truncf %46 : vector<4x8x10x32xf32> to vector<4x8x10x32xbf16>
    %48 = vector.extract_strided_slice %47 {offsets = [0, 0, 0, 0], sizes = [4, 8, 8, 32], strides = [1, 1, 1, 1]} : vector<4x8x10x32xbf16> to vector<4x8x8x32xbf16>
    %49 = vector.shape_cast %48 : vector<4x8x8x32xbf16> to vector<256x32xbf16>
    %50 = vector.extract_strided_slice %47 {offsets = [0, 0, 1, 0], sizes = [4, 8, 8, 32], strides = [1, 1, 1, 1]} : vector<4x8x10x32xbf16> to vector<4x8x8x32xbf16>
    %51 = vector.shape_cast %50 : vector<4x8x8x32xbf16> to vector<256x32xbf16>
    %52 = vector.extract_strided_slice %47 {offsets = [0, 0, 2, 0], sizes = [4, 8, 8, 32], strides = [1, 1, 1, 1]} : vector<4x8x10x32xbf16> to vector<4x8x8x32xbf16>
    %53 = vector.shape_cast %52 : vector<4x8x8x32xbf16> to vector<256x32xbf16>
    %54 = tpu.concatenate %33, %35, %37, %41, %43, %45, %49, %51, %53 in 1 : vector<256x32xbf16>, vector<256x32xbf16>, vector<256x32xbf16>, vector<256x32xbf16>, vector<256x32xbf16>, vector<256x32xbf16>, vector<256x32xbf16>, vector<256x32xbf16>, vector<256x32xbf16> -> vector<256x288xbf16>
    %c0_32 = arith.constant 0 : index
    %c0_33 = arith.constant 0 : index
    %55 = vector.load %arg2[%c0_32, %c0_33] : memref<288x32xbf16, #tpu.memory_space<vmem>>, vector<288x32xbf16>
    %cst_34 = arith.constant dense<0.000000e+00> : vector<256x32xf32>
    %56 = tpu.matmul %54, %55, %cst_34 {dimension_numbers = #tpu.dot_dimension_numbers<[1], [0], [0], [1], [0, 0, 1, 1], [], []>} : vector<256x288xbf16>, vector<288x32xbf16>, vector<256x32xf32> -> vector<256x32xf32>
    %c0_35 = arith.constant 0 : index
    %c0_36 = arith.constant 0 : index
    %57 = vector.load %arg3[%c0_35, %c0_36] : memref<1x32xf32, #tpu.memory_space<vmem>>, vector<1x32xf32>
    %58 = vector.broadcast %57 : vector<1x32xf32> to vector<256x32xf32>
    %59 = arith.addf %56, %58 : vector<256x32xf32>
    %cst_37 = arith.constant 0.000000e+00 : f32
    %60 = vector.broadcast %cst_37 : f32 to vector<256x32xf32>
    %61 = arith.maximumf %59, %60 : vector<256x32xf32>
    %62 = vector.extract_strided_slice %61 {offsets = [0, 0], sizes = [64, 32], strides = [1, 1]} : vector<256x32xf32> to vector<64x32xf32>
    %63 = vector.shape_cast %62 : vector<64x32xf32> to vector<1x8x8x32xf32>
    %c0_38 = arith.constant 0 : index
    %c1_39 = arith.constant 1 : index
    %c1_40 = arith.constant 1 : index
    %c0_41 = arith.constant 0 : index
    %64 = vector.load %arg11[%c0_38, %c1_39, %c1_40, %c0_41] : memref<4x10x10x32xf32, #tpu.memory_space<vmem>>, vector<1x8x8x32xf32>
    tpu.vector_store %arg11[%c0_38, %c1_39, %c1_40, %c0_41], %63 {strides = array<i32>} : memref<4x10x10x32xf32, #tpu.memory_space<vmem>>, vector<1x8x8x32xf32>,
    %65 = vector.extract_strided_slice %61 {offsets = [64, 0], sizes = [64, 32], strides = [1, 1]} : vector<256x32xf32> to vector<64x32xf32>
    %66 = vector.shape_cast %65 : vector<64x32xf32> to vector<1x8x8x32xf32>
    %c1_42 = arith.constant 1 : index
    %c1_43 = arith.constant 1 : index
    %c1_44 = arith.constant 1 : index
    %c0_45 = arith.constant 0 : index
    %67 = vector.load %arg11[%c1_42, %c1_43, %c1_44, %c0_45] : memref<4x10x10x32xf32, #tpu.memory_space<vmem>>, vector<1x8x8x32xf32>
    tpu.vector_store %arg11[%c1_42, %c1_43, %c1_44, %c0_45], %66 {strides = array<i32>} : memref<4x10x10x32xf32, #tpu.memory_space<vmem>>, vector<1x8x8x32xf32>,
    %68 = vector.extract_strided_slice %61 {offsets = [128, 0], sizes = [64, 32], strides = [1, 1]} : vector<256x32xf32> to vector<64x32xf32>
    %69 = vector.shape_cast %68 : vector<64x32xf32> to vector<1x8x8x32xf32>
    %c2_46 = arith.constant 2 : index
    %c1_47 = arith.constant 1 : index
    %c1_48 = arith.constant 1 : index
    %c0_49 = arith.constant 0 : index
    %70 = vector.load %arg11[%c2_46, %c1_47, %c1_48, %c0_49] : memref<4x10x10x32xf32, #tpu.memory_space<vmem>>, vector<1x8x8x32xf32>
    tpu.vector_store %arg11[%c2_46, %c1_47, %c1_48, %c0_49], %69 {strides = array<i32>} : memref<4x10x10x32xf32, #tpu.memory_space<vmem>>, vector<1x8x8x32xf32>,
    %71 = vector.extract_strided_slice %61 {offsets = [192, 0], sizes = [64, 32], strides = [1, 1]} : vector<256x32xf32> to vector<64x32xf32>
    %72 = vector.shape_cast %71 : vector<64x32xf32> to vector<1x8x8x32xf32>
    %c3_50 = arith.constant 3 : index
    %c1_51 = arith.constant 1 : index
    %c1_52 = arith.constant 1 : index
    %c0_53 = arith.constant 0 : index
    %73 = vector.load %arg11[%c3_50, %c1_51, %c1_52, %c0_53] : memref<4x10x10x32xf32, #tpu.memory_space<vmem>>, vector<1x8x8x32xf32>
    tpu.vector_store %arg11[%c3_50, %c1_51, %c1_52, %c0_53], %72 {strides = array<i32>} : memref<4x10x10x32xf32, #tpu.memory_space<vmem>>, vector<1x8x8x32xf32>,
    %c0_54 = arith.constant 0 : index
    %c0_55 = arith.constant 0 : index
    %c0_56 = arith.constant 0 : index
    %c0_57 = arith.constant 0 : index
    %74 = vector.load %arg11[%c0_54, %c0_55, %c0_56, %c0_57] : memref<4x10x10x32xf32, #tpu.memory_space<vmem>>, vector<4x8x10x32xf32>
    %75 = arith.truncf %74 : vector<4x8x10x32xf32> to vector<4x8x10x32xbf16>
    %76 = vector.extract_strided_slice %75 {offsets = [0, 0, 0, 0], sizes = [4, 8, 8, 32], strides = [1, 1, 1, 1]} : vector<4x8x10x32xbf16> to vector<4x8x8x32xbf16>
    %77 = vector.shape_cast %76 : vector<4x8x8x32xbf16> to vector<256x32xbf16>
    %78 = vector.extract_strided_slice %75 {offsets = [0, 0, 1, 0], sizes = [4, 8, 8, 32], strides = [1, 1, 1, 1]} : vector<4x8x10x32xbf16> to vector<4x8x8x32xbf16>
    %79 = vector.shape_cast %78 : vector<4x8x8x32xbf16> to vector<256x32xbf16>
    %80 = vector.extract_strided_slice %75 {offsets = [0, 0, 2, 0], sizes = [4, 8, 8, 32], strides = [1, 1, 1, 1]} : vector<4x8x10x32xbf16> to vector<4x8x8x32xbf16>
    %81 = vector.shape_cast %80 : vector<4x8x8x32xbf16> to vector<256x32xbf16>
    %c0_58 = arith.constant 0 : index
    %c1_59 = arith.constant 1 : index
    %c0_60 = arith.constant 0 : index
    %c0_61 = arith.constant 0 : index
    %82 = vector.load %arg11[%c0_58, %c1_59, %c0_60, %c0_61] : memref<4x10x10x32xf32, #tpu.memory_space<vmem>>, vector<4x8x10x32xf32>
    %83 = arith.truncf %82 : vector<4x8x10x32xf32> to vector<4x8x10x32xbf16>
    %84 = vector.extract_strided_slice %83 {offsets = [0, 0, 0, 0], sizes = [4, 8, 8, 32], strides = [1, 1, 1, 1]} : vector<4x8x10x32xbf16> to vector<4x8x8x32xbf16>
    %85 = vector.shape_cast %84 : vector<4x8x8x32xbf16> to vector<256x32xbf16>
    %86 = vector.extract_strided_slice %83 {offsets = [0, 0, 1, 0], sizes = [4, 8, 8, 32], strides = [1, 1, 1, 1]} : vector<4x8x10x32xbf16> to vector<4x8x8x32xbf16>
    %87 = vector.shape_cast %86 : vector<4x8x8x32xbf16> to vector<256x32xbf16>
    %88 = vector.extract_strided_slice %83 {offsets = [0, 0, 2, 0], sizes = [4, 8, 8, 32], strides = [1, 1, 1, 1]} : vector<4x8x10x32xbf16> to vector<4x8x8x32xbf16>
    %89 = vector.shape_cast %88 : vector<4x8x8x32xbf16> to vector<256x32xbf16>
    %c0_62 = arith.constant 0 : index
    %c2_63 = arith.constant 2 : index
    %c0_64 = arith.constant 0 : index
    %c0_65 = arith.constant 0 : index
    %90 = vector.load %arg11[%c0_62, %c2_63, %c0_64, %c0_65] : memref<4x10x10x32xf32, #tpu.memory_space<vmem>>, vector<4x8x10x32xf32>
    %91 = arith.truncf %90 : vector<4x8x10x32xf32> to vector<4x8x10x32xbf16>
    %92 = vector.extract_strided_slice %91 {offsets = [0, 0, 0, 0], sizes = [4, 8, 8, 32], strides = [1, 1, 1, 1]} : vector<4x8x10x32xbf16> to vector<4x8x8x32xbf16>
    %93 = vector.shape_cast %92 : vector<4x8x8x32xbf16> to vector<256x32xbf16>
    %94 = vector.extract_strided_slice %91 {offsets = [0, 0, 1, 0], sizes = [4, 8, 8, 32], strides = [1, 1, 1, 1]} : vector<4x8x10x32xbf16> to vector<4x8x8x32xbf16>
    %95 = vector.shape_cast %94 : vector<4x8x8x32xbf16> to vector<256x32xbf16>
    %96 = vector.extract_strided_slice %91 {offsets = [0, 0, 2, 0], sizes = [4, 8, 8, 32], strides = [1, 1, 1, 1]} : vector<4x8x10x32xbf16> to vector<4x8x8x32xbf16>
    %97 = vector.shape_cast %96 : vector<4x8x8x32xbf16> to vector<256x32xbf16>
    %98 = tpu.concatenate %77, %79, %81, %85, %87, %89, %93, %95, %97 in 1 : vector<256x32xbf16>, vector<256x32xbf16>, vector<256x32xbf16>, vector<256x32xbf16>, vector<256x32xbf16>, vector<256x32xbf16>, vector<256x32xbf16>, vector<256x32xbf16>, vector<256x32xbf16> -> vector<256x288xbf16>
    %c0_66 = arith.constant 0 : index
    %c0_67 = arith.constant 0 : index
    %99 = vector.load %arg4[%c0_66, %c0_67] : memref<288x32xbf16, #tpu.memory_space<vmem>>, vector<288x32xbf16>
    %cst_68 = arith.constant dense<0.000000e+00> : vector<256x32xf32>
    %100 = tpu.matmul %98, %99, %cst_68 {dimension_numbers = #tpu.dot_dimension_numbers<[1], [0], [0], [1], [0, 0, 1, 1], [], []>} : vector<256x288xbf16>, vector<288x32xbf16>, vector<256x32xf32> -> vector<256x32xf32>
    %c0_69 = arith.constant 0 : index
    %c0_70 = arith.constant 0 : index
    %101 = vector.load %arg5[%c0_69, %c0_70] : memref<1x32xf32, #tpu.memory_space<vmem>>, vector<1x32xf32>
    %102 = vector.broadcast %101 : vector<1x32xf32> to vector<256x32xf32>
    %103 = arith.addf %100, %102 : vector<256x32xf32>
    %cst_71 = arith.constant 0.000000e+00 : f32
    %104 = vector.broadcast %cst_71 : f32 to vector<256x32xf32>
    %105 = arith.maximumf %103, %104 : vector<256x32xf32>
    %106 = vector.extract_strided_slice %105 {offsets = [0, 0], sizes = [64, 32], strides = [1, 1]} : vector<256x32xf32> to vector<64x32xf32>
    %cst_72 = arith.constant dense<0.000000e+00> : vector<32xf32>
    %107 = vector.multi_reduction <add>, %106, %cst_72 [0] : vector<64x32xf32> to vector<32xf32>
    %108 = vector.shape_cast %107 : vector<32xf32> to vector<1x32xf32>
    %cst_73 = arith.constant 6.400000e+01 : f32
    %109 = vector.broadcast %cst_73 : f32 to vector<1x32xf32>
    %110 = arith.divf %108, %109 : vector<1x32xf32>
    %c0_74 = arith.constant 0 : index
    %c0_75 = arith.constant 0 : index
    %111 = vector.load %arg6[%c0_74, %c0_75] : memref<32x2xf32, #tpu.memory_space<vmem>>, vector<32x2xf32>
    %cst_76 = arith.constant dense<0.000000e+00> : vector<1x2xf32>
    %112 = tpu.matmul %110, %111, %cst_76 {dimension_numbers = #tpu.dot_dimension_numbers<[1], [0], [0], [1], [0, 0, 1, 1], [], []>} : vector<1x32xf32>, vector<32x2xf32>, vector<1x2xf32> -> vector<1x2xf32>
    %c0_77 = arith.constant 0 : index
    %c0_78 = arith.constant 0 : index
    %113 = vector.load %arg7[%c0_77, %c0_78] : memref<1x2xf32, #tpu.memory_space<vmem>>, vector<1x2xf32>
    %114 = arith.addf %112, %113 : vector<1x2xf32>
    %cst_79 = arith.constant 0.000000e+00 : f32
    %115 = vector.broadcast %cst_79 : f32 to vector<1x2xf32>
    %116 = arith.maximumf %114, %115 : vector<1x2xf32>
    %c0_80 = arith.constant 0 : index
    %c0_81 = arith.constant 0 : index
    %117 = vector.load %arg8[%c0_80, %c0_81] : memref<2x32xf32, #tpu.memory_space<vmem>>, vector<2x32xf32>
    %cst_82 = arith.constant dense<0.000000e+00> : vector<1x32xf32>
    %118 = tpu.matmul %116, %117, %cst_82 {dimension_numbers = #tpu.dot_dimension_numbers<[1], [0], [0], [1], [0, 0, 1, 1], [], []>} : vector<1x2xf32>, vector<2x32xf32>, vector<1x32xf32> -> vector<1x32xf32>
    %c0_83 = arith.constant 0 : index
    %c0_84 = arith.constant 0 : index
    %119 = vector.load %arg9[%c0_83, %c0_84] : memref<1x32xf32, #tpu.memory_space<vmem>>, vector<1x32xf32>
    %120 = arith.addf %118, %119 : vector<1x32xf32>
    %121 = arith.negf %120 : vector<1x32xf32>
    %122 = math.exp %121 : vector<1x32xf32>
    %cst_85 = arith.constant 1.000000e+00 : f32
    %123 = vector.broadcast %cst_85 : f32 to vector<1x32xf32>
    %124 = arith.addf %123, %122 : vector<1x32xf32>
    %125 = arith.divf %123, %124 : vector<1x32xf32>
    %126 = vector.broadcast %125 : vector<1x32xf32> to vector<64x32xf32>
    %127 = arith.mulf %106, %126 : vector<64x32xf32>
    %128 = arith.truncf %127 : vector<64x32xf32> to vector<64x32xbf16>
    %129 = arith.extf %128 : vector<64x32xbf16> to vector<64x32xf32>
    %130 = arith.subf %127, %129 : vector<64x32xf32>
    %131 = arith.truncf %130 : vector<64x32xf32> to vector<64x32xbf16>
    %cst_86 = arith.constant dense<0.000000e+00> : vector<32x64xf32>
    %132 = tpu.matmul %11, %128, %cst_86 {dimension_numbers = #tpu.dot_dimension_numbers<[1], [1], [0], [0], [0, 0, 1, 0], [], []>} : vector<32x32xbf16>, vector<64x32xbf16>, vector<32x64xf32> -> vector<32x64xf32>
    %cst_87 = arith.constant dense<0.000000e+00> : vector<32x64xf32>
    %133 = tpu.matmul %11, %131, %cst_87 {dimension_numbers = #tpu.dot_dimension_numbers<[1], [1], [0], [0], [0, 0, 1, 0], [], []>} : vector<32x32xbf16>, vector<64x32xbf16>, vector<32x64xf32> -> vector<32x64xf32>
    %134 = arith.addf %132, %133 : vector<32x64xf32>
    %c0_88 = arith.constant 0 : index
    %c0_89 = arith.constant 0 : index
    %c0_90 = arith.constant 0 : index
    %135 = vector.load %arg1[%c0_88, %c0_89, %c0_90] : memref<4x32x64xf32, #tpu.memory_space<vmem>>, vector<1x32x64xf32>
    %136 = vector.shape_cast %134 : vector<32x64xf32> to vector<1x32x64xf32>
    %137 = arith.addf %135, %136 : vector<1x32x64xf32>
    %c0_91 = arith.constant 0 : index
    %c0_92 = arith.constant 0 : index
    %c0_93 = arith.constant 0 : index
    %138 = vector.load %arg10[%c0_91, %c0_92, %c0_93] : memref<4x32x64xf32, #tpu.memory_space<vmem>>, vector<1x32x64xf32>
    tpu.vector_store %arg10[%c0_91, %c0_92, %c0_93], %137 {strides = array<i32>} : memref<4x32x64xf32, #tpu.memory_space<vmem>>, vector<1x32x64xf32>,
    %139 = vector.extract_strided_slice %105 {offsets = [64, 0], sizes = [64, 32], strides = [1, 1]} : vector<256x32xf32> to vector<64x32xf32>
    %cst_94 = arith.constant dense<0.000000e+00> : vector<32xf32>
    %140 = vector.multi_reduction <add>, %139, %cst_94 [0] : vector<64x32xf32> to vector<32xf32>
    %141 = vector.shape_cast %140 : vector<32xf32> to vector<1x32xf32>
    %cst_95 = arith.constant 6.400000e+01 : f32
    %142 = vector.broadcast %cst_95 : f32 to vector<1x32xf32>
    %143 = arith.divf %141, %142 : vector<1x32xf32>
    %c0_96 = arith.constant 0 : index
    %c0_97 = arith.constant 0 : index
    %144 = vector.load %arg6[%c0_96, %c0_97] : memref<32x2xf32, #tpu.memory_space<vmem>>, vector<32x2xf32>
    %cst_98 = arith.constant dense<0.000000e+00> : vector<1x2xf32>
    %145 = tpu.matmul %143, %144, %cst_98 {dimension_numbers = #tpu.dot_dimension_numbers<[1], [0], [0], [1], [0, 0, 1, 1], [], []>} : vector<1x32xf32>, vector<32x2xf32>, vector<1x2xf32> -> vector<1x2xf32>
    %c0_99 = arith.constant 0 : index
    %c0_100 = arith.constant 0 : index
    %146 = vector.load %arg7[%c0_99, %c0_100] : memref<1x2xf32, #tpu.memory_space<vmem>>, vector<1x2xf32>
    %147 = arith.addf %145, %146 : vector<1x2xf32>
    %cst_101 = arith.constant 0.000000e+00 : f32
    %148 = vector.broadcast %cst_101 : f32 to vector<1x2xf32>
    %149 = arith.maximumf %147, %148 : vector<1x2xf32>
    %c0_102 = arith.constant 0 : index
    %c0_103 = arith.constant 0 : index
    %150 = vector.load %arg8[%c0_102, %c0_103] : memref<2x32xf32, #tpu.memory_space<vmem>>, vector<2x32xf32>
    %cst_104 = arith.constant dense<0.000000e+00> : vector<1x32xf32>
    %151 = tpu.matmul %149, %150, %cst_104 {dimension_numbers = #tpu.dot_dimension_numbers<[1], [0], [0], [1], [0, 0, 1, 1], [], []>} : vector<1x2xf32>, vector<2x32xf32>, vector<1x32xf32> -> vector<1x32xf32>
    %c0_105 = arith.constant 0 : index
    %c0_106 = arith.constant 0 : index
    %152 = vector.load %arg9[%c0_105, %c0_106] : memref<1x32xf32, #tpu.memory_space<vmem>>, vector<1x32xf32>
    %153 = arith.addf %151, %152 : vector<1x32xf32>
    %154 = arith.negf %153 : vector<1x32xf32>
    %155 = math.exp %154 : vector<1x32xf32>
    %cst_107 = arith.constant 1.000000e+00 : f32
    %156 = vector.broadcast %cst_107 : f32 to vector<1x32xf32>
    %157 = arith.addf %156, %155 : vector<1x32xf32>
    %158 = arith.divf %156, %157 : vector<1x32xf32>
    %159 = vector.broadcast %158 : vector<1x32xf32> to vector<64x32xf32>
    %160 = arith.mulf %139, %159 : vector<64x32xf32>
    %161 = arith.truncf %160 : vector<64x32xf32> to vector<64x32xbf16>
    %162 = arith.extf %161 : vector<64x32xbf16> to vector<64x32xf32>
    %163 = arith.subf %160, %162 : vector<64x32xf32>
    %164 = arith.truncf %163 : vector<64x32xf32> to vector<64x32xbf16>
    %cst_108 = arith.constant dense<0.000000e+00> : vector<32x64xf32>
    %165 = tpu.matmul %11, %161, %cst_108 {dimension_numbers = #tpu.dot_dimension_numbers<[1], [1], [0], [0], [0, 0, 1, 0], [], []>} : vector<32x32xbf16>, vector<64x32xbf16>, vector<32x64xf32> -> vector<32x64xf32>
    %cst_109 = arith.constant dense<0.000000e+00> : vector<32x64xf32>
    %166 = tpu.matmul %11, %164, %cst_109 {dimension_numbers = #tpu.dot_dimension_numbers<[1], [1], [0], [0], [0, 0, 1, 0], [], []>} : vector<32x32xbf16>, vector<64x32xbf16>, vector<32x64xf32> -> vector<32x64xf32>
    %167 = arith.addf %165, %166 : vector<32x64xf32>
    %c1_110 = arith.constant 1 : index
    %c0_111 = arith.constant 0 : index
    %c0_112 = arith.constant 0 : index
    %168 = vector.load %arg1[%c1_110, %c0_111, %c0_112] : memref<4x32x64xf32, #tpu.memory_space<vmem>>, vector<1x32x64xf32>
    %169 = vector.shape_cast %167 : vector<32x64xf32> to vector<1x32x64xf32>
    %170 = arith.addf %168, %169 : vector<1x32x64xf32>
    %c1_113 = arith.constant 1 : index
    %c0_114 = arith.constant 0 : index
    %c0_115 = arith.constant 0 : index
    %171 = vector.load %arg10[%c1_113, %c0_114, %c0_115] : memref<4x32x64xf32, #tpu.memory_space<vmem>>, vector<1x32x64xf32>
    tpu.vector_store %arg10[%c1_113, %c0_114, %c0_115], %170 {strides = array<i32>} : memref<4x32x64xf32, #tpu.memory_space<vmem>>, vector<1x32x64xf32>,
    %172 = vector.extract_strided_slice %105 {offsets = [128, 0], sizes = [64, 32], strides = [1, 1]} : vector<256x32xf32> to vector<64x32xf32>
    %cst_116 = arith.constant dense<0.000000e+00> : vector<32xf32>
    %173 = vector.multi_reduction <add>, %172, %cst_116 [0] : vector<64x32xf32> to vector<32xf32>
    %174 = vector.shape_cast %173 : vector<32xf32> to vector<1x32xf32>
    %cst_117 = arith.constant 6.400000e+01 : f32
    %175 = vector.broadcast %cst_117 : f32 to vector<1x32xf32>
    %176 = arith.divf %174, %175 : vector<1x32xf32>
    %c0_118 = arith.constant 0 : index
    %c0_119 = arith.constant 0 : index
    %177 = vector.load %arg6[%c0_118, %c0_119] : memref<32x2xf32, #tpu.memory_space<vmem>>, vector<32x2xf32>
    %cst_120 = arith.constant dense<0.000000e+00> : vector<1x2xf32>
    %178 = tpu.matmul %176, %177, %cst_120 {dimension_numbers = #tpu.dot_dimension_numbers<[1], [0], [0], [1], [0, 0, 1, 1], [], []>} : vector<1x32xf32>, vector<32x2xf32>, vector<1x2xf32> -> vector<1x2xf32>
    %c0_121 = arith.constant 0 : index
    %c0_122 = arith.constant 0 : index
    %179 = vector.load %arg7[%c0_121, %c0_122] : memref<1x2xf32, #tpu.memory_space<vmem>>, vector<1x2xf32>
    %180 = arith.addf %178, %179 : vector<1x2xf32>
    %cst_123 = arith.constant 0.000000e+00 : f32
    %181 = vector.broadcast %cst_123 : f32 to vector<1x2xf32>
    %182 = arith.maximumf %180, %181 : vector<1x2xf32>
    %c0_124 = arith.constant 0 : index
    %c0_125 = arith.constant 0 : index
    %183 = vector.load %arg8[%c0_124, %c0_125] : memref<2x32xf32, #tpu.memory_space<vmem>>, vector<2x32xf32>
    %cst_126 = arith.constant dense<0.000000e+00> : vector<1x32xf32>
    %184 = tpu.matmul %182, %183, %cst_126 {dimension_numbers = #tpu.dot_dimension_numbers<[1], [0], [0], [1], [0, 0, 1, 1], [], []>} : vector<1x2xf32>, vector<2x32xf32>, vector<1x32xf32> -> vector<1x32xf32>
    %c0_127 = arith.constant 0 : index
    %c0_128 = arith.constant 0 : index
    %185 = vector.load %arg9[%c0_127, %c0_128] : memref<1x32xf32, #tpu.memory_space<vmem>>, vector<1x32xf32>
    %186 = arith.addf %184, %185 : vector<1x32xf32>
    %187 = arith.negf %186 : vector<1x32xf32>
    %188 = math.exp %187 : vector<1x32xf32>
    %cst_129 = arith.constant 1.000000e+00 : f32
    %189 = vector.broadcast %cst_129 : f32 to vector<1x32xf32>
    %190 = arith.addf %189, %188 : vector<1x32xf32>
    %191 = arith.divf %189, %190 : vector<1x32xf32>
    %192 = vector.broadcast %191 : vector<1x32xf32> to vector<64x32xf32>
    %193 = arith.mulf %172, %192 : vector<64x32xf32>
    %194 = arith.truncf %193 : vector<64x32xf32> to vector<64x32xbf16>
    %195 = arith.extf %194 : vector<64x32xbf16> to vector<64x32xf32>
    %196 = arith.subf %193, %195 : vector<64x32xf32>
    %197 = arith.truncf %196 : vector<64x32xf32> to vector<64x32xbf16>
    %cst_130 = arith.constant dense<0.000000e+00> : vector<32x64xf32>
    %198 = tpu.matmul %11, %194, %cst_130 {dimension_numbers = #tpu.dot_dimension_numbers<[1], [1], [0], [0], [0, 0, 1, 0], [], []>} : vector<32x32xbf16>, vector<64x32xbf16>, vector<32x64xf32> -> vector<32x64xf32>
    %cst_131 = arith.constant dense<0.000000e+00> : vector<32x64xf32>
    %199 = tpu.matmul %11, %197, %cst_131 {dimension_numbers = #tpu.dot_dimension_numbers<[1], [1], [0], [0], [0, 0, 1, 0], [], []>} : vector<32x32xbf16>, vector<64x32xbf16>, vector<32x64xf32> -> vector<32x64xf32>
    %200 = arith.addf %198, %199 : vector<32x64xf32>
    %c2_132 = arith.constant 2 : index
    %c0_133 = arith.constant 0 : index
    %c0_134 = arith.constant 0 : index
    %201 = vector.load %arg1[%c2_132, %c0_133, %c0_134] : memref<4x32x64xf32, #tpu.memory_space<vmem>>, vector<1x32x64xf32>
    %202 = vector.shape_cast %200 : vector<32x64xf32> to vector<1x32x64xf32>
    %203 = arith.addf %201, %202 : vector<1x32x64xf32>
    %c2_135 = arith.constant 2 : index
    %c0_136 = arith.constant 0 : index
    %c0_137 = arith.constant 0 : index
    %204 = vector.load %arg10[%c2_135, %c0_136, %c0_137] : memref<4x32x64xf32, #tpu.memory_space<vmem>>, vector<1x32x64xf32>
    tpu.vector_store %arg10[%c2_135, %c0_136, %c0_137], %203 {strides = array<i32>} : memref<4x32x64xf32, #tpu.memory_space<vmem>>, vector<1x32x64xf32>,
    %205 = vector.extract_strided_slice %105 {offsets = [192, 0], sizes = [64, 32], strides = [1, 1]} : vector<256x32xf32> to vector<64x32xf32>
    %cst_138 = arith.constant dense<0.000000e+00> : vector<32xf32>
    %206 = vector.multi_reduction <add>, %205, %cst_138 [0] : vector<64x32xf32> to vector<32xf32>
    %207 = vector.shape_cast %206 : vector<32xf32> to vector<1x32xf32>
    %cst_139 = arith.constant 6.400000e+01 : f32
    %208 = vector.broadcast %cst_139 : f32 to vector<1x32xf32>
    %209 = arith.divf %207, %208 : vector<1x32xf32>
    %c0_140 = arith.constant 0 : index
    %c0_141 = arith.constant 0 : index
    %210 = vector.load %arg6[%c0_140, %c0_141] : memref<32x2xf32, #tpu.memory_space<vmem>>, vector<32x2xf32>
    %cst_142 = arith.constant dense<0.000000e+00> : vector<1x2xf32>
    %211 = tpu.matmul %209, %210, %cst_142 {dimension_numbers = #tpu.dot_dimension_numbers<[1], [0], [0], [1], [0, 0, 1, 1], [], []>} : vector<1x32xf32>, vector<32x2xf32>, vector<1x2xf32> -> vector<1x2xf32>
    %c0_143 = arith.constant 0 : index
    %c0_144 = arith.constant 0 : index
    %212 = vector.load %arg7[%c0_143, %c0_144] : memref<1x2xf32, #tpu.memory_space<vmem>>, vector<1x2xf32>
    %213 = arith.addf %211, %212 : vector<1x2xf32>
    %cst_145 = arith.constant 0.000000e+00 : f32
    %214 = vector.broadcast %cst_145 : f32 to vector<1x2xf32>
    %215 = arith.maximumf %213, %214 : vector<1x2xf32>
    %c0_146 = arith.constant 0 : index
    %c0_147 = arith.constant 0 : index
    %216 = vector.load %arg8[%c0_146, %c0_147] : memref<2x32xf32, #tpu.memory_space<vmem>>, vector<2x32xf32>
    %cst_148 = arith.constant dense<0.000000e+00> : vector<1x32xf32>
    %217 = tpu.matmul %215, %216, %cst_148 {dimension_numbers = #tpu.dot_dimension_numbers<[1], [0], [0], [1], [0, 0, 1, 1], [], []>} : vector<1x2xf32>, vector<2x32xf32>, vector<1x32xf32> -> vector<1x32xf32>
    %c0_149 = arith.constant 0 : index
    %c0_150 = arith.constant 0 : index
    %218 = vector.load %arg9[%c0_149, %c0_150] : memref<1x32xf32, #tpu.memory_space<vmem>>, vector<1x32xf32>
    %219 = arith.addf %217, %218 : vector<1x32xf32>
    %220 = arith.negf %219 : vector<1x32xf32>
    %221 = math.exp %220 : vector<1x32xf32>
    %cst_151 = arith.constant 1.000000e+00 : f32
    %222 = vector.broadcast %cst_151 : f32 to vector<1x32xf32>
    %223 = arith.addf %222, %221 : vector<1x32xf32>
    %224 = arith.divf %222, %223 : vector<1x32xf32>
    %225 = vector.broadcast %224 : vector<1x32xf32> to vector<64x32xf32>
    %226 = arith.mulf %205, %225 : vector<64x32xf32>
    %227 = arith.truncf %226 : vector<64x32xf32> to vector<64x32xbf16>
    %228 = arith.extf %227 : vector<64x32xbf16> to vector<64x32xf32>
    %229 = arith.subf %226, %228 : vector<64x32xf32>
    %230 = arith.truncf %229 : vector<64x32xf32> to vector<64x32xbf16>
    %cst_152 = arith.constant dense<0.000000e+00> : vector<32x64xf32>
    %231 = tpu.matmul %11, %227, %cst_152 {dimension_numbers = #tpu.dot_dimension_numbers<[1], [1], [0], [0], [0, 0, 1, 0], [], []>} : vector<32x32xbf16>, vector<64x32xbf16>, vector<32x64xf32> -> vector<32x64xf32>
    %cst_153 = arith.constant dense<0.000000e+00> : vector<32x64xf32>
    %232 = tpu.matmul %11, %230, %cst_153 {dimension_numbers = #tpu.dot_dimension_numbers<[1], [1], [0], [0], [0, 0, 1, 0], [], []>} : vector<32x32xbf16>, vector<64x32xbf16>, vector<32x64xf32> -> vector<32x64xf32>
    %233 = arith.addf %231, %232 : vector<32x64xf32>
    %c3_154 = arith.constant 3 : index
    %c0_155 = arith.constant 0 : index
    %c0_156 = arith.constant 0 : index
    %234 = vector.load %arg1[%c3_154, %c0_155, %c0_156] : memref<4x32x64xf32, #tpu.memory_space<vmem>>, vector<1x32x64xf32>
    %235 = vector.shape_cast %233 : vector<32x64xf32> to vector<1x32x64xf32>
    %236 = arith.addf %234, %235 : vector<1x32x64xf32>
    %c3_157 = arith.constant 3 : index
    %c0_158 = arith.constant 0 : index
    %c0_159 = arith.constant 0 : index
    %237 = vector.load %arg10[%c3_157, %c0_158, %c0_159] : memref<4x32x64xf32, #tpu.memory_space<vmem>>, vector<1x32x64xf32>
    tpu.vector_store %arg10[%c3_157, %c0_158, %c0_159], %236 {strides = array<i32>} : memref<4x32x64xf32, #tpu.memory_space<vmem>>, vector<1x32x64xf32>,
    return
  }
  func.func @transform_0(%arg0: i32) -> (i32, i32, i32) {
    %c0_i32 = arith.constant 0 : i32
    %c0_i32_0 = arith.constant 0 : i32
    %c0_i32_1 = arith.constant 0 : i32
    return %arg0, %c0_i32, %c0_i32_0 : i32, i32, i32
  }
  func.func @transform_1(%arg0: i32) -> (i32, i32) {
    %c0_i32 = arith.constant 0 : i32
    %c0_i32_0 = arith.constant 0 : i32
    %c0_i32_1 = arith.constant 0 : i32
    return %c0_i32, %c0_i32_0 : i32, i32
  }
  func.func @transform_2(%arg0: i32) -> (i32, i32) {
    %c0_i32 = arith.constant 0 : i32
    %c0_i32_0 = arith.constant 0 : i32
    %c0_i32_1 = arith.constant 0 : i32
    return %c0_i32, %c0_i32_0 : i32, i32
  }
  func.func @transform_3(%arg0: i32) -> (i32, i32) {
    %c0_i32 = arith.constant 0 : i32
    %c0_i32_0 = arith.constant 0 : i32
    %c0_i32_1 = arith.constant 0 : i32
    return %c0_i32, %c0_i32_0 : i32, i32
  }
  func.func @transform_4(%arg0: i32) -> (i32, i32) {
    %c0_i32 = arith.constant 0 : i32
    %c0_i32_0 = arith.constant 0 : i32
    %c0_i32_1 = arith.constant 0 : i32
    return %c0_i32, %c0_i32_0 : i32, i32
  }
  func.func @transform_5(%arg0: i32) -> (i32, i32) {
    %c0_i32 = arith.constant 0 : i32
    %c0_i32_0 = arith.constant 0 : i32
    %c0_i32_1 = arith.constant 0 : i32
    return %c0_i32, %c0_i32_0 : i32, i32
  }
  func.func @transform_6(%arg0: i32) -> (i32, i32) {
    %c0_i32 = arith.constant 0 : i32
    %c0_i32_0 = arith.constant 0 : i32
    %c0_i32_1 = arith.constant 0 : i32
    return %c0_i32, %c0_i32_0 : i32, i32
  }
  func.func @transform_7(%arg0: i32) -> (i32, i32) {
    %c0_i32 = arith.constant 0 : i32
    %c0_i32_0 = arith.constant 0 : i32
    %c0_i32_1 = arith.constant 0 : i32
    return %c0_i32, %c0_i32_0 : i32, i32
  }
  func.func @transform_8(%arg0: i32) -> (i32, i32) {
    %c0_i32 = arith.constant 0 : i32
    %c0_i32_0 = arith.constant 0 : i32
    %c0_i32_1 = arith.constant 0 : i32
    return %c0_i32, %c0_i32_0 : i32, i32
  }
  func.func @transform_9(%arg0: i32) -> (i32, i32, i32) {
    %c0_i32 = arith.constant 0 : i32
    %c0_i32_0 = arith.constant 0 : i32
    %c0_i32_1 = arith.constant 0 : i32
    return %arg0, %c0_i32, %c0_i32_0 : i32, i32, i32
  }
}

</mosaic_0001>

<llo_original>
// kernel: tpu_custom_call.1
$region0: #{tpu_custom_call.1}
  #allocation0 [shape = 'u32[]', space=smem, size = 0x4, offset = 0x4, fixed_abs, tag = 'smem constant byte address 0x4 - core index']
  #allocation1 [shape = 'u32[144,128]{1,0:T(1,128)}', space=vmem, size = 0x12000, scoped, tag = 'internal scratch']
  #allocation2 [shape = 'f32[4,10,10,32]{3,2,1,0:T(8,128)}', space=vmem, size = 0x50000, scoped, tag = 'scratch operand']
  %s0 = inlined_call_operand.vmem [shape: f32[8,32,64], index: 0, kind: input, shape index: {}]
  %s1 = inlined_call_operand.vmem [shape: bf16[288,32], index: 1, kind: input, shape index: {}]
  %s2 = inlined_call_operand.vmem [shape: f32[1,32], index: 2, kind: input, shape index: {}]
  %s3 = inlined_call_operand.vmem [shape: bf16[288,32], index: 3, kind: input, shape index: {}]
  %s4 = inlined_call_operand.vmem [shape: f32[1,32], index: 4, kind: input, shape index: {}]
  %s5 = inlined_call_operand.vmem [shape: f32[32,2], index: 5, kind: input, shape index: {}]
  %s6 = inlined_call_operand.vmem [shape: f32[1,2], index: 6, kind: input, shape index: {}]
  %s7 = inlined_call_operand.vmem [shape: f32[2,32], index: 7, kind: input, shape index: {}]
  %s8 = inlined_call_operand.vmem [shape: f32[1,32], index: 8, kind: input, shape index: {}]
  %s9 = inlined_call_operand.hbm [shape: f32[8,32,64], index: 9, kind: output, shape index: {}]
  %s10 = sld [smem:[#allocation0]]
  $region69: #{tpu_custom_call.1} parent=0
    _
  %s12 = ssub.s32 1, %s10
  %s13 = scalar_select 0, %s12, %s10
  $region1: #{tpu_custom_call.1} parent=0
    #allocation3 [shape = 'u8[131072]{0}', space=vmem, size = 0x20000, scoped, tag = 'output window, operand 0']
    #allocation4 [shape = 's32[2]{0}', space=sflag, size = 0x8, scoped, tag = 'scoped memory for tpu_custom_call.1']
    %14 = vsyncpa [#allocation4], 0
    %s15 = scalar_lea.sflag [#allocation4], 1
    %16 = vsyncpa %s15, 0
    loop: start=0, step=1, limit=4
    $region2: #{tpu_custom_call.1} parent=1 // loop_pre_header
      _
    $region3: #{tpu_custom_call.1} parent=1 // loop_header
      %s18 = sphi 0, %s22
      %p19 = scmp.ge.s32.totalorder %s18, 4
      %s28 = sphi 0, %s30
      %s31 = sphi 0, %s28
      %s32 = sphi 0, %s31
      %s48 = sphi 0, %s32
      %s52 = sphi 0, %s52
      %s54 = sphi 0, %s52
      %s55 = sphi 0, %s54
      %s69 = sphi 0, %s55
      %s73 = sphi 0, %s73
      %s75 = sphi 0, %s73
      %s76 = sphi 0, %s75
      %s90 = sphi 0, %s76
      %s94 = sphi 0, %s94
      %s96 = sphi 0, %s94
      %s97 = sphi 0, %s96
      %s111 = sphi 0, %s97
      %s115 = sphi 0, %s115
      %s117 = sphi 0, %s115
      %s118 = sphi 0, %s117
      %s132 = sphi 0, %s118
      %s136 = sphi 0, %s136
      %s138 = sphi 0, %s136
      %s139 = sphi 0, %s138
      %s153 = sphi 0, %s139
      %s157 = sphi 0, %s157
      %s159 = sphi 0, %s157
      %s160 = sphi 0, %s159
      %s174 = sphi 0, %s160
      %s178 = sphi 0, %s178
      %s180 = sphi 0, %s178
      %s181 = sphi 0, %s180
      %s195 = sphi 0, %s181
      %s199 = sphi 0, %s199
      %s201 = sphi 0, %s199
      %s202 = sphi 0, %s201
      %s216 = sphi 0, %s202
      %s222 = sphi 0, %s224
      %s225 = sphi 0, %s222
      %s226 = sphi 0, %s225
      %s242 = sphi 0, %s226
    $region4: #{tpu_custom_call.1} parent=1 // loop_header_branch
      %21 = sbr.rel (%p19) target = $region8
    $region5: #{tpu_custom_call.1} parent=1 // loop_body
      %s23 = ssub.s32 %s18, 1
      %s24 = ssub.s32 %s18, 2
      %s25 = sadd.s32 %s18, 1
      %s26 = ssub.s32 %s18, %s25
      %p27 = scmp.eq.s32.totalorder %s26, 0
      %s29 = sadd.s32 %s28, 1
      %s30 = scalar_select %p27, %s28, %s29
      %p33 = pneg %p27
      %p34 = scmp.eq.s32.totalorder %s18, 1
      %p35 = por %p33, %p34
      %p36 = scmp.ne.s32.totalorder %s28, %s31
      %p37 = scmp.eq.s32.totalorder %s18, 0
      %p38 = por %p36, %p37
      %p39 = scmp.ne.s32.totalorder %s28, %s31
      %p40 = scmp.eq.s32.totalorder %s23, 1
      %p41 = por %p39, %p40
      %p42 = scmp.ne.s32.totalorder %s31, %s32
      %p43 = scmp.eq.s32.totalorder %s23, 0
      %p44 = por %p42, %p43
      %p45 = scmp.ne.s32.totalorder %s31, %s32
      %p46 = scmp.eq.s32.totalorder %s24, 1
      %p47 = por %p45, %p46
      %p49 = scmp.ne.s32.totalorder %s32, %s48
      %p50 = scmp.eq.s32.totalorder %s24, 0
      %p51 = por %p49, %p50
      %s53 = sadd.s32 %s52, 1
      %p56 = scmp.eq.s32.totalorder %s18, 1
      %p57 = scmp.ne.s32.totalorder %s52, %s54
      %p58 = scmp.eq.s32.totalorder %s18, 0
      %p59 = por %p57, %p58
      %p60 = scmp.ne.s32.totalorder %s52, %s54
      %p61 = scmp.eq.s32.totalorder %s23, 1
      %p62 = por %p60, %p61
      %p63 = scmp.ne.s32.totalorder %s54, %s55
      %p64 = scmp.eq.s32.totalorder %s23, 0
      %p65 = por %p63, %p64
      %p66 = scmp.ne.s32.totalorder %s54, %s55
      %p67 = scmp.eq.s32.totalorder %s24, 1
      %p68 = por %p66, %p67
      %p70 = scmp.ne.s32.totalorder %s55, %s69
      %p71 = scmp.eq.s32.totalorder %s24, 0
      %p72 = por %p70, %p71
      %s74 = sadd.s32 %s73, 1
      %p77 = scmp.eq.s32.totalorder %s18, 1
      %p78 = scmp.ne.s32.totalorder %s73, %s75
      %p79 = scmp.eq.s32.totalorder %s18, 0
      %p80 = por %p78, %p79
      %p81 = scmp.ne.s32.totalorder %s73, %s75
      %p82 = scmp.eq.s32.totalorder %s23, 1
      %p83 = por %p81, %p82
      %p84 = scmp.ne.s32.totalorder %s75, %s76
      %p85 = scmp.eq.s32.totalorder %s23, 0
      %p86 = por %p84, %p85
      %p87 = scmp.ne.s32.totalorder %s75, %s76
      %p88 = scmp.eq.s32.totalorder %s24, 1
      %p89 = por %p87, %p88
      %p91 = scmp.ne.s32.totalorder %s76, %s90
      %p92 = scmp.eq.s32.totalorder %s24, 0
      %p93 = por %p91, %p92
      %s95 = sadd.s32 %s94, 1
      %p98 = scmp.eq.s32.totalorder %s18, 1
      %p99 = scmp.ne.s32.totalorder %s94, %s96
      %p100 = scmp.eq.s32.totalorder %s18, 0
      %p101 = por %p99, %p100
      %p102 = scmp.ne.s32.totalorder %s94, %s96
      %p103 = scmp.eq.s32.totalorder %s23, 1
      %p104 = por %p102, %p103
      %p105 = scmp.ne.s32.totalorder %s96, %s97
      %p106 = scmp.eq.s32.totalorder %s23, 0
      %p107 = por %p105, %p106
      %p108 = scmp.ne.s32.totalorder %s96, %s97
      %p109 = scmp.eq.s32.totalorder %s24, 1
      %p110 = por %p108, %p109
      %p112 = scmp.ne.s32.totalorder %s97, %s111
      %p113 = scmp.eq.s32.totalorder %s24, 0
      %p114 = por %p112, %p113
      %s116 = sadd.s32 %s115, 1
      %p119 = scmp.eq.s32.totalorder %s18, 1
      %p120 = scmp.ne.s32.totalorder %s115, %s117
      %p121 = scmp.eq.s32.totalorder %s18, 0
      %p122 = por %p120, %p121
      %p123 = scmp.ne.s32.totalorder %s115, %s117
      %p124 = scmp.eq.s32.totalorder %s23, 1
      %p125 = por %p123, %p124
      %p126 = scmp.ne.s32.totalorder %s117, %s118
      %p127 = scmp.eq.s32.totalorder %s23, 0
      %p128 = por %p126, %p127
      %p129 = scmp.ne.s32.totalorder %s117, %s118
      %p130 = scmp.eq.s32.totalorder %s24, 1
      %p131 = por %p129, %p130
      %p133 = scmp.ne.s32.totalorder %s118, %s132
      %p134 = scmp.eq.s32.totalorder %s24, 0
      %p135 = por %p133, %p134
      %s137 = sadd.s32 %s136, 1
      %p140 = scmp.eq.s32.totalorder %s18, 1
      %p141 = scmp.ne.s32.totalorder %s136, %s138
      %p142 = scmp.eq.s32.totalorder %s18, 0
      %p143 = por %p141, %p142
      %p144 = scmp.ne.s32.totalorder %s136, %s138
      %p145 = scmp.eq.s32.totalorder %s23, 1
      %p146 = por %p144, %p145
      %p147 = scmp.ne.s32.totalorder %s138, %s139
      %p148 = scmp.eq.s32.totalorder %s23, 0
      %p149 = por %p147, %p148
      %p150 = scmp.ne.s32.totalorder %s138, %s139
      %p151 = scmp.eq.s32.totalorder %s24, 1
      %p152 = por %p150, %p151
      %p154 = scmp.ne.s32.totalorder %s139, %s153
      %p155 = scmp.eq.s32.totalorder %s24, 0
      %p156 = por %p154, %p155
      %s158 = sadd.s32 %s157, 1
      %p161 = scmp.eq.s32.totalorder %s18, 1
      %p162 = scmp.ne.s32.totalorder %s157, %s159
      %p163 = scmp.eq.s32.totalorder %s18, 0
      %p164 = por %p162, %p163
      %p165 = scmp.ne.s32.totalorder %s157, %s159
      %p166 = scmp.eq.s32.totalorder %s23, 1
      %p167 = por %p165, %p166
      %p168 = scmp.ne.s32.totalorder %s159, %s160
      %p169 = scmp.eq.s32.totalorder %s23, 0
      %p170 = por %p168, %p169
      %p171 = scmp.ne.s32.totalorder %s159, %s160
      %p172 = scmp.eq.s32.totalorder %s24, 1
      %p173 = por %p171, %p172
      %p175 = scmp.ne.s32.totalorder %s160, %s174
      %p176 = scmp.eq.s32.totalorder %s24, 0
      %p177 = por %p175, %p176
      %s179 = sadd.s32 %s178, 1
      %p182 = scmp.eq.s32.totalorder %s18, 1
      %p183 = scmp.ne.s32.totalorder %s178, %s180
      %p184 = scmp.eq.s32.totalorder %s18, 0
      %p185 = por %p183, %p184
      %p186 = scmp.ne.s32.totalorder %s178, %s180
      %p187 = scmp.eq.s32.totalorder %s23, 1
      %p188 = por %p186, %p187
      %p189 = scmp.ne.s32.totalorder %s180, %s181
      %p190 = scmp.eq.s32.totalorder %s23, 0
      %p191 = por %p189, %p190
      %p192 = scmp.ne.s32.totalorder %s180, %s181
      %p193 = scmp.eq.s32.totalorder %s24, 1
      %p194 = por %p192, %p193
      %p196 = scmp.ne.s32.totalorder %s181, %s195
      %p197 = scmp.eq.s32.totalorder %s24, 0
      %p198 = por %p196, %p197
      %s200 = sadd.s32 %s199, 1
      %p203 = scmp.eq.s32.totalorder %s18, 1
      %p204 = scmp.ne.s32.totalorder %s199, %s201
      %p205 = scmp.eq.s32.totalorder %s18, 0
      %p206 = por %p204, %p205
      %p207 = scmp.ne.s32.totalorder %s199, %s201
      %p208 = scmp.eq.s32.totalorder %s23, 1
      %p209 = por %p207, %p208
      %p210 = scmp.ne.s32.totalorder %s201, %s202
      %p211 = scmp.eq.s32.totalorder %s23, 0
      %p212 = por %p210, %p211
      %p213 = scmp.ne.s32.totalorder %s201, %s202
      %p214 = scmp.eq.s32.totalorder %s24, 1
      %p215 = por %p213, %p214
      %p217 = scmp.ne.s32.totalorder %s202, %s216
      %p218 = scmp.eq.s32.totalorder %s24, 0
      %p219 = por %p217, %p218
      %s220 = ssub.s32 %s18, %s25
      %p221 = scmp.eq.s32.totalorder %s220, 0
      %s223 = sadd.s32 %s222, 1
      %s224 = scalar_select %p221, %s222, %s223
      %p227 = pneg %p221
      %p228 = scmp.eq.s32.totalorder %s18, 1
      %p229 = por %p227, %p228
      %p230 = scmp.ne.s32.totalorder %s222, %s225
      %p231 = scmp.eq.s32.totalorder %s18, 0
      %p232 = por %p230, %p231
      %p233 = scmp.ne.s32.totalorder %s222, %s225
      %p234 = scmp.eq.s32.totalorder %s23, 1
      %p235 = por %p233, %p234
      %p236 = scmp.ne.s32.totalorder %s225, %s226
      %p237 = scmp.eq.s32.totalorder %s23, 0
      %p238 = por %p236, %p237
      %p239 = scmp.ne.s32.totalorder %s225, %s226
      %p240 = scmp.eq.s32.totalorder %s24, 1
      %p241 = por %p239, %p240
      %p243 = scmp.ne.s32.totalorder %s226, %s242
      %p244 = scmp.eq.s32.totalorder %s24, 0
      %p245 = por %p243, %p244
      %p246 = scmp.le.s32.totalorder 1, %s18
      %p247 = scmp.lt.s32.totalorder %s18, 3
      %p248 = pnand %p246, %p247
      %p249 = pneg %p248
      // Predicated region
      $region9: #{tpu_custom_call.1} parent=5 // pred_check
        _
      $region10: #{tpu_custom_call.1} parent=5 // pred_check_branch
        %251 = sbr.rel (%p248) target = $region12
      $region11: #{tpu_custom_call.1} parent=5 // pred_region
        %s252 = ssub.s32 %s18, 1
        // Predicated region
        $region13: #{tpu_custom_call.1} parent=11 // pred_check
          %p253 = pneg %p65
        $region14: #{tpu_custom_call.1} parent=11 // pred_check_branch
          %255 = sbr.rel (%p253) target = $region16
        $region15: #{tpu_custom_call.1} parent=11 // pred_region
          _
        $region16: #{tpu_custom_call.1} parent=11 // pred_fallthru
          _
        // Predicated region
        $region17: #{tpu_custom_call.1} parent=11 // pred_check
          %p256 = pneg %p86
        $region18: #{tpu_custom_call.1} parent=11 // pred_check_branch
          %258 = sbr.rel (%p256) target = $region20
        $region19: #{tpu_custom_call.1} parent=11 // pred_region
          _
        $region20: #{tpu_custom_call.1} parent=11 // pred_fallthru
          _
        // Predicated region
        $region21: #{tpu_custom_call.1} parent=11 // pred_check
          %p259 = pneg %p107
        $region22: #{tpu_custom_call.1} parent=11 // pred_check_branch
          %261 = sbr.rel (%p259) target = $region24
        $region23: #{tpu_custom_call.1} parent=11 // pred_region
          _
        $region24: #{tpu_custom_call.1} parent=11 // pred_fallthru
          _
        // Predicated region
        $region25: #{tpu_custom_call.1} parent=11 // pred_check
          %p262 = pneg %p128
        $region26: #{tpu_custom_call.1} parent=11 // pred_check_branch
          %264 = sbr.rel (%p262) target = $region28
        $region27: #{tpu_custom_call.1} parent=11 // pred_region
          _
        $region28: #{tpu_custom_call.1} parent=11 // pred_fallthru
          _
        // Predicated region
        $region29: #{tpu_custom_call.1} parent=11 // pred_check
          %p265 = pneg %p149
        $region30: #{tpu_custom_call.1} parent=11 // pred_check_branch
          %267 = sbr.rel (%p265) target = $region32
        $region31: #{tpu_custom_call.1} parent=11 // pred_region
          _
        $region32: #{tpu_custom_call.1} parent=11 // pred_fallthru
          _
        // Predicated region
        $region33: #{tpu_custom_call.1} parent=11 // pred_check
          %p268 = pneg %p170
        $region34: #{tpu_custom_call.1} parent=11 // pred_check_branch
          %270 = sbr.rel (%p268) target = $region36
        $region35: #{tpu_custom_call.1} parent=11 // pred_region
          _
        $region36: #{tpu_custom_call.1} parent=11 // pred_fallthru
          _
        // Predicated region
        $region37: #{tpu_custom_call.1} parent=11 // pred_check
          %p271 = pneg %p191
        $region38: #{tpu_custom_call.1} parent=11 // pred_check_branch
          %273 = sbr.rel (%p271) target = $region40
        $region39: #{tpu_custom_call.1} parent=11 // pred_region
          _
        $region40: #{tpu_custom_call.1} parent=11 // pred_fallthru
          _
        // Predicated region
        $region41: #{tpu_custom_call.1} parent=11 // pred_check
          %p274 = pneg %p212
        $region42: #{tpu_custom_call.1} parent=11 // pred_check_branch
          %276 = sbr.rel (%p274) target = $region44
        $region43: #{tpu_custom_call.1} parent=11 // pred_region
          _
        $region44: #{tpu_custom_call.1} parent=11 // pred_fallthru
          _
      $region12: #{tpu_custom_call.1} parent=5 // pred_fallthru
        _
      %p277 = scmp.lt.s32.totalorder %s18, 2
      // Predicated region
      $region45: #{tpu_custom_call.1} parent=5 // pred_check
        %p278 = pneg %p277
      $region46: #{tpu_custom_call.1} parent=5 // pred_check_branch
        %280 = sbr.rel (%p278) target = $region48
      $region47: #{tpu_custom_call.1} parent=5 // pred_region
        // Predicated region
        $region49: #{tpu_custom_call.1} parent=47 // pred_check
          %p281 = pneg %p38
        $region50: #{tpu_custom_call.1} parent=47 // pred_check_branch
          %283 = sbr.rel (%p281) target = $region52
        $region51: #{tpu_custom_call.1} parent=47 // pred_region
          %s284 = smul.u32 4, %s18
          %p285 = scmp.lt.s32.totalorder %s284, 7
          %s286 = scalar_select %p285, %s284, 7
          %s287 = smul.addr %s286, 4
          %s288 = smul.addr %s287, 8
          %s289 = scalar_lea.vmem %s0, %s288
          %s290 = smul.u32 4, %s18
        $region52: #{tpu_custom_call.1} parent=47 // pred_fallthru
          _
      $region48: #{tpu_custom_call.1} parent=5 // pred_fallthru
        _
      %p291 = scmp.le.s32.totalorder 1, %s18
      %p292 = scmp.lt.s32.totalorder %s18, 3
      %p293 = pnand %p291, %p292
      %p294 = pneg %p293
      // Predicated region
      $region53: #{tpu_custom_call.1} parent=5 // pred_check
        _
      $region54: #{tpu_custom_call.1} parent=5 // pred_check_branch
        %296 = sbr.rel (%p293) target = $region56
      $region55: #{tpu_custom_call.1} parent=5 // pred_region
        %s297 = ssub.s32 %s18, 1
        %s298 = smul.u32 4, %s23
        %p299 = scmp.lt.s32.totalorder %s298, 7
        %s300 = scalar_select %p299, %s298, 7
        %s301 = smul.addr %s300, 4
        %s302 = smul.addr %s301, 8
        %s303 = scalar_lea.vmem %s0, %s302
        %p304 = pneg %p44
        %p305 = pneg %p41
        %p306 = pneg %p65
        %p307 = pneg %p62
        %p308 = pneg %p86
        %p309 = pneg %p83
        %p310 = pneg %p107
        %p311 = pneg %p104
        %p312 = pneg %p128
        %p313 = pneg %p125
        %p314 = pneg %p149
        %p315 = pneg %p146
        %p316 = pneg %p170
        %p317 = pneg %p167
        %p318 = pneg %p191
        %p319 = pneg %p188
        %p320 = pneg %p212
        %p321 = pneg %p209
        %p322 = pneg %p238
        %p323 = pneg %p235
        %s324 = sand.u32 %s225, 1
        %s325 = scalar_lea.sflag [#allocation4], %s324
        %s326 = sand.u32 %s225, 1
        %s327 = smul.addr %s326, 128
        %s328 = scalar_lea.vmem [#allocation3], %s327
        %s329 = smul.u32 4, %s23
        %p330 = scmp.lt.s32.totalorder %s329, 7
        %s331 = scalar_select %p330, %s329, 7
        %s332 = smul.addr %s331, 4
        %s333 = smul.addr %s332, 8
        %s334 = scalar_lea.vmem %s0, %s333
        %s335 = smul.u32 4, %s23
        %s336 = smul.u32 4, %s23
        %v338 = vlaneseq
        %v339 = vshrl.u32 %v338, 7
        %v340 = vadd.s32 %v339, 8
        %v341 = vadd.s32 %v339, 16
        %v342 = vadd.s32 %v339, 24
        %v343 = vadd.s32 %v339, 32
        %v344 = vadd.s32 %v339, 40
        %v345 = vadd.s32 %v339, 48
        %v346 = vadd.s32 %v339, 56
        %v347 = vlaneseq
        %v348 = vand.u32 %v347, 127
        %vm349 = vcmp.eq.s32.totalorder %v339, %v348
        %vm350 = vcmp.eq.s32.totalorder %v340, %v348
        %vm351 = vcmp.eq.s32.totalorder %v341, %v348
        %vm352 = vcmp.eq.s32.totalorder %v342, %v348
        %vm353 = vcmp.eq.s32.totalorder %v343, %v348
        %vm354 = vcmp.eq.s32.totalorder %v344, %v348
        %vm355 = vcmp.eq.s32.totalorder %v345, %v348
        %vm356 = vcmp.eq.s32.totalorder %v346, %v348
        %v357 = vsel %vm349, 1, 0
        %v358 = vsel %vm350, 1, 0
        %v359 = vsel %vm351, 1, 0
        %v360 = vsel %vm352, 1, 0
        %v361 = vsel %vm353, 1, 0
        %v362 = vsel %vm354, 1, 0
        %v363 = vsel %vm355, 1, 0
        %v364 = vsel %vm356, 1, 0
        %v365 = vcvt.s32.f32 %v357
        %v366 = vcvt.s32.f32 %v358
        %v367 = vcvt.s32.f32 %v359
        %v368 = vcvt.s32.f32 %v360
        %v369 = vcvt.s32.f32 %v361
        %v370 = vcvt.s32.f32 %v362
        %v371 = vcvt.s32.f32 %v363
        %v372 = vcvt.s32.f32 %v364
        %v373 = vpack.c.bf16 %v366, %v365
        %v374 = vpack.c.bf16 %v368, %v367
        %v375 = vpack.c.bf16 %v370, %v369
        %v376 = vpack.c.bf16 %v372, %v371
        %vm377 = vcmask 261120
        %378 = vst.msk [vmem:[#allocation2] sm:$0xff] %vm377, 0.0
        %vm379 = vcmask 254976
        %380 = vst.msk [vmem:[#allocation2 + $0x8] sm:$0x3] %vm379, 0.0
        %381 = vst.msk [vmem:[#allocation2 + $0x10] sm:$0xff] %vm377, 0.0
        %382 = vst.msk [vmem:[#allocation2 + $0x18] sm:$0x3] %vm379, 0.0
        %383 = vst.msk [vmem:[#allocation2 + $0x20] sm:$0xff] %vm377, 0.0
        %384 = vst.msk [vmem:[#allocation2 + $0x28] sm:$0x3] %vm379, 0.0
        %385 = vst.msk [vmem:[#allocation2 + $0x30] sm:$0xff] %vm377, 0.0
        %386 = vst.msk [vmem:[#allocation2 + $0x38] sm:$0x3] %vm379, 0.0
        %387 = vst.msk [vmem:[#allocation2 + $0x40] sm:$0xff] %vm377, 0.0
        %388 = vst.msk [vmem:[#allocation2 + $0x48] sm:$0x3] %vm379, 0.0
        %389 = vst.msk [vmem:[#allocation2 + $0x50] sm:$0xff] %vm377, 0.0
        %390 = vst.msk [vmem:[#allocation2 + $0x58] sm:$0x3] %vm379, 0.0
        %391 = vst.msk [vmem:[#allocation2 + $0x60] sm:$0xff] %vm377, 0.0
        %392 = vst.msk [vmem:[#allocation2 + $0x68] sm:$0x3] %vm379, 0.0
        %393 = vst.msk [vmem:[#allocation2 + $0x70] sm:$0xff] %vm377, 0.0
        %394 = vst.msk [vmem:[#allocation2 + $0x78] sm:$0x3] %vm379, 0.0
        %395 = vst.msk [vmem:[#allocation2 + $0x80] sm:$0xff] %vm377, 0.0
        %396 = vst.msk [vmem:[#allocation2 + $0x88] sm:$0x3] %vm379, 0.0
        %397 = vst.msk [vmem:[#allocation2 + $0x90] sm:$0xff] %vm377, 0.0
        %398 = vst.msk [vmem:[#allocation2 + $0x98] sm:$0x3] %vm379, 0.0
        %399 = vst.msk [vmem:[#allocation2 + $0xa0] sm:$0xff] %vm377, 0.0
        %400 = vst.msk [vmem:[#allocation2 + $0xa8] sm:$0x3] %vm379, 0.0
        %401 = vst.msk [vmem:[#allocation2 + $0xb0] sm:$0xff] %vm377, 0.0
        %402 = vst.msk [vmem:[#allocation2 + $0xb8] sm:$0x3] %vm379, 0.0
        %403 = vst.msk [vmem:[#allocation2 + $0xc0] sm:$0xff] %vm377, 0.0
        %404 = vst.msk [vmem:[#allocation2 + $0xc8] sm:$0x3] %vm379, 0.0
        %405 = vst.msk [vmem:[#allocation2 + $0xd0] sm:$0xff] %vm377, 0.0
        %406 = vst.msk [vmem:[#allocation2 + $0xd8] sm:$0x3] %vm379, 0.0
        %407 = vst.msk [vmem:[#allocation2 + $0xe0] sm:$0xff] %vm377, 0.0
        %408 = vst.msk [vmem:[#allocation2 + $0xe8] sm:$0x3] %vm379, 0.0
        %409 = vst.msk [vmem:[#allocation2 + $0xf0] sm:$0xff] %vm377, 0.0
        %410 = vst.msk [vmem:[#allocation2 + $0xf8] sm:$0x3] %vm379, 0.0
        %411 = vst.msk [vmem:[#allocation2 + $0x100] sm:$0xff] %vm377, 0.0
        %412 = vst.msk [vmem:[#allocation2 + $0x108] sm:$0x3] %vm379, 0.0
        %413 = vst.msk [vmem:[#allocation2 + $0x110] sm:$0xff] %vm377, 0.0
        %414 = vst.msk [vmem:[#allocation2 + $0x118] sm:$0x3] %vm379, 0.0
        %415 = vst.msk [vmem:[#allocation2 + $0x120] sm:$0xff] %vm377, 0.0
        %416 = vst.msk [vmem:[#allocation2 + $0x128] sm:$0x3] %vm379, 0.0
        %417 = vst.msk [vmem:[#allocation2 + $0x130] sm:$0xff] %vm377, 0.0
        %418 = vst.msk [vmem:[#allocation2 + $0x138] sm:$0x3] %vm379, 0.0
        %419 = vst.msk [vmem:[#allocation2 + $0x140] sm:$0xff] %vm377, 0.0
        %420 = vst.msk [vmem:[#allocation2 + $0x148] sm:$0x3] %vm379, 0.0
        %421 = vst.msk [vmem:[#allocation2 + $0x150] sm:$0xff] %vm377, 0.0
        %422 = vst.msk [vmem:[#allocation2 + $0x158] sm:$0x3] %vm379, 0.0
        %423 = vst.msk [vmem:[#allocation2 + $0x160] sm:$0xff] %vm377, 0.0
        %424 = vst.msk [vmem:[#allocation2 + $0x168] sm:$0x3] %vm379, 0.0
        %425 = vst.msk [vmem:[#allocation2 + $0x170] sm:$0xff] %vm377, 0.0
        %426 = vst.msk [vmem:[#allocation2 + $0x178] sm:$0x3] %vm379, 0.0
        %427 = vst.msk [vmem:[#allocation2 + $0x180] sm:$0xff] %vm377, 0.0
        %428 = vst.msk [vmem:[#allocation2 + $0x188] sm:$0x3] %vm379, 0.0
        %429 = vst.msk [vmem:[#allocation2 + $0x190] sm:$0xff] %vm377, 0.0
        %430 = vst.msk [vmem:[#allocation2 + $0x198] sm:$0x3] %vm379, 0.0
        %431 = vst.msk [vmem:[#allocation2 + $0x1a0] sm:$0xff] %vm377, 0.0
        %432 = vst.msk [vmem:[#allocation2 + $0x1a8] sm:$0x3] %vm379, 0.0
        %433 = vst.msk [vmem:[#allocation2 + $0x1b0] sm:$0xff] %vm377, 0.0
        %434 = vst.msk [vmem:[#allocation2 + $0x1b8] sm:$0x3] %vm379, 0.0
        %435 = vst.msk [vmem:[#allocation2 + $0x1c0] sm:$0xff] %vm377, 0.0
        %436 = vst.msk [vmem:[#allocation2 + $0x1c8] sm:$0x3] %vm379, 0.0
        %437 = vst.msk [vmem:[#allocation2 + $0x1d0] sm:$0xff] %vm377, 0.0
        %438 = vst.msk [vmem:[#allocation2 + $0x1d8] sm:$0x3] %vm379, 0.0
        %439 = vst.msk [vmem:[#allocation2 + $0x1e0] sm:$0xff] %vm377, 0.0
        %440 = vst.msk [vmem:[#allocation2 + $0x1e8] sm:$0x3] %vm379, 0.0
        %441 = vst.msk [vmem:[#allocation2 + $0x1f0] sm:$0xff] %vm377, 0.0
        %442 = vst.msk [vmem:[#allocation2 + $0x1f8] sm:$0x3] %vm379, 0.0
        %443 = vst.msk [vmem:[#allocation2 + $0x200] sm:$0xff] %vm377, 0.0
        %444 = vst.msk [vmem:[#allocation2 + $0x208] sm:$0x3] %vm379, 0.0
        %445 = vst.msk [vmem:[#allocation2 + $0x210] sm:$0xff] %vm377, 0.0
        %446 = vst.msk [vmem:[#allocation2 + $0x218] sm:$0x3] %vm379, 0.0
        %447 = vst.msk [vmem:[#allocation2 + $0x220] sm:$0xff] %vm377, 0.0
        %448 = vst.msk [vmem:[#allocation2 + $0x228] sm:$0x3] %vm379, 0.0
        %449 = vst.msk [vmem:[#allocation2 + $0x230] sm:$0xff] %vm377, 0.0
        %450 = vst.msk [vmem:[#allocation2 + $0x238] sm:$0x3] %vm379, 0.0
        %451 = vst.msk [vmem:[#allocation2 + $0x240] sm:$0xff] %vm377, 0.0
        %452 = vst.msk [vmem:[#allocation2 + $0x248] sm:$0x3] %vm379, 0.0
        %453 = vst.msk [vmem:[#allocation2 + $0x250] sm:$0xff] %vm377, 0.0
        %454 = vst.msk [vmem:[#allocation2 + $0x258] sm:$0x3] %vm379, 0.0
        %455 = vst.msk [vmem:[#allocation2 + $0x260] sm:$0xff] %vm377, 0.0
        %456 = vst.msk [vmem:[#allocation2 + $0x268] sm:$0x3] %vm379, 0.0
        %457 = vst.msk [vmem:[#allocation2 + $0x270] sm:$0xff] %vm377, 0.0
        %458 = vst.msk [vmem:[#allocation2 + $0x278] sm:$0x3] %vm379, 0.0
        %v459 = vld [vmem:[%s334] sm:$0xff]
        %v460 = vld [vmem:[%s334 + $0x8] sm:$0xff]
        %v461 = vld [vmem:[%s334 + $0x10] sm:$0xff]
        %v462 = vld [vmem:[%s334 + $0x18] sm:$0xff]
        %v463 = vld [vmem:[%s334 + $0x20] sm:$0xff]
        %v464 = vld [vmem:[%s334 + $0x28] sm:$0xff]
        %v465 = vld [vmem:[%s334 + $0x30] sm:$0xff]
        %v466 = vld [vmem:[%s334 + $0x38] sm:$0xff]
        %v467 = vld [vmem:[%s334 + $0x40] sm:$0xff]
        %v468 = vld [vmem:[%s334 + $0x48] sm:$0xff]
        %v469 = vld [vmem:[%s334 + $0x50] sm:$0xff]
        %v470 = vld [vmem:[%s334 + $0x58] sm:$0xff]
        %v471 = vld [vmem:[%s334 + $0x60] sm:$0xff]
        %v472 = vld [vmem:[%s334 + $0x68] sm:$0xff]
        %v473 = vld [vmem:[%s334 + $0x70] sm:$0xff]
        %v474 = vld [vmem:[%s334 + $0x78] sm:$0xff]
        %v475 = vpack.c.bf16 %v460, %v459
        %v476 = vpack.c.bf16 %v462, %v461
        %v477 = vpack.c.bf16 %v464, %v463
        %v478 = vpack.c.bf16 %v466, %v465
        %v479 = vpack.c.bf16 %v468, %v467
        %v480 = vpack.c.bf16 %v470, %v469
        %v481 = vpack.c.bf16 %v472, %v471
        %v482 = vpack.c.bf16 %v474, %v473
        %vm483 = vcmask 523264
        %v485 = vsel %vm483, %v373, 0
        %v488 = vsel %vm483, %v374, 0
        %v491 = vsel %vm483, %v375, 0
        %v494 = vsel %vm483, %v376, 0
        %v497 = vsel %vm483, %v475, 0
        %v500 = vsel %vm483, %v476, 0
        %v503 = vsel %vm483, %v477, 0
        %v506 = vsel %vm483, %v478, 0
        %v509 = vsel %vm483, %v479, 0
        %v512 = vsel %vm483, %v480, 0
        %v515 = vsel %vm483, %v481, 0
        %v518 = vsel %vm483, %v482, 0
        %520 = vmatprep.subr.bf16.mxu0 0
        %521 = vmatpush1.bf16.xpose.msra.mxu0 %v497
        %522 = vmatprep.subr.bf16.mxu0 0
        %523 = vmatpush1.bf16.xpose.msra.mxu0 %v500
        %524 = vmatprep.subr.bf16.mxu0 0
        %525 = vmatpush1.bf16.xpose.msra.mxu0 %v503
        %526 = vmatprep.subr.bf16.mxu0 0
        %527 = vmatpush1.bf16.xpose.msra.mxu0 %v506
        %528 = vmatprep.subr.bf16.mxu0 0
        %529 = vmatpush1.bf16.xpose.msra.mxu0 %v509
        %530 = vmatprep.subr.bf16.mxu0 0
        %531 = vmatpush1.bf16.xpose.msra.mxu0 %v512
        %532 = vmatprep.subr.bf16.mxu0 0
        %533 = vmatpush1.bf16.xpose.msra.mxu0 %v515
        %534 = vmatprep.subr.bf16.mxu0 0
        %535 = vmatpush1.bf16.xpose.msra.mxu0 %v518
        %536 = vmatprep.subr.bf16.mxu0 0
        %537 = vmatpush1.bf16.xpose.msra.mxu0 0
        %538 = vmatprep.subr.bf16.mxu0 0
        %539 = vmatpush1.bf16.xpose.msra.mxu0 0
        %540 = vmatprep.subr.bf16.mxu0 0
        %541 = vmatpush1.bf16.xpose.msra.mxu0 0
        %542 = vmatprep.subr.bf16.mxu0 0
        %543 = vmatpush1.bf16.xpose.msra.mxu0 0
        %544 = vmatprep.subr.bf16.mxu0 0
        %545 = vmatpush1.bf16.xpose.msra.mxu0 0
        %546 = vmatprep.subr.bf16.mxu0 0
        %547 = vmatpush1.bf16.xpose.msra.mxu0 0
        %548 = vmatprep.subr.bf16.mxu0 0
        %549 = vmatpush1.bf16.xpose.msra.mxu0 0
        %550 = vmatprep.subr.bf16.mxu0 0
        %551 = vmatpush1.bf16.xpose.msra.mxu0 0
        %552 = vmatprep.mubr.bf16.mxu0 0
        %553 = vmatmul.mubr.bf16.gmra.mrb[0].mxu0 %v485
        %v554 = vpop.f32.mrb[0].mxu0
        %v555 = vadd.f32 0.0, %v554
        %v556 = vpop.f32.mrb[0].mxu0
        %v557 = vpop.f32.mrb[0].mxu0
        %v558 = vadd.f32 0.0, %v557
        %v559 = vpop.f32.mrb[0].mxu0
        %560 = vmatprep.mubr.bf16.mxu0 0
        %561 = vmatmul.mubr.bf16.gmra.mrb[0].mxu0 %v488
        %v562 = vpop.f32.mrb[0].mxu0
        %v563 = vadd.f32 0.0, %v562
        %v564 = vpop.f32.mrb[0].mxu0
        %v565 = vpop.f32.mrb[0].mxu0
        %v566 = vadd.f32 0.0, %v565
        %v567 = vpop.f32.mrb[0].mxu0
        %568 = vmatprep.mubr.bf16.mxu0 0
        %569 = vmatmul.mubr.bf16.gmra.mrb[0].mxu0 %v491
        %v570 = vpop.f32.mrb[0].mxu0
        %v571 = vadd.f32 0.0, %v570
        %v572 = vpop.f32.mrb[0].mxu0
        %v573 = vpop.f32.mrb[0].mxu0
        %v574 = vadd.f32 0.0, %v573
        %v575 = vpop.f32.mrb[0].mxu0
        %576 = vmatprep.mubr.bf16.mxu0 0
        %577 = vmatmul.mubr.bf16.gmra.mrb[0].mxu0 %v494
        %v578 = vpop.f32.mrb[0].mxu0
        %v579 = vadd.f32 0.0, %v578
        %v580 = vpop.f32.mrb[0].mxu0
        %v581 = vpop.f32.mrb[0].mxu0
        %v582 = vadd.f32 0.0, %v581
        %v583 = vpop.f32.mrb[0].mxu0
        %584 = vdwg.mxu0
        %s585 = scalar_lea.vmem [#allocation2], 16
        %586 = vst.msk [vmem:[%s585 + $0x1] sm:$0xff] %vm377, %v555
        %587 = vst.msk [vmem:[%s585 + $0x11] sm:$0xff] %vm377, %v558
        %588 = vst.msk [vmem:[%s585 + $0x21] sm:$0xff] %vm377, %v563
        %589 = vst.msk [vmem:[%s585 + $0x31] sm:$0xff] %vm377, %v566
        %590 = vst.msk [vmem:[%s585 + $0x41] sm:$0xff] %vm377, %v571
        %591 = vst.msk [vmem:[%s585 + $0x51] sm:$0xff] %vm377, %v574
        %592 = vst.msk [vmem:[%s585 + $0x61] sm:$0xff] %vm377, %v579
        %593 = vst.msk [vmem:[%s585 + $0x71] sm:$0xff] %vm377, %v582
        %602 = vrot.lane.b32.xlu0 %v555, 96
        %v603 = vpop.permute.xlu0 %602
        %604 = vrot.lane.b32.xlu0 %v558, 96
        %v605 = vpop.permute.xlu0 %604
        %606 = vrot.lane.b32.xlu0 %v563, 96
        %v607 = vpop.permute.xlu0 %606
        %608 = vrot.lane.b32.xlu0 %v566, 96
        %v609 = vpop.permute.xlu0 %608
        %610 = vrot.lane.b32.xlu0 %v571, 96
        %v611 = vpop.permute.xlu0 %610
        %612 = vrot.lane.b32.xlu0 %v574, 96
        %v613 = vpop.permute.xlu0 %612
        %614 = vrot.lane.b32.xlu0 %v579, 96
        %v615 = vpop.permute.xlu0 %614
        %616 = vrot.lane.b32.xlu0 %v582, 96
        %v617 = vpop.permute.xlu0 %616
        %s626 = scalar_lea.vmem [#allocation2], 176
        %627 = vst.msk [vmem:[%s626 + $0x1] sm:$0xff] %vm377, %v603
        %628 = vst.msk [vmem:[%s626 + $0x11] sm:$0xff] %vm377, %v605
        %629 = vst.msk [vmem:[%s626 + $0x21] sm:$0xff] %vm377, %v607
        %630 = vst.msk [vmem:[%s626 + $0x31] sm:$0xff] %vm377, %v609
        %631 = vst.msk [vmem:[%s626 + $0x41] sm:$0xff] %vm377, %v611
        %632 = vst.msk [vmem:[%s626 + $0x51] sm:$0xff] %vm377, %v613
        %633 = vst.msk [vmem:[%s626 + $0x61] sm:$0xff] %vm377, %v615
        %634 = vst.msk [vmem:[%s626 + $0x71] sm:$0xff] %vm377, %v617
        %635 = vrot.lane.b32.xlu0 %v555, 64
        %v636 = vpop.permute.xlu0 %635
        %637 = vrot.lane.b32.xlu0 %v558, 64
        %v638 = vpop.permute.xlu0 %637
        %639 = vrot.lane.b32.xlu0 %v563, 64
        %v640 = vpop.permute.xlu0 %639
        %641 = vrot.lane.b32.xlu0 %v566, 64
        %v642 = vpop.permute.xlu0 %641
        %643 = vrot.lane.b32.xlu0 %v571, 64
        %v644 = vpop.permute.xlu0 %643
        %645 = vrot.lane.b32.xlu0 %v574, 64
        %v646 = vpop.permute.xlu0 %645
        %647 = vrot.lane.b32.xlu0 %v579, 64
        %v648 = vpop.permute.xlu0 %647
        %649 = vrot.lane.b32.xlu0 %v582, 64
        %v650 = vpop.permute.xlu0 %649
        %s659 = scalar_lea.vmem [#allocation2], 336
        %660 = vst.msk [vmem:[%s659 + $0x1] sm:$0xff] %vm377, %v636
        %661 = vst.msk [vmem:[%s659 + $0x11] sm:$0xff] %vm377, %v638
        %662 = vst.msk [vmem:[%s659 + $0x21] sm:$0xff] %vm377, %v640
        %663 = vst.msk [vmem:[%s659 + $0x31] sm:$0xff] %vm377, %v642
        %664 = vst.msk [vmem:[%s659 + $0x41] sm:$0xff] %vm377, %v644
        %665 = vst.msk [vmem:[%s659 + $0x51] sm:$0xff] %vm377, %v646
        %666 = vst.msk [vmem:[%s659 + $0x61] sm:$0xff] %vm377, %v648
        %667 = vst.msk [vmem:[%s659 + $0x71] sm:$0xff] %vm377, %v650
        %668 = vrot.lane.b32.xlu0 %v555, 32
        %v669 = vpop.permute.xlu0 %668
        %670 = vrot.lane.b32.xlu0 %v558, 32
        %v671 = vpop.permute.xlu0 %670
        %672 = vrot.lane.b32.xlu0 %v563, 32
        %v673 = vpop.permute.xlu0 %672
        %674 = vrot.lane.b32.xlu0 %v566, 32
        %v675 = vpop.permute.xlu0 %674
        %676 = vrot.lane.b32.xlu0 %v571, 32
        %v677 = vpop.permute.xlu0 %676
        %678 = vrot.lane.b32.xlu0 %v574, 32
        %v679 = vpop.permute.xlu0 %678
        %680 = vrot.lane.b32.xlu0 %v579, 32
        %v681 = vpop.permute.xlu0 %680
        %682 = vrot.lane.b32.xlu0 %v582, 32
        %v683 = vpop.permute.xlu0 %682
        %s692 = scalar_lea.vmem [#allocation2], 496
        %693 = vst.msk [vmem:[%s692 + $0x1] sm:$0xff] %vm377, %v669
        %694 = vst.msk [vmem:[%s692 + $0x11] sm:$0xff] %vm377, %v671
        %695 = vst.msk [vmem:[%s692 + $0x21] sm:$0xff] %vm377, %v673
        %696 = vst.msk [vmem:[%s692 + $0x31] sm:$0xff] %vm377, %v675
        %697 = vst.msk [vmem:[%s692 + $0x41] sm:$0xff] %vm377, %v677
        %698 = vst.msk [vmem:[%s692 + $0x51] sm:$0xff] %vm377, %v679
        %699 = vst.msk [vmem:[%s692 + $0x61] sm:$0xff] %vm377, %v681
        %700 = vst.msk [vmem:[%s692 + $0x71] sm:$0xff] %vm377, %v683
        %v701 = vld [vmem:[#allocation2] sm:$0xff]
        %v702 = vld [vmem:[#allocation2 + $0x8] sm:$0x3]
        %v703 = vld [vmem:[#allocation2 + $0x10] sm:$0xff]
        %v704 = vld [vmem:[#allocation2 + $0x18] sm:$0x3]
        %v705 = vld [vmem:[#allocation2 + $0x20] sm:$0xff]
        %v706 = vld [vmem:[#allocation2 + $0x28] sm:$0x3]
        %v707 = vld [vmem:[#allocation2 + $0x30] sm:$0xff]
        %v708 = vld [vmem:[#allocation2 + $0x38] sm:$0x3]
        %v709 = vld [vmem:[#allocation2 + $0x40] sm:$0xff]
        %v710 = vld [vmem:[#allocation2 + $0x48] sm:$0x3]
        %v711 = vld [vmem:[#allocation2 + $0x50] sm:$0xff]
        %v712 = vld [vmem:[#allocation2 + $0x58] sm:$0x3]
        %v713 = vld [vmem:[#allocation2 + $0x60] sm:$0xff]
        %v714 = vld [vmem:[#allocation2 + $0x68] sm:$0x3]
        %v715 = vld [vmem:[#allocation2 + $0x70] sm:$0xff]
        %v716 = vld [vmem:[#allocation2 + $0x78] sm:$0x3]
        %v717 = vld [vmem:[#allocation2 + $0xa0] sm:$0xff]
        %v718 = vld [vmem:[#allocation2 + $0xa8] sm:$0x3]
        %v719 = vld [vmem:[#allocation2 + $0xb0] sm:$0xff]
        %v720 = vld [vmem:[#allocation2 + $0xb8] sm:$0x3]
        %v721 = vld [vmem:[#allocation2 + $0xc0] sm:$0xff]
        %v722 = vld [vmem:[#allocation2 + $0xc8] sm:$0x3]
        %v723 = vld [vmem:[#allocation2 + $0xd0] sm:$0xff]
        %v724 = vld [vmem:[#allocation2 + $0xd8] sm:$0x3]
        %v725 = vld [vmem:[#allocation2 + $0xe0] sm:$0xff]
        %v726 = vld [vmem:[#allocation2 + $0xe8] sm:$0x3]
        %v727 = vld [vmem:[#allocation2 + $0xf0] sm:$0xff]
        %v728 = vld [vmem:[#allocation2 + $0xf8] sm:$0x3]
        %v729 = vld [vmem:[#allocation2 + $0x100] sm:$0xff]
        %v730 = vld [vmem:[#allocation2 + $0x108] sm:$0x3]
        %v731 = vld [vmem:[#allocation2 + $0x110] sm:$0xff]
        %v732 = vld [vmem:[#allocation2 + $0x118] sm:$0x3]
        %v733 = vld [vmem:[#allocation2 + $0x140] sm:$0xff]
        %v734 = vld [vmem:[#allocation2 + $0x148] sm:$0x3]
        %v735 = vld [vmem:[#allocation2 + $0x150] sm:$0xff]
        %v736 = vld [vmem:[#allocation2 + $0x158] sm:$0x3]
        %v737 = vld [vmem:[#allocation2 + $0x160] sm:$0xff]
        %v738 = vld [vmem:[#allocation2 + $0x168] sm:$0x3]
        %v739 = vld [vmem:[#allocation2 + $0x170] sm:$0xff]
        %v740 = vld [vmem:[#allocation2 + $0x178] sm:$0x3]
        %v741 = vld [vmem:[#allocation2 + $0x180] sm:$0xff]
        %v742 = vld [vmem:[#allocation2 + $0x188] sm:$0x3]
        %v743 = vld [vmem:[#allocation2 + $0x190] sm:$0xff]
        %v744 = vld [vmem:[#allocation2 + $0x198] sm:$0x3]
        %v745 = vld [vmem:[#allocation2 + $0x1a0] sm:$0xff]
        %v746 = vld [vmem:[#allocation2 + $0x1a8] sm:$0x3]
        %v747 = vld [vmem:[#allocation2 + $0x1b0] sm:$0xff]
        %v748 = vld [vmem:[#allocation2 + $0x1b8] sm:$0x3]
        %v749 = vld [vmem:[#allocation2 + $0x1e0] sm:$0xff]
        %v750 = vld [vmem:[#allocation2 + $0x1e8] sm:$0x3]
        %v751 = vld [vmem:[#allocation2 + $0x1f0] sm:$0xff]
        %v752 = vld [vmem:[#allocation2 + $0x1f8] sm:$0x3]
        %v753 = vld [vmem:[#allocation2 + $0x200] sm:$0xff]
        %v754 = vld [vmem:[#allocation2 + $0x208] sm:$0x3]
        %v755 = vld [vmem:[#allocation2 + $0x210] sm:$0xff]
        %v756 = vld [vmem:[#allocation2 + $0x218] sm:$0x3]
        %v757 = vld [vmem:[#allocation2 + $0x220] sm:$0xff]
        %v758 = vld [vmem:[#allocation2 + $0x228] sm:$0x3]
        %v759 = vld [vmem:[#allocation2 + $0x230] sm:$0xff]
        %v760 = vld [vmem:[#allocation2 + $0x238] sm:$0x3]
        %v761 = vld [vmem:[#allocation2 + $0x240] sm:$0xff]
        %v762 = vld [vmem:[#allocation2 + $0x248] sm:$0x3]
        %v763 = vld [vmem:[#allocation2 + $0x250] sm:$0xff]
        %v764 = vld [vmem:[#allocation2 + $0x258] sm:$0x3]
        %v765 = vpack.c.bf16 %v702, %v701
        %v766 = vpack.c.bf16 %v704, %v703
        %v767 = vpack.c.bf16 %v706, %v705
        %v768 = vpack.c.bf16 %v708, %v707
        %v769 = vpack.c.bf16 %v710, %v709
        %v770 = vpack.c.bf16 %v712, %v711
        %v771 = vpack.c.bf16 %v714, %v713
        %v772 = vpack.c.bf16 %v716, %v715
        %v773 = vpack.c.bf16 %v718, %v717
        %v774 = vpack.c.bf16 %v720, %v719
        %v775 = vpack.c.bf16 %v722, %v721
        %v776 = vpack.c.bf16 %v724, %v723
        %v777 = vpack.c.bf16 %v726, %v725
        %v778 = vpack.c.bf16 %v728, %v727
        %v779 = vpack.c.bf16 %v730, %v729
        %v780 = vpack.c.bf16 %v732, %v731
        %v781 = vpack.c.bf16 %v734, %v733
        %v782 = vpack.c.bf16 %v736, %v735
        %v783 = vpack.c.bf16 %v738, %v737
        %v784 = vpack.c.bf16 %v740, %v739
        %v785 = vpack.c.bf16 %v742, %v741
        %v786 = vpack.c.bf16 %v744, %v743
        %v787 = vpack.c.bf16 %v746, %v745
        %v788 = vpack.c.bf16 %v748, %v747
        %v789 = vpack.c.bf16 %v750, %v749
        %v790 = vpack.c.bf16 %v752, %v751
        %v791 = vpack.c.bf16 %v754, %v753
        %v792 = vpack.c.bf16 %v756, %v755
        %v793 = vpack.c.bf16 %v758, %v757
        %v794 = vpack.c.bf16 %v760, %v759
        %v795 = vpack.c.bf16 %v762, %v761
        %v796 = vpack.c.bf16 %v764, %v763
        %v829 = vunpack.c.l.b16 %v765
        %v830 = vunpack.c.h.b16 %v765
        %v831 = vunpack.c.l.b16 %v766
        %v832 = vunpack.c.h.b16 %v766
        %v833 = vunpack.c.l.b16 %v767
        %v834 = vunpack.c.h.b16 %v767
        %v835 = vunpack.c.l.b16 %v768
        %v836 = vunpack.c.h.b16 %v768
        %v837 = vunpack.c.l.b16 %v769
        %v838 = vunpack.c.h.b16 %v769
        %v839 = vunpack.c.l.b16 %v770
        %v840 = vunpack.c.h.b16 %v770
        %v841 = vunpack.c.l.b16 %v771
        %v842 = vunpack.c.h.b16 %v771
        %v843 = vunpack.c.l.b16 %v772
        %v844 = vunpack.c.h.b16 %v772
        %v845 = vunpack.c.l.b16 %v773
        %v846 = vunpack.c.h.b16 %v773
        %v847 = vunpack.c.l.b16 %v774
        %v848 = vunpack.c.h.b16 %v774
        %v849 = vunpack.c.l.b16 %v775
        %v850 = vunpack.c.h.b16 %v775
        %v851 = vunpack.c.l.b16 %v776
        %v852 = vunpack.c.h.b16 %v776
        %v853 = vunpack.c.l.b16 %v777
        %v854 = vunpack.c.h.b16 %v777
        %v855 = vunpack.c.l.b16 %v778
        %v856 = vunpack.c.h.b16 %v778
        %v857 = vunpack.c.l.b16 %v779
        %v858 = vunpack.c.h.b16 %v779
        %v859 = vunpack.c.l.b16 %v780
        %v860 = vunpack.c.h.b16 %v780
        %v861 = vunpack.c.l.b16 %v781
        %v862 = vunpack.c.h.b16 %v781
        %v863 = vunpack.c.l.b16 %v782
        %v864 = vunpack.c.h.b16 %v782
        %v865 = vunpack.c.l.b16 %v783
        %v866 = vunpack.c.h.b16 %v783
        %v867 = vunpack.c.l.b16 %v784
        %v868 = vunpack.c.h.b16 %v784
        %v869 = vunpack.c.l.b16 %v785
        %v870 = vunpack.c.h.b16 %v785
        %v871 = vunpack.c.l.b16 %v786
        %v872 = vunpack.c.h.b16 %v786
        %v873 = vunpack.c.l.b16 %v787
        %v874 = vunpack.c.h.b16 %v787
        %v875 = vunpack.c.l.b16 %v788
        %v876 = vunpack.c.h.b16 %v788
        %v877 = vunpack.c.l.b16 %v789
        %v878 = vunpack.c.h.b16 %v789
        %v879 = vunpack.c.l.b16 %v790
        %v880 = vunpack.c.h.b16 %v790
        %v881 = vunpack.c.l.b16 %v791
        %v882 = vunpack.c.h.b16 %v791
        %v883 = vunpack.c.l.b16 %v792
        %v884 = vunpack.c.h.b16 %v792
        %v885 = vunpack.c.l.b16 %v793
        %v886 = vunpack.c.h.b16 %v793
        %v887 = vunpack.c.l.b16 %v794
        %v888 = vunpack.c.h.b16 %v794
        %v889 = vunpack.c.l.b16 %v795
        %v890 = vunpack.c.h.b16 %v795
        %v891 = vunpack.c.l.b16 %v796
        %v892 = vunpack.c.h.b16 %v796
        %v893 = vpack.c.b16 %v829, %v829
        %v894 = vpack.c.b16 %v830, %v830
        %v895 = vpack.c.b16 %v831, %v831
        %v896 = vpack.c.b16 %v832, %v832
        %v897 = vpack.c.b16 %v833, %v833
        %v898 = vpack.c.b16 %v834, %v834
        %v899 = vpack.c.b16 %v835, %v835
        %v900 = vpack.c.b16 %v836, %v836
        %v901 = vpack.c.b16 %v837, %v837
        %v902 = vpack.c.b16 %v838, %v838
        %v903 = vpack.c.b16 %v839, %v839
        %v904 = vpack.c.b16 %v840, %v840
        %v905 = vpack.c.b16 %v841, %v841
        %v906 = vpack.c.b16 %v842, %v842
        %v907 = vpack.c.b16 %v843, %v843
        %v908 = vpack.c.b16 %v844, %v844
        %v909 = vpack.c.b16 %v845, %v845
        %v910 = vpack.c.b16 %v846, %v846
        %v911 = vpack.c.b16 %v847, %v847
        %v912 = vpack.c.b16 %v848, %v848
        %v913 = vpack.c.b16 %v849, %v849
        %v914 = vpack.c.b16 %v850, %v850
        %v915 = vpack.c.b16 %v851, %v851
        %v916 = vpack.c.b16 %v852, %v852
        %v917 = vpack.c.b16 %v853, %v853
        %v918 = vpack.c.b16 %v854, %v854
        %v919 = vpack.c.b16 %v855, %v855
        %v920 = vpack.c.b16 %v856, %v856
        %v921 = vpack.c.b16 %v857, %v857
        %v922 = vpack.c.b16 %v858, %v858
        %v923 = vpack.c.b16 %v859, %v859
        %v924 = vpack.c.b16 %v860, %v860
        %v925 = vpack.c.b16 %v861, %v861
        %v926 = vpack.c.b16 %v862, %v862
        %v927 = vpack.c.b16 %v863, %v863
        %v928 = vpack.c.b16 %v864, %v864
        %v929 = vpack.c.b16 %v865, %v865
        %v930 = vpack.c.b16 %v866, %v866
        %v931 = vpack.c.b16 %v867, %v867
        %v932 = vpack.c.b16 %v868, %v868
        %v933 = vpack.c.b16 %v869, %v869
        %v934 = vpack.c.b16 %v870, %v870
        %v935 = vpack.c.b16 %v871, %v871
        %v936 = vpack.c.b16 %v872, %v872
        %v937 = vpack.c.b16 %v873, %v873
        %v938 = vpack.c.b16 %v874, %v874
        %v939 = vpack.c.b16 %v875, %v875
        %v940 = vpack.c.b16 %v876, %v876
        %v941 = vpack.c.b16 %v877, %v877
        %v942 = vpack.c.b16 %v878, %v878
        %v943 = vpack.c.b16 %v879, %v879
        %v944 = vpack.c.b16 %v880, %v880
        %v945 = vpack.c.b16 %v881, %v881
        %v946 = vpack.c.b16 %v882, %v882
        %v947 = vpack.c.b16 %v883, %v883
        %v948 = vpack.c.b16 %v884, %v884
        %v949 = vpack.c.b16 %v885, %v885
        %v950 = vpack.c.b16 %v886, %v886
        %v951 = vpack.c.b16 %v887, %v887
        %v952 = vpack.c.b16 %v888, %v888
        %v953 = vpack.c.b16 %v889, %v889
        %v954 = vpack.c.b16 %v890, %v890
        %v955 = vpack.c.b16 %v891, %v891
        %v956 = vpack.c.b16 %v892, %v892
        %vm957 = vsmask.f32 3328
        %vm958 = vsmask.f32 7440
        %vm959 = vmor %vm957, %vm958
        %v961 = vshrl.u32 %v893, 16
        %v963 = vrot.slane %v961, 4
        %v964 = vshll.u32 %v893, 16
        %v966 = vrot.slane %v964, 5
        %v967 = vor.u32 %v963, %v966
        %v968 = vrot.slane %v967, 4
        %v970 = vshll.u32 %v894, 16
        %v972 = vrot.slane %v970, 5
        %v973 = vsel %vm959, %v968, %v972
        %v975 = vshrl.u32 %v895, 16
        %v977 = vrot.slane %v975, 4
        %v978 = vshll.u32 %v895, 16
        %v980 = vrot.slane %v978, 5
        %v981 = vor.u32 %v977, %v980
        %v982 = vrot.slane %v981, 4
        %v984 = vshll.u32 %v896, 16
        %v986 = vrot.slane %v984, 5
        %v987 = vsel %vm959, %v982, %v986
        %v989 = vshrl.u32 %v897, 16
        %v991 = vrot.slane %v989, 4
        %v992 = vshll.u32 %v897, 16
        %v994 = vrot.slane %v992, 5
        %v995 = vor.u32 %v991, %v994
        %v996 = vrot.slane %v995, 4
        %v998 = vshll.u32 %v898, 16
        %v1000 = vrot.slane %v998, 5
        %v1001 = vsel %vm959, %v996, %v1000
        %v1003 = vshrl.u32 %v899, 16
        %v1005 = vrot.slane %v1003, 4
        %v1006 = vshll.u32 %v899, 16
        %v1008 = vrot.slane %v1006, 5
        %v1009 = vor.u32 %v1005, %v1008
        %v1010 = vrot.slane %v1009, 4
        %v1012 = vshll.u32 %v900, 16
        %v1014 = vrot.slane %v1012, 5
        %v1015 = vsel %vm959, %v1010, %v1014
        %v1017 = vshrl.u32 %v901, 16
        %v1019 = vrot.slane %v1017, 4
        %v1020 = vshll.u32 %v901, 16
        %v1022 = vrot.slane %v1020, 5
        %v1023 = vor.u32 %v1019, %v1022
        %v1024 = vrot.slane %v1023, 4
        %v1026 = vshll.u32 %v902, 16
        %v1028 = vrot.slane %v1026, 5
        %v1029 = vsel %vm959, %v1024, %v1028
        %v1031 = vshrl.u32 %v903, 16
        %v1033 = vrot.slane %v1031, 4
        %v1034 = vshll.u32 %v903, 16
        %v1036 = vrot.slane %v1034, 5
        %v1037 = vor.u32 %v1033, %v1036
        %v1038 = vrot.slane %v1037, 4
        %v1040 = vshll.u32 %v904, 16
        %v1042 = vrot.slane %v1040, 5
        %v1043 = vsel %vm959, %v1038, %v1042
        %v1045 = vshrl.u32 %v905, 16
        %v1047 = vrot.slane %v1045, 4
        %v1048 = vshll.u32 %v905, 16
        %v1050 = vrot.slane %v1048, 5
        %v1051 = vor.u32 %v1047, %v1050
        %v1052 = vrot.slane %v1051, 4
        %v1054 = vshll.u32 %v906, 16
        %v1056 = vrot.slane %v1054, 5
        %v1057 = vsel %vm959, %v1052, %v1056
        %v1059 = vshrl.u32 %v907, 16
        %v1061 = vrot.slane %v1059, 4
        %v1062 = vshll.u32 %v907, 16
        %v1064 = vrot.slane %v1062, 5
        %v1065 = vor.u32 %v1061, %v1064
        %v1066 = vrot.slane %v1065, 4
        %v1068 = vshll.u32 %v908, 16
        %v1070 = vrot.slane %v1068, 5
        %v1071 = vsel %vm959, %v1066, %v1070
        %v1073 = vshrl.u32 %v909, 16
        %v1075 = vrot.slane %v1073, 4
        %v1076 = vshll.u32 %v909, 16
        %v1078 = vrot.slane %v1076, 5
        %v1079 = vor.u32 %v1075, %v1078
        %v1080 = vrot.slane %v1079, 4
        %v1082 = vshll.u32 %v910, 16
        %v1084 = vrot.slane %v1082, 5
        %v1085 = vsel %vm959, %v1080, %v1084
        %v1087 = vshrl.u32 %v911, 16
        %v1089 = vrot.slane %v1087, 4
        %v1090 = vshll.u32 %v911, 16
        %v1092 = vrot.slane %v1090, 5
        %v1093 = vor.u32 %v1089, %v1092
        %v1094 = vrot.slane %v1093, 4
        %v1096 = vshll.u32 %v912, 16
        %v1098 = vrot.slane %v1096, 5
        %v1099 = vsel %vm959, %v1094, %v1098
        %v1101 = vshrl.u32 %v913, 16
        %v1103 = vrot.slane %v1101, 4
        %v1104 = vshll.u32 %v913, 16
        %v1106 = vrot.slane %v1104, 5
        %v1107 = vor.u32 %v1103, %v1106
        %v1108 = vrot.slane %v1107, 4
        %v1110 = vshll.u32 %v914, 16
        %v1112 = vrot.slane %v1110, 5
        %v1113 = vsel %vm959, %v1108, %v1112
        %v1115 = vshrl.u32 %v915, 16
        %v1117 = vrot.slane %v1115, 4
        %v1118 = vshll.u32 %v915, 16
        %v1120 = vrot.slane %v1118, 5
        %v1121 = vor.u32 %v1117, %v1120
        %v1122 = vrot.slane %v1121, 4
        %v1124 = vshll.u32 %v916, 16
        %v1126 = vrot.slane %v1124, 5
        %v1127 = vsel %vm959, %v1122, %v1126
        %v1129 = vshrl.u32 %v917, 16
        %v1131 = vrot.slane %v1129, 4
        %v1132 = vshll.u32 %v917, 16
        %v1134 = vrot.slane %v1132, 5
        %v1135 = vor.u32 %v1131, %v1134
        %v1136 = vrot.slane %v1135, 4
        %v1138 = vshll.u32 %v918, 16
        %v1140 = vrot.slane %v1138, 5
        %v1141 = vsel %vm959, %v1136, %v1140
        %v1143 = vshrl.u32 %v919, 16
        %v1145 = vrot.slane %v1143, 4
        %v1146 = vshll.u32 %v919, 16
        %v1148 = vrot.slane %v1146, 5
        %v1149 = vor.u32 %v1145, %v1148
        %v1150 = vrot.slane %v1149, 4
        %v1152 = vshll.u32 %v920, 16
        %v1154 = vrot.slane %v1152, 5
        %v1155 = vsel %vm959, %v1150, %v1154
        %v1157 = vshrl.u32 %v921, 16
        %v1159 = vrot.slane %v1157, 4
        %v1160 = vshll.u32 %v921, 16
        %v1162 = vrot.slane %v1160, 5
        %v1163 = vor.u32 %v1159, %v1162
        %v1164 = vrot.slane %v1163, 4
        %v1166 = vshll.u32 %v922, 16
        %v1168 = vrot.slane %v1166, 5
        %v1169 = vsel %vm959, %v1164, %v1168
        %v1171 = vshrl.u32 %v923, 16
        %v1173 = vrot.slane %v1171, 4
        %v1174 = vshll.u32 %v923, 16
        %v1176 = vrot.slane %v1174, 5
        %v1177 = vor.u32 %v1173, %v1176
        %v1178 = vrot.slane %v1177, 4
        %v1180 = vshll.u32 %v924, 16
        %v1182 = vrot.slane %v1180, 5
        %v1183 = vsel %vm959, %v1178, %v1182
        %v1185 = vshrl.u32 %v925, 16
        %v1187 = vrot.slane %v1185, 4
        %v1188 = vshll.u32 %v925, 16
        %v1190 = vrot.slane %v1188, 5
        %v1191 = vor.u32 %v1187, %v1190
        %v1192 = vrot.slane %v1191, 4
        %v1194 = vshll.u32 %v926, 16
        %v1196 = vrot.slane %v1194, 5
        %v1197 = vsel %vm959, %v1192, %v1196
        %v1199 = vshrl.u32 %v927, 16
        %v1201 = vrot.slane %v1199, 4
        %v1202 = vshll.u32 %v927, 16
        %v1204 = vrot.slane %v1202, 5
        %v1205 = vor.u32 %v1201, %v1204
        %v1206 = vrot.slane %v1205, 4
        %v1208 = vshll.u32 %v928, 16
        %v1210 = vrot.slane %v1208, 5
        %v1211 = vsel %vm959, %v1206, %v1210
        %v1213 = vshrl.u32 %v929, 16
        %v1215 = vrot.slane %v1213, 4
        %v1216 = vshll.u32 %v929, 16
        %v1218 = vrot.slane %v1216, 5
        %v1219 = vor.u32 %v1215, %v1218
        %v1220 = vrot.slane %v1219, 4
        %v1222 = vshll.u32 %v930, 16
        %v1224 = vrot.slane %v1222, 5
        %v1225 = vsel %vm959, %v1220, %v1224
        %v1227 = vshrl.u32 %v931, 16
        %v1229 = vrot.slane %v1227, 4
        %v1230 = vshll.u32 %v931, 16
        %v1232 = vrot.slane %v1230, 5
        %v1233 = vor.u32 %v1229, %v1232
        %v1234 = vrot.slane %v1233, 4
        %v1236 = vshll.u32 %v932, 16
        %v1238 = vrot.slane %v1236, 5
        %v1239 = vsel %vm959, %v1234, %v1238
        %v1241 = vshrl.u32 %v933, 16
        %v1243 = vrot.slane %v1241, 4
        %v1244 = vshll.u32 %v933, 16
        %v1246 = vrot.slane %v1244, 5
        %v1247 = vor.u32 %v1243, %v1246
        %v1248 = vrot.slane %v1247, 4
        %v1250 = vshll.u32 %v934, 16
        %v1252 = vrot.slane %v1250, 5
        %v1253 = vsel %vm959, %v1248, %v1252
        %v1255 = vshrl.u32 %v935, 16
        %v1257 = vrot.slane %v1255, 4
        %v1258 = vshll.u32 %v935, 16
        %v1260 = vrot.slane %v1258, 5
        %v1261 = vor.u32 %v1257, %v1260
        %v1262 = vrot.slane %v1261, 4
        %v1264 = vshll.u32 %v936, 16
        %v1266 = vrot.slane %v1264, 5
        %v1267 = vsel %vm959, %v1262, %v1266
        %v1269 = vshrl.u32 %v937, 16
        %v1271 = vrot.slane %v1269, 4
        %v1272 = vshll.u32 %v937, 16
        %v1274 = vrot.slane %v1272, 5
        %v1275 = vor.u32 %v1271, %v1274
        %v1276 = vrot.slane %v1275, 4
        %v1278 = vshll.u32 %v938, 16
        %v1280 = vrot.slane %v1278, 5
        %v1281 = vsel %vm959, %v1276, %v1280
        %v1283 = vshrl.u32 %v939, 16
        %v1285 = vrot.slane %v1283, 4
        %v1286 = vshll.u32 %v939, 16
        %v1288 = vrot.slane %v1286, 5
        %v1289 = vor.u32 %v1285, %v1288
        %v1290 = vrot.slane %v1289, 4
        %v1292 = vshll.u32 %v940, 16
        %v1294 = vrot.slane %v1292, 5
        %v1295 = vsel %vm959, %v1290, %v1294
        %v1297 = vshrl.u32 %v941, 16
        %v1299 = vrot.slane %v1297, 4
        %v1300 = vshll.u32 %v941, 16
        %v1302 = vrot.slane %v1300, 5
        %v1303 = vor.u32 %v1299, %v1302
        %v1304 = vrot.slane %v1303, 4
        %v1306 = vshll.u32 %v942, 16
        %v1308 = vrot.slane %v1306, 5
        %v1309 = vsel %vm959, %v1304, %v1308
        %v1311 = vshrl.u32 %v943, 16
        %v1313 = vrot.slane %v1311, 4
        %v1314 = vshll.u32 %v943, 16
        %v1316 = vrot.slane %v1314, 5
        %v1317 = vor.u32 %v1313, %v1316
        %v1318 = vrot.slane %v1317, 4
        %v1320 = vshll.u32 %v944, 16
        %v1322 = vrot.slane %v1320, 5
        %v1323 = vsel %vm959, %v1318, %v1322
        %v1325 = vshrl.u32 %v945, 16
        %v1327 = vrot.slane %v1325, 4
        %v1328 = vshll.u32 %v945, 16
        %v1330 = vrot.slane %v1328, 5
        %v1331 = vor.u32 %v1327, %v1330
        %v1332 = vrot.slane %v1331, 4
        %v1334 = vshll.u32 %v946, 16
        %v1336 = vrot.slane %v1334, 5
        %v1337 = vsel %vm959, %v1332, %v1336
        %v1339 = vshrl.u32 %v947, 16
        %v1341 = vrot.slane %v1339, 4
        %v1342 = vshll.u32 %v947, 16
        %v1344 = vrot.slane %v1342, 5
        %v1345 = vor.u32 %v1341, %v1344
        %v1346 = vrot.slane %v1345, 4
        %v1348 = vshll.u32 %v948, 16
        %v1350 = vrot.slane %v1348, 5
        %v1351 = vsel %vm959, %v1346, %v1350
        %v1353 = vshrl.u32 %v949, 16
        %v1355 = vrot.slane %v1353, 4
        %v1356 = vshll.u32 %v949, 16
        %v1358 = vrot.slane %v1356, 5
        %v1359 = vor.u32 %v1355, %v1358
        %v1360 = vrot.slane %v1359, 4
        %v1362 = vshll.u32 %v950, 16
        %v1364 = vrot.slane %v1362, 5
        %v1365 = vsel %vm959, %v1360, %v1364
        %v1367 = vshrl.u32 %v951, 16
        %v1369 = vrot.slane %v1367, 4
        %v1370 = vshll.u32 %v951, 16
        %v1372 = vrot.slane %v1370, 5
        %v1373 = vor.u32 %v1369, %v1372
        %v1374 = vrot.slane %v1373, 4
        %v1376 = vshll.u32 %v952, 16
        %v1378 = vrot.slane %v1376, 5
        %v1379 = vsel %vm959, %v1374, %v1378
        %v1381 = vshrl.u32 %v953, 16
        %v1383 = vrot.slane %v1381, 4
        %v1384 = vshll.u32 %v953, 16
        %v1386 = vrot.slane %v1384, 5
        %v1387 = vor.u32 %v1383, %v1386
        %v1388 = vrot.slane %v1387, 4
        %v1390 = vshll.u32 %v954, 16
        %v1392 = vrot.slane %v1390, 5
        %v1393 = vsel %vm959, %v1388, %v1392
        %v1395 = vshrl.u32 %v955, 16
        %v1397 = vrot.slane %v1395, 4
        %v1398 = vshll.u32 %v955, 16
        %v1400 = vrot.slane %v1398, 5
        %v1401 = vor.u32 %v1397, %v1400
        %v1402 = vrot.slane %v1401, 4
        %v1404 = vshll.u32 %v956, 16
        %v1406 = vrot.slane %v1404, 5
        %v1407 = vsel %vm959, %v1402, %v1406
        %vm1408 = vcmask 1042432
        %vm1409 = vcmask 1046532
        %vm1410 = vmor %vm1408, %vm1409
        %v1411 = vrot.slane %v893, 5
        %v1412 = vrot.slane %v1411, 4
        %v1413 = vrot.slane %v894, 5
        %v1414 = vsel %vm1410, %v1412, %v1413
        %v1415 = vrot.slane %v895, 5
        %v1416 = vrot.slane %v1415, 4
        %v1417 = vrot.slane %v896, 5
        %v1418 = vsel %vm1410, %v1416, %v1417
        %v1419 = vrot.slane %v897, 5
        %v1420 = vrot.slane %v1419, 4
        %v1421 = vrot.slane %v898, 5
        %v1422 = vsel %vm1410, %v1420, %v1421
        %v1423 = vrot.slane %v899, 5
        %v1424 = vrot.slane %v1423, 4
        %v1425 = vrot.slane %v900, 5
        %v1426 = vsel %vm1410, %v1424, %v1425
        %v1427 = vrot.slane %v901, 5
        %v1428 = vrot.slane %v1427, 4
        %v1429 = vrot.slane %v902, 5
        %v1430 = vsel %vm1410, %v1428, %v1429
        %v1431 = vrot.slane %v903, 5
        %v1432 = vrot.slane %v1431, 4
        %v1433 = vrot.slane %v904, 5
        %v1434 = vsel %vm1410, %v1432, %v1433
        %v1435 = vrot.slane %v905, 5
        %v1436 = vrot.slane %v1435, 4
        %v1437 = vrot.slane %v906, 5
        %v1438 = vsel %vm1410, %v1436, %v1437
        %v1439 = vrot.slane %v907, 5
        %v1440 = vrot.slane %v1439, 4
        %v1441 = vrot.slane %v908, 5
        %v1442 = vsel %vm1410, %v1440, %v1441
        %v1443 = vrot.slane %v909, 5
        %v1444 = vrot.slane %v1443, 4
        %v1445 = vrot.slane %v910, 5
        %v1446 = vsel %vm1410, %v1444, %v1445
        %v1447 = vrot.slane %v911, 5
        %v1448 = vrot.slane %v1447, 4
        %v1449 = vrot.slane %v912, 5
        %v1450 = vsel %vm1410, %v1448, %v1449
        %v1451 = vrot.slane %v913, 5
        %v1452 = vrot.slane %v1451, 4
        %v1453 = vrot.slane %v914, 5
        %v1454 = vsel %vm1410, %v1452, %v1453
        %v1455 = vrot.slane %v915, 5
        %v1456 = vrot.slane %v1455, 4
        %v1457 = vrot.slane %v916, 5
        %v1458 = vsel %vm1410, %v1456, %v1457
        %v1459 = vrot.slane %v917, 5
        %v1460 = vrot.slane %v1459, 4
        %v1461 = vrot.slane %v918, 5
        %v1462 = vsel %vm1410, %v1460, %v1461
        %v1463 = vrot.slane %v919, 5
        %v1464 = vrot.slane %v1463, 4
        %v1465 = vrot.slane %v920, 5
        %v1466 = vsel %vm1410, %v1464, %v1465
        %v1467 = vrot.slane %v921, 5
        %v1468 = vrot.slane %v1467, 4
        %v1469 = vrot.slane %v922, 5
        %v1470 = vsel %vm1410, %v1468, %v1469
        %v1471 = vrot.slane %v923, 5
        %v1472 = vrot.slane %v1471, 4
        %v1473 = vrot.slane %v924, 5
        %v1474 = vsel %vm1410, %v1472, %v1473
        %v1475 = vrot.slane %v925, 5
        %v1476 = vrot.slane %v1475, 4
        %v1477 = vrot.slane %v926, 5
        %v1478 = vsel %vm1410, %v1476, %v1477
        %v1479 = vrot.slane %v927, 5
        %v1480 = vrot.slane %v1479, 4
        %v1481 = vrot.slane %v928, 5
        %v1482 = vsel %vm1410, %v1480, %v1481
        %v1483 = vrot.slane %v929, 5
        %v1484 = vrot.slane %v1483, 4
        %v1485 = vrot.slane %v930, 5
        %v1486 = vsel %vm1410, %v1484, %v1485
        %v1487 = vrot.slane %v931, 5
        %v1488 = vrot.slane %v1487, 4
        %v1489 = vrot.slane %v932, 5
        %v1490 = vsel %vm1410, %v1488, %v1489
        %v1491 = vrot.slane %v933, 5
        %v1492 = vrot.slane %v1491, 4
        %v1493 = vrot.slane %v934, 5
        %v1494 = vsel %vm1410, %v1492, %v1493
        %v1495 = vrot.slane %v935, 5
        %v1496 = vrot.slane %v1495, 4
        %v1497 = vrot.slane %v936, 5
        %v1498 = vsel %vm1410, %v1496, %v1497
        %v1499 = vrot.slane %v937, 5
        %v1500 = vrot.slane %v1499, 4
        %v1501 = vrot.slane %v938, 5
        %v1502 = vsel %vm1410, %v1500, %v1501
        %v1503 = vrot.slane %v939, 5
        %v1504 = vrot.slane %v1503, 4
        %v1505 = vrot.slane %v940, 5
        %v1506 = vsel %vm1410, %v1504, %v1505
        %v1507 = vrot.slane %v941, 5
        %v1508 = vrot.slane %v1507, 4
        %v1509 = vrot.slane %v942, 5
        %v1510 = vsel %vm1410, %v1508, %v1509
        %v1511 = vrot.slane %v943, 5
        %v1512 = vrot.slane %v1511, 4
        %v1513 = vrot.slane %v944, 5
        %v1514 = vsel %vm1410, %v1512, %v1513
        %v1515 = vrot.slane %v945, 5
        %v1516 = vrot.slane %v1515, 4
        %v1517 = vrot.slane %v946, 5
        %v1518 = vsel %vm1410, %v1516, %v1517
        %v1519 = vrot.slane %v947, 5
        %v1520 = vrot.slane %v1519, 4
        %v1521 = vrot.slane %v948, 5
        %v1522 = vsel %vm1410, %v1520, %v1521
        %v1523 = vrot.slane %v949, 5
        %v1524 = vrot.slane %v1523, 4
        %v1525 = vrot.slane %v950, 5
        %v1526 = vsel %vm1410, %v1524, %v1525
        %v1527 = vrot.slane %v951, 5
        %v1528 = vrot.slane %v1527, 4
        %v1529 = vrot.slane %v952, 5
        %v1530 = vsel %vm1410, %v1528, %v1529
        %v1531 = vrot.slane %v953, 5
        %v1532 = vrot.slane %v1531, 4
        %v1533 = vrot.slane %v954, 5
        %v1534 = vsel %vm1410, %v1532, %v1533
        %v1535 = vrot.slane %v955, 5
        %v1536 = vrot.slane %v1535, 4
        %v1537 = vrot.slane %v956, 5
        %v1538 = vsel %vm1410, %v1536, %v1537
        %v1539 = vld [vmem:[%s585] sm:$0xff]
        %v1540 = vld [vmem:[%s585 + $0x8] sm:$0x3]
        %v1541 = vld [vmem:[%s585 + $0x10] sm:$0xff]
        %v1542 = vld [vmem:[%s585 + $0x18] sm:$0x3]
        %v1543 = vld [vmem:[%s585 + $0x20] sm:$0xff]
        %v1544 = vld [vmem:[%s585 + $0x28] sm:$0x3]
        %v1545 = vld [vmem:[%s585 + $0x30] sm:$0xff]
        %v1546 = vld [vmem:[%s585 + $0x38] sm:$0x3]
        %v1547 = vld [vmem:[%s585 + $0x40] sm:$0xff]
        %v1548 = vld [vmem:[%s585 + $0x48] sm:$0x3]
        %v1549 = vld [vmem:[%s585 + $0x50] sm:$0xff]
        %v1550 = vld [vmem:[%s585 + $0x58] sm:$0x3]
        %v1551 = vld [vmem:[%s585 + $0x60] sm:$0xff]
        %v1552 = vld [vmem:[%s585 + $0x68] sm:$0x3]
        %v1553 = vld [vmem:[%s585 + $0x70] sm:$0xff]
        %v1554 = vld [vmem:[%s585 + $0x78] sm:$0x3]
        %v1555 = vld [vmem:[%s585 + $0xa0] sm:$0xff]
        %v1556 = vld [vmem:[%s585 + $0xa8] sm:$0x3]
        %v1557 = vld [vmem:[%s585 + $0xb0] sm:$0xff]
        %v1558 = vld [vmem:[%s585 + $0xb8] sm:$0x3]
        %v1559 = vld [vmem:[%s585 + $0xc0] sm:$0xff]
        %v1560 = vld [vmem:[%s585 + $0xc8] sm:$0x3]
        %v1561 = vld [vmem:[%s585 + $0xd0] sm:$0xff]
        %v1562 = vld [vmem:[%s585 + $0xd8] sm:$0x3]
        %v1563 = vld [vmem:[%s585 + $0xe0] sm:$0xff]
        %v1564 = vld [vmem:[%s585 + $0xe8] sm:$0x3]
        %v1565 = vld [vmem:[%s585 + $0xf0] sm:$0xff]
        %v1566 = vld [vmem:[%s585 + $0xf8] sm:$0x3]
        %v1567 = vld [vmem:[%s585 + $0x100] sm:$0xff]
        %v1568 = vld [vmem:[%s585 + $0x108] sm:$0x3]
        %v1569 = vld [vmem:[%s585 + $0x110] sm:$0xff]
        %v1570 = vld [vmem:[%s585 + $0x118] sm:$0x3]
        %v1571 = vld [vmem:[%s585 + $0x140] sm:$0xff]
        %v1572 = vld [vmem:[%s585 + $0x148] sm:$0x3]
        %v1573 = vld [vmem:[%s585 + $0x150] sm:$0xff]
        %v1574 = vld [vmem:[%s585 + $0x158] sm:$0x3]
        %v1575 = vld [vmem:[%s585 + $0x160] sm:$0xff]
        %v1576 = vld [vmem:[%s585 + $0x168] sm:$0x3]
        %v1577 = vld [vmem:[%s585 + $0x170] sm:$0xff]
        %v1578 = vld [vmem:[%s585 + $0x178] sm:$0x3]
        %v1579 = vld [vmem:[%s585 + $0x180] sm:$0xff]
        %v1580 = vld [vmem:[%s585 + $0x188] sm:$0x3]
        %v1581 = vld [vmem:[%s585 + $0x190] sm:$0xff]
        %v1582 = vld [vmem:[%s585 + $0x198] sm:$0x3]
        %v1583 = vld [vmem:[%s585 + $0x1a0] sm:$0xff]
        %v1584 = vld [vmem:[%s585 + $0x1a8] sm:$0x3]
        %v1585 = vld [vmem:[%s585 + $0x1b0] sm:$0xff]
        %v1586 = vld [vmem:[%s585 + $0x1b8] sm:$0x3]
        %v1587 = vld [vmem:[%s585 + $0x1e0] sm:$0xff]
        %v1588 = vld [vmem:[%s585 + $0x1e8] sm:$0x3]
        %v1589 = vld [vmem:[%s585 + $0x1f0] sm:$0xff]
        %v1590 = vld [vmem:[%s585 + $0x1f8] sm:$0x3]
        %v1591 = vld [vmem:[%s585 + $0x200] sm:$0xff]
        %v1592 = vld [vmem:[%s585 + $0x208] sm:$0x3]
        %v1593 = vld [vmem:[%s585 + $0x210] sm:$0xff]
        %v1594 = vld [vmem:[%s585 + $0x218] sm:$0x3]
        %v1595 = vld [vmem:[%s585 + $0x220] sm:$0xff]
        %v1596 = vld [vmem:[%s585 + $0x228] sm:$0x3]
        %v1597 = vld [vmem:[%s585 + $0x230] sm:$0xff]
        %v1598 = vld [vmem:[%s585 + $0x238] sm:$0x3]
        %v1599 = vld [vmem:[%s585 + $0x240] sm:$0xff]
        %v1600 = vld [vmem:[%s585 + $0x248] sm:$0x3]
        %v1601 = vld [vmem:[%s585 + $0x250] sm:$0xff]
        %v1602 = vld [vmem:[%s585 + $0x258] sm:$0x3]
        %v1603 = vpack.c.bf16 %v1540, %v1539
        %v1604 = vpack.c.bf16 %v1542, %v1541
        %v1605 = vpack.c.bf16 %v1544, %v1543
        %v1606 = vpack.c.bf16 %v1546, %v1545
        %v1607 = vpack.c.bf16 %v1548, %v1547
        %v1608 = vpack.c.bf16 %v1550, %v1549
        %v1609 = vpack.c.bf16 %v1552, %v1551
        %v1610 = vpack.c.bf16 %v1554, %v1553
        %v1611 = vpack.c.bf16 %v1556, %v1555
        %v1612 = vpack.c.bf16 %v1558, %v1557
        %v1613 = vpack.c.bf16 %v1560, %v1559
        %v1614 = vpack.c.bf16 %v1562, %v1561
        %v1615 = vpack.c.bf16 %v1564, %v1563
        %v1616 = vpack.c.bf16 %v1566, %v1565
        %v1617 = vpack.c.bf16 %v1568, %v1567
        %v1618 = vpack.c.bf16 %v1570, %v1569
        %v1619 = vpack.c.bf16 %v1572, %v1571
        %v1620 = vpack.c.bf16 %v1574, %v1573
        %v1621 = vpack.c.bf16 %v1576, %v1575
        %v1622 = vpack.c.bf16 %v1578, %v1577
        %v1623 = vpack.c.bf16 %v1580, %v1579
        %v1624 = vpack.c.bf16 %v1582, %v1581
        %v1625 = vpack.c.bf16 %v1584, %v1583
        %v1626 = vpack.c.bf16 %v1586, %v1585
        %v1627 = vpack.c.bf16 %v1588, %v1587
        %v1628 = vpack.c.bf16 %v1590, %v1589
        %v1629 = vpack.c.bf16 %v1592, %v1591
        %v1630 = vpack.c.bf16 %v1594, %v1593
        %v1631 = vpack.c.bf16 %v1596, %v1595
        %v1632 = vpack.c.bf16 %v1598, %v1597
        %v1633 = vpack.c.bf16 %v1600, %v1599
        %v1634 = vpack.c.bf16 %v1602, %v1601
        %v1667 = vunpack.c.l.b16 %v1603
        %v1668 = vunpack.c.h.b16 %v1603
        %v1669 = vunpack.c.l.b16 %v1604
        %v1670 = vunpack.c.h.b16 %v1604
        %v1671 = vunpack.c.l.b16 %v1605
        %v1672 = vunpack.c.h.b16 %v1605
        %v1673 = vunpack.c.l.b16 %v1606
        %v1674 = vunpack.c.h.b16 %v1606
        %v1675 = vunpack.c.l.b16 %v1607
        %v1676 = vunpack.c.h.b16 %v1607
        %v1677 = vunpack.c.l.b16 %v1608
        %v1678 = vunpack.c.h.b16 %v1608
        %v1679 = vunpack.c.l.b16 %v1609
        %v1680 = vunpack.c.h.b16 %v1609
        %v1681 = vunpack.c.l.b16 %v1610
        %v1682 = vunpack.c.h.b16 %v1610
        %v1683 = vunpack.c.l.b16 %v1611
        %v1684 = vunpack.c.h.b16 %v1611
        %v1685 = vunpack.c.l.b16 %v1612
        %v1686 = vunpack.c.h.b16 %v1612
        %v1687 = vunpack.c.l.b16 %v1613
        %v1688 = vunpack.c.h.b16 %v1613
        %v1689 = vunpack.c.l.b16 %v1614
        %v1690 = vunpack.c.h.b16 %v1614
        %v1691 = vunpack.c.l.b16 %v1615
        %v1692 = vunpack.c.h.b16 %v1615
        %v1693 = vunpack.c.l.b16 %v1616
        %v1694 = vunpack.c.h.b16 %v1616
        %v1695 = vunpack.c.l.b16 %v1617
        %v1696 = vunpack.c.h.b16 %v1617
        %v1697 = vunpack.c.l.b16 %v1618
        %v1698 = vunpack.c.h.b16 %v1618
        %v1699 = vunpack.c.l.b16 %v1619
        %v1700 = vunpack.c.h.b16 %v1619
        %v1701 = vunpack.c.l.b16 %v1620
        %v1702 = vunpack.c.h.b16 %v1620
        %v1703 = vunpack.c.l.b16 %v1621
        %v1704 = vunpack.c.h.b16 %v1621
        %v1705 = vunpack.c.l.b16 %v1622
        %v1706 = vunpack.c.h.b16 %v1622
        %v1707 = vunpack.c.l.b16 %v1623
        %v1708 = vunpack.c.h.b16 %v1623
        %v1709 = vunpack.c.l.b16 %v1624
        %v1710 = vunpack.c.h.b16 %v1624
        %v1711 = vunpack.c.l.b16 %v1625
        %v1712 = vunpack.c.h.b16 %v1625
        %v1713 = vunpack.c.l.b16 %v1626
        %v1714 = vunpack.c.h.b16 %v1626
        %v1715 = vunpack.c.l.b16 %v1627
        %v1716 = vunpack.c.h.b16 %v1627
        %v1717 = vunpack.c.l.b16 %v1628
        %v1718 = vunpack.c.h.b16 %v1628
        %v1719 = vunpack.c.l.b16 %v1629
        %v1720 = vunpack.c.h.b16 %v1629
        %v1721 = vunpack.c.l.b16 %v1630
        %v1722 = vunpack.c.h.b16 %v1630
        %v1723 = vunpack.c.l.b16 %v1631
        %v1724 = vunpack.c.h.b16 %v1631
        %v1725 = vunpack.c.l.b16 %v1632
        %v1726 = vunpack.c.h.b16 %v1632
        %v1727 = vunpack.c.l.b16 %v1633
        %v1728 = vunpack.c.h.b16 %v1633
        %v1729 = vunpack.c.l.b16 %v1634
        %v1730 = vunpack.c.h.b16 %v1634
        %v1731 = vpack.c.b16 %v1667, %v1667
        %v1732 = vpack.c.b16 %v1668, %v1668
        %v1733 = vpack.c.b16 %v1669, %v1669
        %v1734 = vpack.c.b16 %v1670, %v1670
        %v1735 = vpack.c.b16 %v1671, %v1671
        %v1736 = vpack.c.b16 %v1672, %v1672
        %v1737 = vpack.c.b16 %v1673, %v1673
        %v1738 = vpack.c.b16 %v1674, %v1674
        %v1739 = vpack.c.b16 %v1675, %v1675
        %v1740 = vpack.c.b16 %v1676, %v1676
        %v1741 = vpack.c.b16 %v1677, %v1677
        %v1742 = vpack.c.b16 %v1678, %v1678
        %v1743 = vpack.c.b16 %v1679, %v1679
        %v1744 = vpack.c.b16 %v1680, %v1680
        %v1745 = vpack.c.b16 %v1681, %v1681
        %v1746 = vpack.c.b16 %v1682, %v1682
        %v1747 = vpack.c.b16 %v1683, %v1683
        %v1748 = vpack.c.b16 %v1684, %v1684
        %v1749 = vpack.c.b16 %v1685, %v1685
        %v1750 = vpack.c.b16 %v1686, %v1686
        %v1751 = vpack.c.b16 %v1687, %v1687
        %v1752 = vpack.c.b16 %v1688, %v1688
        %v1753 = vpack.c.b16 %v1689, %v1689
        %v1754 = vpack.c.b16 %v1690, %v1690
        %v1755 = vpack.c.b16 %v1691, %v1691
        %v1756 = vpack.c.b16 %v1692, %v1692
        %v1757 = vpack.c.b16 %v1693, %v1693
        %v1758 = vpack.c.b16 %v1694, %v1694
        %v1759 = vpack.c.b16 %v1695, %v1695
        %v1760 = vpack.c.b16 %v1696, %v1696
        %v1761 = vpack.c.b16 %v1697, %v1697
        %v1762 = vpack.c.b16 %v1698, %v1698
        %v1763 = vpack.c.b16 %v1699, %v1699
        %v1764 = vpack.c.b16 %v1700, %v1700
        %v1765 = vpack.c.b16 %v1701, %v1701
        %v1766 = vpack.c.b16 %v1702, %v1702
        %v1767 = vpack.c.b16 %v1703, %v1703
        %v1768 = vpack.c.b16 %v1704, %v1704
        %v1769 = vpack.c.b16 %v1705, %v1705
        %v1770 = vpack.c.b16 %v1706, %v1706
        %v1771 = vpack.c.b16 %v1707, %v1707
        %v1772 = vpack.c.b16 %v1708, %v1708
        %v1773 = vpack.c.b16 %v1709, %v1709
        %v1774 = vpack.c.b16 %v1710, %v1710
        %v1775 = vpack.c.b16 %v1711, %v1711
        %v1776 = vpack.c.b16 %v1712, %v1712
        %v1777 = vpack.c.b16 %v1713, %v1713
        %v1778 = vpack.c.b16 %v1714, %v1714
        %v1779 = vpack.c.b16 %v1715, %v1715
        %v1780 = vpack.c.b16 %v1716, %v1716
        %v1781 = vpack.c.b16 %v1717, %v1717
        %v1782 = vpack.c.b16 %v1718, %v1718
        %v1783 = vpack.c.b16 %v1719, %v1719
        %v1784 = vpack.c.b16 %v1720, %v1720
        %v1785 = vpack.c.b16 %v1721, %v1721
        %v1786 = vpack.c.b16 %v1722, %v1722
        %v1787 = vpack.c.b16 %v1723, %v1723
        %v1788 = vpack.c.b16 %v1724, %v1724
        %v1789 = vpack.c.b16 %v1725, %v1725
        %v1790 = vpack.c.b16 %v1726, %v1726
        %v1791 = vpack.c.b16 %v1727, %v1727
        %v1792 = vpack.c.b16 %v1728, %v1728
        %v1793 = vpack.c.b16 %v1729, %v1729
        %v1794 = vpack.c.b16 %v1730, %v1730
        %v1796 = vshrl.u32 %v1731, 16
        %v1798 = vrot.slane %v1796, 4
        %v1799 = vshll.u32 %v1731, 16
        %v1801 = vrot.slane %v1799, 5
        %v1802 = vor.u32 %v1798, %v1801
        %v1803 = vrot.slane %v1802, 4
        %v1805 = vshll.u32 %v1732, 16
        %v1807 = vrot.slane %v1805, 5
        %v1808 = vsel %vm959, %v1803, %v1807
        %v1810 = vshrl.u32 %v1733, 16
        %v1812 = vrot.slane %v1810, 4
        %v1813 = vshll.u32 %v1733, 16
        %v1815 = vrot.slane %v1813, 5
        %v1816 = vor.u32 %v1812, %v1815
        %v1817 = vrot.slane %v1816, 4
        %v1819 = vshll.u32 %v1734, 16
        %v1821 = vrot.slane %v1819, 5
        %v1822 = vsel %vm959, %v1817, %v1821
        %v1824 = vshrl.u32 %v1735, 16
        %v1826 = vrot.slane %v1824, 4
        %v1827 = vshll.u32 %v1735, 16
        %v1829 = vrot.slane %v1827, 5
        %v1830 = vor.u32 %v1826, %v1829
        %v1831 = vrot.slane %v1830, 4
        %v1833 = vshll.u32 %v1736, 16
        %v1835 = vrot.slane %v1833, 5
        %v1836 = vsel %vm959, %v1831, %v1835
        %v1838 = vshrl.u32 %v1737, 16
        %v1840 = vrot.slane %v1838, 4
        %v1841 = vshll.u32 %v1737, 16
        %v1843 = vrot.slane %v1841, 5
        %v1844 = vor.u32 %v1840, %v1843
        %v1845 = vrot.slane %v1844, 4
        %v1847 = vshll.u32 %v1738, 16
        %v1849 = vrot.slane %v1847, 5
        %v1850 = vsel %vm959, %v1845, %v1849
        %v1852 = vshrl.u32 %v1739, 16
        %v1854 = vrot.slane %v1852, 4
        %v1855 = vshll.u32 %v1739, 16
        %v1857 = vrot.slane %v1855, 5
        %v1858 = vor.u32 %v1854, %v1857
        %v1859 = vrot.slane %v1858, 4
        %v1861 = vshll.u32 %v1740, 16
        %v1863 = vrot.slane %v1861, 5
        %v1864 = vsel %vm959, %v1859, %v1863
        %v1866 = vshrl.u32 %v1741, 16
        %v1868 = vrot.slane %v1866, 4
        %v1869 = vshll.u32 %v1741, 16
        %v1871 = vrot.slane %v1869, 5
        %v1872 = vor.u32 %v1868, %v1871
        %v1873 = vrot.slane %v1872, 4
        %v1875 = vshll.u32 %v1742, 16
        %v1877 = vrot.slane %v1875, 5
        %v1878 = vsel %vm959, %v1873, %v1877
        %v1880 = vshrl.u32 %v1743, 16
        %v1882 = vrot.slane %v1880, 4
        %v1883 = vshll.u32 %v1743, 16
        %v1885 = vrot.slane %v1883, 5
        %v1886 = vor.u32 %v1882, %v1885
        %v1887 = vrot.slane %v1886, 4
        %v1889 = vshll.u32 %v1744, 16
        %v1891 = vrot.slane %v1889, 5
        %v1892 = vsel %vm959, %v1887, %v1891
        %v1894 = vshrl.u32 %v1745, 16
        %v1896 = vrot.slane %v1894, 4
        %v1897 = vshll.u32 %v1745, 16
        %v1899 = vrot.slane %v1897, 5
        %v1900 = vor.u32 %v1896, %v1899
        %v1901 = vrot.slane %v1900, 4
        %v1903 = vshll.u32 %v1746, 16
        %v1905 = vrot.slane %v1903, 5
        %v1906 = vsel %vm959, %v1901, %v1905
        %v1908 = vshrl.u32 %v1747, 16
        %v1910 = vrot.slane %v1908, 4
        %v1911 = vshll.u32 %v1747, 16
        %v1913 = vrot.slane %v1911, 5
        %v1914 = vor.u32 %v1910, %v1913
        %v1915 = vrot.slane %v1914, 4
        %v1917 = vshll.u32 %v1748, 16
        %v1919 = vrot.slane %v1917, 5
        %v1920 = vsel %vm959, %v1915, %v1919
        %v1922 = vshrl.u32 %v1749, 16
        %v1924 = vrot.slane %v1922, 4
        %v1925 = vshll.u32 %v1749, 16
        %v1927 = vrot.slane %v1925, 5
        %v1928 = vor.u32 %v1924, %v1927
        %v1929 = vrot.slane %v1928, 4
        %v1931 = vshll.u32 %v1750, 16
        %v1933 = vrot.slane %v1931, 5
        %v1934 = vsel %vm959, %v1929, %v1933
        %v1936 = vshrl.u32 %v1751, 16
        %v1938 = vrot.slane %v1936, 4
        %v1939 = vshll.u32 %v1751, 16
        %v1941 = vrot.slane %v1939, 5
        %v1942 = vor.u32 %v1938, %v1941
        %v1943 = vrot.slane %v1942, 4
        %v1945 = vshll.u32 %v1752, 16
        %v1947 = vrot.slane %v1945, 5
        %v1948 = vsel %vm959, %v1943, %v1947
        %v1950 = vshrl.u32 %v1753, 16
        %v1952 = vrot.slane %v1950, 4
        %v1953 = vshll.u32 %v1753, 16
        %v1955 = vrot.slane %v1953, 5
        %v1956 = vor.u32 %v1952, %v1955
        %v1957 = vrot.slane %v1956, 4
        %v1959 = vshll.u32 %v1754, 16
        %v1961 = vrot.slane %v1959, 5
        %v1962 = vsel %vm959, %v1957, %v1961
        %v1964 = vshrl.u32 %v1755, 16
        %v1966 = vrot.slane %v1964, 4
        %v1967 = vshll.u32 %v1755, 16
        %v1969 = vrot.slane %v1967, 5
        %v1970 = vor.u32 %v1966, %v1969
        %v1971 = vrot.slane %v1970, 4
        %v1973 = vshll.u32 %v1756, 16
        %v1975 = vrot.slane %v1973, 5
        %v1976 = vsel %vm959, %v1971, %v1975
        %v1978 = vshrl.u32 %v1757, 16
        %v1980 = vrot.slane %v1978, 4
        %v1981 = vshll.u32 %v1757, 16
        %v1983 = vrot.slane %v1981, 5
        %v1984 = vor.u32 %v1980, %v1983
        %v1985 = vrot.slane %v1984, 4
        %v1987 = vshll.u32 %v1758, 16
        %v1989 = vrot.slane %v1987, 5
        %v1990 = vsel %vm959, %v1985, %v1989
        %v1992 = vshrl.u32 %v1759, 16
        %v1994 = vrot.slane %v1992, 4
        %v1995 = vshll.u32 %v1759, 16
        %v1997 = vrot.slane %v1995, 5
        %v1998 = vor.u32 %v1994, %v1997
        %v1999 = vrot.slane %v1998, 4
        %v2001 = vshll.u32 %v1760, 16
        %v2003 = vrot.slane %v2001, 5
        %v2004 = vsel %vm959, %v1999, %v2003
        %v2006 = vshrl.u32 %v1761, 16
        %v2008 = vrot.slane %v2006, 4
        %v2009 = vshll.u32 %v1761, 16
        %v2011 = vrot.slane %v2009, 5
        %v2012 = vor.u32 %v2008, %v2011
        %v2013 = vrot.slane %v2012, 4
        %v2015 = vshll.u32 %v1762, 16
        %v2017 = vrot.slane %v2015, 5
        %v2018 = vsel %vm959, %v2013, %v2017
        %v2020 = vshrl.u32 %v1763, 16
        %v2022 = vrot.slane %v2020, 4
        %v2023 = vshll.u32 %v1763, 16
        %v2025 = vrot.slane %v2023, 5
        %v2026 = vor.u32 %v2022, %v2025
        %v2027 = vrot.slane %v2026, 4
        %v2029 = vshll.u32 %v1764, 16
        %v2031 = vrot.slane %v2029, 5
        %v2032 = vsel %vm959, %v2027, %v2031
        %v2034 = vshrl.u32 %v1765, 16
        %v2036 = vrot.slane %v2034, 4
        %v2037 = vshll.u32 %v1765, 16
        %v2039 = vrot.slane %v2037, 5
        %v2040 = vor.u32 %v2036, %v2039
        %v2041 = vrot.slane %v2040, 4
        %v2043 = vshll.u32 %v1766, 16
        %v2045 = vrot.slane %v2043, 5
        %v2046 = vsel %vm959, %v2041, %v2045
        %v2048 = vshrl.u32 %v1767, 16
        %v2050 = vrot.slane %v2048, 4
        %v2051 = vshll.u32 %v1767, 16
        %v2053 = vrot.slane %v2051, 5
        %v2054 = vor.u32 %v2050, %v2053
        %v2055 = vrot.slane %v2054, 4
        %v2057 = vshll.u32 %v1768, 16
        %v2059 = vrot.slane %v2057, 5
        %v2060 = vsel %vm959, %v2055, %v2059
        %v2062 = vshrl.u32 %v1769, 16
        %v2064 = vrot.slane %v2062, 4
        %v2065 = vshll.u32 %v1769, 16
        %v2067 = vrot.slane %v2065, 5
        %v2068 = vor.u32 %v2064, %v2067
        %v2069 = vrot.slane %v2068, 4
        %v2071 = vshll.u32 %v1770, 16
        %v2073 = vrot.slane %v2071, 5
        %v2074 = vsel %vm959, %v2069, %v2073
        %v2076 = vshrl.u32 %v1771, 16
        %v2078 = vrot.slane %v2076, 4
        %v2079 = vshll.u32 %v1771, 16
        %v2081 = vrot.slane %v2079, 5
        %v2082 = vor.u32 %v2078, %v2081
        %v2083 = vrot.slane %v2082, 4
        %v2085 = vshll.u32 %v1772, 16
        %v2087 = vrot.slane %v2085, 5
        %v2088 = vsel %vm959, %v2083, %v2087
        %v2090 = vshrl.u32 %v1773, 16
        %v2092 = vrot.slane %v2090, 4
        %v2093 = vshll.u32 %v1773, 16
        %v2095 = vrot.slane %v2093, 5
        %v2096 = vor.u32 %v2092, %v2095
        %v2097 = vrot.slane %v2096, 4
        %v2099 = vshll.u32 %v1774, 16
        %v2101 = vrot.slane %v2099, 5
        %v2102 = vsel %vm959, %v2097, %v2101
        %v2104 = vshrl.u32 %v1775, 16
        %v2106 = vrot.slane %v2104, 4
        %v2107 = vshll.u32 %v1775, 16
        %v2109 = vrot.slane %v2107, 5
        %v2110 = vor.u32 %v2106, %v2109
        %v2111 = vrot.slane %v2110, 4
        %v2113 = vshll.u32 %v1776, 16
        %v2115 = vrot.slane %v2113, 5
        %v2116 = vsel %vm959, %v2111, %v2115
        %v2118 = vshrl.u32 %v1777, 16
        %v2120 = vrot.slane %v2118, 4
        %v2121 = vshll.u32 %v1777, 16
        %v2123 = vrot.slane %v2121, 5
        %v2124 = vor.u32 %v2120, %v2123
        %v2125 = vrot.slane %v2124, 4
        %v2127 = vshll.u32 %v1778, 16
        %v2129 = vrot.slane %v2127, 5
        %v2130 = vsel %vm959, %v2125, %v2129
        %v2132 = vshrl.u32 %v1779, 16
        %v2134 = vrot.slane %v2132, 4
        %v2135 = vshll.u32 %v1779, 16
        %v2137 = vrot.slane %v2135, 5
        %v2138 = vor.u32 %v2134, %v2137
        %v2139 = vrot.slane %v2138, 4
        %v2141 = vshll.u32 %v1780, 16
        %v2143 = vrot.slane %v2141, 5
        %v2144 = vsel %vm959, %v2139, %v2143
        %v2146 = vshrl.u32 %v1781, 16
        %v2148 = vrot.slane %v2146, 4
        %v2149 = vshll.u32 %v1781, 16
        %v2151 = vrot.slane %v2149, 5
        %v2152 = vor.u32 %v2148, %v2151
        %v2153 = vrot.slane %v2152, 4
        %v2155 = vshll.u32 %v1782, 16
        %v2157 = vrot.slane %v2155, 5
        %v2158 = vsel %vm959, %v2153, %v2157
        %v2160 = vshrl.u32 %v1783, 16
        %v2162 = vrot.slane %v2160, 4
        %v2163 = vshll.u32 %v1783, 16
        %v2165 = vrot.slane %v2163, 5
        %v2166 = vor.u32 %v2162, %v2165
        %v2167 = vrot.slane %v2166, 4
        %v2169 = vshll.u32 %v1784, 16
        %v2171 = vrot.slane %v2169, 5
        %v2172 = vsel %vm959, %v2167, %v2171
        %v2174 = vshrl.u32 %v1785, 16
        %v2176 = vrot.slane %v2174, 4
        %v2177 = vshll.u32 %v1785, 16
        %v2179 = vrot.slane %v2177, 5
        %v2180 = vor.u32 %v2176, %v2179
        %v2181 = vrot.slane %v2180, 4
        %v2183 = vshll.u32 %v1786, 16
        %v2185 = vrot.slane %v2183, 5
        %v2186 = vsel %vm959, %v2181, %v2185
        %v2188 = vshrl.u32 %v1787, 16
        %v2190 = vrot.slane %v2188, 4
        %v2191 = vshll.u32 %v1787, 16
        %v2193 = vrot.slane %v2191, 5
        %v2194 = vor.u32 %v2190, %v2193
        %v2195 = vrot.slane %v2194, 4
        %v2197 = vshll.u32 %v1788, 16
        %v2199 = vrot.slane %v2197, 5
        %v2200 = vsel %vm959, %v2195, %v2199
        %v2202 = vshrl.u32 %v1789, 16
        %v2204 = vrot.slane %v2202, 4
        %v2205 = vshll.u32 %v1789, 16
        %v2207 = vrot.slane %v2205, 5
        %v2208 = vor.u32 %v2204, %v2207
        %v2209 = vrot.slane %v2208, 4
        %v2211 = vshll.u32 %v1790, 16
        %v2213 = vrot.slane %v2211, 5
        %v2214 = vsel %vm959, %v2209, %v2213
        %v2216 = vshrl.u32 %v1791, 16
        %v2218 = vrot.slane %v2216, 4
        %v2219 = vshll.u32 %v1791, 16
        %v2221 = vrot.slane %v2219, 5
        %v2222 = vor.u32 %v2218, %v2221
        %v2223 = vrot.slane %v2222, 4
        %v2225 = vshll.u32 %v1792, 16
        %v2227 = vrot.slane %v2225, 5
        %v2228 = vsel %vm959, %v2223, %v2227
        %v2230 = vshrl.u32 %v1793, 16
        %v2232 = vrot.slane %v2230, 4
        %v2233 = vshll.u32 %v1793, 16
        %v2235 = vrot.slane %v2233, 5
        %v2236 = vor.u32 %v2232, %v2235
        %v2237 = vrot.slane %v2236, 4
        %v2239 = vshll.u32 %v1794, 16
        %v2241 = vrot.slane %v2239, 5
        %v2242 = vsel %vm959, %v2237, %v2241
        %v2243 = vrot.slane %v1731, 5
        %v2244 = vrot.slane %v2243, 4
        %v2245 = vrot.slane %v1732, 5
        %v2246 = vsel %vm1410, %v2244, %v2245
        %v2247 = vrot.slane %v1733, 5
        %v2248 = vrot.slane %v2247, 4
        %v2249 = vrot.slane %v1734, 5
        %v2250 = vsel %vm1410, %v2248, %v2249
        %v2251 = vrot.slane %v1735, 5
        %v2252 = vrot.slane %v2251, 4
        %v2253 = vrot.slane %v1736, 5
        %v2254 = vsel %vm1410, %v2252, %v2253
        %v2255 = vrot.slane %v1737, 5
        %v2256 = vrot.slane %v2255, 4
        %v2257 = vrot.slane %v1738, 5
        %v2258 = vsel %vm1410, %v2256, %v2257
        %v2259 = vrot.slane %v1739, 5
        %v2260 = vrot.slane %v2259, 4
        %v2261 = vrot.slane %v1740, 5
        %v2262 = vsel %vm1410, %v2260, %v2261
        %v2263 = vrot.slane %v1741, 5
        %v2264 = vrot.slane %v2263, 4
        %v2265 = vrot.slane %v1742, 5
        %v2266 = vsel %vm1410, %v2264, %v2265
        %v2267 = vrot.slane %v1743, 5
        %v2268 = vrot.slane %v2267, 4
        %v2269 = vrot.slane %v1744, 5
        %v2270 = vsel %vm1410, %v2268, %v2269
        %v2271 = vrot.slane %v1745, 5
        %v2272 = vrot.slane %v2271, 4
        %v2273 = vrot.slane %v1746, 5
        %v2274 = vsel %vm1410, %v2272, %v2273
        %v2275 = vrot.slane %v1747, 5
        %v2276 = vrot.slane %v2275, 4
        %v2277 = vrot.slane %v1748, 5
        %v2278 = vsel %vm1410, %v2276, %v2277
        %v2279 = vrot.slane %v1749, 5
        %v2280 = vrot.slane %v2279, 4
        %v2281 = vrot.slane %v1750, 5
        %v2282 = vsel %vm1410, %v2280, %v2281
        %v2283 = vrot.slane %v1751, 5
        %v2284 = vrot.slane %v2283, 4
        %v2285 = vrot.slane %v1752, 5
        %v2286 = vsel %vm1410, %v2284, %v2285
        %v2287 = vrot.slane %v1753, 5
        %v2288 = vrot.slane %v2287, 4
        %v2289 = vrot.slane %v1754, 5
        %v2290 = vsel %vm1410, %v2288, %v2289
        %v2291 = vrot.slane %v1755, 5
        %v2292 = vrot.slane %v2291, 4
        %v2293 = vrot.slane %v1756, 5
        %v2294 = vsel %vm1410, %v2292, %v2293
        %v2295 = vrot.slane %v1757, 5
        %v2296 = vrot.slane %v2295, 4
        %v2297 = vrot.slane %v1758, 5
        %v2298 = vsel %vm1410, %v2296, %v2297
        %v2299 = vrot.slane %v1759, 5
        %v2300 = vrot.slane %v2299, 4
        %v2301 = vrot.slane %v1760, 5
        %v2302 = vsel %vm1410, %v2300, %v2301
        %v2303 = vrot.slane %v1761, 5
        %v2304 = vrot.slane %v2303, 4
        %v2305 = vrot.slane %v1762, 5
        %v2306 = vsel %vm1410, %v2304, %v2305
        %v2307 = vrot.slane %v1763, 5
        %v2308 = vrot.slane %v2307, 4
        %v2309 = vrot.slane %v1764, 5
        %v2310 = vsel %vm1410, %v2308, %v2309
        %v2311 = vrot.slane %v1765, 5
        %v2312 = vrot.slane %v2311, 4
        %v2313 = vrot.slane %v1766, 5
        %v2314 = vsel %vm1410, %v2312, %v2313
        %v2315 = vrot.slane %v1767, 5
        %v2316 = vrot.slane %v2315, 4
        %v2317 = vrot.slane %v1768, 5
        %v2318 = vsel %vm1410, %v2316, %v2317
        %v2319 = vrot.slane %v1769, 5
        %v2320 = vrot.slane %v2319, 4
        %v2321 = vrot.slane %v1770, 5
        %v2322 = vsel %vm1410, %v2320, %v2321
        %v2323 = vrot.slane %v1771, 5
        %v2324 = vrot.slane %v2323, 4
        %v2325 = vrot.slane %v1772, 5
        %v2326 = vsel %vm1410, %v2324, %v2325
        %v2327 = vrot.slane %v1773, 5
        %v2328 = vrot.slane %v2327, 4
        %v2329 = vrot.slane %v1774, 5
        %v2330 = vsel %vm1410, %v2328, %v2329
        %v2331 = vrot.slane %v1775, 5
        %v2332 = vrot.slane %v2331, 4
        %v2333 = vrot.slane %v1776, 5
        %v2334 = vsel %vm1410, %v2332, %v2333
        %v2335 = vrot.slane %v1777, 5
        %v2336 = vrot.slane %v2335, 4
        %v2337 = vrot.slane %v1778, 5
        %v2338 = vsel %vm1410, %v2336, %v2337
        %v2339 = vrot.slane %v1779, 5
        %v2340 = vrot.slane %v2339, 4
        %v2341 = vrot.slane %v1780, 5
        %v2342 = vsel %vm1410, %v2340, %v2341
        %v2343 = vrot.slane %v1781, 5
        %v2344 = vrot.slane %v2343, 4
        %v2345 = vrot.slane %v1782, 5
        %v2346 = vsel %vm1410, %v2344, %v2345
        %v2347 = vrot.slane %v1783, 5
        %v2348 = vrot.slane %v2347, 4
        %v2349 = vrot.slane %v1784, 5
        %v2350 = vsel %vm1410, %v2348, %v2349
        %v2351 = vrot.slane %v1785, 5
        %v2352 = vrot.slane %v2351, 4
        %v2353 = vrot.slane %v1786, 5
        %v2354 = vsel %vm1410, %v2352, %v2353
        %v2355 = vrot.slane %v1787, 5
        %v2356 = vrot.slane %v2355, 4
        %v2357 = vrot.slane %v1788, 5
        %v2358 = vsel %vm1410, %v2356, %v2357
        %v2359 = vrot.slane %v1789, 5
        %v2360 = vrot.slane %v2359, 4
        %v2361 = vrot.slane %v1790, 5
        %v2362 = vsel %vm1410, %v2360, %v2361
        %v2363 = vrot.slane %v1791, 5
        %v2364 = vrot.slane %v2363, 4
        %v2365 = vrot.slane %v1792, 5
        %v2366 = vsel %vm1410, %v2364, %v2365
        %v2367 = vrot.slane %v1793, 5
        %v2368 = vrot.slane %v2367, 4
        %v2369 = vrot.slane %v1794, 5
        %v2370 = vsel %vm1410, %v2368, %v2369
        %s2371 = scalar_lea.vmem [#allocation2], 32
        %v2372 = vld [vmem:[%s2371] sm:$0xff]
        %v2373 = vld [vmem:[%s2371 + $0x8] sm:$0x3]
        %v2374 = vld [vmem:[%s2371 + $0x10] sm:$0xff]
        %v2375 = vld [vmem:[%s2371 + $0x18] sm:$0x3]
        %v2376 = vld [vmem:[%s2371 + $0x20] sm:$0xff]
        %v2377 = vld [vmem:[%s2371 + $0x28] sm:$0x3]
        %v2378 = vld [vmem:[%s2371 + $0x30] sm:$0xff]
        %v2379 = vld [vmem:[%s2371 + $0x38] sm:$0x3]
        %v2380 = vld [vmem:[%s2371 + $0x40] sm:$0xff]
        %v2381 = vld [vmem:[%s2371 + $0x48] sm:$0x3]
        %v2382 = vld [vmem:[%s2371 + $0x50] sm:$0xff]
        %v2383 = vld [vmem:[%s2371 + $0x58] sm:$0x3]
        %v2384 = vld [vmem:[%s2371 + $0x60] sm:$0xff]
        %v2385 = vld [vmem:[%s2371 + $0x68] sm:$0x3]
        %v2386 = vld [vmem:[%s2371 + $0x70] sm:$0xff]
        %v2387 = vld [vmem:[%s2371 + $0x78] sm:$0x3]
        %v2388 = vld [vmem:[%s2371 + $0xa0] sm:$0xff]
        %v2389 = vld [vmem:[%s2371 + $0xa8] sm:$0x3]
        %v2390 = vld [vmem:[%s2371 + $0xb0] sm:$0xff]
        %v2391 = vld [vmem:[%s2371 + $0xb8] sm:$0x3]
        %v2392 = vld [vmem:[%s2371 + $0xc0] sm:$0xff]
        %v2393 = vld [vmem:[%s2371 + $0xc8] sm:$0x3]
        %v2394 = vld [vmem:[%s2371 + $0xd0] sm:$0xff]
        %v2395 = vld [vmem:[%s2371 + $0xd8] sm:$0x3]
        %v2396 = vld [vmem:[%s2371 + $0xe0] sm:$0xff]
        %v2397 = vld [vmem:[%s2371 + $0xe8] sm:$0x3]
        %v2398 = vld [vmem:[%s2371 + $0xf0] sm:$0xff]
        %v2399 = vld [vmem:[%s2371 + $0xf8] sm:$0x3]
        %v2400 = vld [vmem:[%s2371 + $0x100] sm:$0xff]
        %v2401 = vld [vmem:[%s2371 + $0x108] sm:$0x3]
        %v2402 = vld [vmem:[%s2371 + $0x110] sm:$0xff]
        %v2403 = vld [vmem:[%s2371 + $0x118] sm:$0x3]
        %v2404 = vld [vmem:[%s2371 + $0x140] sm:$0xff]
        %v2405 = vld [vmem:[%s2371 + $0x148] sm:$0x3]
        %v2406 = vld [vmem:[%s2371 + $0x150] sm:$0xff]
        %v2407 = vld [vmem:[%s2371 + $0x158] sm:$0x3]
        %v2408 = vld [vmem:[%s2371 + $0x160] sm:$0xff]
        %v2409 = vld [vmem:[%s2371 + $0x168] sm:$0x3]
        %v2410 = vld [vmem:[%s2371 + $0x170] sm:$0xff]
        %v2411 = vld [vmem:[%s2371 + $0x178] sm:$0x3]
        %v2412 = vld [vmem:[%s2371 + $0x180] sm:$0xff]
        %v2413 = vld [vmem:[%s2371 + $0x188] sm:$0x3]
        %v2414 = vld [vmem:[%s2371 + $0x190] sm:$0xff]
        %v2415 = vld [vmem:[%s2371 + $0x198] sm:$0x3]
        %v2416 = vld [vmem:[%s2371 + $0x1a0] sm:$0xff]
        %v2417 = vld [vmem:[%s2371 + $0x1a8] sm:$0x3]
        %v2418 = vld [vmem:[%s2371 + $0x1b0] sm:$0xff]
        %v2419 = vld [vmem:[%s2371 + $0x1b8] sm:$0x3]
        %v2420 = vld [vmem:[%s2371 + $0x1e0] sm:$0xff]
        %v2421 = vld [vmem:[%s2371 + $0x1e8] sm:$0x3]
        %v2422 = vld [vmem:[%s2371 + $0x1f0] sm:$0xff]
        %v2423 = vld [vmem:[%s2371 + $0x1f8] sm:$0x3]
        %v2424 = vld [vmem:[%s2371 + $0x200] sm:$0xff]
        %v2425 = vld [vmem:[%s2371 + $0x208] sm:$0x3]
        %v2426 = vld [vmem:[%s2371 + $0x210] sm:$0xff]
        %v2427 = vld [vmem:[%s2371 + $0x218] sm:$0x3]
        %v2428 = vld [vmem:[%s2371 + $0x220] sm:$0xff]
        %v2429 = vld [vmem:[%s2371 + $0x228] sm:$0x3]
        %v2430 = vld [vmem:[%s2371 + $0x230] sm:$0xff]
        %v2431 = vld [vmem:[%s2371 + $0x238] sm:$0x3]
        %v2432 = vld [vmem:[%s2371 + $0x240] sm:$0xff]
        %v2433 = vld [vmem:[%s2371 + $0x248] sm:$0x3]
        %v2434 = vld [vmem:[%s2371 + $0x250] sm:$0xff]
        %v2435 = vld [vmem:[%s2371 + $0x258] sm:$0x3]
        %v2436 = vpack.c.bf16 %v2373, %v2372
        %v2437 = vpack.c.bf16 %v2375, %v2374
        %v2438 = vpack.c.bf16 %v2377, %v2376
        %v2439 = vpack.c.bf16 %v2379, %v2378
        %v2440 = vpack.c.bf16 %v2381, %v2380
        %v2441 = vpack.c.bf16 %v2383, %v2382
        %v2442 = vpack.c.bf16 %v2385, %v2384
        %v2443 = vpack.c.bf16 %v2387, %v2386
        %v2444 = vpack.c.bf16 %v2389, %v2388
        %v2445 = vpack.c.bf16 %v2391, %v2390
        %v2446 = vpack.c.bf16 %v2393, %v2392
        %v2447 = vpack.c.bf16 %v2395, %v2394
        %v2448 = vpack.c.bf16 %v2397, %v2396
        %v2449 = vpack.c.bf16 %v2399, %v2398
        %v2450 = vpack.c.bf16 %v2401, %v2400
        %v2451 = vpack.c.bf16 %v2403, %v2402
        %v2452 = vpack.c.bf16 %v2405, %v2404
        %v2453 = vpack.c.bf16 %v2407, %v2406
        %v2454 = vpack.c.bf16 %v2409, %v2408
        %v2455 = vpack.c.bf16 %v2411, %v2410
        %v2456 = vpack.c.bf16 %v2413, %v2412
        %v2457 = vpack.c.bf16 %v2415, %v2414
        %v2458 = vpack.c.bf16 %v2417, %v2416
        %v2459 = vpack.c.bf16 %v2419, %v2418
        %v2460 = vpack.c.bf16 %v2421, %v2420
        %v2461 = vpack.c.bf16 %v2423, %v2422
        %v2462 = vpack.c.bf16 %v2425, %v2424
        %v2463 = vpack.c.bf16 %v2427, %v2426
        %v2464 = vpack.c.bf16 %v2429, %v2428
        %v2465 = vpack.c.bf16 %v2431, %v2430
        %v2466 = vpack.c.bf16 %v2433, %v2432
        %v2467 = vpack.c.bf16 %v2435, %v2434
        %v2500 = vunpack.c.l.b16 %v2436
        %v2501 = vunpack.c.h.b16 %v2436
        %v2502 = vunpack.c.l.b16 %v2437
        %v2503 = vunpack.c.h.b16 %v2437
        %v2504 = vunpack.c.l.b16 %v2438
        %v2505 = vunpack.c.h.b16 %v2438
        %v2506 = vunpack.c.l.b16 %v2439
        %v2507 = vunpack.c.h.b16 %v2439
        %v2508 = vunpack.c.l.b16 %v2440
        %v2509 = vunpack.c.h.b16 %v2440
        %v2510 = vunpack.c.l.b16 %v2441
        %v2511 = vunpack.c.h.b16 %v2441
        %v2512 = vunpack.c.l.b16 %v2442
        %v2513 = vunpack.c.h.b16 %v2442
        %v2514 = vunpack.c.l.b16 %v2443
        %v2515 = vunpack.c.h.b16 %v2443
        %v2516 = vunpack.c.l.b16 %v2444
        %v2517 = vunpack.c.h.b16 %v2444
        %v2518 = vunpack.c.l.b16 %v2445
        %v2519 = vunpack.c.h.b16 %v2445
        %v2520 = vunpack.c.l.b16 %v2446
        %v2521 = vunpack.c.h.b16 %v2446
        %v2522 = vunpack.c.l.b16 %v2447
        %v2523 = vunpack.c.h.b16 %v2447
        %v2524 = vunpack.c.l.b16 %v2448
        %v2525 = vunpack.c.h.b16 %v2448
        %v2526 = vunpack.c.l.b16 %v2449
        %v2527 = vunpack.c.h.b16 %v2449
        %v2528 = vunpack.c.l.b16 %v2450
        %v2529 = vunpack.c.h.b16 %v2450
        %v2530 = vunpack.c.l.b16 %v2451
        %v2531 = vunpack.c.h.b16 %v2451
        %v2532 = vunpack.c.l.b16 %v2452
        %v2533 = vunpack.c.h.b16 %v2452
        %v2534 = vunpack.c.l.b16 %v2453
        %v2535 = vunpack.c.h.b16 %v2453
        %v2536 = vunpack.c.l.b16 %v2454
        %v2537 = vunpack.c.h.b16 %v2454
        %v2538 = vunpack.c.l.b16 %v2455
        %v2539 = vunpack.c.h.b16 %v2455
        %v2540 = vunpack.c.l.b16 %v2456
        %v2541 = vunpack.c.h.b16 %v2456
        %v2542 = vunpack.c.l.b16 %v2457
        %v2543 = vunpack.c.h.b16 %v2457
        %v2544 = vunpack.c.l.b16 %v2458
        %v2545 = vunpack.c.h.b16 %v2458
        %v2546 = vunpack.c.l.b16 %v2459
        %v2547 = vunpack.c.h.b16 %v2459
        %v2548 = vunpack.c.l.b16 %v2460
        %v2549 = vunpack.c.h.b16 %v2460
        %v2550 = vunpack.c.l.b16 %v2461
        %v2551 = vunpack.c.h.b16 %v2461
        %v2552 = vunpack.c.l.b16 %v2462
        %v2553 = vunpack.c.h.b16 %v2462
        %v2554 = vunpack.c.l.b16 %v2463
        %v2555 = vunpack.c.h.b16 %v2463
        %v2556 = vunpack.c.l.b16 %v2464
        %v2557 = vunpack.c.h.b16 %v2464
        %v2558 = vunpack.c.l.b16 %v2465
        %v2559 = vunpack.c.h.b16 %v2465
        %v2560 = vunpack.c.l.b16 %v2466
        %v2561 = vunpack.c.h.b16 %v2466
        %v2562 = vunpack.c.l.b16 %v2467
        %v2563 = vunpack.c.h.b16 %v2467
        %v2564 = vpack.c.b16 %v2500, %v2500
        %v2565 = vpack.c.b16 %v2501, %v2501
        %v2566 = vpack.c.b16 %v2502, %v2502
        %v2567 = vpack.c.b16 %v2503, %v2503
        %v2568 = vpack.c.b16 %v2504, %v2504
        %v2569 = vpack.c.b16 %v2505, %v2505
        %v2570 = vpack.c.b16 %v2506, %v2506
        %v2571 = vpack.c.b16 %v2507, %v2507
        %v2572 = vpack.c.b16 %v2508, %v2508
        %v2573 = vpack.c.b16 %v2509, %v2509
        %v2574 = vpack.c.b16 %v2510, %v2510
        %v2575 = vpack.c.b16 %v2511, %v2511
        %v2576 = vpack.c.b16 %v2512, %v2512
        %v2577 = vpack.c.b16 %v2513, %v2513
        %v2578 = vpack.c.b16 %v2514, %v2514
        %v2579 = vpack.c.b16 %v2515, %v2515
        %v2580 = vpack.c.b16 %v2516, %v2516
        %v2581 = vpack.c.b16 %v2517, %v2517
        %v2582 = vpack.c.b16 %v2518, %v2518
        %v2583 = vpack.c.b16 %v2519, %v2519
        %v2584 = vpack.c.b16 %v2520, %v2520
        %v2585 = vpack.c.b16 %v2521, %v2521
        %v2586 = vpack.c.b16 %v2522, %v2522
        %v2587 = vpack.c.b16 %v2523, %v2523
        %v2588 = vpack.c.b16 %v2524, %v2524
        %v2589 = vpack.c.b16 %v2525, %v2525
        %v2590 = vpack.c.b16 %v2526, %v2526
        %v2591 = vpack.c.b16 %v2527, %v2527
        %v2592 = vpack.c.b16 %v2528, %v2528
        %v2593 = vpack.c.b16 %v2529, %v2529
        %v2594 = vpack.c.b16 %v2530, %v2530
        %v2595 = vpack.c.b16 %v2531, %v2531
        %v2596 = vpack.c.b16 %v2532, %v2532
        %v2597 = vpack.c.b16 %v2533, %v2533
        %v2598 = vpack.c.b16 %v2534, %v2534
        %v2599 = vpack.c.b16 %v2535, %v2535
        %v2600 = vpack.c.b16 %v2536, %v2536
        %v2601 = vpack.c.b16 %v2537, %v2537
        %v2602 = vpack.c.b16 %v2538, %v2538
        %v2603 = vpack.c.b16 %v2539, %v2539
        %v2604 = vpack.c.b16 %v2540, %v2540
        %v2605 = vpack.c.b16 %v2541, %v2541
        %v2606 = vpack.c.b16 %v2542, %v2542
        %v2607 = vpack.c.b16 %v2543, %v2543
        %v2608 = vpack.c.b16 %v2544, %v2544
        %v2609 = vpack.c.b16 %v2545, %v2545
        %v2610 = vpack.c.b16 %v2546, %v2546
        %v2611 = vpack.c.b16 %v2547, %v2547
        %v2612 = vpack.c.b16 %v2548, %v2548
        %v2613 = vpack.c.b16 %v2549, %v2549
        %v2614 = vpack.c.b16 %v2550, %v2550
        %v2615 = vpack.c.b16 %v2551, %v2551
        %v2616 = vpack.c.b16 %v2552, %v2552
        %v2617 = vpack.c.b16 %v2553, %v2553
        %v2618 = vpack.c.b16 %v2554, %v2554
        %v2619 = vpack.c.b16 %v2555, %v2555
        %v2620 = vpack.c.b16 %v2556, %v2556
        %v2621 = vpack.c.b16 %v2557, %v2557
        %v2622 = vpack.c.b16 %v2558, %v2558
        %v2623 = vpack.c.b16 %v2559, %v2559
        %v2624 = vpack.c.b16 %v2560, %v2560
        %v2625 = vpack.c.b16 %v2561, %v2561
        %v2626 = vpack.c.b16 %v2562, %v2562
        %v2627 = vpack.c.b16 %v2563, %v2563
        %v2629 = vshrl.u32 %v2564, 16
        %v2631 = vrot.slane %v2629, 4
        %v2632 = vshll.u32 %v2564, 16
        %v2634 = vrot.slane %v2632, 5
        %v2635 = vor.u32 %v2631, %v2634
        %v2636 = vrot.slane %v2635, 4
        %v2638 = vshll.u32 %v2565, 16
        %v2640 = vrot.slane %v2638, 5
        %v2641 = vsel %vm959, %v2636, %v2640
        %v2643 = vshrl.u32 %v2566, 16
        %v2645 = vrot.slane %v2643, 4
        %v2646 = vshll.u32 %v2566, 16
        %v2648 = vrot.slane %v2646, 5
        %v2649 = vor.u32 %v2645, %v2648
        %v2650 = vrot.slane %v2649, 4
        %v2652 = vshll.u32 %v2567, 16
        %v2654 = vrot.slane %v2652, 5
        %v2655 = vsel %vm959, %v2650, %v2654
        %v2657 = vshrl.u32 %v2568, 16
        %v2659 = vrot.slane %v2657, 4
        %v2660 = vshll.u32 %v2568, 16
        %v2662 = vrot.slane %v2660, 5
        %v2663 = vor.u32 %v2659, %v2662
        %v2664 = vrot.slane %v2663, 4
        %v2666 = vshll.u32 %v2569, 16
        %v2668 = vrot.slane %v2666, 5
        %v2669 = vsel %vm959, %v2664, %v2668
        %v2671 = vshrl.u32 %v2570, 16
        %v2673 = vrot.slane %v2671, 4
        %v2674 = vshll.u32 %v2570, 16
        %v2676 = vrot.slane %v2674, 5
        %v2677 = vor.u32 %v2673, %v2676
        %v2678 = vrot.slane %v2677, 4
        %v2680 = vshll.u32 %v2571, 16
        %v2682 = vrot.slane %v2680, 5
        %v2683 = vsel %vm959, %v2678, %v2682
        %v2685 = vshrl.u32 %v2572, 16
        %v2687 = vrot.slane %v2685, 4
        %v2688 = vshll.u32 %v2572, 16
        %v2690 = vrot.slane %v2688, 5
        %v2691 = vor.u32 %v2687, %v2690
        %v2692 = vrot.slane %v2691, 4
        %v2694 = vshll.u32 %v2573, 16
        %v2696 = vrot.slane %v2694, 5
        %v2697 = vsel %vm959, %v2692, %v2696
        %v2699 = vshrl.u32 %v2574, 16
        %v2701 = vrot.slane %v2699, 4
        %v2702 = vshll.u32 %v2574, 16
        %v2704 = vrot.slane %v2702, 5
        %v2705 = vor.u32 %v2701, %v2704
        %v2706 = vrot.slane %v2705, 4
        %v2708 = vshll.u32 %v2575, 16
        %v2710 = vrot.slane %v2708, 5
        %v2711 = vsel %vm959, %v2706, %v2710
        %v2713 = vshrl.u32 %v2576, 16
        %v2715 = vrot.slane %v2713, 4
        %v2716 = vshll.u32 %v2576, 16
        %v2718 = vrot.slane %v2716, 5
        %v2719 = vor.u32 %v2715, %v2718
        %v2720 = vrot.slane %v2719, 4
        %v2722 = vshll.u32 %v2577, 16
        %v2724 = vrot.slane %v2722, 5
        %v2725 = vsel %vm959, %v2720, %v2724
        %v2727 = vshrl.u32 %v2578, 16
        %v2729 = vrot.slane %v2727, 4
        %v2730 = vshll.u32 %v2578, 16
        %v2732 = vrot.slane %v2730, 5
        %v2733 = vor.u32 %v2729, %v2732
        %v2734 = vrot.slane %v2733, 4
        %v2736 = vshll.u32 %v2579, 16
        %v2738 = vrot.slane %v2736, 5
        %v2739 = vsel %vm959, %v2734, %v2738
        %v2741 = vshrl.u32 %v2580, 16
        %v2743 = vrot.slane %v2741, 4
        %v2744 = vshll.u32 %v2580, 16
        %v2746 = vrot.slane %v2744, 5
        %v2747 = vor.u32 %v2743, %v2746
        %v2748 = vrot.slane %v2747, 4
        %v2750 = vshll.u32 %v2581, 16
        %v2752 = vrot.slane %v2750, 5
        %v2753 = vsel %vm959, %v2748, %v2752
        %v2755 = vshrl.u32 %v2582, 16
        %v2757 = vrot.slane %v2755, 4
        %v2758 = vshll.u32 %v2582, 16
        %v2760 = vrot.slane %v2758, 5
        %v2761 = vor.u32 %v2757, %v2760
        %v2762 = vrot.slane %v2761, 4
        %v2764 = vshll.u32 %v2583, 16
        %v2766 = vrot.slane %v2764, 5
        %v2767 = vsel %vm959, %v2762, %v2766
        %v2769 = vshrl.u32 %v2584, 16
        %v2771 = vrot.slane %v2769, 4
        %v2772 = vshll.u32 %v2584, 16
        %v2774 = vrot.slane %v2772, 5
        %v2775 = vor.u32 %v2771, %v2774
        %v2776 = vrot.slane %v2775, 4
        %v2778 = vshll.u32 %v2585, 16
        %v2780 = vrot.slane %v2778, 5
        %v2781 = vsel %vm959, %v2776, %v2780
        %v2783 = vshrl.u32 %v2586, 16
        %v2785 = vrot.slane %v2783, 4
        %v2786 = vshll.u32 %v2586, 16
        %v2788 = vrot.slane %v2786, 5
        %v2789 = vor.u32 %v2785, %v2788
        %v2790 = vrot.slane %v2789, 4
        %v2792 = vshll.u32 %v2587, 16
        %v2794 = vrot.slane %v2792, 5
        %v2795 = vsel %vm959, %v2790, %v2794
        %v2797 = vshrl.u32 %v2588, 16
        %v2799 = vrot.slane %v2797, 4
        %v2800 = vshll.u32 %v2588, 16
        %v2802 = vrot.slane %v2800, 5
        %v2803 = vor.u32 %v2799, %v2802
        %v2804 = vrot.slane %v2803, 4
        %v2806 = vshll.u32 %v2589, 16
        %v2808 = vrot.slane %v2806, 5
        %v2809 = vsel %vm959, %v2804, %v2808
        %v2811 = vshrl.u32 %v2590, 16
        %v2813 = vrot.slane %v2811, 4
        %v2814 = vshll.u32 %v2590, 16
        %v2816 = vrot.slane %v2814, 5
        %v2817 = vor.u32 %v2813, %v2816
        %v2818 = vrot.slane %v2817, 4
        %v2820 = vshll.u32 %v2591, 16
        %v2822 = vrot.slane %v2820, 5
        %v2823 = vsel %vm959, %v2818, %v2822
        %v2825 = vshrl.u32 %v2592, 16
        %v2827 = vrot.slane %v2825, 4
        %v2828 = vshll.u32 %v2592, 16
        %v2830 = vrot.slane %v2828, 5
        %v2831 = vor.u32 %v2827, %v2830
        %v2832 = vrot.slane %v2831, 4
        %v2834 = vshll.u32 %v2593, 16
        %v2836 = vrot.slane %v2834, 5
        %v2837 = vsel %vm959, %v2832, %v2836
        %v2839 = vshrl.u32 %v2594, 16
        %v2841 = vrot.slane %v2839, 4
        %v2842 = vshll.u32 %v2594, 16
        %v2844 = vrot.slane %v2842, 5
        %v2845 = vor.u32 %v2841, %v2844
        %v2846 = vrot.slane %v2845, 4
        %v2848 = vshll.u32 %v2595, 16
        %v2850 = vrot.slane %v2848, 5
        %v2851 = vsel %vm959, %v2846, %v2850
        %v2853 = vshrl.u32 %v2596, 16
        %v2855 = vrot.slane %v2853, 4
        %v2856 = vshll.u32 %v2596, 16
        %v2858 = vrot.slane %v2856, 5
        %v2859 = vor.u32 %v2855, %v2858
        %v2860 = vrot.slane %v2859, 4
        %v2862 = vshll.u32 %v2597, 16
        %v2864 = vrot.slane %v2862, 5
        %v2865 = vsel %vm959, %v2860, %v2864
        %v2867 = vshrl.u32 %v2598, 16
        %v2869 = vrot.slane %v2867, 4
        %v2870 = vshll.u32 %v2598, 16
        %v2872 = vrot.slane %v2870, 5
        %v2873 = vor.u32 %v2869, %v2872
        %v2874 = vrot.slane %v2873, 4
        %v2876 = vshll.u32 %v2599, 16
        %v2878 = vrot.slane %v2876, 5
        %v2879 = vsel %vm959, %v2874, %v2878
        %v2881 = vshrl.u32 %v2600, 16
        %v2883 = vrot.slane %v2881, 4
        %v2884 = vshll.u32 %v2600, 16
        %v2886 = vrot.slane %v2884, 5
        %v2887 = vor.u32 %v2883, %v2886
        %v2888 = vrot.slane %v2887, 4
        %v2890 = vshll.u32 %v2601, 16
        %v2892 = vrot.slane %v2890, 5
        %v2893 = vsel %vm959, %v2888, %v2892
        %v2895 = vshrl.u32 %v2602, 16
        %v2897 = vrot.slane %v2895, 4
        %v2898 = vshll.u32 %v2602, 16
        %v2900 = vrot.slane %v2898, 5
        %v2901 = vor.u32 %v2897, %v2900
        %v2902 = vrot.slane %v2901, 4
        %v2904 = vshll.u32 %v2603, 16
        %v2906 = vrot.slane %v2904, 5
        %v2907 = vsel %vm959, %v2902, %v2906
        %v2909 = vshrl.u32 %v2604, 16
        %v2911 = vrot.slane %v2909, 4
        %v2912 = vshll.u32 %v2604, 16
        %v2914 = vrot.slane %v2912, 5
        %v2915 = vor.u32 %v2911, %v2914
        %v2916 = vrot.slane %v2915, 4
        %v2918 = vshll.u32 %v2605, 16
        %v2920 = vrot.slane %v2918, 5
        %v2921 = vsel %vm959, %v2916, %v2920
        %v2923 = vshrl.u32 %v2606, 16
        %v2925 = vrot.slane %v2923, 4
        %v2926 = vshll.u32 %v2606, 16
        %v2928 = vrot.slane %v2926, 5
        %v2929 = vor.u32 %v2925, %v2928
        %v2930 = vrot.slane %v2929, 4
        %v2932 = vshll.u32 %v2607, 16
        %v2934 = vrot.slane %v2932, 5
        %v2935 = vsel %vm959, %v2930, %v2934
        %v2937 = vshrl.u32 %v2608, 16
        %v2939 = vrot.slane %v2937, 4
        %v2940 = vshll.u32 %v2608, 16
        %v2942 = vrot.slane %v2940, 5
        %v2943 = vor.u32 %v2939, %v2942
        %v2944 = vrot.slane %v2943, 4
        %v2946 = vshll.u32 %v2609, 16
        %v2948 = vrot.slane %v2946, 5
        %v2949 = vsel %vm959, %v2944, %v2948
        %v2951 = vshrl.u32 %v2610, 16
        %v2953 = vrot.slane %v2951, 4
        %v2954 = vshll.u32 %v2610, 16
        %v2956 = vrot.slane %v2954, 5
        %v2957 = vor.u32 %v2953, %v2956
        %v2958 = vrot.slane %v2957, 4
        %v2960 = vshll.u32 %v2611, 16
        %v2962 = vrot.slane %v2960, 5
        %v2963 = vsel %vm959, %v2958, %v2962
        %v2965 = vshrl.u32 %v2612, 16
        %v2967 = vrot.slane %v2965, 4
        %v2968 = vshll.u32 %v2612, 16
        %v2970 = vrot.slane %v2968, 5
        %v2971 = vor.u32 %v2967, %v2970
        %v2972 = vrot.slane %v2971, 4
        %v2974 = vshll.u32 %v2613, 16
        %v2976 = vrot.slane %v2974, 5
        %v2977 = vsel %vm959, %v2972, %v2976
        %v2979 = vshrl.u32 %v2614, 16
        %v2981 = vrot.slane %v2979, 4
        %v2982 = vshll.u32 %v2614, 16
        %v2984 = vrot.slane %v2982, 5
        %v2985 = vor.u32 %v2981, %v2984
        %v2986 = vrot.slane %v2985, 4
        %v2988 = vshll.u32 %v2615, 16
        %v2990 = vrot.slane %v2988, 5
        %v2991 = vsel %vm959, %v2986, %v2990
        %v2993 = vshrl.u32 %v2616, 16
        %v2995 = vrot.slane %v2993, 4
        %v2996 = vshll.u32 %v2616, 16
        %v2998 = vrot.slane %v2996, 5
        %v2999 = vor.u32 %v2995, %v2998
        %v3000 = vrot.slane %v2999, 4
        %v3002 = vshll.u32 %v2617, 16
        %v3004 = vrot.slane %v3002, 5
        %v3005 = vsel %vm959, %v3000, %v3004
        %v3007 = vshrl.u32 %v2618, 16
        %v3009 = vrot.slane %v3007, 4
        %v3010 = vshll.u32 %v2618, 16
        %v3012 = vrot.slane %v3010, 5
        %v3013 = vor.u32 %v3009, %v3012
        %v3014 = vrot.slane %v3013, 4
        %v3016 = vshll.u32 %v2619, 16
        %v3018 = vrot.slane %v3016, 5
        %v3019 = vsel %vm959, %v3014, %v3018
        %v3021 = vshrl.u32 %v2620, 16
        %v3023 = vrot.slane %v3021, 4
        %v3024 = vshll.u32 %v2620, 16
        %v3026 = vrot.slane %v3024, 5
        %v3027 = vor.u32 %v3023, %v3026
        %v3028 = vrot.slane %v3027, 4
        %v3030 = vshll.u32 %v2621, 16
        %v3032 = vrot.slane %v3030, 5
        %v3033 = vsel %vm959, %v3028, %v3032
        %v3035 = vshrl.u32 %v2622, 16
        %v3037 = vrot.slane %v3035, 4
        %v3038 = vshll.u32 %v2622, 16
        %v3040 = vrot.slane %v3038, 5
        %v3041 = vor.u32 %v3037, %v3040
        %v3042 = vrot.slane %v3041, 4
        %v3044 = vshll.u32 %v2623, 16
        %v3046 = vrot.slane %v3044, 5
        %v3047 = vsel %vm959, %v3042, %v3046
        %v3049 = vshrl.u32 %v2624, 16
        %v3051 = vrot.slane %v3049, 4
        %v3052 = vshll.u32 %v2624, 16
        %v3054 = vrot.slane %v3052, 5
        %v3055 = vor.u32 %v3051, %v3054
        %v3056 = vrot.slane %v3055, 4
        %v3058 = vshll.u32 %v2625, 16
        %v3060 = vrot.slane %v3058, 5
        %v3061 = vsel %vm959, %v3056, %v3060
        %v3063 = vshrl.u32 %v2626, 16
        %v3065 = vrot.slane %v3063, 4
        %v3066 = vshll.u32 %v2626, 16
        %v3068 = vrot.slane %v3066, 5
        %v3069 = vor.u32 %v3065, %v3068
        %v3070 = vrot.slane %v3069, 4
        %v3072 = vshll.u32 %v2627, 16
        %v3074 = vrot.slane %v3072, 5
        %v3075 = vsel %vm959, %v3070, %v3074
        %v3076 = vrot.slane %v2564, 5
        %v3077 = vrot.slane %v3076, 4
        %v3078 = vrot.slane %v2565, 5
        %v3079 = vsel %vm1410, %v3077, %v3078
        %v3080 = vrot.slane %v2566, 5
        %v3081 = vrot.slane %v3080, 4
        %v3082 = vrot.slane %v2567, 5
        %v3083 = vsel %vm1410, %v3081, %v3082
        %v3084 = vrot.slane %v2568, 5
        %v3085 = vrot.slane %v3084, 4
        %v3086 = vrot.slane %v2569, 5
        %v3087 = vsel %vm1410, %v3085, %v3086
        %v3088 = vrot.slane %v2570, 5
        %v3089 = vrot.slane %v3088, 4
        %v3090 = vrot.slane %v2571, 5
        %v3091 = vsel %vm1410, %v3089, %v3090
        %v3092 = vrot.slane %v2572, 5
        %v3093 = vrot.slane %v3092, 4
        %v3094 = vrot.slane %v2573, 5
        %v3095 = vsel %vm1410, %v3093, %v3094
        %v3096 = vrot.slane %v2574, 5
        %v3097 = vrot.slane %v3096, 4
        %v3098 = vrot.slane %v2575, 5
        %v3099 = vsel %vm1410, %v3097, %v3098
        %v3100 = vrot.slane %v2576, 5
        %v3101 = vrot.slane %v3100, 4
        %v3102 = vrot.slane %v2577, 5
        %v3103 = vsel %vm1410, %v3101, %v3102
        %v3104 = vrot.slane %v2578, 5
        %v3105 = vrot.slane %v3104, 4
        %v3106 = vrot.slane %v2579, 5
        %v3107 = vsel %vm1410, %v3105, %v3106
        %v3108 = vrot.slane %v2580, 5
        %v3109 = vrot.slane %v3108, 4
        %v3110 = vrot.slane %v2581, 5
        %v3111 = vsel %vm1410, %v3109, %v3110
        %v3112 = vrot.slane %v2582, 5
        %v3113 = vrot.slane %v3112, 4
        %v3114 = vrot.slane %v2583, 5
        %v3115 = vsel %vm1410, %v3113, %v3114
        %v3116 = vrot.slane %v2584, 5
        %v3117 = vrot.slane %v3116, 4
        %v3118 = vrot.slane %v2585, 5
        %v3119 = vsel %vm1410, %v3117, %v3118
        %v3120 = vrot.slane %v2586, 5
        %v3121 = vrot.slane %v3120, 4
        %v3122 = vrot.slane %v2587, 5
        %v3123 = vsel %vm1410, %v3121, %v3122
        %v3124 = vrot.slane %v2588, 5
        %v3125 = vrot.slane %v3124, 4
        %v3126 = vrot.slane %v2589, 5
        %v3127 = vsel %vm1410, %v3125, %v3126
        %v3128 = vrot.slane %v2590, 5
        %v3129 = vrot.slane %v3128, 4
        %v3130 = vrot.slane %v2591, 5
        %v3131 = vsel %vm1410, %v3129, %v3130
        %v3132 = vrot.slane %v2592, 5
        %v3133 = vrot.slane %v3132, 4
        %v3134 = vrot.slane %v2593, 5
        %v3135 = vsel %vm1410, %v3133, %v3134
        %v3136 = vrot.slane %v2594, 5
        %v3137 = vrot.slane %v3136, 4
        %v3138 = vrot.slane %v2595, 5
        %v3139 = vsel %vm1410, %v3137, %v3138
        %v3140 = vrot.slane %v2596, 5
        %v3141 = vrot.slane %v3140, 4
        %v3142 = vrot.slane %v2597, 5
        %v3143 = vsel %vm1410, %v3141, %v3142
        %v3144 = vrot.slane %v2598, 5
        %v3145 = vrot.slane %v3144, 4
        %v3146 = vrot.slane %v2599, 5
        %v3147 = vsel %vm1410, %v3145, %v3146
        %v3148 = vrot.slane %v2600, 5
        %v3149 = vrot.slane %v3148, 4
        %v3150 = vrot.slane %v2601, 5
        %v3151 = vsel %vm1410, %v3149, %v3150
        %v3152 = vrot.slane %v2602, 5
        %v3153 = vrot.slane %v3152, 4
        %v3154 = vrot.slane %v2603, 5
        %v3155 = vsel %vm1410, %v3153, %v3154
        %v3156 = vrot.slane %v2604, 5
        %v3157 = vrot.slane %v3156, 4
        %v3158 = vrot.slane %v2605, 5
        %v3159 = vsel %vm1410, %v3157, %v3158
        %v3160 = vrot.slane %v2606, 5
        %v3161 = vrot.slane %v3160, 4
        %v3162 = vrot.slane %v2607, 5
        %v3163 = vsel %vm1410, %v3161, %v3162
        %v3164 = vrot.slane %v2608, 5
        %v3165 = vrot.slane %v3164, 4
        %v3166 = vrot.slane %v2609, 5
        %v3167 = vsel %vm1410, %v3165, %v3166
        %v3168 = vrot.slane %v2610, 5
        %v3169 = vrot.slane %v3168, 4
        %v3170 = vrot.slane %v2611, 5
        %v3171 = vsel %vm1410, %v3169, %v3170
        %v3172 = vrot.slane %v2612, 5
        %v3173 = vrot.slane %v3172, 4
        %v3174 = vrot.slane %v2613, 5
        %v3175 = vsel %vm1410, %v3173, %v3174
        %v3176 = vrot.slane %v2614, 5
        %v3177 = vrot.slane %v3176, 4
        %v3178 = vrot.slane %v2615, 5
        %v3179 = vsel %vm1410, %v3177, %v3178
        %v3180 = vrot.slane %v2616, 5
        %v3181 = vrot.slane %v3180, 4
        %v3182 = vrot.slane %v2617, 5
        %v3183 = vsel %vm1410, %v3181, %v3182
        %v3184 = vrot.slane %v2618, 5
        %v3185 = vrot.slane %v3184, 4
        %v3186 = vrot.slane %v2619, 5
        %v3187 = vsel %vm1410, %v3185, %v3186
        %v3188 = vrot.slane %v2620, 5
        %v3189 = vrot.slane %v3188, 4
        %v3190 = vrot.slane %v2621, 5
        %v3191 = vsel %vm1410, %v3189, %v3190
        %v3192 = vrot.slane %v2622, 5
        %v3193 = vrot.slane %v3192, 4
        %v3194 = vrot.slane %v2623, 5
        %v3195 = vsel %vm1410, %v3193, %v3194
        %v3196 = vrot.slane %v2624, 5
        %v3197 = vrot.slane %v3196, 4
        %v3198 = vrot.slane %v2625, 5
        %v3199 = vsel %vm1410, %v3197, %v3198
        %v3200 = vrot.slane %v2626, 5
        %v3201 = vrot.slane %v3200, 4
        %v3202 = vrot.slane %v2627, 5
        %v3203 = vsel %vm1410, %v3201, %v3202
        %v3204 = vpack.c.b16 %v831, %v829
        %v3205 = vpack.c.b16 %v835, %v833
        %v3206 = vpack.c.b16 %v839, %v837
        %v3207 = vpack.c.b16 %v843, %v841
        %v3208 = vpack.c.b16 %v847, %v845
        %v3209 = vpack.c.b16 %v851, %v849
        %v3210 = vpack.c.b16 %v855, %v853
        %v3211 = vpack.c.b16 %v859, %v857
        %v3212 = vpack.c.b16 %v863, %v861
        %v3213 = vpack.c.b16 %v867, %v865
        %v3214 = vpack.c.b16 %v871, %v869
        %v3215 = vpack.c.b16 %v875, %v873
        %v3216 = vpack.c.b16 %v879, %v877
        %v3217 = vpack.c.b16 %v883, %v881
        %v3218 = vpack.c.b16 %v887, %v885
        %v3219 = vpack.c.b16 %v891, %v889
        %v3220 = vunpack.c.l.b16 %v973
        %v3221 = vunpack.c.l.b16 %v987
        %v3222 = vunpack.c.l.b16 %v1001
        %v3223 = vunpack.c.l.b16 %v1015
        %v3224 = vunpack.c.l.b16 %v1029
        %v3225 = vunpack.c.l.b16 %v1043
        %v3226 = vunpack.c.l.b16 %v1057
        %v3227 = vunpack.c.l.b16 %v1071
        %v3228 = vunpack.c.l.b16 %v1085
        %v3229 = vunpack.c.l.b16 %v1099
        %v3230 = vunpack.c.l.b16 %v1113
        %v3231 = vunpack.c.l.b16 %v1127
        %v3232 = vunpack.c.l.b16 %v1141
        %v3233 = vunpack.c.l.b16 %v1155
        %v3234 = vunpack.c.l.b16 %v1169
        %v3235 = vunpack.c.l.b16 %v1183
        %v3236 = vunpack.c.l.b16 %v1197
        %v3237 = vunpack.c.l.b16 %v1211
        %v3238 = vunpack.c.l.b16 %v1225
        %v3239 = vunpack.c.l.b16 %v1239
        %v3240 = vunpack.c.l.b16 %v1253
        %v3241 = vunpack.c.l.b16 %v1267
        %v3242 = vunpack.c.l.b16 %v1281
        %v3243 = vunpack.c.l.b16 %v1295
        %v3244 = vunpack.c.l.b16 %v1309
        %v3245 = vunpack.c.l.b16 %v1323
        %v3246 = vunpack.c.l.b16 %v1337
        %v3247 = vunpack.c.l.b16 %v1351
        %v3248 = vunpack.c.l.b16 %v1365
        %v3249 = vunpack.c.l.b16 %v1379
        %v3250 = vunpack.c.l.b16 %v1393
        %v3251 = vunpack.c.l.b16 %v1407
        %v3252 = vpack.c.b16 %v3221, %v3220
        %v3253 = vpack.c.b16 %v3223, %v3222
        %v3254 = vpack.c.b16 %v3225, %v3224
        %v3255 = vpack.c.b16 %v3227, %v3226
        %v3256 = vpack.c.b16 %v3229, %v3228
        %v3257 = vpack.c.b16 %v3231, %v3230
        %v3258 = vpack.c.b16 %v3233, %v3232
        %v3259 = vpack.c.b16 %v3235, %v3234
        %v3260 = vpack.c.b16 %v3237, %v3236
        %v3261 = vpack.c.b16 %v3239, %v3238
        %v3262 = vpack.c.b16 %v3241, %v3240
        %v3263 = vpack.c.b16 %v3243, %v3242
        %v3264 = vpack.c.b16 %v3245, %v3244
        %v3265 = vpack.c.b16 %v3247, %v3246
        %v3266 = vpack.c.b16 %v3249, %v3248
        %v3267 = vpack.c.b16 %v3251, %v3250
        %3268 = vrot.lane.b32.xlu0 %v3252, 32
        %v3269 = vpop.permute.xlu0 %3268
        %3270 = vrot.lane.b32.xlu0 %v3253, 32
        %v3271 = vpop.permute.xlu0 %3270
        %3272 = vrot.lane.b32.xlu0 %v3254, 32
        %v3273 = vpop.permute.xlu0 %3272
        %3274 = vrot.lane.b32.xlu0 %v3255, 32
        %v3275 = vpop.permute.xlu0 %3274
        %3276 = vrot.lane.b32.xlu0 %v3256, 32
        %v3277 = vpop.permute.xlu0 %3276
        %3278 = vrot.lane.b32.xlu0 %v3257, 32
        %v3279 = vpop.permute.xlu0 %3278
        %3280 = vrot.lane.b32.xlu0 %v3258, 32
        %v3281 = vpop.permute.xlu0 %3280
        %3282 = vrot.lane.b32.xlu0 %v3259, 32
        %v3283 = vpop.permute.xlu0 %3282
        %3284 = vrot.lane.b32.xlu0 %v3260, 32
        %v3285 = vpop.permute.xlu0 %3284
        %3286 = vrot.lane.b32.xlu0 %v3261, 32
        %v3287 = vpop.permute.xlu0 %3286
        %3288 = vrot.lane.b32.xlu0 %v3262, 32
        %v3289 = vpop.permute.xlu0 %3288
        %3290 = vrot.lane.b32.xlu0 %v3263, 32
        %v3291 = vpop.permute.xlu0 %3290
        %3292 = vrot.lane.b32.xlu0 %v3264, 32
        %v3293 = vpop.permute.xlu0 %3292
        %3294 = vrot.lane.b32.xlu0 %v3265, 32
        %v3295 = vpop.permute.xlu0 %3294
        %3296 = vrot.lane.b32.xlu0 %v3266, 32
        %v3297 = vpop.permute.xlu0 %3296
        %3298 = vrot.lane.b32.xlu0 %v3267, 32
        %v3299 = vpop.permute.xlu0 %3298
        %v3300 = vunpack.c.l.b16 %v1414
        %v3301 = vunpack.c.l.b16 %v1418
        %v3302 = vunpack.c.l.b16 %v1422
        %v3303 = vunpack.c.l.b16 %v1426
        %v3304 = vunpack.c.l.b16 %v1430
        %v3305 = vunpack.c.l.b16 %v1434
        %v3306 = vunpack.c.l.b16 %v1438
        %v3307 = vunpack.c.l.b16 %v1442
        %v3308 = vunpack.c.l.b16 %v1446
        %v3309 = vunpack.c.l.b16 %v1450
        %v3310 = vunpack.c.l.b16 %v1454
        %v3311 = vunpack.c.l.b16 %v1458
        %v3312 = vunpack.c.l.b16 %v1462
        %v3313 = vunpack.c.l.b16 %v1466
        %v3314 = vunpack.c.l.b16 %v1470
        %v3315 = vunpack.c.l.b16 %v1474
        %v3316 = vunpack.c.l.b16 %v1478
        %v3317 = vunpack.c.l.b16 %v1482
        %v3318 = vunpack.c.l.b16 %v1486
        %v3319 = vunpack.c.l.b16 %v1490
        %v3320 = vunpack.c.l.b16 %v1494
        %v3321 = vunpack.c.l.b16 %v1498
        %v3322 = vunpack.c.l.b16 %v1502
        %v3323 = vunpack.c.l.b16 %v1506
        %v3324 = vunpack.c.l.b16 %v1510
        %v3325 = vunpack.c.l.b16 %v1514
        %v3326 = vunpack.c.l.b16 %v1518
        %v3327 = vunpack.c.l.b16 %v1522
        %v3328 = vunpack.c.l.b16 %v1526
        %v3329 = vunpack.c.l.b16 %v1530
        %v3330 = vunpack.c.l.b16 %v1534
        %v3331 = vunpack.c.l.b16 %v1538
        %v3332 = vpack.c.b16 %v3301, %v3300
        %v3333 = vpack.c.b16 %v3303, %v3302
        %v3334 = vpack.c.b16 %v3305, %v3304
        %v3335 = vpack.c.b16 %v3307, %v3306
        %v3336 = vpack.c.b16 %v3309, %v3308
        %v3337 = vpack.c.b16 %v3311, %v3310
        %v3338 = vpack.c.b16 %v3313, %v3312
        %v3339 = vpack.c.b16 %v3315, %v3314
        %v3340 = vpack.c.b16 %v3317, %v3316
        %v3341 = vpack.c.b16 %v3319, %v3318
        %v3342 = vpack.c.b16 %v3321, %v3320
        %v3343 = vpack.c.b16 %v3323, %v3322
        %v3344 = vpack.c.b16 %v3325, %v3324
        %v3345 = vpack.c.b16 %v3327, %v3326
        %v3346 = vpack.c.b16 %v3329, %v3328
        %v3347 = vpack.c.b16 %v3331, %v3330
        %3348 = vrot.lane.b32.xlu0 %v3332, 64
        %v3349 = vpop.permute.xlu0 %3348
        %3350 = vrot.lane.b32.xlu0 %v3333, 64
        %v3351 = vpop.permute.xlu0 %3350
        %3352 = vrot.lane.b32.xlu0 %v3334, 64
        %v3353 = vpop.permute.xlu0 %3352
        %3354 = vrot.lane.b32.xlu0 %v3335, 64
        %v3355 = vpop.permute.xlu0 %3354
        %3356 = vrot.lane.b32.xlu0 %v3336, 64
        %v3357 = vpop.permute.xlu0 %3356
        %3358 = vrot.lane.b32.xlu0 %v3337, 64
        %v3359 = vpop.permute.xlu0 %3358
        %3360 = vrot.lane.b32.xlu0 %v3338, 64
        %v3361 = vpop.permute.xlu0 %3360
        %3362 = vrot.lane.b32.xlu0 %v3339, 64
        %v3363 = vpop.permute.xlu0 %3362
        %3364 = vrot.lane.b32.xlu0 %v3340, 64
        %v3365 = vpop.permute.xlu0 %3364
        %3366 = vrot.lane.b32.xlu0 %v3341, 64
        %v3367 = vpop.permute.xlu0 %3366
        %3368 = vrot.lane.b32.xlu0 %v3342, 64
        %v3369 = vpop.permute.xlu0 %3368
        %3370 = vrot.lane.b32.xlu0 %v3343, 64
        %v3371 = vpop.permute.xlu0 %3370
        %3372 = vrot.lane.b32.xlu0 %v3344, 64
        %v3373 = vpop.permute.xlu0 %3372
        %3374 = vrot.lane.b32.xlu0 %v3345, 64
        %v3375 = vpop.permute.xlu0 %3374
        %3376 = vrot.lane.b32.xlu0 %v3346, 64
        %v3377 = vpop.permute.xlu0 %3376
        %3378 = vrot.lane.b32.xlu0 %v3347, 64
        %v3379 = vpop.permute.xlu0 %3378
        %v3380 = vpack.c.b16 %v1669, %v1667
        %v3381 = vpack.c.b16 %v1673, %v1671
        %v3382 = vpack.c.b16 %v1677, %v1675
        %v3383 = vpack.c.b16 %v1681, %v1679
        %v3384 = vpack.c.b16 %v1685, %v1683
        %v3385 = vpack.c.b16 %v1689, %v1687
        %v3386 = vpack.c.b16 %v1693, %v1691
        %v3387 = vpack.c.b16 %v1697, %v1695
        %v3388 = vpack.c.b16 %v1701, %v1699
        %v3389 = vpack.c.b16 %v1705, %v1703
        %v3390 = vpack.c.b16 %v1709, %v1707
        %v3391 = vpack.c.b16 %v1713, %v1711
        %v3392 = vpack.c.b16 %v1717, %v1715
        %v3393 = vpack.c.b16 %v1721, %v1719
        %v3394 = vpack.c.b16 %v1725, %v1723
        %v3395 = vpack.c.b16 %v1729, %v1727
        %3396 = vrot.lane.b32.xlu0 %v3380, 96
        %v3397 = vpop.permute.xlu0 %3396
        %3398 = vrot.lane.b32.xlu0 %v3381, 96
        %v3399 = vpop.permute.xlu0 %3398
        %3400 = vrot.lane.b32.xlu0 %v3382, 96
        %v3401 = vpop.permute.xlu0 %3400
        %3402 = vrot.lane.b32.xlu0 %v3383, 96
        %v3403 = vpop.permute.xlu0 %3402
        %3404 = vrot.lane.b32.xlu0 %v3384, 96
        %v3405 = vpop.permute.xlu0 %3404
        %3406 = vrot.lane.b32.xlu0 %v3385, 96
        %v3407 = vpop.permute.xlu0 %3406
        %3408 = vrot.lane.b32.xlu0 %v3386, 96
        %v3409 = vpop.permute.xlu0 %3408
        %3410 = vrot.lane.b32.xlu0 %v3387, 96
        %v3411 = vpop.permute.xlu0 %3410
        %3412 = vrot.lane.b32.xlu0 %v3388, 96
        %v3413 = vpop.permute.xlu0 %3412
        %3414 = vrot.lane.b32.xlu0 %v3389, 96
        %v3415 = vpop.permute.xlu0 %3414
        %3416 = vrot.lane.b32.xlu0 %v3390, 96
        %v3417 = vpop.permute.xlu0 %3416
        %3418 = vrot.lane.b32.xlu0 %v3391, 96
        %v3419 = vpop.permute.xlu0 %3418
        %3420 = vrot.lane.b32.xlu0 %v3392, 96
        %v3421 = vpop.permute.xlu0 %3420
        %3422 = vrot.lane.b32.xlu0 %v3393, 96
        %v3423 = vpop.permute.xlu0 %3422
        %3424 = vrot.lane.b32.xlu0 %v3394, 96
        %v3425 = vpop.permute.xlu0 %3424
        %3426 = vrot.lane.b32.xlu0 %v3395, 96
        %v3427 = vpop.permute.xlu0 %3426
        %v3428 = vunpack.c.l.b16 %v1808
        %v3429 = vunpack.c.l.b16 %v1822
        %v3430 = vunpack.c.l.b16 %v1836
        %v3431 = vunpack.c.l.b16 %v1850
        %v3432 = vunpack.c.l.b16 %v1864
        %v3433 = vunpack.c.l.b16 %v1878
        %v3434 = vunpack.c.l.b16 %v1892
        %v3435 = vunpack.c.l.b16 %v1906
        %v3436 = vunpack.c.l.b16 %v1920
        %v3437 = vunpack.c.l.b16 %v1934
        %v3438 = vunpack.c.l.b16 %v1948
        %v3439 = vunpack.c.l.b16 %v1962
        %v3440 = vunpack.c.l.b16 %v1976
        %v3441 = vunpack.c.l.b16 %v1990
        %v3442 = vunpack.c.l.b16 %v2004
        %v3443 = vunpack.c.l.b16 %v2018
        %v3444 = vunpack.c.l.b16 %v2032
        %v3445 = vunpack.c.l.b16 %v2046
        %v3446 = vunpack.c.l.b16 %v2060
        %v3447 = vunpack.c.l.b16 %v2074
        %v3448 = vunpack.c.l.b16 %v2088
        %v3449 = vunpack.c.l.b16 %v2102
        %v3450 = vunpack.c.l.b16 %v2116
        %v3451 = vunpack.c.l.b16 %v2130
        %v3452 = vunpack.c.l.b16 %v2144
        %v3453 = vunpack.c.l.b16 %v2158
        %v3454 = vunpack.c.l.b16 %v2172
        %v3455 = vunpack.c.l.b16 %v2186
        %v3456 = vunpack.c.l.b16 %v2200
        %v3457 = vunpack.c.l.b16 %v2214
        %v3458 = vunpack.c.l.b16 %v2228
        %v3459 = vunpack.c.l.b16 %v2242
        %v3460 = vpack.c.b16 %v3429, %v3428
        %v3461 = vpack.c.b16 %v3431, %v3430
        %v3462 = vpack.c.b16 %v3433, %v3432
        %v3463 = vpack.c.b16 %v3435, %v3434
        %v3464 = vpack.c.b16 %v3437, %v3436
        %v3465 = vpack.c.b16 %v3439, %v3438
        %v3466 = vpack.c.b16 %v3441, %v3440
        %v3467 = vpack.c.b16 %v3443, %v3442
        %v3468 = vpack.c.b16 %v3445, %v3444
        %v3469 = vpack.c.b16 %v3447, %v3446
        %v3470 = vpack.c.b16 %v3449, %v3448
        %v3471 = vpack.c.b16 %v3451, %v3450
        %v3472 = vpack.c.b16 %v3453, %v3452
        %v3473 = vpack.c.b16 %v3455, %v3454
        %v3474 = vpack.c.b16 %v3457, %v3456
        %v3475 = vpack.c.b16 %v3459, %v3458
        %v3476 = vunpack.c.l.b16 %v2246
        %v3477 = vunpack.c.l.b16 %v2250
        %v3478 = vunpack.c.l.b16 %v2254
        %v3479 = vunpack.c.l.b16 %v2258
        %v3480 = vunpack.c.l.b16 %v2262
        %v3481 = vunpack.c.l.b16 %v2266
        %v3482 = vunpack.c.l.b16 %v2270
        %v3483 = vunpack.c.l.b16 %v2274
        %v3484 = vunpack.c.l.b16 %v2278
        %v3485 = vunpack.c.l.b16 %v2282
        %v3486 = vunpack.c.l.b16 %v2286
        %v3487 = vunpack.c.l.b16 %v2290
        %v3488 = vunpack.c.l.b16 %v2294
        %v3489 = vunpack.c.l.b16 %v2298
        %v3490 = vunpack.c.l.b16 %v2302
        %v3491 = vunpack.c.l.b16 %v2306
        %v3492 = vunpack.c.l.b16 %v2310
        %v3493 = vunpack.c.l.b16 %v2314
        %v3494 = vunpack.c.l.b16 %v2318
        %v3495 = vunpack.c.l.b16 %v2322
        %v3496 = vunpack.c.l.b16 %v2326
        %v3497 = vunpack.c.l.b16 %v2330
        %v3498 = vunpack.c.l.b16 %v2334
        %v3499 = vunpack.c.l.b16 %v2338
        %v3500 = vunpack.c.l.b16 %v2342
        %v3501 = vunpack.c.l.b16 %v2346
        %v3502 = vunpack.c.l.b16 %v2350
        %v3503 = vunpack.c.l.b16 %v2354
        %v3504 = vunpack.c.l.b16 %v2358
        %v3505 = vunpack.c.l.b16 %v2362
        %v3506 = vunpack.c.l.b16 %v2366
        %v3507 = vunpack.c.l.b16 %v2370
        %v3508 = vpack.c.b16 %v3477, %v3476
        %v3509 = vpack.c.b16 %v3479, %v3478
        %v3510 = vpack.c.b16 %v3481, %v3480
        %v3511 = vpack.c.b16 %v3483, %v3482
        %v3512 = vpack.c.b16 %v3485, %v3484
        %v3513 = vpack.c.b16 %v3487, %v3486
        %v3514 = vpack.c.b16 %v3489, %v3488
        %v3515 = vpack.c.b16 %v3491, %v3490
        %v3516 = vpack.c.b16 %v3493, %v3492
        %v3517 = vpack.c.b16 %v3495, %v3494
        %v3518 = vpack.c.b16 %v3497, %v3496
        %v3519 = vpack.c.b16 %v3499, %v3498
        %v3520 = vpack.c.b16 %v3501, %v3500
        %v3521 = vpack.c.b16 %v3503, %v3502
        %v3522 = vpack.c.b16 %v3505, %v3504
        %v3523 = vpack.c.b16 %v3507, %v3506
        %3524 = vrot.lane.b32.xlu0 %v3508, 32
        %v3525 = vpop.permute.xlu0 %3524
        %3526 = vrot.lane.b32.xlu0 %v3509, 32
        %v3527 = vpop.permute.xlu0 %3526
        %3528 = vrot.lane.b32.xlu0 %v3510, 32
        %v3529 = vpop.permute.xlu0 %3528
        %3530 = vrot.lane.b32.xlu0 %v3511, 32
        %v3531 = vpop.permute.xlu0 %3530
        %3532 = vrot.lane.b32.xlu0 %v3512, 32
        %v3533 = vpop.permute.xlu0 %3532
        %3534 = vrot.lane.b32.xlu0 %v3513, 32
        %v3535 = vpop.permute.xlu0 %3534
        %3536 = vrot.lane.b32.xlu0 %v3514, 32
        %v3537 = vpop.permute.xlu0 %3536
        %3538 = vrot.lane.b32.xlu0 %v3515, 32
        %v3539 = vpop.permute.xlu0 %3538
        %3540 = vrot.lane.b32.xlu0 %v3516, 32
        %v3541 = vpop.permute.xlu0 %3540
        %3542 = vrot.lane.b32.xlu0 %v3517, 32
        %v3543 = vpop.permute.xlu0 %3542
        %3544 = vrot.lane.b32.xlu0 %v3518, 32
        %v3545 = vpop.permute.xlu0 %3544
        %3546 = vrot.lane.b32.xlu0 %v3519, 32
        %v3547 = vpop.permute.xlu0 %3546
        %3548 = vrot.lane.b32.xlu0 %v3520, 32
        %v3549 = vpop.permute.xlu0 %3548
        %3550 = vrot.lane.b32.xlu0 %v3521, 32
        %v3551 = vpop.permute.xlu0 %3550
        %3552 = vrot.lane.b32.xlu0 %v3522, 32
        %v3553 = vpop.permute.xlu0 %3552
        %3554 = vrot.lane.b32.xlu0 %v3523, 32
        %v3555 = vpop.permute.xlu0 %3554
        %v3556 = vpack.c.b16 %v2502, %v2500
        %v3557 = vpack.c.b16 %v2506, %v2504
        %v3558 = vpack.c.b16 %v2510, %v2508
        %v3559 = vpack.c.b16 %v2514, %v2512
        %v3560 = vpack.c.b16 %v2518, %v2516
        %v3561 = vpack.c.b16 %v2522, %v2520
        %v3562 = vpack.c.b16 %v2526, %v2524
        %v3563 = vpack.c.b16 %v2530, %v2528
        %v3564 = vpack.c.b16 %v2534, %v2532
        %v3565 = vpack.c.b16 %v2538, %v2536
        %v3566 = vpack.c.b16 %v2542, %v2540
        %v3567 = vpack.c.b16 %v2546, %v2544
        %v3568 = vpack.c.b16 %v2550, %v2548
        %v3569 = vpack.c.b16 %v2554, %v2552
        %v3570 = vpack.c.b16 %v2558, %v2556
        %v3571 = vpack.c.b16 %v2562, %v2560
        %3572 = vrot.lane.b32.xlu0 %v3556, 64
        %v3573 = vpop.permute.xlu0 %3572
        %3574 = vrot.lane.b32.xlu0 %v3557, 64
        %v3575 = vpop.permute.xlu0 %3574
        %3576 = vrot.lane.b32.xlu0 %v3558, 64
        %v3577 = vpop.permute.xlu0 %3576
        %3578 = vrot.lane.b32.xlu0 %v3559, 64
        %v3579 = vpop.permute.xlu0 %3578
        %3580 = vrot.lane.b32.xlu0 %v3560, 64
        %v3581 = vpop.permute.xlu0 %3580
        %3582 = vrot.lane.b32.xlu0 %v3561, 64
        %v3583 = vpop.permute.xlu0 %3582
        %3584 = vrot.lane.b32.xlu0 %v3562, 64
        %v3585 = vpop.permute.xlu0 %3584
        %3586 = vrot.lane.b32.xlu0 %v3563, 64
        %v3587 = vpop.permute.xlu0 %3586
        %3588 = vrot.lane.b32.xlu0 %v3564, 64
        %v3589 = vpop.permute.xlu0 %3588
        %3590 = vrot.lane.b32.xlu0 %v3565, 64
        %v3591 = vpop.permute.xlu0 %3590
        %3592 = vrot.lane.b32.xlu0 %v3566, 64
        %v3593 = vpop.permute.xlu0 %3592
        %3594 = vrot.lane.b32.xlu0 %v3567, 64
        %v3595 = vpop.permute.xlu0 %3594
        %3596 = vrot.lane.b32.xlu0 %v3568, 64
        %v3597 = vpop.permute.xlu0 %3596
        %3598 = vrot.lane.b32.xlu0 %v3569, 64
        %v3599 = vpop.permute.xlu0 %3598
        %3600 = vrot.lane.b32.xlu0 %v3570, 64
        %v3601 = vpop.permute.xlu0 %3600
        %3602 = vrot.lane.b32.xlu0 %v3571, 64
        %v3603 = vpop.permute.xlu0 %3602
        %v3604 = vunpack.c.l.b16 %v2641
        %v3605 = vunpack.c.l.b16 %v2655
        %v3606 = vunpack.c.l.b16 %v2669
        %v3607 = vunpack.c.l.b16 %v2683
        %v3608 = vunpack.c.l.b16 %v2697
        %v3609 = vunpack.c.l.b16 %v2711
        %v3610 = vunpack.c.l.b16 %v2725
        %v3611 = vunpack.c.l.b16 %v2739
        %v3612 = vunpack.c.l.b16 %v2753
        %v3613 = vunpack.c.l.b16 %v2767
        %v3614 = vunpack.c.l.b16 %v2781
        %v3615 = vunpack.c.l.b16 %v2795
        %v3616 = vunpack.c.l.b16 %v2809
        %v3617 = vunpack.c.l.b16 %v2823
        %v3618 = vunpack.c.l.b16 %v2837
        %v3619 = vunpack.c.l.b16 %v2851
        %v3620 = vunpack.c.l.b16 %v2865
        %v3621 = vunpack.c.l.b16 %v2879
        %v3622 = vunpack.c.l.b16 %v2893
        %v3623 = vunpack.c.l.b16 %v2907
        %v3624 = vunpack.c.l.b16 %v2921
        %v3625 = vunpack.c.l.b16 %v2935
        %v3626 = vunpack.c.l.b16 %v2949
        %v3627 = vunpack.c.l.b16 %v2963
        %v3628 = vunpack.c.l.b16 %v2977
        %v3629 = vunpack.c.l.b16 %v2991
        %v3630 = vunpack.c.l.b16 %v3005
        %v3631 = vunpack.c.l.b16 %v3019
        %v3632 = vunpack.c.l.b16 %v3033
        %v3633 = vunpack.c.l.b16 %v3047
        %v3634 = vunpack.c.l.b16 %v3061
        %v3635 = vunpack.c.l.b16 %v3075
        %v3636 = vpack.c.b16 %v3605, %v3604
        %v3637 = vpack.c.b16 %v3607, %v3606
        %v3638 = vpack.c.b16 %v3609, %v3608
        %v3639 = vpack.c.b16 %v3611, %v3610
        %v3640 = vpack.c.b16 %v3613, %v3612
        %v3641 = vpack.c.b16 %v3615, %v3614
        %v3642 = vpack.c.b16 %v3617, %v3616
        %v3643 = vpack.c.b16 %v3619, %v3618
        %v3644 = vpack.c.b16 %v3621, %v3620
        %v3645 = vpack.c.b16 %v3623, %v3622
        %v3646 = vpack.c.b16 %v3625, %v3624
        %v3647 = vpack.c.b16 %v3627, %v3626
        %v3648 = vpack.c.b16 %v3629, %v3628
        %v3649 = vpack.c.b16 %v3631, %v3630
        %v3650 = vpack.c.b16 %v3633, %v3632
        %v3651 = vpack.c.b16 %v3635, %v3634
        %3652 = vrot.lane.b32.xlu0 %v3636, 96
        %v3653 = vpop.permute.xlu0 %3652
        %3654 = vrot.lane.b32.xlu0 %v3637, 96
        %v3655 = vpop.permute.xlu0 %3654
        %3656 = vrot.lane.b32.xlu0 %v3638, 96
        %v3657 = vpop.permute.xlu0 %3656
        %3658 = vrot.lane.b32.xlu0 %v3639, 96
        %v3659 = vpop.permute.xlu0 %3658
        %3660 = vrot.lane.b32.xlu0 %v3640, 96
        %v3661 = vpop.permute.xlu0 %3660
        %3662 = vrot.lane.b32.xlu0 %v3641, 96
        %v3663 = vpop.permute.xlu0 %3662
        %3664 = vrot.lane.b32.xlu0 %v3642, 96
        %v3665 = vpop.permute.xlu0 %3664
        %3666 = vrot.lane.b32.xlu0 %v3643, 96
        %v3667 = vpop.permute.xlu0 %3666
        %3668 = vrot.lane.b32.xlu0 %v3644, 96
        %v3669 = vpop.permute.xlu0 %3668
        %3670 = vrot.lane.b32.xlu0 %v3645, 96
        %v3671 = vpop.permute.xlu0 %3670
        %3672 = vrot.lane.b32.xlu0 %v3646, 96
        %v3673 = vpop.permute.xlu0 %3672
        %3674 = vrot.lane.b32.xlu0 %v3647, 96
        %v3675 = vpop.permute.xlu0 %3674
        %3676 = vrot.lane.b32.xlu0 %v3648, 96
        %v3677 = vpop.permute.xlu0 %3676
        %3678 = vrot.lane.b32.xlu0 %v3649, 96
        %v3679 = vpop.permute.xlu0 %3678
        %3680 = vrot.lane.b32.xlu0 %v3650, 96
        %v3681 = vpop.permute.xlu0 %3680
        %3682 = vrot.lane.b32.xlu0 %v3651, 96
        %v3683 = vpop.permute.xlu0 %3682
        %v3684 = vunpack.c.l.b16 %v3079
        %v3685 = vunpack.c.l.b16 %v3083
        %v3686 = vunpack.c.l.b16 %v3087
        %v3687 = vunpack.c.l.b16 %v3091
        %v3688 = vunpack.c.l.b16 %v3095
        %v3689 = vunpack.c.l.b16 %v3099
        %v3690 = vunpack.c.l.b16 %v3103
        %v3691 = vunpack.c.l.b16 %v3107
        %v3692 = vunpack.c.l.b16 %v3111
        %v3693 = vunpack.c.l.b16 %v3115
        %v3694 = vunpack.c.l.b16 %v3119
        %v3695 = vunpack.c.l.b16 %v3123
        %v3696 = vunpack.c.l.b16 %v3127
        %v3697 = vunpack.c.l.b16 %v3131
        %v3698 = vunpack.c.l.b16 %v3135
        %v3699 = vunpack.c.l.b16 %v3139
        %v3700 = vunpack.c.l.b16 %v3143
        %v3701 = vunpack.c.l.b16 %v3147
        %v3702 = vunpack.c.l.b16 %v3151
        %v3703 = vunpack.c.l.b16 %v3155
        %v3704 = vunpack.c.l.b16 %v3159
        %v3705 = vunpack.c.l.b16 %v3163
        %v3706 = vunpack.c.l.b16 %v3167
        %v3707 = vunpack.c.l.b16 %v3171
        %v3708 = vunpack.c.l.b16 %v3175
        %v3709 = vunpack.c.l.b16 %v3179
        %v3710 = vunpack.c.l.b16 %v3183
        %v3711 = vunpack.c.l.b16 %v3187
        %v3712 = vunpack.c.l.b16 %v3191
        %v3713 = vunpack.c.l.b16 %v3195
        %v3714 = vunpack.c.l.b16 %v3199
        %v3715 = vunpack.c.l.b16 %v3203
        %v3716 = vpack.c.b16 %v3685, %v3684
        %v3717 = vpack.c.b16 %v3687, %v3686
        %v3718 = vpack.c.b16 %v3689, %v3688
        %v3719 = vpack.c.b16 %v3691, %v3690
        %v3720 = vpack.c.b16 %v3693, %v3692
        %v3721 = vpack.c.b16 %v3695, %v3694
        %v3722 = vpack.c.b16 %v3697, %v3696
        %v3723 = vpack.c.b16 %v3699, %v3698
        %v3724 = vpack.c.b16 %v3701, %v3700
        %v3725 = vpack.c.b16 %v3703, %v3702
        %v3726 = vpack.c.b16 %v3705, %v3704
        %v3727 = vpack.c.b16 %v3707, %v3706
        %v3728 = vpack.c.b16 %v3709, %v3708
        %v3729 = vpack.c.b16 %v3711, %v3710
        %v3730 = vpack.c.b16 %v3713, %v3712
        %v3731 = vpack.c.b16 %v3715, %v3714
        %v3734 = vsel %vm377, %v3204, %v3269
        %v3737 = vsel %vm377, %v3205, %v3271
        %v3740 = vsel %vm377, %v3206, %v3273
        %v3743 = vsel %vm377, %v3207, %v3275
        %v3746 = vsel %vm377, %v3208, %v3277
        %v3749 = vsel %vm377, %v3209, %v3279
        %v3752 = vsel %vm377, %v3210, %v3281
        %v3755 = vsel %vm377, %v3211, %v3283
        %v3758 = vsel %vm377, %v3212, %v3285
        %v3761 = vsel %vm377, %v3213, %v3287
        %v3764 = vsel %vm377, %v3214, %v3289
        %v3767 = vsel %vm377, %v3215, %v3291
        %v3770 = vsel %vm377, %v3216, %v3293
        %v3773 = vsel %vm377, %v3217, %v3295
        %v3776 = vsel %vm377, %v3218, %v3297
        %v3779 = vsel %vm377, %v3219, %v3299
        %v3781 = vsel %vm483, %v3734, %v3349
        %v3783 = vsel %vm483, %v3737, %v3351
        %v3785 = vsel %vm483, %v3740, %v3353
        %v3787 = vsel %vm483, %v3743, %v3355
        %v3789 = vsel %vm483, %v3746, %v3357
        %v3791 = vsel %vm483, %v3749, %v3359
        %v3793 = vsel %vm483, %v3752, %v3361
        %v3795 = vsel %vm483, %v3755, %v3363
        %v3797 = vsel %vm483, %v3758, %v3365
        %v3799 = vsel %vm483, %v3761, %v3367
        %v3801 = vsel %vm483, %v3764, %v3369
        %v3803 = vsel %vm483, %v3767, %v3371
        %v3805 = vsel %vm483, %v3770, %v3373
        %v3807 = vsel %vm483, %v3773, %v3375
        %v3809 = vsel %vm483, %v3776, %v3377
        %v3811 = vsel %vm483, %v3779, %v3379
        %vm3812 = vcmask 785408
        %v3814 = vsel %vm3812, %v3781, %v3397
        %v3817 = vsel %vm3812, %v3783, %v3399
        %v3820 = vsel %vm3812, %v3785, %v3401
        %v3823 = vsel %vm3812, %v3787, %v3403
        %v3826 = vsel %vm3812, %v3789, %v3405
        %v3829 = vsel %vm3812, %v3791, %v3407
        %v3832 = vsel %vm3812, %v3793, %v3409
        %v3835 = vsel %vm3812, %v3795, %v3411
        %v3838 = vsel %vm3812, %v3797, %v3413
        %v3841 = vsel %vm3812, %v3799, %v3415
        %v3844 = vsel %vm3812, %v3801, %v3417
        %v3847 = vsel %vm3812, %v3803, %v3419
        %v3850 = vsel %vm3812, %v3805, %v3421
        %v3853 = vsel %vm3812, %v3807, %v3423
        %v3856 = vsel %vm3812, %v3809, %v3425
        %v3859 = vsel %vm3812, %v3811, %v3427
        %v3863 = vsel %vm377, %v3460, %v3525
        %v3866 = vsel %vm377, %v3461, %v3527
        %v3869 = vsel %vm377, %v3462, %v3529
        %v3872 = vsel %vm377, %v3463, %v3531
        %v3875 = vsel %vm377, %v3464, %v3533
        %v3878 = vsel %vm377, %v3465, %v3535
        %v3881 = vsel %vm377, %v3466, %v3537
        %v3884 = vsel %vm377, %v3467, %v3539
        %v3887 = vsel %vm377, %v3468, %v3541
        %v3890 = vsel %vm377, %v3469, %v3543
        %v3893 = vsel %vm377, %v3470, %v3545
        %v3896 = vsel %vm377, %v3471, %v3547
        %v3899 = vsel %vm377, %v3472, %v3549
        %v3902 = vsel %vm377, %v3473, %v3551
        %v3905 = vsel %vm377, %v3474, %v3553
        %v3908 = vsel %vm377, %v3475, %v3555
        %v3910 = vsel %vm483, %v3863, %v3573
        %v3912 = vsel %vm483, %v3866, %v3575
        %v3914 = vsel %vm483, %v3869, %v3577
        %v3916 = vsel %vm483, %v3872, %v3579
        %v3918 = vsel %vm483, %v3875, %v3581
        %v3920 = vsel %vm483, %v3878, %v3583
        %v3922 = vsel %vm483, %v3881, %v3585
        %v3924 = vsel %vm483, %v3884, %v3587
        %v3926 = vsel %vm483, %v3887, %v3589
        %v3928 = vsel %vm483, %v3890, %v3591
        %v3930 = vsel %vm483, %v3893, %v3593
        %v3932 = vsel %vm483, %v3896, %v3595
        %v3934 = vsel %vm483, %v3899, %v3597
        %v3936 = vsel %vm483, %v3902, %v3599
        %v3938 = vsel %vm483, %v3905, %v3601
        %v3940 = vsel %vm483, %v3908, %v3603
        %v3942 = vsel %vm3812, %v3910, %v3653
        %v3945 = vsel %vm3812, %v3912, %v3655
        %v3948 = vsel %vm3812, %v3914, %v3657
        %v3951 = vsel %vm3812, %v3916, %v3659
        %v3954 = vsel %vm3812, %v3918, %v3661
        %v3957 = vsel %vm3812, %v3920, %v3663
        %v3960 = vsel %vm3812, %v3922, %v3665
        %v3963 = vsel %vm3812, %v3924, %v3667
        %v3966 = vsel %vm3812, %v3926, %v3669
        %v3969 = vsel %vm3812, %v3928, %v3671
        %v3972 = vsel %vm3812, %v3930, %v3673
        %v3975 = vsel %vm3812, %v3932, %v3675
        %v3978 = vsel %vm3812, %v3934, %v3677
        %v3981 = vsel %vm3812, %v3936, %v3679
        %v3984 = vsel %vm3812, %v3938, %v3681
        %v3987 = vsel %vm3812, %v3940, %v3683
        %v3989 = vld [vmem:[%s1] sm:$0xf]
        %v3990 = vld [vmem:[%s1 + $0x4] sm:$0xf]
        %v3991 = vld [vmem:[%s1 + $0x8] sm:$0xf]
        %v3992 = vld [vmem:[%s1 + $0xc] sm:$0xf]
        %v3993 = vld [vmem:[%s1 + $0x10] sm:$0xf]
        %v3994 = vld [vmem:[%s1 + $0x14] sm:$0xf]
        %v3995 = vld [vmem:[%s1 + $0x18] sm:$0xf]
        %v3996 = vld [vmem:[%s1 + $0x1c] sm:$0xf]
        %v3997 = vld [vmem:[%s1 + $0x20] sm:$0xf]
        %v3998 = vld [vmem:[%s1 + $0x24] sm:$0xf]
        %v3999 = vld [vmem:[%s1 + $0x28] sm:$0xf]
        %v4000 = vld [vmem:[%s1 + $0x2c] sm:$0xf]
        %v4001 = vld [vmem:[%s1 + $0x30] sm:$0xf]
        %v4002 = vld [vmem:[%s1 + $0x34] sm:$0xf]
        %v4003 = vld [vmem:[%s1 + $0x38] sm:$0xf]
        %v4004 = vld [vmem:[%s1 + $0x3c] sm:$0xf]
        %v4005 = vld [vmem:[%s1 + $0x40] sm:$0xf]
        %v4006 = vld [vmem:[%s1 + $0x44] sm:$0xf]
        %v4007 = vld [vmem:[%s1 + $0x48] sm:$0xf]
        %v4008 = vld [vmem:[%s1 + $0x4c] sm:$0xf]
        %v4009 = vld [vmem:[%s1 + $0x50] sm:$0xf]
        %v4010 = vld [vmem:[%s1 + $0x54] sm:$0xf]
        %v4011 = vld [vmem:[%s1 + $0x58] sm:$0xf]
        %v4012 = vld [vmem:[%s1 + $0x5c] sm:$0xf]
        %v4013 = vld [vmem:[%s1 + $0x60] sm:$0xf]
        %v4014 = vld [vmem:[%s1 + $0x64] sm:$0xf]
        %v4015 = vld [vmem:[%s1 + $0x68] sm:$0xf]
        %v4016 = vld [vmem:[%s1 + $0x6c] sm:$0xf]
        %v4017 = vld [vmem:[%s1 + $0x70] sm:$0xf]
        %v4018 = vld [vmem:[%s1 + $0x74] sm:$0xf]
        %v4019 = vld [vmem:[%s1 + $0x78] sm:$0xf]
        %v4020 = vld [vmem:[%s1 + $0x7c] sm:$0xf]
        %v4021 = vld [vmem:[%s1 + $0x80] sm:$0xf]
        %v4022 = vld [vmem:[%s1 + $0x84] sm:$0xf]
        %v4023 = vld [vmem:[%s1 + $0x88] sm:$0xf]
        %v4024 = vld [vmem:[%s1 + $0x8c] sm:$0xf]
        %v4025 = vld [vmem:[%s2] sm:$0x1]
        %v4027 = vlaneseq
        %v4028 = vshrl.u32 %v4027, 7
        %v4029 = vsub.s32 0, %v4028
        %v4030 = vrot.slane %v4025, %v4029
        %v4068 = vunpack.c.l.b16 %v3989
        %v4069 = vunpack.c.l.b16 %v3990
        %v4070 = vunpack.c.l.b16 %v3991
        %v4071 = vunpack.c.l.b16 %v3992
        %v4072 = vunpack.c.l.b16 %v3993
        %v4073 = vunpack.c.l.b16 %v3994
        %v4074 = vunpack.c.l.b16 %v3995
        %v4075 = vunpack.c.l.b16 %v3996
        %v4076 = vunpack.c.l.b16 %v3997
        %v4077 = vunpack.c.l.b16 %v3998
        %v4078 = vunpack.c.l.b16 %v3999
        %v4079 = vunpack.c.l.b16 %v4000
        %v4080 = vunpack.c.l.b16 %v4001
        %v4081 = vunpack.c.l.b16 %v4002
        %v4082 = vunpack.c.l.b16 %v4003
        %v4083 = vunpack.c.l.b16 %v4004
        %v4084 = vunpack.c.l.b16 %v4005
        %v4085 = vunpack.c.l.b16 %v4006
        %v4086 = vunpack.c.l.b16 %v4007
        %v4087 = vunpack.c.l.b16 %v4008
        %v4088 = vunpack.c.l.b16 %v4009
        %v4089 = vunpack.c.l.b16 %v4010
        %v4090 = vunpack.c.l.b16 %v4011
        %v4091 = vunpack.c.l.b16 %v4012
        %v4092 = vunpack.c.l.b16 %v4013
        %v4093 = vunpack.c.l.b16 %v4014
        %v4094 = vunpack.c.l.b16 %v4015
        %v4095 = vunpack.c.l.b16 %v4016
        %v4096 = vunpack.c.l.b16 %v4017
        %v4097 = vunpack.c.l.b16 %v4018
        %v4098 = vunpack.c.l.b16 %v4019
        %v4099 = vunpack.c.l.b16 %v4020
        %v4100 = vunpack.c.l.b16 %v4021
        %v4101 = vunpack.c.l.b16 %v4022
        %v4102 = vunpack.c.l.b16 %v4023
        %v4103 = vunpack.c.l.b16 %v4024
        %v4104 = vpack.c.b16 %v4069, %v4068
        %v4105 = vpack.c.b16 %v4071, %v4070
        %v4106 = vpack.c.b16 %v4073, %v4072
        %v4107 = vpack.c.b16 %v4075, %v4074
        %v4108 = vpack.c.b16 %v4077, %v4076
        %v4109 = vpack.c.b16 %v4079, %v4078
        %v4110 = vpack.c.b16 %v4081, %v4080
        %v4111 = vpack.c.b16 %v4083, %v4082
        %v4112 = vpack.c.b16 %v4085, %v4084
        %v4113 = vpack.c.b16 %v4087, %v4086
        %v4114 = vpack.c.b16 %v4089, %v4088
        %v4115 = vpack.c.b16 %v4091, %v4090
        %v4116 = vpack.c.b16 %v4093, %v4092
        %v4117 = vpack.c.b16 %v4095, %v4094
        %v4118 = vpack.c.b16 %v4097, %v4096
        %v4119 = vpack.c.b16 %v4099, %v4098
        %v4120 = vpack.c.b16 %v4101, %v4100
        %v4121 = vpack.c.b16 %v4103, %v4102
        %v4141 = vsel %vm377, %v3716, 0
        %v4144 = vsel %vm377, %v3717, 0
        %v4147 = vsel %vm377, %v3718, 0
        %v4150 = vsel %vm377, %v3719, 0
        %v4153 = vsel %vm377, %v3720, 0
        %v4156 = vsel %vm377, %v3721, 0
        %v4159 = vsel %vm377, %v3722, 0
        %v4162 = vsel %vm377, %v3723, 0
        %v4165 = vsel %vm377, %v3724, 0
        %v4168 = vsel %vm377, %v3725, 0
        %v4171 = vsel %vm377, %v3726, 0
        %v4174 = vsel %vm377, %v3727, 0
        %v4177 = vsel %vm377, %v3728, 0
        %v4180 = vsel %vm377, %v3729, 0
        %v4183 = vsel %vm377, %v3730, 0
        %v4186 = vsel %vm377, %v3731, 0
        %4188 = vmatprep.subr.bf16.mxu0 0
        %4189 = vmatpush1.bf16.msra.mxu0 %v4104
        %4190 = vmatprep.subr.bf16.mxu0 0
        %4191 = vmatpush1.bf16.msra.mxu0 %v4105
        %4192 = vmatprep.subr.bf16.mxu0 0
        %4193 = vmatpush1.bf16.msra.mxu0 %v4106
        %4194 = vmatprep.subr.bf16.mxu0 0
        %4195 = vmatpush1.bf16.msra.mxu0 %v4107
        %4196 = vmatprep.subr.bf16.mxu0 0
        %4197 = vmatpush1.bf16.msra.mxu0 %v4108
        %4198 = vmatprep.subr.bf16.mxu0 0
        %4199 = vmatpush1.bf16.msra.mxu0 %v4109
        %4200 = vmatprep.subr.bf16.mxu0 0
        %4201 = vmatpush1.bf16.msra.mxu0 %v4110
        %4202 = vmatprep.subr.bf16.mxu0 0
        %4203 = vmatpush1.bf16.msra.mxu0 %v4111
        %4204 = vmatprep.subr.bf16.mxu0 0
        %4205 = vmatpush1.bf16.msra.mxu0 %v4112
        %4206 = vmatprep.subr.bf16.mxu0 0
        %4207 = vmatpush1.bf16.msra.mxu0 %v4113
        %4208 = vmatprep.subr.bf16.mxu0 0
        %4209 = vmatpush1.bf16.msra.mxu0 %v4114
        %4210 = vmatprep.subr.bf16.mxu0 0
        %4211 = vmatpush1.bf16.msra.mxu0 %v4115
        %4212 = vmatprep.subr.bf16.mxu0 0
        %4213 = vmatpush1.bf16.msra.mxu0 %v4116
        %4214 = vmatprep.subr.bf16.mxu0 0
        %4215 = vmatpush1.bf16.msra.mxu0 %v4117
        %4216 = vmatprep.subr.bf16.mxu0 0
        %4217 = vmatpush1.bf16.msra.mxu0 %v4118
        %4218 = vmatprep.subr.bf16.mxu0 0
        %4219 = vmatpush1.bf16.msra.mxu0 %v4119
        %4220 = vmatprep.mubr.bf16.mxu0 %v3942
        %4221 = vmatmul.mubr.bf16.gmra.mrb[0].mxu0 %v3814
        %v4222 = vpop.f32.mrb[0].mxu0
        %v4223 = vadd.f32 %v4030, %v4222
        %v4224 = vpop.f32.mrb[0].mxu0
        %v4225 = vpop.f32.mrb[0].mxu0
        %v4226 = vadd.f32 %v4030, %v4225
        %v4227 = vpop.f32.mrb[0].mxu0
        %4228 = vmatprep.mubr.bf16.mxu0 %v3945
        %4229 = vmatmul.mubr.bf16.gmra.mrb[0].mxu0 %v3817
        %v4230 = vpop.f32.mrb[0].mxu0
        %v4231 = vadd.f32 %v4030, %v4230
        %v4232 = vpop.f32.mrb[0].mxu0
        %v4233 = vpop.f32.mrb[0].mxu0
        %v4234 = vadd.f32 %v4030, %v4233
        %v4235 = vpop.f32.mrb[0].mxu0
        %4236 = vmatprep.mubr.bf16.mxu0 %v3948
        %4237 = vmatmul.mubr.bf16.gmra.mrb[0].mxu0 %v3820
        %v4238 = vpop.f32.mrb[0].mxu0
        %v4239 = vadd.f32 %v4030, %v4238
        %v4240 = vpop.f32.mrb[0].mxu0
        %v4241 = vpop.f32.mrb[0].mxu0
        %v4242 = vadd.f32 %v4030, %v4241
        %v4243 = vpop.f32.mrb[0].mxu0
        %4244 = vmatprep.mubr.bf16.mxu0 %v3951
        %4245 = vmatmul.mubr.bf16.gmra.mrb[0].mxu0 %v3823
        %v4246 = vpop.f32.mrb[0].mxu0
        %v4247 = vadd.f32 %v4030, %v4246
        %v4248 = vpop.f32.mrb[0].mxu0
        %v4249 = vpop.f32.mrb[0].mxu0
        %v4250 = vadd.f32 %v4030, %v4249
        %v4251 = vpop.f32.mrb[0].mxu0
        %4252 = vmatprep.mubr.bf16.mxu0 %v3954
        %4253 = vmatmul.mubr.bf16.gmra.mrb[0].mxu0 %v3826
        %v4254 = vpop.f32.mrb[0].mxu0
        %v4255 = vadd.f32 %v4030, %v4254
        %v4256 = vpop.f32.mrb[0].mxu0
        %v4257 = vpop.f32.mrb[0].mxu0
        %v4258 = vadd.f32 %v4030, %v4257
        %v4259 = vpop.f32.mrb[0].mxu0
        %4260 = vmatprep.mubr.bf16.mxu0 %v3957
        %4261 = vmatmul.mubr.bf16.gmra.mrb[0].mxu0 %v3829
        %v4262 = vpop.f32.mrb[0].mxu0
        %v4263 = vadd.f32 %v4030, %v4262
        %v4264 = vpop.f32.mrb[0].mxu0
        %v4265 = vpop.f32.mrb[0].mxu0
        %v4266 = vadd.f32 %v4030, %v4265
        %v4267 = vpop.f32.mrb[0].mxu0
        %4268 = vmatprep.mubr.bf16.mxu0 %v3960
        %4269 = vmatmul.mubr.bf16.gmra.mrb[0].mxu0 %v3832
        %v4270 = vpop.f32.mrb[0].mxu0
        %v4271 = vadd.f32 %v4030, %v4270
        %v4272 = vpop.f32.mrb[0].mxu0
        %v4273 = vpop.f32.mrb[0].mxu0
        %v4274 = vadd.f32 %v4030, %v4273
        %v4275 = vpop.f32.mrb[0].mxu0
        %4276 = vmatprep.mubr.bf16.mxu0 %v3963
        %4277 = vmatmul.mubr.bf16.gmra.mrb[0].mxu0 %v3835
        %v4278 = vpop.f32.mrb[0].mxu0
        %v4279 = vadd.f32 %v4030, %v4278
        %v4280 = vpop.f32.mrb[0].mxu0
        %v4281 = vpop.f32.mrb[0].mxu0
        %v4282 = vadd.f32 %v4030, %v4281
        %v4283 = vpop.f32.mrb[0].mxu0
        %4284 = vmatprep.mubr.bf16.mxu0 %v3966
        %4285 = vmatmul.mubr.bf16.gmra.mrb[0].mxu0 %v3838
        %v4286 = vpop.f32.mrb[0].mxu0
        %v4287 = vadd.f32 %v4030, %v4286
        %v4288 = vpop.f32.mrb[0].mxu0
        %v4289 = vpop.f32.mrb[0].mxu0
        %v4290 = vadd.f32 %v4030, %v4289
        %v4291 = vpop.f32.mrb[0].mxu0
        %4292 = vmatprep.mubr.bf16.mxu0 %v3969
        %4293 = vmatmul.mubr.bf16.gmra.mrb[0].mxu0 %v3841
        %v4294 = vpop.f32.mrb[0].mxu0
        %v4295 = vadd.f32 %v4030, %v4294
        %v4296 = vpop.f32.mrb[0].mxu0
        %v4297 = vpop.f32.mrb[0].mxu0
        %v4298 = vadd.f32 %v4030, %v4297
        %v4299 = vpop.f32.mrb[0].mxu0
        %4300 = vmatprep.mubr.bf16.mxu0 %v3972
        %4301 = vmatmul.mubr.bf16.gmra.mrb[0].mxu0 %v3844
        %v4302 = vpop.f32.mrb[0].mxu0
        %v4303 = vadd.f32 %v4030, %v4302
        %v4304 = vpop.f32.mrb[0].mxu0
        %v4305 = vpop.f32.mrb[0].mxu0
        %v4306 = vadd.f32 %v4030, %v4305
        %v4307 = vpop.f32.mrb[0].mxu0
        %4308 = vmatprep.mubr.bf16.mxu0 %v3975
        %4309 = vmatmul.mubr.bf16.gmra.mrb[0].mxu0 %v3847
        %v4310 = vpop.f32.mrb[0].mxu0
        %v4311 = vadd.f32 %v4030, %v4310
        %v4312 = vpop.f32.mrb[0].mxu0
        %v4313 = vpop.f32.mrb[0].mxu0
        %v4314 = vadd.f32 %v4030, %v4313
        %v4315 = vpop.f32.mrb[0].mxu0
        %4316 = vmatprep.mubr.bf16.mxu0 %v3978
        %4317 = vmatmul.mubr.bf16.gmra.mrb[0].mxu0 %v3850
        %v4318 = vpop.f32.mrb[0].mxu0
        %v4319 = vadd.f32 %v4030, %v4318
        %v4320 = vpop.f32.mrb[0].mxu0
        %v4321 = vpop.f32.mrb[0].mxu0
        %v4322 = vadd.f32 %v4030, %v4321
        %v4323 = vpop.f32.mrb[0].mxu0
        %4324 = vmatprep.mubr.bf16.mxu0 %v3981
        %4325 = vmatmul.mubr.bf16.gmra.mrb[0].mxu0 %v3853
        %v4326 = vpop.f32.mrb[0].mxu0
        %v4327 = vadd.f32 %v4030, %v4326
        %v4328 = vpop.f32.mrb[0].mxu0
        %v4329 = vpop.f32.mrb[0].mxu0
        %v4330 = vadd.f32 %v4030, %v4329
        %v4331 = vpop.f32.mrb[0].mxu0
        %4332 = vmatprep.mubr.bf16.mxu0 %v3984
        %4333 = vmatmul.mubr.bf16.gmra.mrb[0].mxu0 %v3856
        %v4334 = vpop.f32.mrb[0].mxu0
        %v4335 = vadd.f32 %v4030, %v4334
        %v4336 = vpop.f32.mrb[0].mxu0
        %v4337 = vpop.f32.mrb[0].mxu0
        %v4338 = vadd.f32 %v4030, %v4337
        %v4339 = vpop.f32.mrb[0].mxu0
        %4340 = vmatprep.mubr.bf16.mxu0 %v3987
        %4341 = vmatmul.mubr.bf16.gmra.mrb[0].mxu0 %v3859
        %v4342 = vpop.f32.mrb[0].mxu0
        %v4343 = vadd.f32 %v4030, %v4342
        %v4344 = vpop.f32.mrb[0].mxu0
        %v4345 = vpop.f32.mrb[0].mxu0
        %v4346 = vadd.f32 %v4030, %v4345
        %v4347 = vpop.f32.mrb[0].mxu0
        %4348 = vdwg.mxu0
        %4349 = vmatprep.subr.bf16.mxu0 0
        %4350 = vmatpush1.bf16.msra.mxu0 %v4120
        %4351 = vmatprep.subr.bf16.mxu0 0
        %4352 = vmatpush1.bf16.msra.mxu0 %v4121
        %4353 = vmatprep.subr.bf16.mxu0 0
        %4354 = vmatpush1.bf16.msra.mxu0 0
        %4355 = vmatprep.subr.bf16.mxu0 0
        %4356 = vmatpush1.bf16.msra.mxu0 0
        %4357 = vmatprep.subr.bf16.mxu0 0
        %4358 = vmatpush1.bf16.msra.mxu0 0
        %4359 = vmatprep.subr.bf16.mxu0 0
        %4360 = vmatpush1.bf16.msra.mxu0 0
        %4361 = vmatprep.subr.bf16.mxu0 0
        %4362 = vmatpush1.bf16.msra.mxu0 0
        %4363 = vmatprep.subr.bf16.mxu0 0
        %4364 = vmatpush1.bf16.msra.mxu0 0
        %4365 = vmatprep.subr.bf16.mxu0 0
        %4366 = vmatpush1.bf16.msra.mxu0 0
        %4367 = vmatprep.subr.bf16.mxu0 0
        %4368 = vmatpush1.bf16.msra.mxu0 0
        %4369 = vmatprep.subr.bf16.mxu0 0
        %4370 = vmatpush1.bf16.msra.mxu0 0
        %4371 = vmatprep.subr.bf16.mxu0 0
        %4372 = vmatpush1.bf16.msra.mxu0 0
        %4373 = vmatprep.subr.bf16.mxu0 0
        %4374 = vmatpush1.bf16.msra.mxu0 0
        %4375 = vmatprep.subr.bf16.mxu0 0
        %4376 = vmatpush1.bf16.msra.mxu0 0
        %4377 = vmatprep.subr.bf16.mxu0 0
        %4378 = vmatpush1.bf16.msra.mxu0 0
        %4379 = vmatprep.subr.bf16.mxu0 0
        %4380 = vmatpush1.bf16.msra.mxu0 0
        %4381 = vmatprep.mubr.bf16.mxu0 0
        %4382 = vmatmul.mubr.bf16.gmra.mrb[0].mxu0 %v4141
        %v4383 = vpop.f32.mrb[0].mxu0
        %v4384 = vadd.f32 %v4223, %v4383
        %v4385 = vpop.f32.mrb[0].mxu0
        %v4386 = vpop.f32.mrb[0].mxu0
        %v4387 = vadd.f32 %v4226, %v4386
        %v4388 = vpop.f32.mrb[0].mxu0
        %4389 = vmatprep.mubr.bf16.mxu0 0
        %4390 = vmatmul.mubr.bf16.gmra.mrb[0].mxu0 %v4144
        %v4391 = vpop.f32.mrb[0].mxu0
        %v4392 = vadd.f32 %v4231, %v4391
        %v4393 = vpop.f32.mrb[0].mxu0
        %v4394 = vpop.f32.mrb[0].mxu0
        %v4395 = vadd.f32 %v4234, %v4394
        %v4396 = vpop.f32.mrb[0].mxu0
        %4397 = vmatprep.mubr.bf16.mxu0 0
        %4398 = vmatmul.mubr.bf16.gmra.mrb[0].mxu0 %v4147
        %v4399 = vpop.f32.mrb[0].mxu0
        %v4400 = vadd.f32 %v4239, %v4399
        %v4401 = vpop.f32.mrb[0].mxu0
        %v4402 = vpop.f32.mrb[0].mxu0
        %v4403 = vadd.f32 %v4242, %v4402
        %v4404 = vpop.f32.mrb[0].mxu0
        %4405 = vmatprep.mubr.bf16.mxu0 0
        %4406 = vmatmul.mubr.bf16.gmra.mrb[0].mxu0 %v4150
        %v4407 = vpop.f32.mrb[0].mxu0
        %v4408 = vadd.f32 %v4247, %v4407
        %v4409 = vpop.f32.mrb[0].mxu0
        %v4410 = vpop.f32.mrb[0].mxu0
        %v4411 = vadd.f32 %v4250, %v4410
        %v4412 = vpop.f32.mrb[0].mxu0
        %4413 = vmatprep.mubr.bf16.mxu0 0
        %4414 = vmatmul.mubr.bf16.gmra.mrb[0].mxu0 %v4153
        %v4415 = vpop.f32.mrb[0].mxu0
        %v4416 = vadd.f32 %v4255, %v4415
        %v4417 = vpop.f32.mrb[0].mxu0
        %v4418 = vpop.f32.mrb[0].mxu0
        %v4419 = vadd.f32 %v4258, %v4418
        %v4420 = vpop.f32.mrb[0].mxu0
        %4421 = vmatprep.mubr.bf16.mxu0 0
        %4422 = vmatmul.mubr.bf16.gmra.mrb[0].mxu0 %v4156
        %v4423 = vpop.f32.mrb[0].mxu0
        %v4424 = vadd.f32 %v4263, %v4423
        %v4425 = vpop.f32.mrb[0].mxu0
        %v4426 = vpop.f32.mrb[0].mxu0
        %v4427 = vadd.f32 %v4266, %v4426
        %v4428 = vpop.f32.mrb[0].mxu0
        %4429 = vmatprep.mubr.bf16.mxu0 0
        %4430 = vmatmul.mubr.bf16.gmra.mrb[0].mxu0 %v4159
        %v4431 = vpop.f32.mrb[0].mxu0
        %v4432 = vadd.f32 %v4271, %v4431
        %v4433 = vpop.f32.mrb[0].mxu0
        %v4434 = vpop.f32.mrb[0].mxu0
        %v4435 = vadd.f32 %v4274, %v4434
        %v4436 = vpop.f32.mrb[0].mxu0
        %4437 = vmatprep.mubr.bf16.mxu0 0
        %4438 = vmatmul.mubr.bf16.gmra.mrb[0].mxu0 %v4162
        %v4439 = vpop.f32.mrb[0].mxu0
        %v4440 = vadd.f32 %v4279, %v4439
        %v4441 = vpop.f32.mrb[0].mxu0
        %v4442 = vpop.f32.mrb[0].mxu0
        %v4443 = vadd.f32 %v4282, %v4442
        %v4444 = vpop.f32.mrb[0].mxu0
        %4445 = vmatprep.mubr.bf16.mxu0 0
        %4446 = vmatmul.mubr.bf16.gmra.mrb[0].mxu0 %v4165
        %v4447 = vpop.f32.mrb[0].mxu0
        %v4448 = vadd.f32 %v4287, %v4447
        %v4449 = vpop.f32.mrb[0].mxu0
        %v4450 = vpop.f32.mrb[0].mxu0
        %v4451 = vadd.f32 %v4290, %v4450
        %v4452 = vpop.f32.mrb[0].mxu0
        %4453 = vmatprep.mubr.bf16.mxu0 0
        %4454 = vmatmul.mubr.bf16.gmra.mrb[0].mxu0 %v4168
        %v4455 = vpop.f32.mrb[0].mxu0
        %v4456 = vadd.f32 %v4295, %v4455
        %v4457 = vpop.f32.mrb[0].mxu0
        %v4458 = vpop.f32.mrb[0].mxu0
        %v4459 = vadd.f32 %v4298, %v4458
        %v4460 = vpop.f32.mrb[0].mxu0
        %4461 = vmatprep.mubr.bf16.mxu0 0
        %4462 = vmatmul.mubr.bf16.gmra.mrb[0].mxu0 %v4171
        %v4463 = vpop.f32.mrb[0].mxu0
        %v4464 = vadd.f32 %v4303, %v4463
        %v4465 = vpop.f32.mrb[0].mxu0
        %v4466 = vpop.f32.mrb[0].mxu0
        %v4467 = vadd.f32 %v4306, %v4466
        %v4468 = vpop.f32.mrb[0].mxu0
        %4469 = vmatprep.mubr.bf16.mxu0 0
        %4470 = vmatmul.mubr.bf16.gmra.mrb[0].mxu0 %v4174
        %v4471 = vpop.f32.mrb[0].mxu0
        %v4472 = vadd.f32 %v4311, %v4471
        %v4473 = vpop.f32.mrb[0].mxu0
        %v4474 = vpop.f32.mrb[0].mxu0
        %v4475 = vadd.f32 %v4314, %v4474
        %v4476 = vpop.f32.mrb[0].mxu0
        %4477 = vmatprep.mubr.bf16.mxu0 0
        %4478 = vmatmul.mubr.bf16.gmra.mrb[0].mxu0 %v4177
        %v4479 = vpop.f32.mrb[0].mxu0
        %v4480 = vadd.f32 %v4319, %v4479
        %v4481 = vpop.f32.mrb[0].mxu0
        %v4482 = vpop.f32.mrb[0].mxu0
        %v4483 = vadd.f32 %v4322, %v4482
        %v4484 = vpop.f32.mrb[0].mxu0
        %4485 = vmatprep.mubr.bf16.mxu0 0
        %4486 = vmatmul.mubr.bf16.gmra.mrb[0].mxu0 %v4180
        %v4487 = vpop.f32.mrb[0].mxu0
        %v4488 = vadd.f32 %v4327, %v4487
        %v4489 = vpop.f32.mrb[0].mxu0
        %v4490 = vpop.f32.mrb[0].mxu0
        %v4491 = vadd.f32 %v4330, %v4490
        %v4492 = vpop.f32.mrb[0].mxu0
        %4493 = vmatprep.mubr.bf16.mxu0 0
        %4494 = vmatmul.mubr.bf16.gmra.mrb[0].mxu0 %v4183
        %v4495 = vpop.f32.mrb[0].mxu0
        %v4496 = vadd.f32 %v4335, %v4495
        %v4497 = vpop.f32.mrb[0].mxu0
        %v4498 = vpop.f32.mrb[0].mxu0
        %v4499 = vadd.f32 %v4338, %v4498
        %v4500 = vpop.f32.mrb[0].mxu0
        %4501 = vmatprep.mubr.bf16.mxu0 0
        %4502 = vmatmul.mubr.bf16.gmra.mrb[0].mxu0 %v4186
        %v4503 = vpop.f32.mrb[0].mxu0
        %v4504 = vadd.f32 %v4343, %v4503
        %v4505 = vpop.f32.mrb[0].mxu0
        %v4506 = vpop.f32.mrb[0].mxu0
        %v4507 = vadd.f32 %v4346, %v4506
        %v4508 = vpop.f32.mrb[0].mxu0
        %4509 = vdwg.mxu0
        %v4510 = vmax.f32 %v4384, 0.0
        %v4511 = vmax.f32 %v4387, 0.0
        %v4512 = vmax.f32 %v4392, 0.0
        %v4513 = vmax.f32 %v4395, 0.0
        %v4514 = vmax.f32 %v4400, 0.0
        %v4515 = vmax.f32 %v4403, 0.0
        %v4516 = vmax.f32 %v4408, 0.0
        %v4517 = vmax.f32 %v4411, 0.0
        %v4518 = vmax.f32 %v4416, 0.0
        %v4519 = vmax.f32 %v4419, 0.0
        %v4520 = vmax.f32 %v4424, 0.0
        %v4521 = vmax.f32 %v4427, 0.0
        %v4522 = vmax.f32 %v4432, 0.0
        %v4523 = vmax.f32 %v4435, 0.0
        %v4524 = vmax.f32 %v4440, 0.0
        %v4525 = vmax.f32 %v4443, 0.0
        %v4526 = vmax.f32 %v4448, 0.0
        %v4527 = vmax.f32 %v4451, 0.0
        %v4528 = vmax.f32 %v4456, 0.0
        %v4529 = vmax.f32 %v4459, 0.0
        %v4530 = vmax.f32 %v4464, 0.0
        %v4531 = vmax.f32 %v4467, 0.0
        %v4532 = vmax.f32 %v4472, 0.0
        %v4533 = vmax.f32 %v4475, 0.0
        %v4534 = vmax.f32 %v4480, 0.0
        %v4535 = vmax.f32 %v4483, 0.0
        %v4536 = vmax.f32 %v4488, 0.0
        %v4537 = vmax.f32 %v4491, 0.0
        %v4538 = vmax.f32 %v4496, 0.0
        %v4539 = vmax.f32 %v4499, 0.0
        %v4540 = vmax.f32 %v4504, 0.0
        %v4541 = vmax.f32 %v4507, 0.0
        %4542 = vst.msk [vmem:[%s585 + $0x1] sm:$0xff] %vm377, %v4510
        %4543 = vst.msk [vmem:[%s585 + $0x11] sm:$0xff] %vm377, %v4511
        %4544 = vst.msk [vmem:[%s585 + $0x21] sm:$0xff] %vm377, %v4512
        %4545 = vst.msk [vmem:[%s585 + $0x31] sm:$0xff] %vm377, %v4513
        %4546 = vst.msk [vmem:[%s585 + $0x41] sm:$0xff] %vm377, %v4514
        %4547 = vst.msk [vmem:[%s585 + $0x51] sm:$0xff] %vm377, %v4515
        %4548 = vst.msk [vmem:[%s585 + $0x61] sm:$0xff] %vm377, %v4516
        %4549 = vst.msk [vmem:[%s585 + $0x71] sm:$0xff] %vm377, %v4517
        %4550 = vst.msk [vmem:[%s626 + $0x1] sm:$0xff] %vm377, %v4518
        %4551 = vst.msk [vmem:[%s626 + $0x11] sm:$0xff] %vm377, %v4519
        %4552 = vst.msk [vmem:[%s626 + $0x21] sm:$0xff] %vm377, %v4520
        %4553 = vst.msk [vmem:[%s626 + $0x31] sm:$0xff] %vm377, %v4521
        %4554 = vst.msk [vmem:[%s626 + $0x41] sm:$0xff] %vm377, %v4522
        %4555 = vst.msk [vmem:[%s626 + $0x51] sm:$0xff] %vm377, %v4523
        %4556 = vst.msk [vmem:[%s626 + $0x61] sm:$0xff] %vm377, %v4524
        %4557 = vst.msk [vmem:[%s626 + $0x71] sm:$0xff] %vm377, %v4525
        %4558 = vst.msk [vmem:[%s659 + $0x1] sm:$0xff] %vm377, %v4526
        %4559 = vst.msk [vmem:[%s659 + $0x11] sm:$0xff] %vm377, %v4527
        %4560 = vst.msk [vmem:[%s659 + $0x21] sm:$0xff] %vm377, %v4528
        %4561 = vst.msk [vmem:[%s659 + $0x31] sm:$0xff] %vm377, %v4529
        %4562 = vst.msk [vmem:[%s659 + $0x41] sm:$0xff] %vm377, %v4530
        %4563 = vst.msk [vmem:[%s659 + $0x51] sm:$0xff] %vm377, %v4531
        %4564 = vst.msk [vmem:[%s659 + $0x61] sm:$0xff] %vm377, %v4532
        %4565 = vst.msk [vmem:[%s659 + $0x71] sm:$0xff] %vm377, %v4533
        %4566 = vst.msk [vmem:[%s692 + $0x1] sm:$0xff] %vm377, %v4534
        %4567 = vst.msk [vmem:[%s692 + $0x11] sm:$0xff] %vm377, %v4535
        %4568 = vst.msk [vmem:[%s692 + $0x21] sm:$0xff] %vm377, %v4536
        %4569 = vst.msk [vmem:[%s692 + $0x31] sm:$0xff] %vm377, %v4537
        %4570 = vst.msk [vmem:[%s692 + $0x41] sm:$0xff] %vm377, %v4538
        %4571 = vst.msk [vmem:[%s692 + $0x51] sm:$0xff] %vm377, %v4539
        %4572 = vst.msk [vmem:[%s692 + $0x61] sm:$0xff] %vm377, %v4540
        %4573 = vst.msk [vmem:[%s692 + $0x71] sm:$0xff] %vm377, %v4541
        %v4574 = vld [vmem:[#allocation2] sm:$0xff]
        %v4575 = vld [vmem:[#allocation2 + $0x8] sm:$0x3]
        %v4576 = vld [vmem:[#allocation2 + $0x10] sm:$0xff]
        %v4577 = vld [vmem:[#allocation2 + $0x18] sm:$0x3]
        %v4578 = vld [vmem:[#allocation2 + $0x20] sm:$0xff]
        %v4579 = vld [vmem:[#allocation2 + $0x28] sm:$0x3]
        %v4580 = vld [vmem:[#allocation2 + $0x30] sm:$0xff]
        %v4581 = vld [vmem:[#allocation2 + $0x38] sm:$0x3]
        %v4582 = vld [vmem:[#allocation2 + $0x40] sm:$0xff]
        %v4583 = vld [vmem:[#allocation2 + $0x48] sm:$0x3]
        %v4584 = vld [vmem:[#allocation2 + $0x50] sm:$0xff]
        %v4585 = vld [vmem:[#allocation2 + $0x58] sm:$0x3]
        %v4586 = vld [vmem:[#allocation2 + $0x60] sm:$0xff]
        %v4587 = vld [vmem:[#allocation2 + $0x68] sm:$0x3]
        %v4588 = vld [vmem:[#allocation2 + $0x70] sm:$0xff]
        %v4589 = vld [vmem:[#allocation2 + $0x78] sm:$0x3]
        %v4590 = vld [vmem:[#allocation2 + $0xa0] sm:$0xff]
        %v4591 = vld [vmem:[#allocation2 + $0xa8] sm:$0x3]
        %v4592 = vld [vmem:[#allocation2 + $0xb0] sm:$0xff]
        %v4593 = vld [vmem:[#allocation2 + $0xb8] sm:$0x3]
        %v4594 = vld [vmem:[#allocation2 + $0xc0] sm:$0xff]
        %v4595 = vld [vmem:[#allocation2 + $0xc8] sm:$0x3]
        %v4596 = vld [vmem:[#allocation2 + $0xd0] sm:$0xff]
        %v4597 = vld [vmem:[#allocation2 + $0xd8] sm:$0x3]
        %v4598 = vld [vmem:[#allocation2 + $0xe0] sm:$0xff]
        %v4599 = vld [vmem:[#allocation2 + $0xe8] sm:$0x3]
        %v4600 = vld [vmem:[#allocation2 + $0xf0] sm:$0xff]
        %v4601 = vld [vmem:[#allocation2 + $0xf8] sm:$0x3]
        %v4602 = vld [vmem:[#allocation2 + $0x100] sm:$0xff]
        %v4603 = vld [vmem:[#allocation2 + $0x108] sm:$0x3]
        %v4604 = vld [vmem:[#allocation2 + $0x110] sm:$0xff]
        %v4605 = vld [vmem:[#allocation2 + $0x118] sm:$0x3]
        %v4606 = vld [vmem:[#allocation2 + $0x140] sm:$0xff]
        %v4607 = vld [vmem:[#allocation2 + $0x148] sm:$0x3]
        %v4608 = vld [vmem:[#allocation2 + $0x150] sm:$0xff]
        %v4609 = vld [vmem:[#allocation2 + $0x158] sm:$0x3]
        %v4610 = vld [vmem:[#allocation2 + $0x160] sm:$0xff]
        %v4611 = vld [vmem:[#allocation2 + $0x168] sm:$0x3]
        %v4612 = vld [vmem:[#allocation2 + $0x170] sm:$0xff]
        %v4613 = vld [vmem:[#allocation2 + $0x178] sm:$0x3]
        %v4614 = vld [vmem:[#allocation2 + $0x180] sm:$0xff]
        %v4615 = vld [vmem:[#allocation2 + $0x188] sm:$0x3]
        %v4616 = vld [vmem:[#allocation2 + $0x190] sm:$0xff]
        %v4617 = vld [vmem:[#allocation2 + $0x198] sm:$0x3]
        %v4618 = vld [vmem:[#allocation2 + $0x1a0] sm:$0xff]
        %v4619 = vld [vmem:[#allocation2 + $0x1a8] sm:$0x3]
        %v4620 = vld [vmem:[#allocation2 + $0x1b0] sm:$0xff]
        %v4621 = vld [vmem:[#allocation2 + $0x1b8] sm:$0x3]
        %v4622 = vld [vmem:[#allocation2 + $0x1e0] sm:$0xff]
        %v4623 = vld [vmem:[#allocation2 + $0x1e8] sm:$0x3]
        %v4624 = vld [vmem:[#allocation2 + $0x1f0] sm:$0xff]
        %v4625 = vld [vmem:[#allocation2 + $0x1f8] sm:$0x3]
        %v4626 = vld [vmem:[#allocation2 + $0x200] sm:$0xff]
        %v4627 = vld [vmem:[#allocation2 + $0x208] sm:$0x3]
        %v4628 = vld [vmem:[#allocation2 + $0x210] sm:$0xff]
        %v4629 = vld [vmem:[#allocation2 + $0x218] sm:$0x3]
        %v4630 = vld [vmem:[#allocation2 + $0x220] sm:$0xff]
        %v4631 = vld [vmem:[#allocation2 + $0x228] sm:$0x3]
        %v4632 = vld [vmem:[#allocation2 + $0x230] sm:$0xff]
        %v4633 = vld [vmem:[#allocation2 + $0x238] sm:$0x3]
        %v4634 = vld [vmem:[#allocation2 + $0x240] sm:$0xff]
        %v4635 = vld [vmem:[#allocation2 + $0x248] sm:$0x3]
        %v4636 = vld [vmem:[#allocation2 + $0x250] sm:$0xff]
        %v4637 = vld [vmem:[#allocation2 + $0x258] sm:$0x3]
        %v4638 = vpack.c.bf16 %v4575, %v4574
        %v4639 = vpack.c.bf16 %v4577, %v4576
        %v4640 = vpack.c.bf16 %v4579, %v4578
        %v4641 = vpack.c.bf16 %v4581, %v4580
        %v4642 = vpack.c.bf16 %v4583, %v4582
        %v4643 = vpack.c.bf16 %v4585, %v4584
        %v4644 = vpack.c.bf16 %v4587, %v4586
        %v4645 = vpack.c.bf16 %v4589, %v4588
        %v4646 = vpack.c.bf16 %v4591, %v4590
        %v4647 = vpack.c.bf16 %v4593, %v4592
        %v4648 = vpack.c.bf16 %v4595, %v4594
        %v4649 = vpack.c.bf16 %v4597, %v4596
        %v4650 = vpack.c.bf16 %v4599, %v4598
        %v4651 = vpack.c.bf16 %v4601, %v4600
        %v4652 = vpack.c.bf16 %v4603, %v4602
        %v4653 = vpack.c.bf16 %v4605, %v4604
        %v4654 = vpack.c.bf16 %v4607, %v4606
        %v4655 = vpack.c.bf16 %v4609, %v4608
        %v4656 = vpack.c.bf16 %v4611, %v4610
        %v4657 = vpack.c.bf16 %v4613, %v4612
        %v4658 = vpack.c.bf16 %v4615, %v4614
        %v4659 = vpack.c.bf16 %v4617, %v4616
        %v4660 = vpack.c.bf16 %v4619, %v4618
        %v4661 = vpack.c.bf16 %v4621, %v4620
        %v4662 = vpack.c.bf16 %v4623, %v4622
        %v4663 = vpack.c.bf16 %v4625, %v4624
        %v4664 = vpack.c.bf16 %v4627, %v4626
        %v4665 = vpack.c.bf16 %v4629, %v4628
        %v4666 = vpack.c.bf16 %v4631, %v4630
        %v4667 = vpack.c.bf16 %v4633, %v4632
        %v4668 = vpack.c.bf16 %v4635, %v4634
        %v4669 = vpack.c.bf16 %v4637, %v4636
        %v4702 = vunpack.c.l.b16 %v4638
        %v4703 = vunpack.c.h.b16 %v4638
        %v4704 = vunpack.c.l.b16 %v4639
        %v4705 = vunpack.c.h.b16 %v4639
        %v4706 = vunpack.c.l.b16 %v4640
        %v4707 = vunpack.c.h.b16 %v4640
        %v4708 = vunpack.c.l.b16 %v4641
        %v4709 = vunpack.c.h.b16 %v4641
        %v4710 = vunpack.c.l.b16 %v4642
        %v4711 = vunpack.c.h.b16 %v4642
        %v4712 = vunpack.c.l.b16 %v4643
        %v4713 = vunpack.c.h.b16 %v4643
        %v4714 = vunpack.c.l.b16 %v4644
        %v4715 = vunpack.c.h.b16 %v4644
        %v4716 = vunpack.c.l.b16 %v4645
        %v4717 = vunpack.c.h.b16 %v4645
        %v4718 = vunpack.c.l.b16 %v4646
        %v4719 = vunpack.c.h.b16 %v4646
        %v4720 = vunpack.c.l.b16 %v4647
        %v4721 = vunpack.c.h.b16 %v4647
        %v4722 = vunpack.c.l.b16 %v4648
        %v4723 = vunpack.c.h.b16 %v4648
        %v4724 = vunpack.c.l.b16 %v4649
        %v4725 = vunpack.c.h.b16 %v4649
        %v4726 = vunpack.c.l.b16 %v4650
        %v4727 = vunpack.c.h.b16 %v4650
        %v4728 = vunpack.c.l.b16 %v4651
        %v4729 = vunpack.c.h.b16 %v4651
        %v4730 = vunpack.c.l.b16 %v4652
        %v4731 = vunpack.c.h.b16 %v4652
        %v4732 = vunpack.c.l.b16 %v4653
        %v4733 = vunpack.c.h.b16 %v4653
        %v4734 = vunpack.c.l.b16 %v4654
        %v4735 = vunpack.c.h.b16 %v4654
        %v4736 = vunpack.c.l.b16 %v4655
        %v4737 = vunpack.c.h.b16 %v4655
        %v4738 = vunpack.c.l.b16 %v4656
        %v4739 = vunpack.c.h.b16 %v4656
        %v4740 = vunpack.c.l.b16 %v4657
        %v4741 = vunpack.c.h.b16 %v4657
        %v4742 = vunpack.c.l.b16 %v4658
        %v4743 = vunpack.c.h.b16 %v4658
        %v4744 = vunpack.c.l.b16 %v4659
        %v4745 = vunpack.c.h.b16 %v4659
        %v4746 = vunpack.c.l.b16 %v4660
        %v4747 = vunpack.c.h.b16 %v4660
        %v4748 = vunpack.c.l.b16 %v4661
        %v4749 = vunpack.c.h.b16 %v4661
        %v4750 = vunpack.c.l.b16 %v4662
        %v4751 = vunpack.c.h.b16 %v4662
        %v4752 = vunpack.c.l.b16 %v4663
        %v4753 = vunpack.c.h.b16 %v4663
        %v4754 = vunpack.c.l.b16 %v4664
        %v4755 = vunpack.c.h.b16 %v4664
        %v4756 = vunpack.c.l.b16 %v4665
        %v4757 = vunpack.c.h.b16 %v4665
        %v4758 = vunpack.c.l.b16 %v4666
        %v4759 = vunpack.c.h.b16 %v4666
        %v4760 = vunpack.c.l.b16 %v4667
        %v4761 = vunpack.c.h.b16 %v4667
        %v4762 = vunpack.c.l.b16 %v4668
        %v4763 = vunpack.c.h.b16 %v4668
        %v4764 = vunpack.c.l.b16 %v4669
        %v4765 = vunpack.c.h.b16 %v4669
        %v4766 = vpack.c.b16 %v4702, %v4702
        %v4767 = vpack.c.b16 %v4703, %v4703
        %v4768 = vpack.c.b16 %v4704, %v4704
        %v4769 = vpack.c.b16 %v4705, %v4705
        %v4770 = vpack.c.b16 %v4706, %v4706
        %v4771 = vpack.c.b16 %v4707, %v4707
        %v4772 = vpack.c.b16 %v4708, %v4708
        %v4773 = vpack.c.b16 %v4709, %v4709
        %v4774 = vpack.c.b16 %v4710, %v4710
        %v4775 = vpack.c.b16 %v4711, %v4711
        %v4776 = vpack.c.b16 %v4712, %v4712
        %v4777 = vpack.c.b16 %v4713, %v4713
        %v4778 = vpack.c.b16 %v4714, %v4714
        %v4779 = vpack.c.b16 %v4715, %v4715
        %v4780 = vpack.c.b16 %v4716, %v4716
        %v4781 = vpack.c.b16 %v4717, %v4717
        %v4782 = vpack.c.b16 %v4718, %v4718
        %v4783 = vpack.c.b16 %v4719, %v4719
        %v4784 = vpack.c.b16 %v4720, %v4720
        %v4785 = vpack.c.b16 %v4721, %v4721
        %v4786 = vpack.c.b16 %v4722, %v4722
        %v4787 = vpack.c.b16 %v4723, %v4723
        %v4788 = vpack.c.b16 %v4724, %v4724
        %v4789 = vpack.c.b16 %v4725, %v4725
        %v4790 = vpack.c.b16 %v4726, %v4726
        %v4791 = vpack.c.b16 %v4727, %v4727
        %v4792 = vpack.c.b16 %v4728, %v4728
        %v4793 = vpack.c.b16 %v4729, %v4729
        %v4794 = vpack.c.b16 %v4730, %v4730
        %v4795 = vpack.c.b16 %v4731, %v4731
        %v4796 = vpack.c.b16 %v4732, %v4732
        %v4797 = vpack.c.b16 %v4733, %v4733
        %v4798 = vpack.c.b16 %v4734, %v4734
        %v4799 = vpack.c.b16 %v4735, %v4735
        %v4800 = vpack.c.b16 %v4736, %v4736
        %v4801 = vpack.c.b16 %v4737, %v4737
        %v4802 = vpack.c.b16 %v4738, %v4738
        %v4803 = vpack.c.b16 %v4739, %v4739
        %v4804 = vpack.c.b16 %v4740, %v4740
        %v4805 = vpack.c.b16 %v4741, %v4741
        %v4806 = vpack.c.b16 %v4742, %v4742
        %v4807 = vpack.c.b16 %v4743, %v4743
        %v4808 = vpack.c.b16 %v4744, %v4744
        %v4809 = vpack.c.b16 %v4745, %v4745
        %v4810 = vpack.c.b16 %v4746, %v4746
        %v4811 = vpack.c.b16 %v4747, %v4747
        %v4812 = vpack.c.b16 %v4748, %v4748
        %v4813 = vpack.c.b16 %v4749, %v4749
        %v4814 = vpack.c.b16 %v4750, %v4750
        %v4815 = vpack.c.b16 %v4751, %v4751
        %v4816 = vpack.c.b16 %v4752, %v4752
        %v4817 = vpack.c.b16 %v4753, %v4753
        %v4818 = vpack.c.b16 %v4754, %v4754
        %v4819 = vpack.c.b16 %v4755, %v4755
        %v4820 = vpack.c.b16 %v4756, %v4756
        %v4821 = vpack.c.b16 %v4757, %v4757
        %v4822 = vpack.c.b16 %v4758, %v4758
        %v4823 = vpack.c.b16 %v4759, %v4759
        %v4824 = vpack.c.b16 %v4760, %v4760
        %v4825 = vpack.c.b16 %v4761, %v4761
        %v4826 = vpack.c.b16 %v4762, %v4762
        %v4827 = vpack.c.b16 %v4763, %v4763
        %v4828 = vpack.c.b16 %v4764, %v4764
        %v4829 = vpack.c.b16 %v4765, %v4765
        %v4831 = vshrl.u32 %v4766, 16
        %v4833 = vrot.slane %v4831, 4
        %v4834 = vshll.u32 %v4766, 16
        %v4836 = vrot.slane %v4834, 5
        %v4837 = vor.u32 %v4833, %v4836
        %v4838 = vrot.slane %v4837, 4
        %v4840 = vshll.u32 %v4767, 16
        %v4842 = vrot.slane %v4840, 5
        %v4843 = vsel %vm959, %v4838, %v4842
        %v4845 = vshrl.u32 %v4768, 16
        %v4847 = vrot.slane %v4845, 4
        %v4848 = vshll.u32 %v4768, 16
        %v4850 = vrot.slane %v4848, 5
        %v4851 = vor.u32 %v4847, %v4850
        %v4852 = vrot.slane %v4851, 4
        %v4854 = vshll.u32 %v4769, 16
        %v4856 = vrot.slane %v4854, 5
        %v4857 = vsel %vm959, %v4852, %v4856
        %v4859 = vshrl.u32 %v4770, 16
        %v4861 = vrot.slane %v4859, 4
        %v4862 = vshll.u32 %v4770, 16
        %v4864 = vrot.slane %v4862, 5
        %v4865 = vor.u32 %v4861, %v4864
        %v4866 = vrot.slane %v4865, 4
        %v4868 = vshll.u32 %v4771, 16
        %v4870 = vrot.slane %v4868, 5
        %v4871 = vsel %vm959, %v4866, %v4870
        %v4873 = vshrl.u32 %v4772, 16
        %v4875 = vrot.slane %v4873, 4
        %v4876 = vshll.u32 %v4772, 16
        %v4878 = vrot.slane %v4876, 5
        %v4879 = vor.u32 %v4875, %v4878
        %v4880 = vrot.slane %v4879, 4
        %v4882 = vshll.u32 %v4773, 16
        %v4884 = vrot.slane %v4882, 5
        %v4885 = vsel %vm959, %v4880, %v4884
        %v4887 = vshrl.u32 %v4774, 16
        %v4889 = vrot.slane %v4887, 4
        %v4890 = vshll.u32 %v4774, 16
        %v4892 = vrot.slane %v4890, 5
        %v4893 = vor.u32 %v4889, %v4892
        %v4894 = vrot.slane %v4893, 4
        %v4896 = vshll.u32 %v4775, 16
        %v4898 = vrot.slane %v4896, 5
        %v4899 = vsel %vm959, %v4894, %v4898
        %v4901 = vshrl.u32 %v4776, 16
        %v4903 = vrot.slane %v4901, 4
        %v4904 = vshll.u32 %v4776, 16
        %v4906 = vrot.slane %v4904, 5
        %v4907 = vor.u32 %v4903, %v4906
        %v4908 = vrot.slane %v4907, 4
        %v4910 = vshll.u32 %v4777, 16
        %v4912 = vrot.slane %v4910, 5
        %v4913 = vsel %vm959, %v4908, %v4912
        %v4915 = vshrl.u32 %v4778, 16
        %v4917 = vrot.slane %v4915, 4
        %v4918 = vshll.u32 %v4778, 16
        %v4920 = vrot.slane %v4918, 5
        %v4921 = vor.u32 %v4917, %v4920
        %v4922 = vrot.slane %v4921, 4
        %v4924 = vshll.u32 %v4779, 16
        %v4926 = vrot.slane %v4924, 5
        %v4927 = vsel %vm959, %v4922, %v4926
        %v4929 = vshrl.u32 %v4780, 16
        %v4931 = vrot.slane %v4929, 4
        %v4932 = vshll.u32 %v4780, 16
        %v4934 = vrot.slane %v4932, 5
        %v4935 = vor.u32 %v4931, %v4934
        %v4936 = vrot.slane %v4935, 4
        %v4938 = vshll.u32 %v4781, 16
        %v4940 = vrot.slane %v4938, 5
        %v4941 = vsel %vm959, %v4936, %v4940
        %v4943 = vshrl.u32 %v4782, 16
        %v4945 = vrot.slane %v4943, 4
        %v4946 = vshll.u32 %v4782, 16
        %v4948 = vrot.slane %v4946, 5
        %v4949 = vor.u32 %v4945, %v4948
        %v4950 = vrot.slane %v4949, 4
        %v4952 = vshll.u32 %v4783, 16
        %v4954 = vrot.slane %v4952, 5
        %v4955 = vsel %vm959, %v4950, %v4954
        %v4957 = vshrl.u32 %v4784, 16
        %v4959 = vrot.slane %v4957, 4
        %v4960 = vshll.u32 %v4784, 16
        %v4962 = vrot.slane %v4960, 5
        %v4963 = vor.u32 %v4959, %v4962
        %v4964 = vrot.slane %v4963, 4
        %v4966 = vshll.u32 %v4785, 16
        %v4968 = vrot.slane %v4966, 5
        %v4969 = vsel %vm959, %v4964, %v4968
        %v4971 = vshrl.u32 %v4786, 16
        %v4973 = vrot.slane %v4971, 4
        %v4974 = vshll.u32 %v4786, 16
        %v4976 = vrot.slane %v4974, 5
        %v4977 = vor.u32 %v4973, %v4976
        %v4978 = vrot.slane %v4977, 4
        %v4980 = vshll.u32 %v4787, 16
        %v4982 = vrot.slane %v4980, 5
        %v4983 = vsel %vm959, %v4978, %v4982
        %v4985 = vshrl.u32 %v4788, 16
        %v4987 = vrot.slane %v4985, 4
        %v4988 = vshll.u32 %v4788, 16
        %v4990 = vrot.slane %v4988, 5
        %v4991 = vor.u32 %v4987, %v4990
        %v4992 = vrot.slane %v4991, 4
        %v4994 = vshll.u32 %v4789, 16
        %v4996 = vrot.slane %v4994, 5
        %v4997 = vsel %vm959, %v4992, %v4996
        %v4999 = vshrl.u32 %v4790, 16
        %v5001 = vrot.slane %v4999, 4
        %v5002 = vshll.u32 %v4790, 16
        %v5004 = vrot.slane %v5002, 5
        %v5005 = vor.u32 %v5001, %v5004
        %v5006 = vrot.slane %v5005, 4
        %v5008 = vshll.u32 %v4791, 16
        %v5010 = vrot.slane %v5008, 5
        %v5011 = vsel %vm959, %v5006, %v5010
        %v5013 = vshrl.u32 %v4792, 16
        %v5015 = vrot.slane %v5013, 4
        %v5016 = vshll.u32 %v4792, 16
        %v5018 = vrot.slane %v5016, 5
        %v5019 = vor.u32 %v5015, %v5018
        %v5020 = vrot.slane %v5019, 4
        %v5022 = vshll.u32 %v4793, 16
        %v5024 = vrot.slane %v5022, 5
        %v5025 = vsel %vm959, %v5020, %v5024
        %v5027 = vshrl.u32 %v4794, 16
        %v5029 = vrot.slane %v5027, 4
        %v5030 = vshll.u32 %v4794, 16
        %v5032 = vrot.slane %v5030, 5
        %v5033 = vor.u32 %v5029, %v5032
        %v5034 = vrot.slane %v5033, 4
        %v5036 = vshll.u32 %v4795, 16
        %v5038 = vrot.slane %v5036, 5
        %v5039 = vsel %vm959, %v5034, %v5038
        %v5041 = vshrl.u32 %v4796, 16
        %v5043 = vrot.slane %v5041, 4
        %v5044 = vshll.u32 %v4796, 16
        %v5046 = vrot.slane %v5044, 5
        %v5047 = vor.u32 %v5043, %v5046
        %v5048 = vrot.slane %v5047, 4
        %v5050 = vshll.u32 %v4797, 16
        %v5052 = vrot.slane %v5050, 5
        %v5053 = vsel %vm959, %v5048, %v5052
        %v5055 = vshrl.u32 %v4798, 16
        %v5057 = vrot.slane %v5055, 4
        %v5058 = vshll.u32 %v4798, 16
        %v5060 = vrot.slane %v5058, 5
        %v5061 = vor.u32 %v5057, %v5060
        %v5062 = vrot.slane %v5061, 4
        %v5064 = vshll.u32 %v4799, 16
        %v5066 = vrot.slane %v5064, 5
        %v5067 = vsel %vm959, %v5062, %v5066
        %v5069 = vshrl.u32 %v4800, 16
        %v5071 = vrot.slane %v5069, 4
        %v5072 = vshll.u32 %v4800, 16
        %v5074 = vrot.slane %v5072, 5
        %v5075 = vor.u32 %v5071, %v5074
        %v5076 = vrot.slane %v5075, 4
        %v5078 = vshll.u32 %v4801, 16
        %v5080 = vrot.slane %v5078, 5
        %v5081 = vsel %vm959, %v5076, %v5080
        %v5083 = vshrl.u32 %v4802, 16
        %v5085 = vrot.slane %v5083, 4
        %v5086 = vshll.u32 %v4802, 16
        %v5088 = vrot.slane %v5086, 5
        %v5089 = vor.u32 %v5085, %v5088
        %v5090 = vrot.slane %v5089, 4
        %v5092 = vshll.u32 %v4803, 16
        %v5094 = vrot.slane %v5092, 5
        %v5095 = vsel %vm959, %v5090, %v5094
        %v5097 = vshrl.u32 %v4804, 16
        %v5099 = vrot.slane %v5097, 4
        %v5100 = vshll.u32 %v4804, 16
        %v5102 = vrot.slane %v5100, 5
        %v5103 = vor.u32 %v5099, %v5102
        %v5104 = vrot.slane %v5103, 4
        %v5106 = vshll.u32 %v4805, 16
        %v5108 = vrot.slane %v5106, 5
        %v5109 = vsel %vm959, %v5104, %v5108
        %v5111 = vshrl.u32 %v4806, 16
        %v5113 = vrot.slane %v5111, 4
        %v5114 = vshll.u32 %v4806, 16
        %v5116 = vrot.slane %v5114, 5
        %v5117 = vor.u32 %v5113, %v5116
        %v5118 = vrot.slane %v5117, 4
        %v5120 = vshll.u32 %v4807, 16
        %v5122 = vrot.slane %v5120, 5
        %v5123 = vsel %vm959, %v5118, %v5122
        %v5125 = vshrl.u32 %v4808, 16
        %v5127 = vrot.slane %v5125, 4
        %v5128 = vshll.u32 %v4808, 16
        %v5130 = vrot.slane %v5128, 5
        %v5131 = vor.u32 %v5127, %v5130
        %v5132 = vrot.slane %v5131, 4
        %v5134 = vshll.u32 %v4809, 16
        %v5136 = vrot.slane %v5134, 5
        %v5137 = vsel %vm959, %v5132, %v5136
        %v5139 = vshrl.u32 %v4810, 16
        %v5141 = vrot.slane %v5139, 4
        %v5142 = vshll.u32 %v4810, 16
        %v5144 = vrot.slane %v5142, 5
        %v5145 = vor.u32 %v5141, %v5144
        %v5146 = vrot.slane %v5145, 4
        %v5148 = vshll.u32 %v4811, 16
        %v5150 = vrot.slane %v5148, 5
        %v5151 = vsel %vm959, %v5146, %v5150
        %v5153 = vshrl.u32 %v4812, 16
        %v5155 = vrot.slane %v5153, 4
        %v5156 = vshll.u32 %v4812, 16
        %v5158 = vrot.slane %v5156, 5
        %v5159 = vor.u32 %v5155, %v5158
        %v5160 = vrot.slane %v5159, 4
        %v5162 = vshll.u32 %v4813, 16
        %v5164 = vrot.slane %v5162, 5
        %v5165 = vsel %vm959, %v5160, %v5164
        %v5167 = vshrl.u32 %v4814, 16
        %v5169 = vrot.slane %v5167, 4
        %v5170 = vshll.u32 %v4814, 16
        %v5172 = vrot.slane %v5170, 5
        %v5173 = vor.u32 %v5169, %v5172
        %v5174 = vrot.slane %v5173, 4
        %v5176 = vshll.u32 %v4815, 16
        %v5178 = vrot.slane %v5176, 5
        %v5179 = vsel %vm959, %v5174, %v5178
        %v5181 = vshrl.u32 %v4816, 16
        %v5183 = vrot.slane %v5181, 4
        %v5184 = vshll.u32 %v4816, 16
        %v5186 = vrot.slane %v5184, 5
        %v5187 = vor.u32 %v5183, %v5186
        %v5188 = vrot.slane %v5187, 4
        %v5190 = vshll.u32 %v4817, 16
        %v5192 = vrot.slane %v5190, 5
        %v5193 = vsel %vm959, %v5188, %v5192
        %v5195 = vshrl.u32 %v4818, 16
        %v5197 = vrot.slane %v5195, 4
        %v5198 = vshll.u32 %v4818, 16
        %v5200 = vrot.slane %v5198, 5
        %v5201 = vor.u32 %v5197, %v5200
        %v5202 = vrot.slane %v5201, 4
        %v5204 = vshll.u32 %v4819, 16
        %v5206 = vrot.slane %v5204, 5
        %v5207 = vsel %vm959, %v5202, %v5206
        %v5209 = vshrl.u32 %v4820, 16
        %v5211 = vrot.slane %v5209, 4
        %v5212 = vshll.u32 %v4820, 16
        %v5214 = vrot.slane %v5212, 5
        %v5215 = vor.u32 %v5211, %v5214
        %v5216 = vrot.slane %v5215, 4
        %v5218 = vshll.u32 %v4821, 16
        %v5220 = vrot.slane %v5218, 5
        %v5221 = vsel %vm959, %v5216, %v5220
        %v5223 = vshrl.u32 %v4822, 16
        %v5225 = vrot.slane %v5223, 4
        %v5226 = vshll.u32 %v4822, 16
        %v5228 = vrot.slane %v5226, 5
        %v5229 = vor.u32 %v5225, %v5228
        %v5230 = vrot.slane %v5229, 4
        %v5232 = vshll.u32 %v4823, 16
        %v5234 = vrot.slane %v5232, 5
        %v5235 = vsel %vm959, %v5230, %v5234
        %v5237 = vshrl.u32 %v4824, 16
        %v5239 = vrot.slane %v5237, 4
        %v5240 = vshll.u32 %v4824, 16
        %v5242 = vrot.slane %v5240, 5
        %v5243 = vor.u32 %v5239, %v5242
        %v5244 = vrot.slane %v5243, 4
        %v5246 = vshll.u32 %v4825, 16
        %v5248 = vrot.slane %v5246, 5
        %v5249 = vsel %vm959, %v5244, %v5248
        %v5251 = vshrl.u32 %v4826, 16
        %v5253 = vrot.slane %v5251, 4
        %v5254 = vshll.u32 %v4826, 16
        %v5256 = vrot.slane %v5254, 5
        %v5257 = vor.u32 %v5253, %v5256
        %v5258 = vrot.slane %v5257, 4
        %v5260 = vshll.u32 %v4827, 16
        %v5262 = vrot.slane %v5260, 5
        %v5263 = vsel %vm959, %v5258, %v5262
        %v5265 = vshrl.u32 %v4828, 16
        %v5267 = vrot.slane %v5265, 4
        %v5268 = vshll.u32 %v4828, 16
        %v5270 = vrot.slane %v5268, 5
        %v5271 = vor.u32 %v5267, %v5270
        %v5272 = vrot.slane %v5271, 4
        %v5274 = vshll.u32 %v4829, 16
        %v5276 = vrot.slane %v5274, 5
        %v5277 = vsel %vm959, %v5272, %v5276
        %v5278 = vrot.slane %v4766, 5
        %v5279 = vrot.slane %v5278, 4
        %v5280 = vrot.slane %v4767, 5
        %v5281 = vsel %vm1410, %v5279, %v5280
        %v5282 = vrot.slane %v4768, 5
        %v5283 = vrot.slane %v5282, 4
        %v5284 = vrot.slane %v4769, 5
        %v5285 = vsel %vm1410, %v5283, %v5284
        %v5286 = vrot.slane %v4770, 5
        %v5287 = vrot.slane %v5286, 4
        %v5288 = vrot.slane %v4771, 5
        %v5289 = vsel %vm1410, %v5287, %v5288
        %v5290 = vrot.slane %v4772, 5
        %v5291 = vrot.slane %v5290, 4
        %v5292 = vrot.slane %v4773, 5
        %v5293 = vsel %vm1410, %v5291, %v5292
        %v5294 = vrot.slane %v4774, 5
        %v5295 = vrot.slane %v5294, 4
        %v5296 = vrot.slane %v4775, 5
        %v5297 = vsel %vm1410, %v5295, %v5296
        %v5298 = vrot.slane %v4776, 5
        %v5299 = vrot.slane %v5298, 4
        %v5300 = vrot.slane %v4777, 5
        %v5301 = vsel %vm1410, %v5299, %v5300
        %v5302 = vrot.slane %v4778, 5
        %v5303 = vrot.slane %v5302, 4
        %v5304 = vrot.slane %v4779, 5
        %v5305 = vsel %vm1410, %v5303, %v5304
        %v5306 = vrot.slane %v4780, 5
        %v5307 = vrot.slane %v5306, 4
        %v5308 = vrot.slane %v4781, 5
        %v5309 = vsel %vm1410, %v5307, %v5308
        %v5310 = vrot.slane %v4782, 5
        %v5311 = vrot.slane %v5310, 4
        %v5312 = vrot.slane %v4783, 5
        %v5313 = vsel %vm1410, %v5311, %v5312
        %v5314 = vrot.slane %v4784, 5
        %v5315 = vrot.slane %v5314, 4
        %v5316 = vrot.slane %v4785, 5
        %v5317 = vsel %vm1410, %v5315, %v5316
        %v5318 = vrot.slane %v4786, 5
        %v5319 = vrot.slane %v5318, 4
        %v5320 = vrot.slane %v4787, 5
        %v5321 = vsel %vm1410, %v5319, %v5320
        %v5322 = vrot.slane %v4788, 5
        %v5323 = vrot.slane %v5322, 4
        %v5324 = vrot.slane %v4789, 5
        %v5325 = vsel %vm1410, %v5323, %v5324
        %v5326 = vrot.slane %v4790, 5
        %v5327 = vrot.slane %v5326, 4
        %v5328 = vrot.slane %v4791, 5
        %v5329 = vsel %vm1410, %v5327, %v5328
        %v5330 = vrot.slane %v4792, 5
        %v5331 = vrot.slane %v5330, 4
        %v5332 = vrot.slane %v4793, 5
        %v5333 = vsel %vm1410, %v5331, %v5332
        %v5334 = vrot.slane %v4794, 5
        %v5335 = vrot.slane %v5334, 4
        %v5336 = vrot.slane %v4795, 5
        %v5337 = vsel %vm1410, %v5335, %v5336
        %v5338 = vrot.slane %v4796, 5
        %v5339 = vrot.slane %v5338, 4
        %v5340 = vrot.slane %v4797, 5
        %v5341 = vsel %vm1410, %v5339, %v5340
        %v5342 = vrot.slane %v4798, 5
        %v5343 = vrot.slane %v5342, 4
        %v5344 = vrot.slane %v4799, 5
        %v5345 = vsel %vm1410, %v5343, %v5344
        %v5346 = vrot.slane %v4800, 5
        %v5347 = vrot.slane %v5346, 4
        %v5348 = vrot.slane %v4801, 5
        %v5349 = vsel %vm1410, %v5347, %v5348
        %v5350 = vrot.slane %v4802, 5
        %v5351 = vrot.slane %v5350, 4
        %v5352 = vrot.slane %v4803, 5
        %v5353 = vsel %vm1410, %v5351, %v5352
        %v5354 = vrot.slane %v4804, 5
        %v5355 = vrot.slane %v5354, 4
        %v5356 = vrot.slane %v4805, 5
        %v5357 = vsel %vm1410, %v5355, %v5356
        %v5358 = vrot.slane %v4806, 5
        %v5359 = vrot.slane %v5358, 4
        %v5360 = vrot.slane %v4807, 5
        %v5361 = vsel %vm1410, %v5359, %v5360
        %v5362 = vrot.slane %v4808, 5
        %v5363 = vrot.slane %v5362, 4
        %v5364 = vrot.slane %v4809, 5
        %v5365 = vsel %vm1410, %v5363, %v5364
        %v5366 = vrot.slane %v4810, 5
        %v5367 = vrot.slane %v5366, 4
        %v5368 = vrot.slane %v4811, 5
        %v5369 = vsel %vm1410, %v5367, %v5368
        %v5370 = vrot.slane %v4812, 5
        %v5371 = vrot.slane %v5370, 4
        %v5372 = vrot.slane %v4813, 5
        %v5373 = vsel %vm1410, %v5371, %v5372
        %v5374 = vrot.slane %v4814, 5
        %v5375 = vrot.slane %v5374, 4
        %v5376 = vrot.slane %v4815, 5
        %v5377 = vsel %vm1410, %v5375, %v5376
        %v5378 = vrot.slane %v4816, 5
        %v5379 = vrot.slane %v5378, 4
        %v5380 = vrot.slane %v4817, 5
        %v5381 = vsel %vm1410, %v5379, %v5380
        %v5382 = vrot.slane %v4818, 5
        %v5383 = vrot.slane %v5382, 4
        %v5384 = vrot.slane %v4819, 5
        %v5385 = vsel %vm1410, %v5383, %v5384
        %v5386 = vrot.slane %v4820, 5
        %v5387 = vrot.slane %v5386, 4
        %v5388 = vrot.slane %v4821, 5
        %v5389 = vsel %vm1410, %v5387, %v5388
        %v5390 = vrot.slane %v4822, 5
        %v5391 = vrot.slane %v5390, 4
        %v5392 = vrot.slane %v4823, 5
        %v5393 = vsel %vm1410, %v5391, %v5392
        %v5394 = vrot.slane %v4824, 5
        %v5395 = vrot.slane %v5394, 4
        %v5396 = vrot.slane %v4825, 5
        %v5397 = vsel %vm1410, %v5395, %v5396
        %v5398 = vrot.slane %v4826, 5
        %v5399 = vrot.slane %v5398, 4
        %v5400 = vrot.slane %v4827, 5
        %v5401 = vsel %vm1410, %v5399, %v5400
        %v5402 = vrot.slane %v4828, 5
        %v5403 = vrot.slane %v5402, 4
        %v5404 = vrot.slane %v4829, 5
        %v5405 = vsel %vm1410, %v5403, %v5404
        %v5406 = vld [vmem:[%s585] sm:$0xff]
        %v5407 = vld [vmem:[%s585 + $0x8] sm:$0x3]
        %v5408 = vld [vmem:[%s585 + $0x10] sm:$0xff]
        %v5409 = vld [vmem:[%s585 + $0x18] sm:$0x3]
        %v5410 = vld [vmem:[%s585 + $0x20] sm:$0xff]
        %v5411 = vld [vmem:[%s585 + $0x28] sm:$0x3]
        %v5412 = vld [vmem:[%s585 + $0x30] sm:$0xff]
        %v5413 = vld [vmem:[%s585 + $0x38] sm:$0x3]
        %v5414 = vld [vmem:[%s585 + $0x40] sm:$0xff]
        %v5415 = vld [vmem:[%s585 + $0x48] sm:$0x3]
        %v5416 = vld [vmem:[%s585 + $0x50] sm:$0xff]
        %v5417 = vld [vmem:[%s585 + $0x58] sm:$0x3]
        %v5418 = vld [vmem:[%s585 + $0x60] sm:$0xff]
        %v5419 = vld [vmem:[%s585 + $0x68] sm:$0x3]
        %v5420 = vld [vmem:[%s585 + $0x70] sm:$0xff]
        %v5421 = vld [vmem:[%s585 + $0x78] sm:$0x3]
        %v5422 = vld [vmem:[%s585 + $0xa0] sm:$0xff]
        %v5423 = vld [vmem:[%s585 + $0xa8] sm:$0x3]
        %v5424 = vld [vmem:[%s585 + $0xb0] sm:$0xff]
        %v5425 = vld [vmem:[%s585 + $0xb8] sm:$0x3]
        %v5426 = vld [vmem:[%s585 + $0xc0] sm:$0xff]
        %v5427 = vld [vmem:[%s585 + $0xc8] sm:$0x3]
        %v5428 = vld [vmem:[%s585 + $0xd0] sm:$0xff]
        %v5429 = vld [vmem:[%s585 + $0xd8] sm:$0x3]
        %v5430 = vld [vmem:[%s585 + $0xe0] sm:$0xff]
        %v5431 = vld [vmem:[%s585 + $0xe8] sm:$0x3]
        %v5432 = vld [vmem:[%s585 + $0xf0] sm:$0xff]
        %v5433 = vld [vmem:[%s585 + $0xf8] sm:$0x3]
        %v5434 = vld [vmem:[%s585 + $0x100] sm:$0xff]
        %v5435 = vld [vmem:[%s585 + $0x108] sm:$0x3]
        %v5436 = vld [vmem:[%s585 + $0x110] sm:$0xff]
        %v5437 = vld [vmem:[%s585 + $0x118] sm:$0x3]
        %v5438 = vld [vmem:[%s585 + $0x140] sm:$0xff]
        %v5439 = vld [vmem:[%s585 + $0x148] sm:$0x3]
        %v5440 = vld [vmem:[%s585 + $0x150] sm:$0xff]
        %v5441 = vld [vmem:[%s585 + $0x158] sm:$0x3]
        %v5442 = vld [vmem:[%s585 + $0x160] sm:$0xff]
        %v5443 = vld [vmem:[%s585 + $0x168] sm:$0x3]
        %v5444 = vld [vmem:[%s585 + $0x170] sm:$0xff]
        %v5445 = vld [vmem:[%s585 + $0x178] sm:$0x3]
        %v5446 = vld [vmem:[%s585 + $0x180] sm:$0xff]
        %v5447 = vld [vmem:[%s585 + $0x188] sm:$0x3]
        %v5448 = vld [vmem:[%s585 + $0x190] sm:$0xff]
        %v5449 = vld [vmem:[%s585 + $0x198] sm:$0x3]
        %v5450 = vld [vmem:[%s585 + $0x1a0] sm:$0xff]
        %v5451 = vld [vmem:[%s585 + $0x1a8] sm:$0x3]
        %v5452 = vld [vmem:[%s585 + $0x1b0] sm:$0xff]
        %v5453 = vld [vmem:[%s585 + $0x1b8] sm:$0x3]
        %v5454 = vld [vmem:[%s585 + $0x1e0] sm:$0xff]
        %v5455 = vld [vmem:[%s585 + $0x1e8] sm:$0x3]
        %v5456 = vld [vmem:[%s585 + $0x1f0] sm:$0xff]
        %v5457 = vld [vmem:[%s585 + $0x1f8] sm:$0x3]
        %v5458 = vld [vmem:[%s585 + $0x200] sm:$0xff]
        %v5459 = vld [vmem:[%s585 + $0x208] sm:$0x3]
        %v5460 = vld [vmem:[%s585 + $0x210] sm:$0xff]
        %v5461 = vld [vmem:[%s585 + $0x218] sm:$0x3]
        %v5462 = vld [vmem:[%s585 + $0x220] sm:$0xff]
        %v5463 = vld [vmem:[%s585 + $0x228] sm:$0x3]
        %v5464 = vld [vmem:[%s585 + $0x230] sm:$0xff]
        %v5465 = vld [vmem:[%s585 + $0x238] sm:$0x3]
        %v5466 = vld [vmem:[%s585 + $0x240] sm:$0xff]
        %v5467 = vld [vmem:[%s585 + $0x248] sm:$0x3]
        %v5468 = vld [vmem:[%s585 + $0x250] sm:$0xff]
        %v5469 = vld [vmem:[%s585 + $0x258] sm:$0x3]
        %v5470 = vpack.c.bf16 %v5407, %v5406
        %v5471 = vpack.c.bf16 %v5409, %v5408
        %v5472 = vpack.c.bf16 %v5411, %v5410
        %v5473 = vpack.c.bf16 %v5413, %v5412
        %v5474 = vpack.c.bf16 %v5415, %v5414
        %v5475 = vpack.c.bf16 %v5417, %v5416
        %v5476 = vpack.c.bf16 %v5419, %v5418
        %v5477 = vpack.c.bf16 %v5421, %v5420
        %v5478 = vpack.c.bf16 %v5423, %v5422
        %v5479 = vpack.c.bf16 %v5425, %v5424
        %v5480 = vpack.c.bf16 %v5427, %v5426
        %v5481 = vpack.c.bf16 %v5429, %v5428
        %v5482 = vpack.c.bf16 %v5431, %v5430
        %v5483 = vpack.c.bf16 %v5433, %v5432
        %v5484 = vpack.c.bf16 %v5435, %v5434
        %v5485 = vpack.c.bf16 %v5437, %v5436
        %v5486 = vpack.c.bf16 %v5439, %v5438
        %v5487 = vpack.c.bf16 %v5441, %v5440
        %v5488 = vpack.c.bf16 %v5443, %v5442
        %v5489 = vpack.c.bf16 %v5445, %v5444
        %v5490 = vpack.c.bf16 %v5447, %v5446
        %v5491 = vpack.c.bf16 %v5449, %v5448
        %v5492 = vpack.c.bf16 %v5451, %v5450
        %v5493 = vpack.c.bf16 %v5453, %v5452
        %v5494 = vpack.c.bf16 %v5455, %v5454
        %v5495 = vpack.c.bf16 %v5457, %v5456
        %v5496 = vpack.c.bf16 %v5459, %v5458
        %v5497 = vpack.c.bf16 %v5461, %v5460
        %v5498 = vpack.c.bf16 %v5463, %v5462
        %v5499 = vpack.c.bf16 %v5465, %v5464
        %v5500 = vpack.c.bf16 %v5467, %v5466
        %v5501 = vpack.c.bf16 %v5469, %v5468
        %v5534 = vunpack.c.l.b16 %v5470
        %v5535 = vunpack.c.h.b16 %v5470
        %v5536 = vunpack.c.l.b16 %v5471
        %v5537 = vunpack.c.h.b16 %v5471
        %v5538 = vunpack.c.l.b16 %v5472
        %v5539 = vunpack.c.h.b16 %v5472
        %v5540 = vunpack.c.l.b16 %v5473
        %v5541 = vunpack.c.h.b16 %v5473
        %v5542 = vunpack.c.l.b16 %v5474
        %v5543 = vunpack.c.h.b16 %v5474
        %v5544 = vunpack.c.l.b16 %v5475
        %v5545 = vunpack.c.h.b16 %v5475
        %v5546 = vunpack.c.l.b16 %v5476
        %v5547 = vunpack.c.h.b16 %v5476
        %v5548 = vunpack.c.l.b16 %v5477
        %v5549 = vunpack.c.h.b16 %v5477
        %v5550 = vunpack.c.l.b16 %v5478
        %v5551 = vunpack.c.h.b16 %v5478
        %v5552 = vunpack.c.l.b16 %v5479
        %v5553 = vunpack.c.h.b16 %v5479
        %v5554 = vunpack.c.l.b16 %v5480
        %v5555 = vunpack.c.h.b16 %v5480
        %v5556 = vunpack.c.l.b16 %v5481
        %v5557 = vunpack.c.h.b16 %v5481
        %v5558 = vunpack.c.l.b16 %v5482
        %v5559 = vunpack.c.h.b16 %v5482
        %v5560 = vunpack.c.l.b16 %v5483
        %v5561 = vunpack.c.h.b16 %v5483
        %v5562 = vunpack.c.l.b16 %v5484
        %v5563 = vunpack.c.h.b16 %v5484
        %v5564 = vunpack.c.l.b16 %v5485
        %v5565 = vunpack.c.h.b16 %v5485
        %v5566 = vunpack.c.l.b16 %v5486
        %v5567 = vunpack.c.h.b16 %v5486
        %v5568 = vunpack.c.l.b16 %v5487
        %v5569 = vunpack.c.h.b16 %v5487
        %v5570 = vunpack.c.l.b16 %v5488
        %v5571 = vunpack.c.h.b16 %v5488
        %v5572 = vunpack.c.l.b16 %v5489
        %v5573 = vunpack.c.h.b16 %v5489
        %v5574 = vunpack.c.l.b16 %v5490
        %v5575 = vunpack.c.h.b16 %v5490
        %v5576 = vunpack.c.l.b16 %v5491
        %v5577 = vunpack.c.h.b16 %v5491
        %v5578 = vunpack.c.l.b16 %v5492
        %v5579 = vunpack.c.h.b16 %v5492
        %v5580 = vunpack.c.l.b16 %v5493
        %v5581 = vunpack.c.h.b16 %v5493
        %v5582 = vunpack.c.l.b16 %v5494
        %v5583 = vunpack.c.h.b16 %v5494
        %v5584 = vunpack.c.l.b16 %v5495
        %v5585 = vunpack.c.h.b16 %v5495
        %v5586 = vunpack.c.l.b16 %v5496
        %v5587 = vunpack.c.h.b16 %v5496
        %v5588 = vunpack.c.l.b16 %v5497
        %v5589 = vunpack.c.h.b16 %v5497
        %v5590 = vunpack.c.l.b16 %v5498
        %v5591 = vunpack.c.h.b16 %v5498
        %v5592 = vunpack.c.l.b16 %v5499
        %v5593 = vunpack.c.h.b16 %v5499
        %v5594 = vunpack.c.l.b16 %v5500
        %v5595 = vunpack.c.h.b16 %v5500
        %v5596 = vunpack.c.l.b16 %v5501
        %v5597 = vunpack.c.h.b16 %v5501
        %v5598 = vpack.c.b16 %v5534, %v5534
        %v5599 = vpack.c.b16 %v5535, %v5535
        %v5600 = vpack.c.b16 %v5536, %v5536
        %v5601 = vpack.c.b16 %v5537, %v5537
        %v5602 = vpack.c.b16 %v5538, %v5538
        %v5603 = vpack.c.b16 %v5539, %v5539
        %v5604 = vpack.c.b16 %v5540, %v5540
        %v5605 = vpack.c.b16 %v5541, %v5541
        %v5606 = vpack.c.b16 %v5542, %v5542
        %v5607 = vpack.c.b16 %v5543, %v5543
        %v5608 = vpack.c.b16 %v5544, %v5544
        %v5609 = vpack.c.b16 %v5545, %v5545
        %v5610 = vpack.c.b16 %v5546, %v5546
        %v5611 = vpack.c.b16 %v5547, %v5547
        %v5612 = vpack.c.b16 %v5548, %v5548
        %v5613 = vpack.c.b16 %v5549, %v5549
        %v5614 = vpack.c.b16 %v5550, %v5550
        %v5615 = vpack.c.b16 %v5551, %v5551
        %v5616 = vpack.c.b16 %v5552, %v5552
        %v5617 = vpack.c.b16 %v5553, %v5553
        %v5618 = vpack.c.b16 %v5554, %v5554
        %v5619 = vpack.c.b16 %v5555, %v5555
        %v5620 = vpack.c.b16 %v5556, %v5556
        %v5621 = vpack.c.b16 %v5557, %v5557
        %v5622 = vpack.c.b16 %v5558, %v5558
        %v5623 = vpack.c.b16 %v5559, %v5559
        %v5624 = vpack.c.b16 %v5560, %v5560
        %v5625 = vpack.c.b16 %v5561, %v5561
        %v5626 = vpack.c.b16 %v5562, %v5562
        %v5627 = vpack.c.b16 %v5563, %v5563
        %v5628 = vpack.c.b16 %v5564, %v5564
        %v5629 = vpack.c.b16 %v5565, %v5565
        %v5630 = vpack.c.b16 %v5566, %v5566
        %v5631 = vpack.c.b16 %v5567, %v5567
        %v5632 = vpack.c.b16 %v5568, %v5568
        %v5633 = vpack.c.b16 %v5569, %v5569
        %v5634 = vpack.c.b16 %v5570, %v5570
        %v5635 = vpack.c.b16 %v5571, %v5571
        %v5636 = vpack.c.b16 %v5572, %v5572
        %v5637 = vpack.c.b16 %v5573, %v5573
        %v5638 = vpack.c.b16 %v5574, %v5574
        %v5639 = vpack.c.b16 %v5575, %v5575
        %v5640 = vpack.c.b16 %v5576, %v5576
        %v5641 = vpack.c.b16 %v5577, %v5577
        %v5642 = vpack.c.b16 %v5578, %v5578
        %v5643 = vpack.c.b16 %v5579, %v5579
        %v5644 = vpack.c.b16 %v5580, %v5580
        %v5645 = vpack.c.b16 %v5581, %v5581
        %v5646 = vpack.c.b16 %v5582, %v5582
        %v5647 = vpack.c.b16 %v5583, %v5583
        %v5648 = vpack.c.b16 %v5584, %v5584
        %v5649 = vpack.c.b16 %v5585, %v5585
        %v5650 = vpack.c.b16 %v5586, %v5586
        %v5651 = vpack.c.b16 %v5587, %v5587
        %v5652 = vpack.c.b16 %v5588, %v5588
        %v5653 = vpack.c.b16 %v5589, %v5589
        %v5654 = vpack.c.b16 %v5590, %v5590
        %v5655 = vpack.c.b16 %v5591, %v5591
        %v5656 = vpack.c.b16 %v5592, %v5592
        %v5657 = vpack.c.b16 %v5593, %v5593
        %v5658 = vpack.c.b16 %v5594, %v5594
        %v5659 = vpack.c.b16 %v5595, %v5595
        %v5660 = vpack.c.b16 %v5596, %v5596
        %v5661 = vpack.c.b16 %v5597, %v5597
        %v5663 = vshrl.u32 %v5598, 16
        %v5665 = vrot.slane %v5663, 4
        %v5666 = vshll.u32 %v5598, 16
        %v5668 = vrot.slane %v5666, 5
        %v5669 = vor.u32 %v5665, %v5668
        %v5670 = vrot.slane %v5669, 4
        %v5672 = vshll.u32 %v5599, 16
        %v5674 = vrot.slane %v5672, 5
        %v5675 = vsel %vm959, %v5670, %v5674
        %v5677 = vshrl.u32 %v5600, 16
        %v5679 = vrot.slane %v5677, 4
        %v5680 = vshll.u32 %v5600, 16
        %v5682 = vrot.slane %v5680, 5
        %v5683 = vor.u32 %v5679, %v5682
        %v5684 = vrot.slane %v5683, 4
        %v5686 = vshll.u32 %v5601, 16
        %v5688 = vrot.slane %v5686, 5
        %v5689 = vsel %vm959, %v5684, %v5688
        %v5691 = vshrl.u32 %v5602, 16
        %v5693 = vrot.slane %v5691, 4
        %v5694 = vshll.u32 %v5602, 16
        %v5696 = vrot.slane %v5694, 5
        %v5697 = vor.u32 %v5693, %v5696
        %v5698 = vrot.slane %v5697, 4
        %v5700 = vshll.u32 %v5603, 16
        %v5702 = vrot.slane %v5700, 5
        %v5703 = vsel %vm959, %v5698, %v5702
        %v5705 = vshrl.u32 %v5604, 16
        %v5707 = vrot.slane %v5705, 4
        %v5708 = vshll.u32 %v5604, 16
        %v5710 = vrot.slane %v5708, 5
        %v5711 = vor.u32 %v5707, %v5710
        %v5712 = vrot.slane %v5711, 4
        %v5714 = vshll.u32 %v5605, 16
        %v5716 = vrot.slane %v5714, 5
        %v5717 = vsel %vm959, %v5712, %v5716
        %v5719 = vshrl.u32 %v5606, 16
        %v5721 = vrot.slane %v5719, 4
        %v5722 = vshll.u32 %v5606, 16
        %v5724 = vrot.slane %v5722, 5
        %v5725 = vor.u32 %v5721, %v5724
        %v5726 = vrot.slane %v5725, 4
        %v5728 = vshll.u32 %v5607, 16
        %v5730 = vrot.slane %v5728, 5
        %v5731 = vsel %vm959, %v5726, %v5730
        %v5733 = vshrl.u32 %v5608, 16
        %v5735 = vrot.slane %v5733, 4
        %v5736 = vshll.u32 %v5608, 16
        %v5738 = vrot.slane %v5736, 5
        %v5739 = vor.u32 %v5735, %v5738
        %v5740 = vrot.slane %v5739, 4
        %v5742 = vshll.u32 %v5609, 16
        %v5744 = vrot.slane %v5742, 5
        %v5745 = vsel %vm959, %v5740, %v5744
        %v5747 = vshrl.u32 %v5610, 16
        %v5749 = vrot.slane %v5747, 4
        %v5750 = vshll.u32 %v5610, 16
        %v5752 = vrot.slane %v5750, 5
        %v5753 = vor.u32 %v5749, %v5752
        %v5754 = vrot.slane %v5753, 4
        %v5756 = vshll.u32 %v5611, 16
        %v5758 = vrot.slane %v5756, 5
        %v5759 = vsel %vm959, %v5754, %v5758
        %v5761 = vshrl.u32 %v5612, 16
        %v5763 = vrot.slane %v5761, 4
        %v5764 = vshll.u32 %v5612, 16
        %v5766 = vrot.slane %v5764, 5
        %v5767 = vor.u32 %v5763, %v5766
        %v5768 = vrot.slane %v5767, 4
        %v5770 = vshll.u32 %v5613, 16
        %v5772 = vrot.slane %v5770, 5
        %v5773 = vsel %vm959, %v5768, %v5772
        %v5775 = vshrl.u32 %v5614, 16
        %v5777 = vrot.slane %v5775, 4
        %v5778 = vshll.u32 %v5614, 16
        %v5780 = vrot.slane %v5778, 5
        %v5781 = vor.u32 %v5777, %v5780
        %v5782 = vrot.slane %v5781, 4
        %v5784 = vshll.u32 %v5615, 16
        %v5786 = vrot.slane %v5784, 5
        %v5787 = vsel %vm959, %v5782, %v5786
        %v5789 = vshrl.u32 %v5616, 16
        %v5791 = vrot.slane %v5789, 4
        %v5792 = vshll.u32 %v5616, 16
        %v5794 = vrot.slane %v5792, 5
        %v5795 = vor.u32 %v5791, %v5794
        %v5796 = vrot.slane %v5795, 4
        %v5798 = vshll.u32 %v5617, 16
        %v5800 = vrot.slane %v5798, 5
        %v5801 = vsel %vm959, %v5796, %v5800
        %v5803 = vshrl.u32 %v5618, 16
        %v5805 = vrot.slane %v5803, 4
        %v5806 = vshll.u32 %v5618, 16
        %v5808 = vrot.slane %v5806, 5
        %v5809 = vor.u32 %v5805, %v5808
        %v5810 = vrot.slane %v5809, 4
        %v5812 = vshll.u32 %v5619, 16
        %v5814 = vrot.slane %v5812, 5
        %v5815 = vsel %vm959, %v5810, %v5814
        %v5817 = vshrl.u32 %v5620, 16
        %v5819 = vrot.slane %v5817, 4
        %v5820 = vshll.u32 %v5620, 16
        %v5822 = vrot.slane %v5820, 5
        %v5823 = vor.u32 %v5819, %v5822
        %v5824 = vrot.slane %v5823, 4
        %v5826 = vshll.u32 %v5621, 16
        %v5828 = vrot.slane %v5826, 5
        %v5829 = vsel %vm959, %v5824, %v5828
        %v5831 = vshrl.u32 %v5622, 16
        %v5833 = vrot.slane %v5831, 4
        %v5834 = vshll.u32 %v5622, 16
        %v5836 = vrot.slane %v5834, 5
        %v5837 = vor.u32 %v5833, %v5836
        %v5838 = vrot.slane %v5837, 4
        %v5840 = vshll.u32 %v5623, 16
        %v5842 = vrot.slane %v5840, 5
        %v5843 = vsel %vm959, %v5838, %v5842
        %v5845 = vshrl.u32 %v5624, 16
        %v5847 = vrot.slane %v5845, 4
        %v5848 = vshll.u32 %v5624, 16
        %v5850 = vrot.slane %v5848, 5
        %v5851 = vor.u32 %v5847, %v5850
        %v5852 = vrot.slane %v5851, 4
        %v5854 = vshll.u32 %v5625, 16
        %v5856 = vrot.slane %v5854, 5
        %v5857 = vsel %vm959, %v5852, %v5856
        %v5859 = vshrl.u32 %v5626, 16
        %v5861 = vrot.slane %v5859, 4
        %v5862 = vshll.u32 %v5626, 16
        %v5864 = vrot.slane %v5862, 5
        %v5865 = vor.u32 %v5861, %v5864
        %v5866 = vrot.slane %v5865, 4
        %v5868 = vshll.u32 %v5627, 16
        %v5870 = vrot.slane %v5868, 5
        %v5871 = vsel %vm959, %v5866, %v5870
        %v5873 = vshrl.u32 %v5628, 16
        %v5875 = vrot.slane %v5873, 4
        %v5876 = vshll.u32 %v5628, 16
        %v5878 = vrot.slane %v5876, 5
        %v5879 = vor.u32 %v5875, %v5878
        %v5880 = vrot.slane %v5879, 4
        %v5882 = vshll.u32 %v5629, 16
        %v5884 = vrot.slane %v5882, 5
        %v5885 = vsel %vm959, %v5880, %v5884
        %v5887 = vshrl.u32 %v5630, 16
        %v5889 = vrot.slane %v5887, 4
        %v5890 = vshll.u32 %v5630, 16
        %v5892 = vrot.slane %v5890, 5
        %v5893 = vor.u32 %v5889, %v5892
        %v5894 = vrot.slane %v5893, 4
        %v5896 = vshll.u32 %v5631, 16
        %v5898 = vrot.slane %v5896, 5
        %v5899 = vsel %vm959, %v5894, %v5898
        %v5901 = vshrl.u32 %v5632, 16
        %v5903 = vrot.slane %v5901, 4
        %v5904 = vshll.u32 %v5632, 16
        %v5906 = vrot.slane %v5904, 5
        %v5907 = vor.u32 %v5903, %v5906
        %v5908 = vrot.slane %v5907, 4
        %v5910 = vshll.u32 %v5633, 16
        %v5912 = vrot.slane %v5910, 5
        %v5913 = vsel %vm959, %v5908, %v5912
        %v5915 = vshrl.u32 %v5634, 16
        %v5917 = vrot.slane %v5915, 4
        %v5918 = vshll.u32 %v5634, 16
        %v5920 = vrot.slane %v5918, 5
        %v5921 = vor.u32 %v5917, %v5920
        %v5922 = vrot.slane %v5921, 4
        %v5924 = vshll.u32 %v5635, 16
        %v5926 = vrot.slane %v5924, 5
        %v5927 = vsel %vm959, %v5922, %v5926
        %v5929 = vshrl.u32 %v5636, 16
        %v5931 = vrot.slane %v5929, 4
        %v5932 = vshll.u32 %v5636, 16
        %v5934 = vrot.slane %v5932, 5
        %v5935 = vor.u32 %v5931, %v5934
        %v5936 = vrot.slane %v5935, 4
        %v5938 = vshll.u32 %v5637, 16
        %v5940 = vrot.slane %v5938, 5
        %v5941 = vsel %vm959, %v5936, %v5940
        %v5943 = vshrl.u32 %v5638, 16
        %v5945 = vrot.slane %v5943, 4
        %v5946 = vshll.u32 %v5638, 16
        %v5948 = vrot.slane %v5946, 5
        %v5949 = vor.u32 %v5945, %v5948
        %v5950 = vrot.slane %v5949, 4
        %v5952 = vshll.u32 %v5639, 16
        %v5954 = vrot.slane %v5952, 5
        %v5955 = vsel %vm959, %v5950, %v5954
        %v5957 = vshrl.u32 %v5640, 16
        %v5959 = vrot.slane %v5957, 4
        %v5960 = vshll.u32 %v5640, 16
        %v5962 = vrot.slane %v5960, 5
        %v5963 = vor.u32 %v5959, %v5962
        %v5964 = vrot.slane %v5963, 4
        %v5966 = vshll.u32 %v5641, 16
        %v5968 = vrot.slane %v5966, 5
        %v5969 = vsel %vm959, %v5964, %v5968
        %v5971 = vshrl.u32 %v5642, 16
        %v5973 = vrot.slane %v5971, 4
        %v5974 = vshll.u32 %v5642, 16
        %v5976 = vrot.slane %v5974, 5
        %v5977 = vor.u32 %v5973, %v5976
        %v5978 = vrot.slane %v5977, 4
        %v5980 = vshll.u32 %v5643, 16
        %v5982 = vrot.slane %v5980, 5
        %v5983 = vsel %vm959, %v5978, %v5982
        %v5985 = vshrl.u32 %v5644, 16
        %v5987 = vrot.slane %v5985, 4
        %v5988 = vshll.u32 %v5644, 16
        %v5990 = vrot.slane %v5988, 5
        %v5991 = vor.u32 %v5987, %v5990
        %v5992 = vrot.slane %v5991, 4
        %v5994 = vshll.u32 %v5645, 16
        %v5996 = vrot.slane %v5994, 5
        %v5997 = vsel %vm959, %v5992, %v5996
        %v5999 = vshrl.u32 %v5646, 16
        %v6001 = vrot.slane %v5999, 4
        %v6002 = vshll.u32 %v5646, 16
        %v6004 = vrot.slane %v6002, 5
        %v6005 = vor.u32 %v6001, %v6004
        %v6006 = vrot.slane %v6005, 4
        %v6008 = vshll.u32 %v5647, 16
        %v6010 = vrot.slane %v6008, 5
        %v6011 = vsel %vm959, %v6006, %v6010
        %v6013 = vshrl.u32 %v5648, 16
        %v6015 = vrot.slane %v6013, 4
        %v6016 = vshll.u32 %v5648, 16
        %v6018 = vrot.slane %v6016, 5
        %v6019 = vor.u32 %v6015, %v6018
        %v6020 = vrot.slane %v6019, 4
        %v6022 = vshll.u32 %v5649, 16
        %v6024 = vrot.slane %v6022, 5
        %v6025 = vsel %vm959, %v6020, %v6024
        %v6027 = vshrl.u32 %v5650, 16
        %v6029 = vrot.slane %v6027, 4
        %v6030 = vshll.u32 %v5650, 16
        %v6032 = vrot.slane %v6030, 5
        %v6033 = vor.u32 %v6029, %v6032
        %v6034 = vrot.slane %v6033, 4
        %v6036 = vshll.u32 %v5651, 16
        %v6038 = vrot.slane %v6036, 5
        %v6039 = vsel %vm959, %v6034, %v6038
        %v6041 = vshrl.u32 %v5652, 16
        %v6043 = vrot.slane %v6041, 4
        %v6044 = vshll.u32 %v5652, 16
        %v6046 = vrot.slane %v6044, 5
        %v6047 = vor.u32 %v6043, %v6046
        %v6048 = vrot.slane %v6047, 4
        %v6050 = vshll.u32 %v5653, 16
        %v6052 = vrot.slane %v6050, 5
        %v6053 = vsel %vm959, %v6048, %v6052
        %v6055 = vshrl.u32 %v5654, 16
        %v6057 = vrot.slane %v6055, 4
        %v6058 = vshll.u32 %v5654, 16
        %v6060 = vrot.slane %v6058, 5
        %v6061 = vor.u32 %v6057, %v6060
        %v6062 = vrot.slane %v6061, 4
        %v6064 = vshll.u32 %v5655, 16
        %v6066 = vrot.slane %v6064, 5
        %v6067 = vsel %vm959, %v6062, %v6066
        %v6069 = vshrl.u32 %v5656, 16
        %v6071 = vrot.slane %v6069, 4
        %v6072 = vshll.u32 %v5656, 16
        %v6074 = vrot.slane %v6072, 5
        %v6075 = vor.u32 %v6071, %v6074
        %v6076 = vrot.slane %v6075, 4
        %v6078 = vshll.u32 %v5657, 16
        %v6080 = vrot.slane %v6078, 5
        %v6081 = vsel %vm959, %v6076, %v6080
        %v6083 = vshrl.u32 %v5658, 16
        %v6085 = vrot.slane %v6083, 4
        %v6086 = vshll.u32 %v5658, 16
        %v6088 = vrot.slane %v6086, 5
        %v6089 = vor.u32 %v6085, %v6088
        %v6090 = vrot.slane %v6089, 4
        %v6092 = vshll.u32 %v5659, 16
        %v6094 = vrot.slane %v6092, 5
        %v6095 = vsel %vm959, %v6090, %v6094
        %v6097 = vshrl.u32 %v5660, 16
        %v6099 = vrot.slane %v6097, 4
        %v6100 = vshll.u32 %v5660, 16
        %v6102 = vrot.slane %v6100, 5
        %v6103 = vor.u32 %v6099, %v6102
        %v6104 = vrot.slane %v6103, 4
        %v6106 = vshll.u32 %v5661, 16
        %v6108 = vrot.slane %v6106, 5
        %v6109 = vsel %vm959, %v6104, %v6108
        %v6110 = vrot.slane %v5598, 5
        %v6111 = vrot.slane %v6110, 4
        %v6112 = vrot.slane %v5599, 5
        %v6113 = vsel %vm1410, %v6111, %v6112
        %v6114 = vrot.slane %v5600, 5
        %v6115 = vrot.slane %v6114, 4
        %v6116 = vrot.slane %v5601, 5
        %v6117 = vsel %vm1410, %v6115, %v6116
        %v6118 = vrot.slane %v5602, 5
        %v6119 = vrot.slane %v6118, 4
        %v6120 = vrot.slane %v5603, 5
        %v6121 = vsel %vm1410, %v6119, %v6120
        %v6122 = vrot.slane %v5604, 5
        %v6123 = vrot.slane %v6122, 4
        %v6124 = vrot.slane %v5605, 5
        %v6125 = vsel %vm1410, %v6123, %v6124
        %v6126 = vrot.slane %v5606, 5
        %v6127 = vrot.slane %v6126, 4
        %v6128 = vrot.slane %v5607, 5
        %v6129 = vsel %vm1410, %v6127, %v6128
        %v6130 = vrot.slane %v5608, 5
        %v6131 = vrot.slane %v6130, 4
        %v6132 = vrot.slane %v5609, 5
        %v6133 = vsel %vm1410, %v6131, %v6132
        %v6134 = vrot.slane %v5610, 5
        %v6135 = vrot.slane %v6134, 4
        %v6136 = vrot.slane %v5611, 5
        %v6137 = vsel %vm1410, %v6135, %v6136
        %v6138 = vrot.slane %v5612, 5
        %v6139 = vrot.slane %v6138, 4
        %v6140 = vrot.slane %v5613, 5
        %v6141 = vsel %vm1410, %v6139, %v6140
        %v6142 = vrot.slane %v5614, 5
        %v6143 = vrot.slane %v6142, 4
        %v6144 = vrot.slane %v5615, 5
        %v6145 = vsel %vm1410, %v6143, %v6144
        %v6146 = vrot.slane %v5616, 5
        %v6147 = vrot.slane %v6146, 4
        %v6148 = vrot.slane %v5617, 5
        %v6149 = vsel %vm1410, %v6147, %v6148
        %v6150 = vrot.slane %v5618, 5
        %v6151 = vrot.slane %v6150, 4
        %v6152 = vrot.slane %v5619, 5
        %v6153 = vsel %vm1410, %v6151, %v6152
        %v6154 = vrot.slane %v5620, 5
        %v6155 = vrot.slane %v6154, 4
        %v6156 = vrot.slane %v5621, 5
        %v6157 = vsel %vm1410, %v6155, %v6156
        %v6158 = vrot.slane %v5622, 5
        %v6159 = vrot.slane %v6158, 4
        %v6160 = vrot.slane %v5623, 5
        %v6161 = vsel %vm1410, %v6159, %v6160
        %v6162 = vrot.slane %v5624, 5
        %v6163 = vrot.slane %v6162, 4
        %v6164 = vrot.slane %v5625, 5
        %v6165 = vsel %vm1410, %v6163, %v6164
        %v6166 = vrot.slane %v5626, 5
        %v6167 = vrot.slane %v6166, 4
        %v6168 = vrot.slane %v5627, 5
        %v6169 = vsel %vm1410, %v6167, %v6168
        %v6170 = vrot.slane %v5628, 5
        %v6171 = vrot.slane %v6170, 4
        %v6172 = vrot.slane %v5629, 5
        %v6173 = vsel %vm1410, %v6171, %v6172
        %v6174 = vrot.slane %v5630, 5
        %v6175 = vrot.slane %v6174, 4
        %v6176 = vrot.slane %v5631, 5
        %v6177 = vsel %vm1410, %v6175, %v6176
        %v6178 = vrot.slane %v5632, 5
        %v6179 = vrot.slane %v6178, 4
        %v6180 = vrot.slane %v5633, 5
        %v6181 = vsel %vm1410, %v6179, %v6180
        %v6182 = vrot.slane %v5634, 5
        %v6183 = vrot.slane %v6182, 4
        %v6184 = vrot.slane %v5635, 5
        %v6185 = vsel %vm1410, %v6183, %v6184
        %v6186 = vrot.slane %v5636, 5
        %v6187 = vrot.slane %v6186, 4
        %v6188 = vrot.slane %v5637, 5
        %v6189 = vsel %vm1410, %v6187, %v6188
        %v6190 = vrot.slane %v5638, 5
        %v6191 = vrot.slane %v6190, 4
        %v6192 = vrot.slane %v5639, 5
        %v6193 = vsel %vm1410, %v6191, %v6192
        %v6194 = vrot.slane %v5640, 5
        %v6195 = vrot.slane %v6194, 4
        %v6196 = vrot.slane %v5641, 5
        %v6197 = vsel %vm1410, %v6195, %v6196
        %v6198 = vrot.slane %v5642, 5
        %v6199 = vrot.slane %v6198, 4
        %v6200 = vrot.slane %v5643, 5
        %v6201 = vsel %vm1410, %v6199, %v6200
        %v6202 = vrot.slane %v5644, 5
        %v6203 = vrot.slane %v6202, 4
        %v6204 = vrot.slane %v5645, 5
        %v6205 = vsel %vm1410, %v6203, %v6204
        %v6206 = vrot.slane %v5646, 5
        %v6207 = vrot.slane %v6206, 4
        %v6208 = vrot.slane %v5647, 5
        %v6209 = vsel %vm1410, %v6207, %v6208
        %v6210 = vrot.slane %v5648, 5
        %v6211 = vrot.slane %v6210, 4
        %v6212 = vrot.slane %v5649, 5
        %v6213 = vsel %vm1410, %v6211, %v6212
        %v6214 = vrot.slane %v5650, 5
        %v6215 = vrot.slane %v6214, 4
        %v6216 = vrot.slane %v5651, 5
        %v6217 = vsel %vm1410, %v6215, %v6216
        %v6218 = vrot.slane %v5652, 5
        %v6219 = vrot.slane %v6218, 4
        %v6220 = vrot.slane %v5653, 5
        %v6221 = vsel %vm1410, %v6219, %v6220
        %v6222 = vrot.slane %v5654, 5
        %v6223 = vrot.slane %v6222, 4
        %v6224 = vrot.slane %v5655, 5
        %v6225 = vsel %vm1410, %v6223, %v6224
        %v6226 = vrot.slane %v5656, 5
        %v6227 = vrot.slane %v6226, 4
        %v6228 = vrot.slane %v5657, 5
        %v6229 = vsel %vm1410, %v6227, %v6228
        %v6230 = vrot.slane %v5658, 5
        %v6231 = vrot.slane %v6230, 4
        %v6232 = vrot.slane %v5659, 5
        %v6233 = vsel %vm1410, %v6231, %v6232
        %v6234 = vrot.slane %v5660, 5
        %v6235 = vrot.slane %v6234, 4
        %v6236 = vrot.slane %v5661, 5
        %v6237 = vsel %vm1410, %v6235, %v6236
        %v6238 = vld [vmem:[%s2371] sm:$0xff]
        %v6239 = vld [vmem:[%s2371 + $0x8] sm:$0x3]
        %v6240 = vld [vmem:[%s2371 + $0x10] sm:$0xff]
        %v6241 = vld [vmem:[%s2371 + $0x18] sm:$0x3]
        %v6242 = vld [vmem:[%s2371 + $0x20] sm:$0xff]
        %v6243 = vld [vmem:[%s2371 + $0x28] sm:$0x3]
        %v6244 = vld [vmem:[%s2371 + $0x30] sm:$0xff]
        %v6245 = vld [vmem:[%s2371 + $0x38] sm:$0x3]
        %v6246 = vld [vmem:[%s2371 + $0x40] sm:$0xff]
        %v6247 = vld [vmem:[%s2371 + $0x48] sm:$0x3]
        %v6248 = vld [vmem:[%s2371 + $0x50] sm:$0xff]
        %v6249 = vld [vmem:[%s2371 + $0x58] sm:$0x3]
        %v6250 = vld [vmem:[%s2371 + $0x60] sm:$0xff]
        %v6251 = vld [vmem:[%s2371 + $0x68] sm:$0x3]
        %v6252 = vld [vmem:[%s2371 + $0x70] sm:$0xff]
        %v6253 = vld [vmem:[%s2371 + $0x78] sm:$0x3]
        %v6254 = vld [vmem:[%s2371 + $0xa0] sm:$0xff]
        %v6255 = vld [vmem:[%s2371 + $0xa8] sm:$0x3]
        %v6256 = vld [vmem:[%s2371 + $0xb0] sm:$0xff]
        %v6257 = vld [vmem:[%s2371 + $0xb8] sm:$0x3]
        %v6258 = vld [vmem:[%s2371 + $0xc0] sm:$0xff]
        %v6259 = vld [vmem:[%s2371 + $0xc8] sm:$0x3]
        %v6260 = vld [vmem:[%s2371 + $0xd0] sm:$0xff]
        %v6261 = vld [vmem:[%s2371 + $0xd8] sm:$0x3]
        %v6262 = vld [vmem:[%s2371 + $0xe0] sm:$0xff]
        %v6263 = vld [vmem:[%s2371 + $0xe8] sm:$0x3]
        %v6264 = vld [vmem:[%s2371 + $0xf0] sm:$0xff]
        %v6265 = vld [vmem:[%s2371 + $0xf8] sm:$0x3]
        %v6266 = vld [vmem:[%s2371 + $0x100] sm:$0xff]
        %v6267 = vld [vmem:[%s2371 + $0x108] sm:$0x3]
        %v6268 = vld [vmem:[%s2371 + $0x110] sm:$0xff]
        %v6269 = vld [vmem:[%s2371 + $0x118] sm:$0x3]
        %v6270 = vld [vmem:[%s2371 + $0x140] sm:$0xff]
        %v6271 = vld [vmem:[%s2371 + $0x148] sm:$0x3]
        %v6272 = vld [vmem:[%s2371 + $0x150] sm:$0xff]
        %v6273 = vld [vmem:[%s2371 + $0x158] sm:$0x3]
        %v6274 = vld [vmem:[%s2371 + $0x160] sm:$0xff]
        %v6275 = vld [vmem:[%s2371 + $0x168] sm:$0x3]
        %v6276 = vld [vmem:[%s2371 + $0x170] sm:$0xff]
        %v6277 = vld [vmem:[%s2371 + $0x178] sm:$0x3]
        %v6278 = vld [vmem:[%s2371 + $0x180] sm:$0xff]
        %v6279 = vld [vmem:[%s2371 + $0x188] sm:$0x3]
        %v6280 = vld [vmem:[%s2371 + $0x190] sm:$0xff]
        %v6281 = vld [vmem:[%s2371 + $0x198] sm:$0x3]
        %v6282 = vld [vmem:[%s2371 + $0x1a0] sm:$0xff]
        %v6283 = vld [vmem:[%s2371 + $0x1a8] sm:$0x3]
        %v6284 = vld [vmem:[%s2371 + $0x1b0] sm:$0xff]
        %v6285 = vld [vmem:[%s2371 + $0x1b8] sm:$0x3]
        %v6286 = vld [vmem:[%s2371 + $0x1e0] sm:$0xff]
        %v6287 = vld [vmem:[%s2371 + $0x1e8] sm:$0x3]
        %v6288 = vld [vmem:[%s2371 + $0x1f0] sm:$0xff]
        %v6289 = vld [vmem:[%s2371 + $0x1f8] sm:$0x3]
        %v6290 = vld [vmem:[%s2371 + $0x200] sm:$0xff]
        %v6291 = vld [vmem:[%s2371 + $0x208] sm:$0x3]
        %v6292 = vld [vmem:[%s2371 + $0x210] sm:$0xff]
        %v6293 = vld [vmem:[%s2371 + $0x218] sm:$0x3]
        %v6294 = vld [vmem:[%s2371 + $0x220] sm:$0xff]
        %v6295 = vld [vmem:[%s2371 + $0x228] sm:$0x3]
        %v6296 = vld [vmem:[%s2371 + $0x230] sm:$0xff]
        %v6297 = vld [vmem:[%s2371 + $0x238] sm:$0x3]
        %v6298 = vld [vmem:[%s2371 + $0x240] sm:$0xff]
        %v6299 = vld [vmem:[%s2371 + $0x248] sm:$0x3]
        %v6300 = vld [vmem:[%s2371 + $0x250] sm:$0xff]
        %v6301 = vld [vmem:[%s2371 + $0x258] sm:$0x3]
        %v6302 = vpack.c.bf16 %v6239, %v6238
        %v6303 = vpack.c.bf16 %v6241, %v6240
        %v6304 = vpack.c.bf16 %v6243, %v6242
        %v6305 = vpack.c.bf16 %v6245, %v6244
        %v6306 = vpack.c.bf16 %v6247, %v6246
        %v6307 = vpack.c.bf16 %v6249, %v6248
        %v6308 = vpack.c.bf16 %v6251, %v6250
        %v6309 = vpack.c.bf16 %v6253, %v6252
        %v6310 = vpack.c.bf16 %v6255, %v6254
        %v6311 = vpack.c.bf16 %v6257, %v6256
        %v6312 = vpack.c.bf16 %v6259, %v6258
        %v6313 = vpack.c.bf16 %v6261, %v6260
        %v6314 = vpack.c.bf16 %v6263, %v6262
        %v6315 = vpack.c.bf16 %v6265, %v6264
        %v6316 = vpack.c.bf16 %v6267, %v6266
        %v6317 = vpack.c.bf16 %v6269, %v6268
        %v6318 = vpack.c.bf16 %v6271, %v6270
        %v6319 = vpack.c.bf16 %v6273, %v6272
        %v6320 = vpack.c.bf16 %v6275, %v6274
        %v6321 = vpack.c.bf16 %v6277, %v6276
        %v6322 = vpack.c.bf16 %v6279, %v6278
        %v6323 = vpack.c.bf16 %v6281, %v6280
        %v6324 = vpack.c.bf16 %v6283, %v6282
        %v6325 = vpack.c.bf16 %v6285, %v6284
        %v6326 = vpack.c.bf16 %v6287, %v6286
        %v6327 = vpack.c.bf16 %v6289, %v6288
        %v6328 = vpack.c.bf16 %v6291, %v6290
        %v6329 = vpack.c.bf16 %v6293, %v6292
        %v6330 = vpack.c.bf16 %v6295, %v6294
        %v6331 = vpack.c.bf16 %v6297, %v6296
        %v6332 = vpack.c.bf16 %v6299, %v6298
        %v6333 = vpack.c.bf16 %v6301, %v6300
        %v6366 = vunpack.c.l.b16 %v6302
        %v6367 = vunpack.c.h.b16 %v6302
        %v6368 = vunpack.c.l.b16 %v6303
        %v6369 = vunpack.c.h.b16 %v6303
        %v6370 = vunpack.c.l.b16 %v6304
        %v6371 = vunpack.c.h.b16 %v6304
        %v6372 = vunpack.c.l.b16 %v6305
        %v6373 = vunpack.c.h.b16 %v6305
        %v6374 = vunpack.c.l.b16 %v6306
        %v6375 = vunpack.c.h.b16 %v6306
        %v6376 = vunpack.c.l.b16 %v6307
        %v6377 = vunpack.c.h.b16 %v6307
        %v6378 = vunpack.c.l.b16 %v6308
        %v6379 = vunpack.c.h.b16 %v6308
        %v6380 = vunpack.c.l.b16 %v6309
        %v6381 = vunpack.c.h.b16 %v6309
        %v6382 = vunpack.c.l.b16 %v6310
        %v6383 = vunpack.c.h.b16 %v6310
        %v6384 = vunpack.c.l.b16 %v6311
        %v6385 = vunpack.c.h.b16 %v6311
        %v6386 = vunpack.c.l.b16 %v6312
        %v6387 = vunpack.c.h.b16 %v6312
        %v6388 = vunpack.c.l.b16 %v6313
        %v6389 = vunpack.c.h.b16 %v6313
        %v6390 = vunpack.c.l.b16 %v6314
        %v6391 = vunpack.c.h.b16 %v6314
        %v6392 = vunpack.c.l.b16 %v6315
        %v6393 = vunpack.c.h.b16 %v6315
        %v6394 = vunpack.c.l.b16 %v6316
        %v6395 = vunpack.c.h.b16 %v6316
        %v6396 = vunpack.c.l.b16 %v6317
        %v6397 = vunpack.c.h.b16 %v6317
        %v6398 = vunpack.c.l.b16 %v6318
        %v6399 = vunpack.c.h.b16 %v6318
        %v6400 = vunpack.c.l.b16 %v6319
        %v6401 = vunpack.c.h.b16 %v6319
        %v6402 = vunpack.c.l.b16 %v6320
        %v6403 = vunpack.c.h.b16 %v6320
        %v6404 = vunpack.c.l.b16 %v6321
        %v6405 = vunpack.c.h.b16 %v6321
        %v6406 = vunpack.c.l.b16 %v6322
        %v6407 = vunpack.c.h.b16 %v6322
        %v6408 = vunpack.c.l.b16 %v6323
        %v6409 = vunpack.c.h.b16 %v6323
        %v6410 = vunpack.c.l.b16 %v6324
        %v6411 = vunpack.c.h.b16 %v6324
        %v6412 = vunpack.c.l.b16 %v6325
        %v6413 = vunpack.c.h.b16 %v6325
        %v6414 = vunpack.c.l.b16 %v6326
        %v6415 = vunpack.c.h.b16 %v6326
        %v6416 = vunpack.c.l.b16 %v6327
        %v6417 = vunpack.c.h.b16 %v6327
        %v6418 = vunpack.c.l.b16 %v6328
        %v6419 = vunpack.c.h.b16 %v6328
        %v6420 = vunpack.c.l.b16 %v6329
        %v6421 = vunpack.c.h.b16 %v6329
        %v6422 = vunpack.c.l.b16 %v6330
        %v6423 = vunpack.c.h.b16 %v6330
        %v6424 = vunpack.c.l.b16 %v6331
        %v6425 = vunpack.c.h.b16 %v6331
        %v6426 = vunpack.c.l.b16 %v6332
        %v6427 = vunpack.c.h.b16 %v6332
        %v6428 = vunpack.c.l.b16 %v6333
        %v6429 = vunpack.c.h.b16 %v6333
        %v6430 = vpack.c.b16 %v6366, %v6366
        %v6431 = vpack.c.b16 %v6367, %v6367
        %v6432 = vpack.c.b16 %v6368, %v6368
        %v6433 = vpack.c.b16 %v6369, %v6369
        %v6434 = vpack.c.b16 %v6370, %v6370
        %v6435 = vpack.c.b16 %v6371, %v6371
        %v6436 = vpack.c.b16 %v6372, %v6372
        %v6437 = vpack.c.b16 %v6373, %v6373
        %v6438 = vpack.c.b16 %v6374, %v6374
        %v6439 = vpack.c.b16 %v6375, %v6375
        %v6440 = vpack.c.b16 %v6376, %v6376
        %v6441 = vpack.c.b16 %v6377, %v6377
        %v6442 = vpack.c.b16 %v6378, %v6378
        %v6443 = vpack.c.b16 %v6379, %v6379
        %v6444 = vpack.c.b16 %v6380, %v6380
        %v6445 = vpack.c.b16 %v6381, %v6381
        %v6446 = vpack.c.b16 %v6382, %v6382
        %v6447 = vpack.c.b16 %v6383, %v6383
        %v6448 = vpack.c.b16 %v6384, %v6384
        %v6449 = vpack.c.b16 %v6385, %v6385
        %v6450 = vpack.c.b16 %v6386, %v6386
        %v6451 = vpack.c.b16 %v6387, %v6387
        %v6452 = vpack.c.b16 %v6388, %v6388
        %v6453 = vpack.c.b16 %v6389, %v6389
        %v6454 = vpack.c.b16 %v6390, %v6390
        %v6455 = vpack.c.b16 %v6391, %v6391
        %v6456 = vpack.c.b16 %v6392, %v6392
        %v6457 = vpack.c.b16 %v6393, %v6393
        %v6458 = vpack.c.b16 %v6394, %v6394
        %v6459 = vpack.c.b16 %v6395, %v6395
        %v6460 = vpack.c.b16 %v6396, %v6396
        %v6461 = vpack.c.b16 %v6397, %v6397
        %v6462 = vpack.c.b16 %v6398, %v6398
        %v6463 = vpack.c.b16 %v6399, %v6399
        %v6464 = vpack.c.b16 %v6400, %v6400
        %v6465 = vpack.c.b16 %v6401, %v6401
        %v6466 = vpack.c.b16 %v6402, %v6402
        %v6467 = vpack.c.b16 %v6403, %v6403
        %v6468 = vpack.c.b16 %v6404, %v6404
        %v6469 = vpack.c.b16 %v6405, %v6405
        %v6470 = vpack.c.b16 %v6406, %v6406
        %v6471 = vpack.c.b16 %v6407, %v6407
        %v6472 = vpack.c.b16 %v6408, %v6408
        %v6473 = vpack.c.b16 %v6409, %v6409
        %v6474 = vpack.c.b16 %v6410, %v6410
        %v6475 = vpack.c.b16 %v6411, %v6411
        %v6476 = vpack.c.b16 %v6412, %v6412
        %v6477 = vpack.c.b16 %v6413, %v6413
        %v6478 = vpack.c.b16 %v6414, %v6414
        %v6479 = vpack.c.b16 %v6415, %v6415
        %v6480 = vpack.c.b16 %v6416, %v6416
        %v6481 = vpack.c.b16 %v6417, %v6417
        %v6482 = vpack.c.b16 %v6418, %v6418
        %v6483 = vpack.c.b16 %v6419, %v6419
        %v6484 = vpack.c.b16 %v6420, %v6420
        %v6485 = vpack.c.b16 %v6421, %v6421
        %v6486 = vpack.c.b16 %v6422, %v6422
        %v6487 = vpack.c.b16 %v6423, %v6423
        %v6488 = vpack.c.b16 %v6424, %v6424
        %v6489 = vpack.c.b16 %v6425, %v6425
        %v6490 = vpack.c.b16 %v6426, %v6426
        %v6491 = vpack.c.b16 %v6427, %v6427
        %v6492 = vpack.c.b16 %v6428, %v6428
        %v6493 = vpack.c.b16 %v6429, %v6429
        %v6495 = vshrl.u32 %v6430, 16
        %v6497 = vrot.slane %v6495, 4
        %v6498 = vshll.u32 %v6430, 16
        %v6500 = vrot.slane %v6498, 5
        %v6501 = vor.u32 %v6497, %v6500
        %v6502 = vrot.slane %v6501, 4
        %v6504 = vshll.u32 %v6431, 16
        %v6506 = vrot.slane %v6504, 5
        %v6507 = vsel %vm959, %v6502, %v6506
        %v6509 = vshrl.u32 %v6432, 16
        %v6511 = vrot.slane %v6509, 4
        %v6512 = vshll.u32 %v6432, 16
        %v6514 = vrot.slane %v6512, 5
        %v6515 = vor.u32 %v6511, %v6514
        %v6516 = vrot.slane %v6515, 4
        %v6518 = vshll.u32 %v6433, 16
        %v6520 = vrot.slane %v6518, 5
        %v6521 = vsel %vm959, %v6516, %v6520
        %v6523 = vshrl.u32 %v6434, 16
        %v6525 = vrot.slane %v6523, 4
        %v6526 = vshll.u32 %v6434, 16
        %v6528 = vrot.slane %v6526, 5
        %v6529 = vor.u32 %v6525, %v6528
        %v6530 = vrot.slane %v6529, 4
        %v6532 = vshll.u32 %v6435, 16
        %v6534 = vrot.slane %v6532, 5
        %v6535 = vsel %vm959, %v6530, %v6534
        %v6537 = vshrl.u32 %v6436, 16
        %v6539 = vrot.slane %v6537, 4
        %v6540 = vshll.u32 %v6436, 16
        %v6542 = vrot.slane %v6540, 5
        %v6543 = vor.u32 %v6539, %v6542
        %v6544 = vrot.slane %v6543, 4
        %v6546 = vshll.u32 %v6437, 16
        %v6548 = vrot.slane %v6546, 5
        %v6549 = vsel %vm959, %v6544, %v6548
        %v6551 = vshrl.u32 %v6438, 16
        %v6553 = vrot.slane %v6551, 4
        %v6554 = vshll.u32 %v6438, 16
        %v6556 = vrot.slane %v6554, 5
        %v6557 = vor.u32 %v6553, %v6556
        %v6558 = vrot.slane %v6557, 4
        %v6560 = vshll.u32 %v6439, 16
        %v6562 = vrot.slane %v6560, 5
        %v6563 = vsel %vm959, %v6558, %v6562
        %v6565 = vshrl.u32 %v6440, 16
        %v6567 = vrot.slane %v6565, 4
        %v6568 = vshll.u32 %v6440, 16
        %v6570 = vrot.slane %v6568, 5
        %v6571 = vor.u32 %v6567, %v6570
        %v6572 = vrot.slane %v6571, 4
        %v6574 = vshll.u32 %v6441, 16
        %v6576 = vrot.slane %v6574, 5
        %v6577 = vsel %vm959, %v6572, %v6576
        %v6579 = vshrl.u32 %v6442, 16
        %v6581 = vrot.slane %v6579, 4
        %v6582 = vshll.u32 %v6442, 16
        %v6584 = vrot.slane %v6582, 5
        %v6585 = vor.u32 %v6581, %v6584
        %v6586 = vrot.slane %v6585, 4
        %v6588 = vshll.u32 %v6443, 16
        %v6590 = vrot.slane %v6588, 5
        %v6591 = vsel %vm959, %v6586, %v6590
        %v6593 = vshrl.u32 %v6444, 16
        %v6595 = vrot.slane %v6593, 4
        %v6596 = vshll.u32 %v6444, 16
        %v6598 = vrot.slane %v6596, 5
        %v6599 = vor.u32 %v6595, %v6598
        %v6600 = vrot.slane %v6599, 4
        %v6602 = vshll.u32 %v6445, 16
        %v6604 = vrot.slane %v6602, 5
        %v6605 = vsel %vm959, %v6600, %v6604
        %v6607 = vshrl.u32 %v6446, 16
        %v6609 = vrot.slane %v6607, 4
        %v6610 = vshll.u32 %v6446, 16
        %v6612 = vrot.slane %v6610, 5
        %v6613 = vor.u32 %v6609, %v6612
        %v6614 = vrot.slane %v6613, 4
        %v6616 = vshll.u32 %v6447, 16
        %v6618 = vrot.slane %v6616, 5
        %v6619 = vsel %vm959, %v6614, %v6618
        %v6621 = vshrl.u32 %v6448, 16
        %v6623 = vrot.slane %v6621, 4
        %v6624 = vshll.u32 %v6448, 16
        %v6626 = vrot.slane %v6624, 5
        %v6627 = vor.u32 %v6623, %v6626
        %v6628 = vrot.slane %v6627, 4
        %v6630 = vshll.u32 %v6449, 16
        %v6632 = vrot.slane %v6630, 5
        %v6633 = vsel %vm959, %v6628, %v6632
        %v6635 = vshrl.u32 %v6450, 16
        %v6637 = vrot.slane %v6635, 4
        %v6638 = vshll.u32 %v6450, 16
        %v6640 = vrot.slane %v6638, 5
        %v6641 = vor.u32 %v6637, %v6640
        %v6642 = vrot.slane %v6641, 4
        %v6644 = vshll.u32 %v6451, 16
        %v6646 = vrot.slane %v6644, 5
        %v6647 = vsel %vm959, %v6642, %v6646
        %v6649 = vshrl.u32 %v6452, 16
        %v6651 = vrot.slane %v6649, 4
        %v6652 = vshll.u32 %v6452, 16
        %v6654 = vrot.slane %v6652, 5
        %v6655 = vor.u32 %v6651, %v6654
        %v6656 = vrot.slane %v6655, 4
        %v6658 = vshll.u32 %v6453, 16
        %v6660 = vrot.slane %v6658, 5
        %v6661 = vsel %vm959, %v6656, %v6660
        %v6663 = vshrl.u32 %v6454, 16
        %v6665 = vrot.slane %v6663, 4
        %v6666 = vshll.u32 %v6454, 16
        %v6668 = vrot.slane %v6666, 5
        %v6669 = vor.u32 %v6665, %v6668
        %v6670 = vrot.slane %v6669, 4
        %v6672 = vshll.u32 %v6455, 16
        %v6674 = vrot.slane %v6672, 5
        %v6675 = vsel %vm959, %v6670, %v6674
        %v6677 = vshrl.u32 %v6456, 16
        %v6679 = vrot.slane %v6677, 4
        %v6680 = vshll.u32 %v6456, 16
        %v6682 = vrot.slane %v6680, 5
        %v6683 = vor.u32 %v6679, %v6682
        %v6684 = vrot.slane %v6683, 4
        %v6686 = vshll.u32 %v6457, 16
        %v6688 = vrot.slane %v6686, 5
        %v6689 = vsel %vm959, %v6684, %v6688
        %v6691 = vshrl.u32 %v6458, 16
        %v6693 = vrot.slane %v6691, 4
        %v6694 = vshll.u32 %v6458, 16
        %v6696 = vrot.slane %v6694, 5
        %v6697 = vor.u32 %v6693, %v6696
        %v6698 = vrot.slane %v6697, 4
        %v6700 = vshll.u32 %v6459, 16
        %v6702 = vrot.slane %v6700, 5
        %v6703 = vsel %vm959, %v6698, %v6702
        %v6705 = vshrl.u32 %v6460, 16
        %v6707 = vrot.slane %v6705, 4
        %v6708 = vshll.u32 %v6460, 16
        %v6710 = vrot.slane %v6708, 5
        %v6711 = vor.u32 %v6707, %v6710
        %v6712 = vrot.slane %v6711, 4
        %v6714 = vshll.u32 %v6461, 16
        %v6716 = vrot.slane %v6714, 5
        %v6717 = vsel %vm959, %v6712, %v6716
        %v6719 = vshrl.u32 %v6462, 16
        %v6721 = vrot.slane %v6719, 4
        %v6722 = vshll.u32 %v6462, 16
        %v6724 = vrot.slane %v6722, 5
        %v6725 = vor.u32 %v6721, %v6724
        %v6726 = vrot.slane %v6725, 4
        %v6728 = vshll.u32 %v6463, 16
        %v6730 = vrot.slane %v6728, 5
        %v6731 = vsel %vm959, %v6726, %v6730
        %v6733 = vshrl.u32 %v6464, 16
        %v6735 = vrot.slane %v6733, 4
        %v6736 = vshll.u32 %v6464, 16
        %v6738 = vrot.slane %v6736, 5
        %v6739 = vor.u32 %v6735, %v6738
        %v6740 = vrot.slane %v6739, 4
        %v6742 = vshll.u32 %v6465, 16
        %v6744 = vrot.slane %v6742, 5
        %v6745 = vsel %vm959, %v6740, %v6744
        %v6747 = vshrl.u32 %v6466, 16
        %v6749 = vrot.slane %v6747, 4
        %v6750 = vshll.u32 %v6466, 16
        %v6752 = vrot.slane %v6750, 5
        %v6753 = vor.u32 %v6749, %v6752
        %v6754 = vrot.slane %v6753, 4
        %v6756 = vshll.u32 %v6467, 16
        %v6758 = vrot.slane %v6756, 5
        %v6759 = vsel %vm959, %v6754, %v6758
        %v6761 = vshrl.u32 %v6468, 16
        %v6763 = vrot.slane %v6761, 4
        %v6764 = vshll.u32 %v6468, 16
        %v6766 = vrot.slane %v6764, 5
        %v6767 = vor.u32 %v6763, %v6766
        %v6768 = vrot.slane %v6767, 4
        %v6770 = vshll.u32 %v6469, 16
        %v6772 = vrot.slane %v6770, 5
        %v6773 = vsel %vm959, %v6768, %v6772
        %v6775 = vshrl.u32 %v6470, 16
        %v6777 = vrot.slane %v6775, 4
        %v6778 = vshll.u32 %v6470, 16
        %v6780 = vrot.slane %v6778, 5
        %v6781 = vor.u32 %v6777, %v6780
        %v6782 = vrot.slane %v6781, 4
        %v6784 = vshll.u32 %v6471, 16
        %v6786 = vrot.slane %v6784, 5
        %v6787 = vsel %vm959, %v6782, %v6786
        %v6789 = vshrl.u32 %v6472, 16
        %v6791 = vrot.slane %v6789, 4
        %v6792 = vshll.u32 %v6472, 16
        %v6794 = vrot.slane %v6792, 5
        %v6795 = vor.u32 %v6791, %v6794
        %v6796 = vrot.slane %v6795, 4
        %v6798 = vshll.u32 %v6473, 16
        %v6800 = vrot.slane %v6798, 5
        %v6801 = vsel %vm959, %v6796, %v6800
        %v6803 = vshrl.u32 %v6474, 16
        %v6805 = vrot.slane %v6803, 4
        %v6806 = vshll.u32 %v6474, 16
        %v6808 = vrot.slane %v6806, 5
        %v6809 = vor.u32 %v6805, %v6808
        %v6810 = vrot.slane %v6809, 4
        %v6812 = vshll.u32 %v6475, 16
        %v6814 = vrot.slane %v6812, 5
        %v6815 = vsel %vm959, %v6810, %v6814
        %v6817 = vshrl.u32 %v6476, 16
        %v6819 = vrot.slane %v6817, 4
        %v6820 = vshll.u32 %v6476, 16
        %v6822 = vrot.slane %v6820, 5
        %v6823 = vor.u32 %v6819, %v6822
        %v6824 = vrot.slane %v6823, 4
        %v6826 = vshll.u32 %v6477, 16
        %v6828 = vrot.slane %v6826, 5
        %v6829 = vsel %vm959, %v6824, %v6828
        %v6831 = vshrl.u32 %v6478, 16
        %v6833 = vrot.slane %v6831, 4
        %v6834 = vshll.u32 %v6478, 16
        %v6836 = vrot.slane %v6834, 5
        %v6837 = vor.u32 %v6833, %v6836
        %v6838 = vrot.slane %v6837, 4
        %v6840 = vshll.u32 %v6479, 16
        %v6842 = vrot.slane %v6840, 5
        %v6843 = vsel %vm959, %v6838, %v6842
        %v6845 = vshrl.u32 %v6480, 16
        %v6847 = vrot.slane %v6845, 4
        %v6848 = vshll.u32 %v6480, 16
        %v6850 = vrot.slane %v6848, 5
        %v6851 = vor.u32 %v6847, %v6850
        %v6852 = vrot.slane %v6851, 4
        %v6854 = vshll.u32 %v6481, 16
        %v6856 = vrot.slane %v6854, 5
        %v6857 = vsel %vm959, %v6852, %v6856
        %v6859 = vshrl.u32 %v6482, 16
        %v6861 = vrot.slane %v6859, 4
        %v6862 = vshll.u32 %v6482, 16
        %v6864 = vrot.slane %v6862, 5
        %v6865 = vor.u32 %v6861, %v6864
        %v6866 = vrot.slane %v6865, 4
        %v6868 = vshll.u32 %v6483, 16
        %v6870 = vrot.slane %v6868, 5
        %v6871 = vsel %vm959, %v6866, %v6870
        %v6873 = vshrl.u32 %v6484, 16
        %v6875 = vrot.slane %v6873, 4
        %v6876 = vshll.u32 %v6484, 16
        %v6878 = vrot.slane %v6876, 5
        %v6879 = vor.u32 %v6875, %v6878
        %v6880 = vrot.slane %v6879, 4
        %v6882 = vshll.u32 %v6485, 16
        %v6884 = vrot.slane %v6882, 5
        %v6885 = vsel %vm959, %v6880, %v6884
        %v6887 = vshrl.u32 %v6486, 16
        %v6889 = vrot.slane %v6887, 4
        %v6890 = vshll.u32 %v6486, 16
        %v6892 = vrot.slane %v6890, 5
        %v6893 = vor.u32 %v6889, %v6892
        %v6894 = vrot.slane %v6893, 4
        %v6896 = vshll.u32 %v6487, 16
        %v6898 = vrot.slane %v6896, 5
        %v6899 = vsel %vm959, %v6894, %v6898
        %v6901 = vshrl.u32 %v6488, 16
        %v6903 = vrot.slane %v6901, 4
        %v6904 = vshll.u32 %v6488, 16
        %v6906 = vrot.slane %v6904, 5
        %v6907 = vor.u32 %v6903, %v6906
        %v6908 = vrot.slane %v6907, 4
        %v6910 = vshll.u32 %v6489, 16
        %v6912 = vrot.slane %v6910, 5
        %v6913 = vsel %vm959, %v6908, %v6912
        %v6915 = vshrl.u32 %v6490, 16
        %v6917 = vrot.slane %v6915, 4
        %v6918 = vshll.u32 %v6490, 16
        %v6920 = vrot.slane %v6918, 5
        %v6921 = vor.u32 %v6917, %v6920
        %v6922 = vrot.slane %v6921, 4
        %v6924 = vshll.u32 %v6491, 16
        %v6926 = vrot.slane %v6924, 5
        %v6927 = vsel %vm959, %v6922, %v6926
        %v6929 = vshrl.u32 %v6492, 16
        %v6931 = vrot.slane %v6929, 4
        %v6932 = vshll.u32 %v6492, 16
        %v6934 = vrot.slane %v6932, 5
        %v6935 = vor.u32 %v6931, %v6934
        %v6936 = vrot.slane %v6935, 4
        %v6938 = vshll.u32 %v6493, 16
        %v6940 = vrot.slane %v6938, 5
        %v6941 = vsel %vm959, %v6936, %v6940
        %v6942 = vrot.slane %v6430, 5
        %v6943 = vrot.slane %v6942, 4
        %v6944 = vrot.slane %v6431, 5
        %v6945 = vsel %vm1410, %v6943, %v6944
        %v6946 = vrot.slane %v6432, 5
        %v6947 = vrot.slane %v6946, 4
        %v6948 = vrot.slane %v6433, 5
        %v6949 = vsel %vm1410, %v6947, %v6948
        %v6950 = vrot.slane %v6434, 5
        %v6951 = vrot.slane %v6950, 4
        %v6952 = vrot.slane %v6435, 5
        %v6953 = vsel %vm1410, %v6951, %v6952
        %v6954 = vrot.slane %v6436, 5
        %v6955 = vrot.slane %v6954, 4
        %v6956 = vrot.slane %v6437, 5
        %v6957 = vsel %vm1410, %v6955, %v6956
        %v6958 = vrot.slane %v6438, 5
        %v6959 = vrot.slane %v6958, 4
        %v6960 = vrot.slane %v6439, 5
        %v6961 = vsel %vm1410, %v6959, %v6960
        %v6962 = vrot.slane %v6440, 5
        %v6963 = vrot.slane %v6962, 4
        %v6964 = vrot.slane %v6441, 5
        %v6965 = vsel %vm1410, %v6963, %v6964
        %v6966 = vrot.slane %v6442, 5
        %v6967 = vrot.slane %v6966, 4
        %v6968 = vrot.slane %v6443, 5
        %v6969 = vsel %vm1410, %v6967, %v6968
        %v6970 = vrot.slane %v6444, 5
        %v6971 = vrot.slane %v6970, 4
        %v6972 = vrot.slane %v6445, 5
        %v6973 = vsel %vm1410, %v6971, %v6972
        %v6974 = vrot.slane %v6446, 5
        %v6975 = vrot.slane %v6974, 4
        %v6976 = vrot.slane %v6447, 5
        %v6977 = vsel %vm1410, %v6975, %v6976
        %v6978 = vrot.slane %v6448, 5
        %v6979 = vrot.slane %v6978, 4
        %v6980 = vrot.slane %v6449, 5
        %v6981 = vsel %vm1410, %v6979, %v6980
        %v6982 = vrot.slane %v6450, 5
        %v6983 = vrot.slane %v6982, 4
        %v6984 = vrot.slane %v6451, 5
        %v6985 = vsel %vm1410, %v6983, %v6984
        %v6986 = vrot.slane %v6452, 5
        %v6987 = vrot.slane %v6986, 4
        %v6988 = vrot.slane %v6453, 5
        %v6989 = vsel %vm1410, %v6987, %v6988
        %v6990 = vrot.slane %v6454, 5
        %v6991 = vrot.slane %v6990, 4
        %v6992 = vrot.slane %v6455, 5
        %v6993 = vsel %vm1410, %v6991, %v6992
        %v6994 = vrot.slane %v6456, 5
        %v6995 = vrot.slane %v6994, 4
        %v6996 = vrot.slane %v6457, 5
        %v6997 = vsel %vm1410, %v6995, %v6996
        %v6998 = vrot.slane %v6458, 5
        %v6999 = vrot.slane %v6998, 4
        %v7000 = vrot.slane %v6459, 5
        %v7001 = vsel %vm1410, %v6999, %v7000
        %v7002 = vrot.slane %v6460, 5
        %v7003 = vrot.slane %v7002, 4
        %v7004 = vrot.slane %v6461, 5
        %v7005 = vsel %vm1410, %v7003, %v7004
        %v7006 = vrot.slane %v6462, 5
        %v7007 = vrot.slane %v7006, 4
        %v7008 = vrot.slane %v6463, 5
        %v7009 = vsel %vm1410, %v7007, %v7008
        %v7010 = vrot.slane %v6464, 5
        %v7011 = vrot.slane %v7010, 4
        %v7012 = vrot.slane %v6465, 5
        %v7013 = vsel %vm1410, %v7011, %v7012
        %v7014 = vrot.slane %v6466, 5
        %v7015 = vrot.slane %v7014, 4
        %v7016 = vrot.slane %v6467, 5
        %v7017 = vsel %vm1410, %v7015, %v7016
        %v7018 = vrot.slane %v6468, 5
        %v7019 = vrot.slane %v7018, 4
        %v7020 = vrot.slane %v6469, 5
        %v7021 = vsel %vm1410, %v7019, %v7020
        %v7022 = vrot.slane %v6470, 5
        %v7023 = vrot.slane %v7022, 4
        %v7024 = vrot.slane %v6471, 5
        %v7025 = vsel %vm1410, %v7023, %v7024
        %v7026 = vrot.slane %v6472, 5
        %v7027 = vrot.slane %v7026, 4
        %v7028 = vrot.slane %v6473, 5
        %v7029 = vsel %vm1410, %v7027, %v7028
        %v7030 = vrot.slane %v6474, 5
        %v7031 = vrot.slane %v7030, 4
        %v7032 = vrot.slane %v6475, 5
        %v7033 = vsel %vm1410, %v7031, %v7032
        %v7034 = vrot.slane %v6476, 5
        %v7035 = vrot.slane %v7034, 4
        %v7036 = vrot.slane %v6477, 5
        %v7037 = vsel %vm1410, %v7035, %v7036
        %v7038 = vrot.slane %v6478, 5
        %v7039 = vrot.slane %v7038, 4
        %v7040 = vrot.slane %v6479, 5
        %v7041 = vsel %vm1410, %v7039, %v7040
        %v7042 = vrot.slane %v6480, 5
        %v7043 = vrot.slane %v7042, 4
        %v7044 = vrot.slane %v6481, 5
        %v7045 = vsel %vm1410, %v7043, %v7044
        %v7046 = vrot.slane %v6482, 5
        %v7047 = vrot.slane %v7046, 4
        %v7048 = vrot.slane %v6483, 5
        %v7049 = vsel %vm1410, %v7047, %v7048
        %v7050 = vrot.slane %v6484, 5
        %v7051 = vrot.slane %v7050, 4
        %v7052 = vrot.slane %v6485, 5
        %v7053 = vsel %vm1410, %v7051, %v7052
        %v7054 = vrot.slane %v6486, 5
        %v7055 = vrot.slane %v7054, 4
        %v7056 = vrot.slane %v6487, 5
        %v7057 = vsel %vm1410, %v7055, %v7056
        %v7058 = vrot.slane %v6488, 5
        %v7059 = vrot.slane %v7058, 4
        %v7060 = vrot.slane %v6489, 5
        %v7061 = vsel %vm1410, %v7059, %v7060
        %v7062 = vrot.slane %v6490, 5
        %v7063 = vrot.slane %v7062, 4
        %v7064 = vrot.slane %v6491, 5
        %v7065 = vsel %vm1410, %v7063, %v7064
        %v7066 = vrot.slane %v6492, 5
        %v7067 = vrot.slane %v7066, 4
        %v7068 = vrot.slane %v6493, 5
        %v7069 = vsel %vm1410, %v7067, %v7068
        %v7070 = vpack.c.b16 %v4704, %v4702
        %v7071 = vpack.c.b16 %v4708, %v4706
        %v7072 = vpack.c.b16 %v4712, %v4710
        %v7073 = vpack.c.b16 %v4716, %v4714
        %v7074 = vpack.c.b16 %v4720, %v4718
        %v7075 = vpack.c.b16 %v4724, %v4722
        %v7076 = vpack.c.b16 %v4728, %v4726
        %v7077 = vpack.c.b16 %v4732, %v4730
        %v7078 = vpack.c.b16 %v4736, %v4734
        %v7079 = vpack.c.b16 %v4740, %v4738
        %v7080 = vpack.c.b16 %v4744, %v4742
        %v7081 = vpack.c.b16 %v4748, %v4746
        %v7082 = vpack.c.b16 %v4752, %v4750
        %v7083 = vpack.c.b16 %v4756, %v4754
        %v7084 = vpack.c.b16 %v4760, %v4758
        %v7085 = vpack.c.b16 %v4764, %v4762
        %v7086 = vunpack.c.l.b16 %v4843
        %v7087 = vunpack.c.l.b16 %v4857
        %v7088 = vunpack.c.l.b16 %v4871
        %v7089 = vunpack.c.l.b16 %v4885
        %v7090 = vunpack.c.l.b16 %v4899
        %v7091 = vunpack.c.l.b16 %v4913
        %v7092 = vunpack.c.l.b16 %v4927
        %v7093 = vunpack.c.l.b16 %v4941
        %v7094 = vunpack.c.l.b16 %v4955
        %v7095 = vunpack.c.l.b16 %v4969
        %v7096 = vunpack.c.l.b16 %v4983
        %v7097 = vunpack.c.l.b16 %v4997
        %v7098 = vunpack.c.l.b16 %v5011
        %v7099 = vunpack.c.l.b16 %v5025
        %v7100 = vunpack.c.l.b16 %v5039
        %v7101 = vunpack.c.l.b16 %v5053
        %v7102 = vunpack.c.l.b16 %v5067
        %v7103 = vunpack.c.l.b16 %v5081
        %v7104 = vunpack.c.l.b16 %v5095
        %v7105 = vunpack.c.l.b16 %v5109
        %v7106 = vunpack.c.l.b16 %v5123
        %v7107 = vunpack.c.l.b16 %v5137
        %v7108 = vunpack.c.l.b16 %v5151
        %v7109 = vunpack.c.l.b16 %v5165
        %v7110 = vunpack.c.l.b16 %v5179
        %v7111 = vunpack.c.l.b16 %v5193
        %v7112 = vunpack.c.l.b16 %v5207
        %v7113 = vunpack.c.l.b16 %v5221
        %v7114 = vunpack.c.l.b16 %v5235
        %v7115 = vunpack.c.l.b16 %v5249
        %v7116 = vunpack.c.l.b16 %v5263
        %v7117 = vunpack.c.l.b16 %v5277
        %v7118 = vpack.c.b16 %v7087, %v7086
        %v7119 = vpack.c.b16 %v7089, %v7088
        %v7120 = vpack.c.b16 %v7091, %v7090
        %v7121 = vpack.c.b16 %v7093, %v7092
        %v7122 = vpack.c.b16 %v7095, %v7094
        %v7123 = vpack.c.b16 %v7097, %v7096
        %v7124 = vpack.c.b16 %v7099, %v7098
        %v7125 = vpack.c.b16 %v7101, %v7100
        %v7126 = vpack.c.b16 %v7103, %v7102
        %v7127 = vpack.c.b16 %v7105, %v7104
        %v7128 = vpack.c.b16 %v7107, %v7106
        %v7129 = vpack.c.b16 %v7109, %v7108
        %v7130 = vpack.c.b16 %v7111, %v7110
        %v7131 = vpack.c.b16 %v7113, %v7112
        %v7132 = vpack.c.b16 %v7115, %v7114
        %v7133 = vpack.c.b16 %v7117, %v7116
        %7134 = vrot.lane.b32.xlu0 %v7118, 32
        %v7135 = vpop.permute.xlu0 %7134
        %7136 = vrot.lane.b32.xlu0 %v7119, 32
        %v7137 = vpop.permute.xlu0 %7136
        %7138 = vrot.lane.b32.xlu0 %v7120, 32
        %v7139 = vpop.permute.xlu0 %7138
        %7140 = vrot.lane.b32.xlu0 %v7121, 32
        %v7141 = vpop.permute.xlu0 %7140
        %7142 = vrot.lane.b32.xlu0 %v7122, 32
        %v7143 = vpop.permute.xlu0 %7142
        %7144 = vrot.lane.b32.xlu0 %v7123, 32
        %v7145 = vpop.permute.xlu0 %7144
        %7146 = vrot.lane.b32.xlu0 %v7124, 32
        %v7147 = vpop.permute.xlu0 %7146
        %7148 = vrot.lane.b32.xlu0 %v7125, 32
        %v7149 = vpop.permute.xlu0 %7148
        %7150 = vrot.lane.b32.xlu0 %v7126, 32
        %v7151 = vpop.permute.xlu0 %7150
        %7152 = vrot.lane.b32.xlu0 %v7127, 32
        %v7153 = vpop.permute.xlu0 %7152
        %7154 = vrot.lane.b32.xlu0 %v7128, 32
        %v7155 = vpop.permute.xlu0 %7154
        %7156 = vrot.lane.b32.xlu0 %v7129, 32
        %v7157 = vpop.permute.xlu0 %7156
        %7158 = vrot.lane.b32.xlu0 %v7130, 32
        %v7159 = vpop.permute.xlu0 %7158
        %7160 = vrot.lane.b32.xlu0 %v7131, 32
        %v7161 = vpop.permute.xlu0 %7160
        %7162 = vrot.lane.b32.xlu0 %v7132, 32
        %v7163 = vpop.permute.xlu0 %7162
        %7164 = vrot.lane.b32.xlu0 %v7133, 32
        %v7165 = vpop.permute.xlu0 %7164
        %v7166 = vunpack.c.l.b16 %v5281
        %v7167 = vunpack.c.l.b16 %v5285
        %v7168 = vunpack.c.l.b16 %v5289
        %v7169 = vunpack.c.l.b16 %v5293
        %v7170 = vunpack.c.l.b16 %v5297
        %v7171 = vunpack.c.l.b16 %v5301
        %v7172 = vunpack.c.l.b16 %v5305
        %v7173 = vunpack.c.l.b16 %v5309
        %v7174 = vunpack.c.l.b16 %v5313
        %v7175 = vunpack.c.l.b16 %v5317
        %v7176 = vunpack.c.l.b16 %v5321
        %v7177 = vunpack.c.l.b16 %v5325
        %v7178 = vunpack.c.l.b16 %v5329
        %v7179 = vunpack.c.l.b16 %v5333
        %v7180 = vunpack.c.l.b16 %v5337
        %v7181 = vunpack.c.l.b16 %v5341
        %v7182 = vunpack.c.l.b16 %v5345
        %v7183 = vunpack.c.l.b16 %v5349
        %v7184 = vunpack.c.l.b16 %v5353
        %v7185 = vunpack.c.l.b16 %v5357
        %v7186 = vunpack.c.l.b16 %v5361
        %v7187 = vunpack.c.l.b16 %v5365
        %v7188 = vunpack.c.l.b16 %v5369
        %v7189 = vunpack.c.l.b16 %v5373
        %v7190 = vunpack.c.l.b16 %v5377
        %v7191 = vunpack.c.l.b16 %v5381
        %v7192 = vunpack.c.l.b16 %v5385
        %v7193 = vunpack.c.l.b16 %v5389
        %v7194 = vunpack.c.l.b16 %v5393
        %v7195 = vunpack.c.l.b16 %v5397
        %v7196 = vunpack.c.l.b16 %v5401
        %v7197 = vunpack.c.l.b16 %v5405
        %v7198 = vpack.c.b16 %v7167, %v7166
        %v7199 = vpack.c.b16 %v7169, %v7168
        %v7200 = vpack.c.b16 %v7171, %v7170
        %v7201 = vpack.c.b16 %v7173, %v7172
        %v7202 = vpack.c.b16 %v7175, %v7174
        %v7203 = vpack.c.b16 %v7177, %v7176
        %v7204 = vpack.c.b16 %v7179, %v7178
        %v7205 = vpack.c.b16 %v7181, %v7180
        %v7206 = vpack.c.b16 %v7183, %v7182
        %v7207 = vpack.c.b16 %v7185, %v7184
        %v7208 = vpack.c.b16 %v7187, %v7186
        %v7209 = vpack.c.b16 %v7189, %v7188
        %v7210 = vpack.c.b16 %v7191, %v7190
        %v7211 = vpack.c.b16 %v7193, %v7192
        %v7212 = vpack.c.b16 %v7195, %v7194
        %v7213 = vpack.c.b16 %v7197, %v7196
        %7214 = vrot.lane.b32.xlu0 %v7198, 64
        %v7215 = vpop.permute.xlu0 %7214
        %7216 = vrot.lane.b32.xlu0 %v7199, 64
        %v7217 = vpop.permute.xlu0 %7216
        %7218 = vrot.lane.b32.xlu0 %v7200, 64
        %v7219 = vpop.permute.xlu0 %7218
        %7220 = vrot.lane.b32.xlu0 %v7201, 64
        %v7221 = vpop.permute.xlu0 %7220
        %7222 = vrot.lane.b32.xlu0 %v7202, 64
        %v7223 = vpop.permute.xlu0 %7222
        %7224 = vrot.lane.b32.xlu0 %v7203, 64
        %v7225 = vpop.permute.xlu0 %7224
        %7226 = vrot.lane.b32.xlu0 %v7204, 64
        %v7227 = vpop.permute.xlu0 %7226
        %7228 = vrot.lane.b32.xlu0 %v7205, 64
        %v7229 = vpop.permute.xlu0 %7228
        %7230 = vrot.lane.b32.xlu0 %v7206, 64
        %v7231 = vpop.permute.xlu0 %7230
        %7232 = vrot.lane.b32.xlu0 %v7207, 64
        %v7233 = vpop.permute.xlu0 %7232
        %7234 = vrot.lane.b32.xlu0 %v7208, 64
        %v7235 = vpop.permute.xlu0 %7234
        %7236 = vrot.lane.b32.xlu0 %v7209, 64
        %v7237 = vpop.permute.xlu0 %7236
        %7238 = vrot.lane.b32.xlu0 %v7210, 64
        %v7239 = vpop.permute.xlu0 %7238
        %7240 = vrot.lane.b32.xlu0 %v7211, 64
        %v7241 = vpop.permute.xlu0 %7240
        %7242 = vrot.lane.b32.xlu0 %v7212, 64
        %v7243 = vpop.permute.xlu0 %7242
        %7244 = vrot.lane.b32.xlu0 %v7213, 64
        %v7245 = vpop.permute.xlu0 %7244
        %v7246 = vpack.c.b16 %v5536, %v5534
        %v7247 = vpack.c.b16 %v5540, %v5538
        %v7248 = vpack.c.b16 %v5544, %v5542
        %v7249 = vpack.c.b16 %v5548, %v5546
        %v7250 = vpack.c.b16 %v5552, %v5550
        %v7251 = vpack.c.b16 %v5556, %v5554
        %v7252 = vpack.c.b16 %v5560, %v5558
        %v7253 = vpack.c.b16 %v5564, %v5562
        %v7254 = vpack.c.b16 %v5568, %v5566
        %v7255 = vpack.c.b16 %v5572, %v5570
        %v7256 = vpack.c.b16 %v5576, %v5574
        %v7257 = vpack.c.b16 %v5580, %v5578
        %v7258 = vpack.c.b16 %v5584, %v5582
        %v7259 = vpack.c.b16 %v5588, %v5586
        %v7260 = vpack.c.b16 %v5592, %v5590
        %v7261 = vpack.c.b16 %v5596, %v5594
        %7262 = vrot.lane.b32.xlu0 %v7246, 96
        %v7263 = vpop.permute.xlu0 %7262
        %7264 = vrot.lane.b32.xlu0 %v7247, 96
        %v7265 = vpop.permute.xlu0 %7264
        %7266 = vrot.lane.b32.xlu0 %v7248, 96
        %v7267 = vpop.permute.xlu0 %7266
        %7268 = vrot.lane.b32.xlu0 %v7249, 96
        %v7269 = vpop.permute.xlu0 %7268
        %7270 = vrot.lane.b32.xlu0 %v7250, 96
        %v7271 = vpop.permute.xlu0 %7270
        %7272 = vrot.lane.b32.xlu0 %v7251, 96
        %v7273 = vpop.permute.xlu0 %7272
        %7274 = vrot.lane.b32.xlu0 %v7252, 96
        %v7275 = vpop.permute.xlu0 %7274
        %7276 = vrot.lane.b32.xlu0 %v7253, 96
        %v7277 = vpop.permute.xlu0 %7276
        %7278 = vrot.lane.b32.xlu0 %v7254, 96
        %v7279 = vpop.permute.xlu0 %7278
        %7280 = vrot.lane.b32.xlu0 %v7255, 96
        %v7281 = vpop.permute.xlu0 %7280
        %7282 = vrot.lane.b32.xlu0 %v7256, 96
        %v7283 = vpop.permute.xlu0 %7282
        %7284 = vrot.lane.b32.xlu0 %v7257, 96
        %v7285 = vpop.permute.xlu0 %7284
        %7286 = vrot.lane.b32.xlu0 %v7258, 96
        %v7287 = vpop.permute.xlu0 %7286
        %7288 = vrot.lane.b32.xlu0 %v7259, 96
        %v7289 = vpop.permute.xlu0 %7288
        %7290 = vrot.lane.b32.xlu0 %v7260, 96
        %v7291 = vpop.permute.xlu0 %7290
        %7292 = vrot.lane.b32.xlu0 %v7261, 96
        %v7293 = vpop.permute.xlu0 %7292
        %v7294 = vunpack.c.l.b16 %v5675
        %v7295 = vunpack.c.l.b16 %v5689
        %v7296 = vunpack.c.l.b16 %v5703
        %v7297 = vunpack.c.l.b16 %v5717
        %v7298 = vunpack.c.l.b16 %v5731
        %v7299 = vunpack.c.l.b16 %v5745
        %v7300 = vunpack.c.l.b16 %v5759
        %v7301 = vunpack.c.l.b16 %v5773
        %v7302 = vunpack.c.l.b16 %v5787
        %v7303 = vunpack.c.l.b16 %v5801
        %v7304 = vunpack.c.l.b16 %v5815
        %v7305 = vunpack.c.l.b16 %v5829
        %v7306 = vunpack.c.l.b16 %v5843
        %v7307 = vunpack.c.l.b16 %v5857
        %v7308 = vunpack.c.l.b16 %v5871
        %v7309 = vunpack.c.l.b16 %v5885
        %v7310 = vunpack.c.l.b16 %v5899
        %v7311 = vunpack.c.l.b16 %v5913
        %v7312 = vunpack.c.l.b16 %v5927
        %v7313 = vunpack.c.l.b16 %v5941
        %v7314 = vunpack.c.l.b16 %v5955
        %v7315 = vunpack.c.l.b16 %v5969
        %v7316 = vunpack.c.l.b16 %v5983
        %v7317 = vunpack.c.l.b16 %v5997
        %v7318 = vunpack.c.l.b16 %v6011
        %v7319 = vunpack.c.l.b16 %v6025
        %v7320 = vunpack.c.l.b16 %v6039
        %v7321 = vunpack.c.l.b16 %v6053
        %v7322 = vunpack.c.l.b16 %v6067
        %v7323 = vunpack.c.l.b16 %v6081
        %v7324 = vunpack.c.l.b16 %v6095
        %v7325 = vunpack.c.l.b16 %v6109
        %v7326 = vpack.c.b16 %v7295, %v7294
        %v7327 = vpack.c.b16 %v7297, %v7296
        %v7328 = vpack.c.b16 %v7299, %v7298
        %v7329 = vpack.c.b16 %v7301, %v7300
        %v7330 = vpack.c.b16 %v7303, %v7302
        %v7331 = vpack.c.b16 %v7305, %v7304
        %v7332 = vpack.c.b16 %v7307, %v7306
        %v7333 = vpack.c.b16 %v7309, %v7308
        %v7334 = vpack.c.b16 %v7311, %v7310
        %v7335 = vpack.c.b16 %v7313, %v7312
        %v7336 = vpack.c.b16 %v7315, %v7314
        %v7337 = vpack.c.b16 %v7317, %v7316
        %v7338 = vpack.c.b16 %v7319, %v7318
        %v7339 = vpack.c.b16 %v7321, %v7320
        %v7340 = vpack.c.b16 %v7323, %v7322
        %v7341 = vpack.c.b16 %v7325, %v7324
        %v7342 = vunpack.c.l.b16 %v6113
        %v7343 = vunpack.c.l.b16 %v6117
        %v7344 = vunpack.c.l.b16 %v6121
        %v7345 = vunpack.c.l.b16 %v6125
        %v7346 = vunpack.c.l.b16 %v6129
        %v7347 = vunpack.c.l.b16 %v6133
        %v7348 = vunpack.c.l.b16 %v6137
        %v7349 = vunpack.c.l.b16 %v6141
        %v7350 = vunpack.c.l.b16 %v6145
        %v7351 = vunpack.c.l.b16 %v6149
        %v7352 = vunpack.c.l.b16 %v6153
        %v7353 = vunpack.c.l.b16 %v6157
        %v7354 = vunpack.c.l.b16 %v6161
        %v7355 = vunpack.c.l.b16 %v6165
        %v7356 = vunpack.c.l.b16 %v6169
        %v7357 = vunpack.c.l.b16 %v6173
        %v7358 = vunpack.c.l.b16 %v6177
        %v7359 = vunpack.c.l.b16 %v6181
        %v7360 = vunpack.c.l.b16 %v6185
        %v7361 = vunpack.c.l.b16 %v6189
        %v7362 = vunpack.c.l.b16 %v6193
        %v7363 = vunpack.c.l.b16 %v6197
        %v7364 = vunpack.c.l.b16 %v6201
        %v7365 = vunpack.c.l.b16 %v6205
        %v7366 = vunpack.c.l.b16 %v6209
        %v7367 = vunpack.c.l.b16 %v6213
        %v7368 = vunpack.c.l.b16 %v6217
        %v7369 = vunpack.c.l.b16 %v6221
        %v7370 = vunpack.c.l.b16 %v6225
        %v7371 = vunpack.c.l.b16 %v6229
        %v7372 = vunpack.c.l.b16 %v6233
        %v7373 = vunpack.c.l.b16 %v6237
        %v7374 = vpack.c.b16 %v7343, %v7342
        %v7375 = vpack.c.b16 %v7345, %v7344
        %v7376 = vpack.c.b16 %v7347, %v7346
        %v7377 = vpack.c.b16 %v7349, %v7348
        %v7378 = vpack.c.b16 %v7351, %v7350
        %v7379 = vpack.c.b16 %v7353, %v7352
        %v7380 = vpack.c.b16 %v7355, %v7354
        %v7381 = vpack.c.b16 %v7357, %v7356
        %v7382 = vpack.c.b16 %v7359, %v7358
        %v7383 = vpack.c.b16 %v7361, %v7360
        %v7384 = vpack.c.b16 %v7363, %v7362
        %v7385 = vpack.c.b16 %v7365, %v7364
        %v7386 = vpack.c.b16 %v7367, %v7366
        %v7387 = vpack.c.b16 %v7369, %v7368
        %v7388 = vpack.c.b16 %v7371, %v7370
        %v7389 = vpack.c.b16 %v7373, %v7372
        %7390 = vrot.lane.b32.xlu0 %v7374, 32
        %v7391 = vpop.permute.xlu0 %7390
        %7392 = vrot.lane.b32.xlu0 %v7375, 32
        %v7393 = vpop.permute.xlu0 %7392
        %7394 = vrot.lane.b32.xlu0 %v7376, 32
        %v7395 = vpop.permute.xlu0 %7394
        %7396 = vrot.lane.b32.xlu0 %v7377, 32
        %v7397 = vpop.permute.xlu0 %7396
        %7398 = vrot.lane.b32.xlu0 %v7378, 32
        %v7399 = vpop.permute.xlu0 %7398
        %7400 = vrot.lane.b32.xlu0 %v7379, 32
        %v7401 = vpop.permute.xlu0 %7400
        %7402 = vrot.lane.b32.xlu0 %v7380, 32
        %v7403 = vpop.permute.xlu0 %7402
        %7404 = vrot.lane.b32.xlu0 %v7381, 32
        %v7405 = vpop.permute.xlu0 %7404
        %7406 = vrot.lane.b32.xlu0 %v7382, 32
        %v7407 = vpop.permute.xlu0 %7406
        %7408 = vrot.lane.b32.xlu0 %v7383, 32
        %v7409 = vpop.permute.xlu0 %7408
        %7410 = vrot.lane.b32.xlu0 %v7384, 32
        %v7411 = vpop.permute.xlu0 %7410
        %7412 = vrot.lane.b32.xlu0 %v7385, 32
        %v7413 = vpop.permute.xlu0 %7412
        %7414 = vrot.lane.b32.xlu0 %v7386, 32
        %v7415 = vpop.permute.xlu0 %7414
        %7416 = vrot.lane.b32.xlu0 %v7387, 32
        %v7417 = vpop.permute.xlu0 %7416
        %7418 = vrot.lane.b32.xlu0 %v7388, 32
        %v7419 = vpop.permute.xlu0 %7418
        %7420 = vrot.lane.b32.xlu0 %v7389, 32
        %v7421 = vpop.permute.xlu0 %7420
        %v7422 = vpack.c.b16 %v6368, %v6366
        %v7423 = vpack.c.b16 %v6372, %v6370
        %v7424 = vpack.c.b16 %v6376, %v6374
        %v7425 = vpack.c.b16 %v6380, %v6378
        %v7426 = vpack.c.b16 %v6384, %v6382
        %v7427 = vpack.c.b16 %v6388, %v6386
        %v7428 = vpack.c.b16 %v6392, %v6390
        %v7429 = vpack.c.b16 %v6396, %v6394
        %v7430 = vpack.c.b16 %v6400, %v6398
        %v7431 = vpack.c.b16 %v6404, %v6402
        %v7432 = vpack.c.b16 %v6408, %v6406
        %v7433 = vpack.c.b16 %v6412, %v6410
        %v7434 = vpack.c.b16 %v6416, %v6414
        %v7435 = vpack.c.b16 %v6420, %v6418
        %v7436 = vpack.c.b16 %v6424, %v6422
        %v7437 = vpack.c.b16 %v6428, %v6426
        %7438 = vrot.lane.b32.xlu0 %v7422, 64
        %v7439 = vpop.permute.xlu0 %7438
        %7440 = vrot.lane.b32.xlu0 %v7423, 64
        %v7441 = vpop.permute.xlu0 %7440
        %7442 = vrot.lane.b32.xlu0 %v7424, 64
        %v7443 = vpop.permute.xlu0 %7442
        %7444 = vrot.lane.b32.xlu0 %v7425, 64
        %v7445 = vpop.permute.xlu0 %7444
        %7446 = vrot.lane.b32.xlu0 %v7426, 64
        %v7447 = vpop.permute.xlu0 %7446
        %7448 = vrot.lane.b32.xlu0 %v7427, 64
        %v7449 = vpop.permute.xlu0 %7448
        %7450 = vrot.lane.b32.xlu0 %v7428, 64
        %v7451 = vpop.permute.xlu0 %7450
        %7452 = vrot.lane.b32.xlu0 %v7429, 64
        %v7453 = vpop.permute.xlu0 %7452
        %7454 = vrot.lane.b32.xlu0 %v7430, 64
        %v7455 = vpop.permute.xlu0 %7454
        %7456 = vrot.lane.b32.xlu0 %v7431, 64
        %v7457 = vpop.permute.xlu0 %7456
        %7458 = vrot.lane.b32.xlu0 %v7432, 64
        %v7459 = vpop.permute.xlu0 %7458
        %7460 = vrot.lane.b32.xlu0 %v7433, 64
        %v7461 = vpop.permute.xlu0 %7460
        %7462 = vrot.lane.b32.xlu0 %v7434, 64
        %v7463 = vpop.permute.xlu0 %7462
        %7464 = vrot.lane.b32.xlu0 %v7435, 64
        %v7465 = vpop.permute.xlu0 %7464
        %7466 = vrot.lane.b32.xlu0 %v7436, 64
        %v7467 = vpop.permute.xlu0 %7466
        %7468 = vrot.lane.b32.xlu0 %v7437, 64
        %v7469 = vpop.permute.xlu0 %7468
        %v7470 = vunpack.c.l.b16 %v6507
        %v7471 = vunpack.c.l.b16 %v6521
        %v7472 = vunpack.c.l.b16 %v6535
        %v7473 = vunpack.c.l.b16 %v6549
        %v7474 = vunpack.c.l.b16 %v6563
        %v7475 = vunpack.c.l.b16 %v6577
        %v7476 = vunpack.c.l.b16 %v6591
        %v7477 = vunpack.c.l.b16 %v6605
        %v7478 = vunpack.c.l.b16 %v6619
        %v7479 = vunpack.c.l.b16 %v6633
        %v7480 = vunpack.c.l.b16 %v6647
        %v7481 = vunpack.c.l.b16 %v6661
        %v7482 = vunpack.c.l.b16 %v6675
        %v7483 = vunpack.c.l.b16 %v6689
        %v7484 = vunpack.c.l.b16 %v6703
        %v7485 = vunpack.c.l.b16 %v6717
        %v7486 = vunpack.c.l.b16 %v6731
        %v7487 = vunpack.c.l.b16 %v6745
        %v7488 = vunpack.c.l.b16 %v6759
        %v7489 = vunpack.c.l.b16 %v6773
        %v7490 = vunpack.c.l.b16 %v6787
        %v7491 = vunpack.c.l.b16 %v6801
        %v7492 = vunpack.c.l.b16 %v6815
        %v7493 = vunpack.c.l.b16 %v6829
        %v7494 = vunpack.c.l.b16 %v6843
        %v7495 = vunpack.c.l.b16 %v6857
        %v7496 = vunpack.c.l.b16 %v6871
        %v7497 = vunpack.c.l.b16 %v6885
        %v7498 = vunpack.c.l.b16 %v6899
        %v7499 = vunpack.c.l.b16 %v6913
        %v7500 = vunpack.c.l.b16 %v6927
        %v7501 = vunpack.c.l.b16 %v6941
        %v7502 = vpack.c.b16 %v7471, %v7470
        %v7503 = vpack.c.b16 %v7473, %v7472
        %v7504 = vpack.c.b16 %v7475, %v7474
        %v7505 = vpack.c.b16 %v7477, %v7476
        %v7506 = vpack.c.b16 %v7479, %v7478
        %v7507 = vpack.c.b16 %v7481, %v7480
        %v7508 = vpack.c.b16 %v7483, %v7482
        %v7509 = vpack.c.b16 %v7485, %v7484
        %v7510 = vpack.c.b16 %v7487, %v7486
        %v7511 = vpack.c.b16 %v7489, %v7488
        %v7512 = vpack.c.b16 %v7491, %v7490
        %v7513 = vpack.c.b16 %v7493, %v7492
        %v7514 = vpack.c.b16 %v7495, %v7494
        %v7515 = vpack.c.b16 %v7497, %v7496
        %v7516 = vpack.c.b16 %v7499, %v7498
        %v7517 = vpack.c.b16 %v7501, %v7500
        %7518 = vrot.lane.b32.xlu0 %v7502, 96
        %v7519 = vpop.permute.xlu0 %7518
        %7520 = vrot.lane.b32.xlu0 %v7503, 96
        %v7521 = vpop.permute.xlu0 %7520
        %7522 = vrot.lane.b32.xlu0 %v7504, 96
        %v7523 = vpop.permute.xlu0 %7522
        %7524 = vrot.lane.b32.xlu0 %v7505, 96
        %v7525 = vpop.permute.xlu0 %7524
        %7526 = vrot.lane.b32.xlu0 %v7506, 96
        %v7527 = vpop.permute.xlu0 %7526
        %7528 = vrot.lane.b32.xlu0 %v7507, 96
        %v7529 = vpop.permute.xlu0 %7528
        %7530 = vrot.lane.b32.xlu0 %v7508, 96
        %v7531 = vpop.permute.xlu0 %7530
        %7532 = vrot.lane.b32.xlu0 %v7509, 96
        %v7533 = vpop.permute.xlu0 %7532
        %7534 = vrot.lane.b32.xlu0 %v7510, 96
        %v7535 = vpop.permute.xlu0 %7534
        %7536 = vrot.lane.b32.xlu0 %v7511, 96
        %v7537 = vpop.permute.xlu0 %7536
        %7538 = vrot.lane.b32.xlu0 %v7512, 96
        %v7539 = vpop.permute.xlu0 %7538
        %7540 = vrot.lane.b32.xlu0 %v7513, 96
        %v7541 = vpop.permute.xlu0 %7540
        %7542 = vrot.lane.b32.xlu0 %v7514, 96
        %v7543 = vpop.permute.xlu0 %7542
        %7544 = vrot.lane.b32.xlu0 %v7515, 96
        %v7545 = vpop.permute.xlu0 %7544
        %7546 = vrot.lane.b32.xlu0 %v7516, 96
        %v7547 = vpop.permute.xlu0 %7546
        %7548 = vrot.lane.b32.xlu0 %v7517, 96
        %v7549 = vpop.permute.xlu0 %7548
        %v7550 = vunpack.c.l.b16 %v6945
        %v7551 = vunpack.c.l.b16 %v6949
        %v7552 = vunpack.c.l.b16 %v6953
        %v7553 = vunpack.c.l.b16 %v6957
        %v7554 = vunpack.c.l.b16 %v6961
        %v7555 = vunpack.c.l.b16 %v6965
        %v7556 = vunpack.c.l.b16 %v6969
        %v7557 = vunpack.c.l.b16 %v6973
        %v7558 = vunpack.c.l.b16 %v6977
        %v7559 = vunpack.c.l.b16 %v6981
        %v7560 = vunpack.c.l.b16 %v6985
        %v7561 = vunpack.c.l.b16 %v6989
        %v7562 = vunpack.c.l.b16 %v6993
        %v7563 = vunpack.c.l.b16 %v6997
        %v7564 = vunpack.c.l.b16 %v7001
        %v7565 = vunpack.c.l.b16 %v7005
        %v7566 = vunpack.c.l.b16 %v7009
        %v7567 = vunpack.c.l.b16 %v7013
        %v7568 = vunpack.c.l.b16 %v7017
        %v7569 = vunpack.c.l.b16 %v7021
        %v7570 = vunpack.c.l.b16 %v7025
        %v7571 = vunpack.c.l.b16 %v7029
        %v7572 = vunpack.c.l.b16 %v7033
        %v7573 = vunpack.c.l.b16 %v7037
        %v7574 = vunpack.c.l.b16 %v7041
        %v7575 = vunpack.c.l.b16 %v7045
        %v7576 = vunpack.c.l.b16 %v7049
        %v7577 = vunpack.c.l.b16 %v7053
        %v7578 = vunpack.c.l.b16 %v7057
        %v7579 = vunpack.c.l.b16 %v7061
        %v7580 = vunpack.c.l.b16 %v7065
        %v7581 = vunpack.c.l.b16 %v7069
        %v7582 = vpack.c.b16 %v7551, %v7550
        %v7583 = vpack.c.b16 %v7553, %v7552
        %v7584 = vpack.c.b16 %v7555, %v7554
        %v7585 = vpack.c.b16 %v7557, %v7556
        %v7586 = vpack.c.b16 %v7559, %v7558
        %v7587 = vpack.c.b16 %v7561, %v7560
        %v7588 = vpack.c.b16 %v7563, %v7562
        %v7589 = vpack.c.b16 %v7565, %v7564
        %v7590 = vpack.c.b16 %v7567, %v7566
        %v7591 = vpack.c.b16 %v7569, %v7568
        %v7592 = vpack.c.b16 %v7571, %v7570
        %v7593 = vpack.c.b16 %v7573, %v7572
        %v7594 = vpack.c.b16 %v7575, %v7574
        %v7595 = vpack.c.b16 %v7577, %v7576
        %v7596 = vpack.c.b16 %v7579, %v7578
        %v7597 = vpack.c.b16 %v7581, %v7580
        %v7600 = vsel %vm377, %v7070, %v7135
        %v7603 = vsel %vm377, %v7071, %v7137
        %v7606 = vsel %vm377, %v7072, %v7139
        %v7609 = vsel %vm377, %v7073, %v7141
        %v7612 = vsel %vm377, %v7074, %v7143
        %v7615 = vsel %vm377, %v7075, %v7145
        %v7618 = vsel %vm377, %v7076, %v7147
        %v7621 = vsel %vm377, %v7077, %v7149
        %v7624 = vsel %vm377, %v7078, %v7151
        %v7627 = vsel %vm377, %v7079, %v7153
        %v7630 = vsel %vm377, %v7080, %v7155
        %v7633 = vsel %vm377, %v7081, %v7157
        %v7636 = vsel %vm377, %v7082, %v7159
        %v7639 = vsel %vm377, %v7083, %v7161
        %v7642 = vsel %vm377, %v7084, %v7163
        %v7645 = vsel %vm377, %v7085, %v7165
        %v7647 = vsel %vm483, %v7600, %v7215
        %v7649 = vsel %vm483, %v7603, %v7217
        %v7651 = vsel %vm483, %v7606, %v7219
        %v7653 = vsel %vm483, %v7609, %v7221
        %v7655 = vsel %vm483, %v7612, %v7223
        %v7657 = vsel %vm483, %v7615, %v7225
        %v7659 = vsel %vm483, %v7618, %v7227
        %v7661 = vsel %vm483, %v7621, %v7229
        %v7663 = vsel %vm483, %v7624, %v7231
        %v7665 = vsel %vm483, %v7627, %v7233
        %v7667 = vsel %vm483, %v7630, %v7235
        %v7669 = vsel %vm483, %v7633, %v7237
        %v7671 = vsel %vm483, %v7636, %v7239
        %v7673 = vsel %vm483, %v7639, %v7241
        %v7675 = vsel %vm483, %v7642, %v7243
        %v7677 = vsel %vm483, %v7645, %v7245
        %v7679 = vsel %vm3812, %v7647, %v7263
        %v7682 = vsel %vm3812, %v7649, %v7265
        %v7685 = vsel %vm3812, %v7651, %v7267
        %v7688 = vsel %vm3812, %v7653, %v7269
        %v7691 = vsel %vm3812, %v7655, %v7271
        %v7694 = vsel %vm3812, %v7657, %v7273
        %v7697 = vsel %vm3812, %v7659, %v7275
        %v7700 = vsel %vm3812, %v7661, %v7277
        %v7703 = vsel %vm3812, %v7663, %v7279
        %v7706 = vsel %vm3812, %v7665, %v7281
        %v7709 = vsel %vm3812, %v7667, %v7283
        %v7712 = vsel %vm3812, %v7669, %v7285
        %v7715 = vsel %vm3812, %v7671, %v7287
        %v7718 = vsel %vm3812, %v7673, %v7289
        %v7721 = vsel %vm3812, %v7675, %v7291
        %v7724 = vsel %vm3812, %v7677, %v7293
        %v7728 = vsel %vm377, %v7326, %v7391
        %v7731 = vsel %vm377, %v7327, %v7393
        %v7734 = vsel %vm377, %v7328, %v7395
        %v7737 = vsel %vm377, %v7329, %v7397
        %v7740 = vsel %vm377, %v7330, %v7399
        %v7743 = vsel %vm377, %v7331, %v7401
        %v7746 = vsel %vm377, %v7332, %v7403
        %v7749 = vsel %vm377, %v7333, %v7405
        %v7752 = vsel %vm377, %v7334, %v7407
        %v7755 = vsel %vm377, %v7335, %v7409
        %v7758 = vsel %vm377, %v7336, %v7411
        %v7761 = vsel %vm377, %v7337, %v7413
        %v7764 = vsel %vm377, %v7338, %v7415
        %v7767 = vsel %vm377, %v7339, %v7417
        %v7770 = vsel %vm377, %v7340, %v7419
        %v7773 = vsel %vm377, %v7341, %v7421
        %v7775 = vsel %vm483, %v7728, %v7439
        %v7777 = vsel %vm483, %v7731, %v7441
        %v7779 = vsel %vm483, %v7734, %v7443
        %v7781 = vsel %vm483, %v7737, %v7445
        %v7783 = vsel %vm483, %v7740, %v7447
        %v7785 = vsel %vm483, %v7743, %v7449
        %v7787 = vsel %vm483, %v7746, %v7451
        %v7789 = vsel %vm483, %v7749, %v7453
        %v7791 = vsel %vm483, %v7752, %v7455
        %v7793 = vsel %vm483, %v7755, %v7457
        %v7795 = vsel %vm483, %v7758, %v7459
        %v7797 = vsel %vm483, %v7761, %v7461
        %v7799 = vsel %vm483, %v7764, %v7463
        %v7801 = vsel %vm483, %v7767, %v7465
        %v7803 = vsel %vm483, %v7770, %v7467
        %v7805 = vsel %vm483, %v7773, %v7469
        %v7807 = vsel %vm3812, %v7775, %v7519
        %v7810 = vsel %vm3812, %v7777, %v7521
        %v7813 = vsel %vm3812, %v7779, %v7523
        %v7816 = vsel %vm3812, %v7781, %v7525
        %v7819 = vsel %vm3812, %v7783, %v7527
        %v7822 = vsel %vm3812, %v7785, %v7529
        %v7825 = vsel %vm3812, %v7787, %v7531
        %v7828 = vsel %vm3812, %v7789, %v7533
        %v7831 = vsel %vm3812, %v7791, %v7535
        %v7834 = vsel %vm3812, %v7793, %v7537
        %v7837 = vsel %vm3812, %v7795, %v7539
        %v7840 = vsel %vm3812, %v7797, %v7541
        %v7843 = vsel %vm3812, %v7799, %v7543
        %v7846 = vsel %vm3812, %v7801, %v7545
        %v7849 = vsel %vm3812, %v7803, %v7547
        %v7852 = vsel %vm3812, %v7805, %v7549
        %v7854 = vld [vmem:[%s3] sm:$0xf]
        %v7855 = vld [vmem:[%s3 + $0x4] sm:$0xf]
        %v7856 = vld [vmem:[%s3 + $0x8] sm:$0xf]
        %v7857 = vld [vmem:[%s3 + $0xc] sm:$0xf]
        %v7858 = vld [vmem:[%s3 + $0x10] sm:$0xf]
        %v7859 = vld [vmem:[%s3 + $0x14] sm:$0xf]
        %v7860 = vld [vmem:[%s3 + $0x18] sm:$0xf]
        %v7861 = vld [vmem:[%s3 + $0x1c] sm:$0xf]
        %v7862 = vld [vmem:[%s3 + $0x20] sm:$0xf]
        %v7863 = vld [vmem:[%s3 + $0x24] sm:$0xf]
        %v7864 = vld [vmem:[%s3 + $0x28] sm:$0xf]
        %v7865 = vld [vmem:[%s3 + $0x2c] sm:$0xf]
        %v7866 = vld [vmem:[%s3 + $0x30] sm:$0xf]
        %v7867 = vld [vmem:[%s3 + $0x34] sm:$0xf]
        %v7868 = vld [vmem:[%s3 + $0x38] sm:$0xf]
        %v7869 = vld [vmem:[%s3 + $0x3c] sm:$0xf]
        %v7870 = vld [vmem:[%s3 + $0x40] sm:$0xf]
        %v7871 = vld [vmem:[%s3 + $0x44] sm:$0xf]
        %v7872 = vld [vmem:[%s3 + $0x48] sm:$0xf]
        %v7873 = vld [vmem:[%s3 + $0x4c] sm:$0xf]
        %v7874 = vld [vmem:[%s3 + $0x50] sm:$0xf]
        %v7875 = vld [vmem:[%s3 + $0x54] sm:$0xf]
        %v7876 = vld [vmem:[%s3 + $0x58] sm:$0xf]
        %v7877 = vld [vmem:[%s3 + $0x5c] sm:$0xf]
        %v7878 = vld [vmem:[%s3 + $0x60] sm:$0xf]
        %v7879 = vld [vmem:[%s3 + $0x64] sm:$0xf]
        %v7880 = vld [vmem:[%s3 + $0x68] sm:$0xf]
        %v7881 = vld [vmem:[%s3 + $0x6c] sm:$0xf]
        %v7882 = vld [vmem:[%s3 + $0x70] sm:$0xf]
        %v7883 = vld [vmem:[%s3 + $0x74] sm:$0xf]
        %v7884 = vld [vmem:[%s3 + $0x78] sm:$0xf]
        %v7885 = vld [vmem:[%s3 + $0x7c] sm:$0xf]
        %v7886 = vld [vmem:[%s3 + $0x80] sm:$0xf]
        %v7887 = vld [vmem:[%s3 + $0x84] sm:$0xf]
        %v7888 = vld [vmem:[%s3 + $0x88] sm:$0xf]
        %v7889 = vld [vmem:[%s3 + $0x8c] sm:$0xf]
        %v7890 = vld [vmem:[%s4] sm:$0x1]
        %v7892 = vlaneseq
        %v7893 = vshrl.u32 %v7892, 7
        %v7894 = vsub.s32 0, %v7893
        %v7895 = vrot.slane %v7890, %v7894
        %v7933 = vunpack.c.l.b16 %v7854
        %v7934 = vunpack.c.l.b16 %v7855
        %v7935 = vunpack.c.l.b16 %v7856
        %v7936 = vunpack.c.l.b16 %v7857
        %v7937 = vunpack.c.l.b16 %v7858
        %v7938 = vunpack.c.l.b16 %v7859
        %v7939 = vunpack.c.l.b16 %v7860
        %v7940 = vunpack.c.l.b16 %v7861
        %v7941 = vunpack.c.l.b16 %v7862
        %v7942 = vunpack.c.l.b16 %v7863
        %v7943 = vunpack.c.l.b16 %v7864
        %v7944 = vunpack.c.l.b16 %v7865
        %v7945 = vunpack.c.l.b16 %v7866
        %v7946 = vunpack.c.l.b16 %v7867
        %v7947 = vunpack.c.l.b16 %v7868
        %v7948 = vunpack.c.l.b16 %v7869
        %v7949 = vunpack.c.l.b16 %v7870
        %v7950 = vunpack.c.l.b16 %v7871
        %v7951 = vunpack.c.l.b16 %v7872
        %v7952 = vunpack.c.l.b16 %v7873
        %v7953 = vunpack.c.l.b16 %v7874
        %v7954 = vunpack.c.l.b16 %v7875
        %v7955 = vunpack.c.l.b16 %v7876
        %v7956 = vunpack.c.l.b16 %v7877
        %v7957 = vunpack.c.l.b16 %v7878
        %v7958 = vunpack.c.l.b16 %v7879
        %v7959 = vunpack.c.l.b16 %v7880
        %v7960 = vunpack.c.l.b16 %v7881
        %v7961 = vunpack.c.l.b16 %v7882
        %v7962 = vunpack.c.l.b16 %v7883
        %v7963 = vunpack.c.l.b16 %v7884
        %v7964 = vunpack.c.l.b16 %v7885
        %v7965 = vunpack.c.l.b16 %v7886
        %v7966 = vunpack.c.l.b16 %v7887
        %v7967 = vunpack.c.l.b16 %v7888
        %v7968 = vunpack.c.l.b16 %v7889
        %v7969 = vpack.c.b16 %v7934, %v7933
        %v7970 = vpack.c.b16 %v7936, %v7935
        %v7971 = vpack.c.b16 %v7938, %v7937
        %v7972 = vpack.c.b16 %v7940, %v7939
        %v7973 = vpack.c.b16 %v7942, %v7941
        %v7974 = vpack.c.b16 %v7944, %v7943
        %v7975 = vpack.c.b16 %v7946, %v7945
        %v7976 = vpack.c.b16 %v7948, %v7947
        %v7977 = vpack.c.b16 %v7950, %v7949
        %v7978 = vpack.c.b16 %v7952, %v7951
        %v7979 = vpack.c.b16 %v7954, %v7953
        %v7980 = vpack.c.b16 %v7956, %v7955
        %v7981 = vpack.c.b16 %v7958, %v7957
        %v7982 = vpack.c.b16 %v7960, %v7959
        %v7983 = vpack.c.b16 %v7962, %v7961
        %v7984 = vpack.c.b16 %v7964, %v7963
        %v7985 = vpack.c.b16 %v7966, %v7965
        %v7986 = vpack.c.b16 %v7968, %v7967
        %v8006 = vsel %vm377, %v7582, 0
        %v8009 = vsel %vm377, %v7583, 0
        %v8012 = vsel %vm377, %v7584, 0
        %v8015 = vsel %vm377, %v7585, 0
        %v8018 = vsel %vm377, %v7586, 0
        %v8021 = vsel %vm377, %v7587, 0
        %v8024 = vsel %vm377, %v7588, 0
        %v8027 = vsel %vm377, %v7589, 0
        %v8030 = vsel %vm377, %v7590, 0
        %v8033 = vsel %vm377, %v7591, 0
        %v8036 = vsel %vm377, %v7592, 0
        %v8039 = vsel %vm377, %v7593, 0
        %v8042 = vsel %vm377, %v7594, 0
        %v8045 = vsel %vm377, %v7595, 0
        %v8048 = vsel %vm377, %v7596, 0
        %v8051 = vsel %vm377, %v7597, 0
        %8053 = vmatprep.subr.bf16.mxu0 0
        %8054 = vmatpush1.bf16.msra.mxu0 %v7969
        %8055 = vmatprep.subr.bf16.mxu0 0
        %8056 = vmatpush1.bf16.msra.mxu0 %v7970
        %8057 = vmatprep.subr.bf16.mxu0 0
        %8058 = vmatpush1.bf16.msra.mxu0 %v7971
        %8059 = vmatprep.subr.bf16.mxu0 0
        %8060 = vmatpush1.bf16.msra.mxu0 %v7972
        %8061 = vmatprep.subr.bf16.mxu0 0
        %8062 = vmatpush1.bf16.msra.mxu0 %v7973
        %8063 = vmatprep.subr.bf16.mxu0 0
        %8064 = vmatpush1.bf16.msra.mxu0 %v7974
        %8065 = vmatprep.subr.bf16.mxu0 0
        %8066 = vmatpush1.bf16.msra.mxu0 %v7975
        %8067 = vmatprep.subr.bf16.mxu0 0
        %8068 = vmatpush1.bf16.msra.mxu0 %v7976
        %8069 = vmatprep.subr.bf16.mxu0 0
        %8070 = vmatpush1.bf16.msra.mxu0 %v7977
        %8071 = vmatprep.subr.bf16.mxu0 0
        %8072 = vmatpush1.bf16.msra.mxu0 %v7978
        %8073 = vmatprep.subr.bf16.mxu0 0
        %8074 = vmatpush1.bf16.msra.mxu0 %v7979
        %8075 = vmatprep.subr.bf16.mxu0 0
        %8076 = vmatpush1.bf16.msra.mxu0 %v7980
        %8077 = vmatprep.subr.bf16.mxu0 0
        %8078 = vmatpush1.bf16.msra.mxu0 %v7981
        %8079 = vmatprep.subr.bf16.mxu0 0
        %8080 = vmatpush1.bf16.msra.mxu0 %v7982
        %8081 = vmatprep.subr.bf16.mxu0 0
        %8082 = vmatpush1.bf16.msra.mxu0 %v7983
        %8083 = vmatprep.subr.bf16.mxu0 0
        %8084 = vmatpush1.bf16.msra.mxu0 %v7984
        %8085 = vmatprep.mubr.bf16.mxu0 %v7807
        %8086 = vmatmul.mubr.bf16.gmra.mrb[0].mxu0 %v7679
        %v8087 = vpop.f32.mrb[0].mxu0
        %v8088 = vadd.f32 %v7895, %v8087
        %v8089 = vpop.f32.mrb[0].mxu0
        %v8090 = vpop.f32.mrb[0].mxu0
        %v8091 = vadd.f32 %v7895, %v8090
        %v8092 = vpop.f32.mrb[0].mxu0
        %8093 = vmatprep.mubr.bf16.mxu0 %v7810
        %8094 = vmatmul.mubr.bf16.gmra.mrb[0].mxu0 %v7682
        %v8095 = vpop.f32.mrb[0].mxu0
        %v8096 = vadd.f32 %v7895, %v8095
        %v8097 = vpop.f32.mrb[0].mxu0
        %v8098 = vpop.f32.mrb[0].mxu0
        %v8099 = vadd.f32 %v7895, %v8098
        %v8100 = vpop.f32.mrb[0].mxu0
        %8101 = vmatprep.mubr.bf16.mxu0 %v7813
        %8102 = vmatmul.mubr.bf16.gmra.mrb[0].mxu0 %v7685
        %v8103 = vpop.f32.mrb[0].mxu0
        %v8104 = vadd.f32 %v7895, %v8103
        %v8105 = vpop.f32.mrb[0].mxu0
        %v8106 = vpop.f32.mrb[0].mxu0
        %v8107 = vadd.f32 %v7895, %v8106
        %v8108 = vpop.f32.mrb[0].mxu0
        %8109 = vmatprep.mubr.bf16.mxu0 %v7816
        %8110 = vmatmul.mubr.bf16.gmra.mrb[0].mxu0 %v7688
        %v8111 = vpop.f32.mrb[0].mxu0
        %v8112 = vadd.f32 %v7895, %v8111
        %v8113 = vpop.f32.mrb[0].mxu0
        %v8114 = vpop.f32.mrb[0].mxu0
        %v8115 = vadd.f32 %v7895, %v8114
        %v8116 = vpop.f32.mrb[0].mxu0
        %8117 = vmatprep.mubr.bf16.mxu0 %v7819
        %8118 = vmatmul.mubr.bf16.gmra.mrb[0].mxu0 %v7691
        %v8119 = vpop.f32.mrb[0].mxu0
        %v8120 = vadd.f32 %v7895, %v8119
        %v8121 = vpop.f32.mrb[0].mxu0
        %v8122 = vpop.f32.mrb[0].mxu0
        %v8123 = vadd.f32 %v7895, %v8122
        %v8124 = vpop.f32.mrb[0].mxu0
        %8125 = vmatprep.mubr.bf16.mxu0 %v7822
        %8126 = vmatmul.mubr.bf16.gmra.mrb[0].mxu0 %v7694
        %v8127 = vpop.f32.mrb[0].mxu0
        %v8128 = vadd.f32 %v7895, %v8127
        %v8129 = vpop.f32.mrb[0].mxu0
        %v8130 = vpop.f32.mrb[0].mxu0
        %v8131 = vadd.f32 %v7895, %v8130
        %v8132 = vpop.f32.mrb[0].mxu0
        %8133 = vmatprep.mubr.bf16.mxu0 %v7825
        %8134 = vmatmul.mubr.bf16.gmra.mrb[0].mxu0 %v7697
        %v8135 = vpop.f32.mrb[0].mxu0
        %v8136 = vadd.f32 %v7895, %v8135
        %v8137 = vpop.f32.mrb[0].mxu0
        %v8138 = vpop.f32.mrb[0].mxu0
        %v8139 = vadd.f32 %v7895, %v8138
        %v8140 = vpop.f32.mrb[0].mxu0
        %8141 = vmatprep.mubr.bf16.mxu0 %v7828
        %8142 = vmatmul.mubr.bf16.gmra.mrb[0].mxu0 %v7700
        %v8143 = vpop.f32.mrb[0].mxu0
        %v8144 = vadd.f32 %v7895, %v8143
        %v8145 = vpop.f32.mrb[0].mxu0
        %v8146 = vpop.f32.mrb[0].mxu0
        %v8147 = vadd.f32 %v7895, %v8146
        %v8148 = vpop.f32.mrb[0].mxu0
        %8149 = vmatprep.mubr.bf16.mxu0 %v7831
        %8150 = vmatmul.mubr.bf16.gmra.mrb[0].mxu0 %v7703
        %v8151 = vpop.f32.mrb[0].mxu0
        %v8152 = vadd.f32 %v7895, %v8151
        %v8153 = vpop.f32.mrb[0].mxu0
        %v8154 = vpop.f32.mrb[0].mxu0
        %v8155 = vadd.f32 %v7895, %v8154
        %v8156 = vpop.f32.mrb[0].mxu0
        %8157 = vmatprep.mubr.bf16.mxu0 %v7834
        %8158 = vmatmul.mubr.bf16.gmra.mrb[0].mxu0 %v7706
        %v8159 = vpop.f32.mrb[0].mxu0
        %v8160 = vadd.f32 %v7895, %v8159
        %v8161 = vpop.f32.mrb[0].mxu0
        %v8162 = vpop.f32.mrb[0].mxu0
        %v8163 = vadd.f32 %v7895, %v8162
        %v8164 = vpop.f32.mrb[0].mxu0
        %8165 = vmatprep.mubr.bf16.mxu0 %v7837
        %8166 = vmatmul.mubr.bf16.gmra.mrb[0].mxu0 %v7709
        %v8167 = vpop.f32.mrb[0].mxu0
        %v8168 = vadd.f32 %v7895, %v8167
        %v8169 = vpop.f32.mrb[0].mxu0
        %v8170 = vpop.f32.mrb[0].mxu0
        %v8171 = vadd.f32 %v7895, %v8170
        %v8172 = vpop.f32.mrb[0].mxu0
        %8173 = vmatprep.mubr.bf16.mxu0 %v7840
        %8174 = vmatmul.mubr.bf16.gmra.mrb[0].mxu0 %v7712
        %v8175 = vpop.f32.mrb[0].mxu0
        %v8176 = vadd.f32 %v7895, %v8175
        %v8177 = vpop.f32.mrb[0].mxu0
        %v8178 = vpop.f32.mrb[0].mxu0
        %v8179 = vadd.f32 %v7895, %v8178
        %v8180 = vpop.f32.mrb[0].mxu0
        %8181 = vmatprep.mubr.bf16.mxu0 %v7843
        %8182 = vmatmul.mubr.bf16.gmra.mrb[0].mxu0 %v7715
        %v8183 = vpop.f32.mrb[0].mxu0
        %v8184 = vadd.f32 %v7895, %v8183
        %v8185 = vpop.f32.mrb[0].mxu0
        %v8186 = vpop.f32.mrb[0].mxu0
        %v8187 = vadd.f32 %v7895, %v8186
        %v8188 = vpop.f32.mrb[0].mxu0
        %8189 = vmatprep.mubr.bf16.mxu0 %v7846
        %8190 = vmatmul.mubr.bf16.gmra.mrb[0].mxu0 %v7718
        %v8191 = vpop.f32.mrb[0].mxu0
        %v8192 = vadd.f32 %v7895, %v8191
        %v8193 = vpop.f32.mrb[0].mxu0
        %v8194 = vpop.f32.mrb[0].mxu0
        %v8195 = vadd.f32 %v7895, %v8194
        %v8196 = vpop.f32.mrb[0].mxu0
        %8197 = vmatprep.mubr.bf16.mxu0 %v7849
        %8198 = vmatmul.mubr.bf16.gmra.mrb[0].mxu0 %v7721
        %v8199 = vpop.f32.mrb[0].mxu0
        %v8200 = vadd.f32 %v7895, %v8199
        %v8201 = vpop.f32.mrb[0].mxu0
        %v8202 = vpop.f32.mrb[0].mxu0
        %v8203 = vadd.f32 %v7895, %v8202
        %v8204 = vpop.f32.mrb[0].mxu0
        %8205 = vmatprep.mubr.bf16.mxu0 %v7852
        %8206 = vmatmul.mubr.bf16.gmra.mrb[0].mxu0 %v7724
        %v8207 = vpop.f32.mrb[0].mxu0
        %v8208 = vadd.f32 %v7895, %v8207
        %v8209 = vpop.f32.mrb[0].mxu0
        %v8210 = vpop.f32.mrb[0].mxu0
        %v8211 = vadd.f32 %v7895, %v8210
        %v8212 = vpop.f32.mrb[0].mxu0
        %8213 = vdwg.mxu0
        %8214 = vmatprep.subr.bf16.mxu0 0
        %8215 = vmatpush1.bf16.msra.mxu0 %v7985
        %8216 = vmatprep.subr.bf16.mxu0 0
        %8217 = vmatpush1.bf16.msra.mxu0 %v7986
        %8218 = vmatprep.subr.bf16.mxu0 0
        %8219 = vmatpush1.bf16.msra.mxu0 0
        %8220 = vmatprep.subr.bf16.mxu0 0
        %8221 = vmatpush1.bf16.msra.mxu0 0
        %8222 = vmatprep.subr.bf16.mxu0 0
        %8223 = vmatpush1.bf16.msra.mxu0 0
        %8224 = vmatprep.subr.bf16.mxu0 0
        %8225 = vmatpush1.bf16.msra.mxu0 0
        %8226 = vmatprep.subr.bf16.mxu0 0
        %8227 = vmatpush1.bf16.msra.mxu0 0
        %8228 = vmatprep.subr.bf16.mxu0 0
        %8229 = vmatpush1.bf16.msra.mxu0 0
        %8230 = vmatprep.subr.bf16.mxu0 0
        %8231 = vmatpush1.bf16.msra.mxu0 0
        %8232 = vmatprep.subr.bf16.mxu0 0
        %8233 = vmatpush1.bf16.msra.mxu0 0
        %8234 = vmatprep.subr.bf16.mxu0 0
        %8235 = vmatpush1.bf16.msra.mxu0 0
        %8236 = vmatprep.subr.bf16.mxu0 0
        %8237 = vmatpush1.bf16.msra.mxu0 0
        %8238 = vmatprep.subr.bf16.mxu0 0
        %8239 = vmatpush1.bf16.msra.mxu0 0
        %8240 = vmatprep.subr.bf16.mxu0 0
        %8241 = vmatpush1.bf16.msra.mxu0 0
        %8242 = vmatprep.subr.bf16.mxu0 0
        %8243 = vmatpush1.bf16.msra.mxu0 0
        %8244 = vmatprep.subr.bf16.mxu0 0
        %8245 = vmatpush1.bf16.msra.mxu0 0
        %8246 = vmatprep.mubr.bf16.mxu0 0
        %8247 = vmatmul.mubr.bf16.gmra.mrb[0].mxu0 %v8006
        %v8248 = vpop.f32.mrb[0].mxu0
        %v8249 = vadd.f32 %v8088, %v8248
        %v8250 = vpop.f32.mrb[0].mxu0
        %v8251 = vpop.f32.mrb[0].mxu0
        %v8252 = vadd.f32 %v8091, %v8251
        %v8253 = vpop.f32.mrb[0].mxu0
        %8254 = vmatprep.mubr.bf16.mxu0 0
        %8255 = vmatmul.mubr.bf16.gmra.mrb[0].mxu0 %v8009
        %v8256 = vpop.f32.mrb[0].mxu0
        %v8257 = vadd.f32 %v8096, %v8256
        %v8258 = vpop.f32.mrb[0].mxu0
        %v8259 = vpop.f32.mrb[0].mxu0
        %v8260 = vadd.f32 %v8099, %v8259
        %v8261 = vpop.f32.mrb[0].mxu0
        %8262 = vmatprep.mubr.bf16.mxu0 0
        %8263 = vmatmul.mubr.bf16.gmra.mrb[0].mxu0 %v8012
        %v8264 = vpop.f32.mrb[0].mxu0
        %v8265 = vadd.f32 %v8104, %v8264
        %v8266 = vpop.f32.mrb[0].mxu0
        %v8267 = vpop.f32.mrb[0].mxu0
        %v8268 = vadd.f32 %v8107, %v8267
        %v8269 = vpop.f32.mrb[0].mxu0
        %8270 = vmatprep.mubr.bf16.mxu0 0
        %8271 = vmatmul.mubr.bf16.gmra.mrb[0].mxu0 %v8015
        %v8272 = vpop.f32.mrb[0].mxu0
        %v8273 = vadd.f32 %v8112, %v8272
        %v8274 = vpop.f32.mrb[0].mxu0
        %v8275 = vpop.f32.mrb[0].mxu0
        %v8276 = vadd.f32 %v8115, %v8275
        %v8277 = vpop.f32.mrb[0].mxu0
        %8278 = vmatprep.mubr.bf16.mxu0 0
        %8279 = vmatmul.mubr.bf16.gmra.mrb[0].mxu0 %v8018
        %v8280 = vpop.f32.mrb[0].mxu0
        %v8281 = vadd.f32 %v8120, %v8280
        %v8282 = vpop.f32.mrb[0].mxu0
        %v8283 = vpop.f32.mrb[0].mxu0
        %v8284 = vadd.f32 %v8123, %v8283
        %v8285 = vpop.f32.mrb[0].mxu0
        %8286 = vmatprep.mubr.bf16.mxu0 0
        %8287 = vmatmul.mubr.bf16.gmra.mrb[0].mxu0 %v8021
        %v8288 = vpop.f32.mrb[0].mxu0
        %v8289 = vadd.f32 %v8128, %v8288
        %v8290 = vpop.f32.mrb[0].mxu0
        %v8291 = vpop.f32.mrb[0].mxu0
        %v8292 = vadd.f32 %v8131, %v8291
        %v8293 = vpop.f32.mrb[0].mxu0
        %8294 = vmatprep.mubr.bf16.mxu0 0
        %8295 = vmatmul.mubr.bf16.gmra.mrb[0].mxu0 %v8024
        %v8296 = vpop.f32.mrb[0].mxu0
        %v8297 = vadd.f32 %v8136, %v8296
        %v8298 = vpop.f32.mrb[0].mxu0
        %v8299 = vpop.f32.mrb[0].mxu0
        %v8300 = vadd.f32 %v8139, %v8299
        %v8301 = vpop.f32.mrb[0].mxu0
        %8302 = vmatprep.mubr.bf16.mxu0 0
        %8303 = vmatmul.mubr.bf16.gmra.mrb[0].mxu0 %v8027
        %v8304 = vpop.f32.mrb[0].mxu0
        %v8305 = vadd.f32 %v8144, %v8304
        %v8306 = vpop.f32.mrb[0].mxu0
        %v8307 = vpop.f32.mrb[0].mxu0
        %v8308 = vadd.f32 %v8147, %v8307
        %v8309 = vpop.f32.mrb[0].mxu0
        %8310 = vmatprep.mubr.bf16.mxu0 0
        %8311 = vmatmul.mubr.bf16.gmra.mrb[0].mxu0 %v8030
        %v8312 = vpop.f32.mrb[0].mxu0
        %v8313 = vadd.f32 %v8152, %v8312
        %v8314 = vpop.f32.mrb[0].mxu0
        %v8315 = vpop.f32.mrb[0].mxu0
        %v8316 = vadd.f32 %v8155, %v8315
        %v8317 = vpop.f32.mrb[0].mxu0
        %8318 = vmatprep.mubr.bf16.mxu0 0
        %8319 = vmatmul.mubr.bf16.gmra.mrb[0].mxu0 %v8033
        %v8320 = vpop.f32.mrb[0].mxu0
        %v8321 = vadd.f32 %v8160, %v8320
        %v8322 = vpop.f32.mrb[0].mxu0
        %v8323 = vpop.f32.mrb[0].mxu0
        %v8324 = vadd.f32 %v8163, %v8323
        %v8325 = vpop.f32.mrb[0].mxu0
        %8326 = vmatprep.mubr.bf16.mxu0 0
        %8327 = vmatmul.mubr.bf16.gmra.mrb[0].mxu0 %v8036
        %v8328 = vpop.f32.mrb[0].mxu0
        %v8329 = vadd.f32 %v8168, %v8328
        %v8330 = vpop.f32.mrb[0].mxu0
        %v8331 = vpop.f32.mrb[0].mxu0
        %v8332 = vadd.f32 %v8171, %v8331
        %v8333 = vpop.f32.mrb[0].mxu0
        %8334 = vmatprep.mubr.bf16.mxu0 0
        %8335 = vmatmul.mubr.bf16.gmra.mrb[0].mxu0 %v8039
        %v8336 = vpop.f32.mrb[0].mxu0
        %v8337 = vadd.f32 %v8176, %v8336
        %v8338 = vpop.f32.mrb[0].mxu0
        %v8339 = vpop.f32.mrb[0].mxu0
        %v8340 = vadd.f32 %v8179, %v8339
        %v8341 = vpop.f32.mrb[0].mxu0
        %8342 = vmatprep.mubr.bf16.mxu0 0
        %8343 = vmatmul.mubr.bf16.gmra.mrb[0].mxu0 %v8042
        %v8344 = vpop.f32.mrb[0].mxu0
        %v8345 = vadd.f32 %v8184, %v8344
        %v8346 = vpop.f32.mrb[0].mxu0
        %v8347 = vpop.f32.mrb[0].mxu0
        %v8348 = vadd.f32 %v8187, %v8347
        %v8349 = vpop.f32.mrb[0].mxu0
        %8350 = vmatprep.mubr.bf16.mxu0 0
        %8351 = vmatmul.mubr.bf16.gmra.mrb[0].mxu0 %v8045
        %v8352 = vpop.f32.mrb[0].mxu0
        %v8353 = vadd.f32 %v8192, %v8352
        %v8354 = vpop.f32.mrb[0].mxu0
        %v8355 = vpop.f32.mrb[0].mxu0
        %v8356 = vadd.f32 %v8195, %v8355
        %v8357 = vpop.f32.mrb[0].mxu0
        %8358 = vmatprep.mubr.bf16.mxu0 0
        %8359 = vmatmul.mubr.bf16.gmra.mrb[0].mxu0 %v8048
        %v8360 = vpop.f32.mrb[0].mxu0
        %v8361 = vadd.f32 %v8200, %v8360
        %v8362 = vpop.f32.mrb[0].mxu0
        %v8363 = vpop.f32.mrb[0].mxu0
        %v8364 = vadd.f32 %v8203, %v8363
        %v8365 = vpop.f32.mrb[0].mxu0
        %8366 = vmatprep.mubr.bf16.mxu0 0
        %8367 = vmatmul.mubr.bf16.gmra.mrb[0].mxu0 %v8051
        %v8368 = vpop.f32.mrb[0].mxu0
        %v8369 = vadd.f32 %v8208, %v8368
        %v8370 = vpop.f32.mrb[0].mxu0
        %v8371 = vpop.f32.mrb[0].mxu0
        %v8372 = vadd.f32 %v8211, %v8371
        %v8373 = vpop.f32.mrb[0].mxu0
        %8374 = vdwg.mxu0
        %v8375 = vmax.f32 %v8249, 0.0
        %v8376 = vmax.f32 %v8252, 0.0
        %v8377 = vmax.f32 %v8257, 0.0
        %v8378 = vmax.f32 %v8260, 0.0
        %v8379 = vmax.f32 %v8265, 0.0
        %v8380 = vmax.f32 %v8268, 0.0
        %v8381 = vmax.f32 %v8273, 0.0
        %v8382 = vmax.f32 %v8276, 0.0
        %v8383 = vmax.f32 %v8281, 0.0
        %v8384 = vmax.f32 %v8284, 0.0
        %v8385 = vmax.f32 %v8289, 0.0
        %v8386 = vmax.f32 %v8292, 0.0
        %v8387 = vmax.f32 %v8297, 0.0
        %v8388 = vmax.f32 %v8300, 0.0
        %v8389 = vmax.f32 %v8305, 0.0
        %v8390 = vmax.f32 %v8308, 0.0
        %v8391 = vmax.f32 %v8313, 0.0
        %v8392 = vmax.f32 %v8316, 0.0
        %v8393 = vmax.f32 %v8321, 0.0
        %v8394 = vmax.f32 %v8324, 0.0
        %v8395 = vmax.f32 %v8329, 0.0
        %v8396 = vmax.f32 %v8332, 0.0
        %v8397 = vmax.f32 %v8337, 0.0
        %v8398 = vmax.f32 %v8340, 0.0
        %v8399 = vmax.f32 %v8345, 0.0
        %v8400 = vmax.f32 %v8348, 0.0
        %v8401 = vmax.f32 %v8353, 0.0
        %v8402 = vmax.f32 %v8356, 0.0
        %v8403 = vmax.f32 %v8361, 0.0
        %v8404 = vmax.f32 %v8364, 0.0
        %v8405 = vmax.f32 %v8369, 0.0
        %v8406 = vmax.f32 %v8372, 0.0
        %v8407 = vsel %vm377, %v8375, 0.0
        %v8408 = vsel %vm377, %v8376, 0.0
        %v8409 = vadd.f32 %v8407, %v8408
        %v8410 = vsel %vm377, %v8377, 0.0
        %v8411 = vadd.f32 %v8409, %v8410
        %v8412 = vsel %vm377, %v8378, 0.0
        %v8413 = vadd.f32 %v8411, %v8412
        %v8414 = vsel %vm377, %v8379, 0.0
        %v8415 = vadd.f32 %v8413, %v8414
        %v8416 = vsel %vm377, %v8380, 0.0
        %v8417 = vadd.f32 %v8415, %v8416
        %v8418 = vsel %vm377, %v8381, 0.0
        %v8419 = vadd.f32 %v8417, %v8418
        %v8420 = vsel %vm377, %v8382, 0.0
        %v8421 = vadd.f32 %v8419, %v8420
        %v8422 = vrot.slane %v8421, 4
        %v8423 = vadd.f32 %v8421, %v8422
        %v8424 = vrot.slane %v8423, 2
        %v8425 = vadd.f32 %v8423, %v8424
        %v8426 = vrot.slane %v8425, 1
        %v8427 = vadd.f32 %v8425, %v8426
        %v8428 = vrcp.pop 64.0
        %v8429 = vmul.f32 %v8427, %v8428
        %v8430 = vld [vmem:[%s5] sm:$0xff]
        %v8431 = vld [vmem:[%s5 + $0x8] sm:$0xff]
        %v8432 = vld [vmem:[%s5 + $0x10] sm:$0xff]
        %v8433 = vld [vmem:[%s5 + $0x18] sm:$0xff]
        %v8434 = vld [vmem:[%s6] sm:$0x1]
        %v8436 = vsel %vm377, %v8429, 0
        %8438 = vmatprep.subr.mxu0 0.0
        %8439 = vmatpush1.msra.mxu0 %v8430
        %8440 = vmatprep.subr.mxu0 0.0
        %8441 = vmatpush1.msra.mxu0 %v8431
        %8442 = vmatprep.subr.mxu0 0.0
        %8443 = vmatpush1.msra.mxu0 %v8432
        %8444 = vmatprep.subr.mxu0 0.0
        %8445 = vmatpush1.msra.mxu0 %v8433
        %8446 = vmatprep.subr.mxu0 0.0
        %8447 = vmatpush1.msra.mxu0 0.0
        %8448 = vmatprep.subr.mxu0 0.0
        %8449 = vmatpush1.msra.mxu0 0.0
        %8450 = vmatprep.subr.mxu0 0.0
        %8451 = vmatpush1.msra.mxu0 0.0
        %8452 = vmatprep.subr.mxu0 0.0
        %8453 = vmatpush1.msra.mxu0 0.0
        %8454 = vmatprep.subr.mxu0 0.0
        %8455 = vmatpush1.msra.mxu0 0.0
        %8456 = vmatprep.subr.mxu0 0.0
        %8457 = vmatpush1.msra.mxu0 0.0
        %8458 = vmatprep.subr.mxu0 0.0
        %8459 = vmatpush1.msra.mxu0 0.0
        %8460 = vmatprep.subr.mxu0 0.0
        %8461 = vmatpush1.msra.mxu0 0.0
        %8462 = vmatprep.subr.mxu0 0.0
        %8463 = vmatpush1.msra.mxu0 0.0
        %8464 = vmatprep.subr.mxu0 0.0
        %8465 = vmatpush1.msra.mxu0 0.0
        %8466 = vmatprep.subr.mxu0 0.0
        %8467 = vmatpush1.msra.mxu0 0.0
        %8468 = vmatprep.subr.mxu0 0.0
        %8469 = vmatpush1.msra.mxu0 0.0
        %8470 = vmatprep.subr.mxu0 0.0
        %8471 = vmatpush1.msra.mxu0 0.0
        %8472 = vmatprep.subr.mxu0 0.0
        %8473 = vmatpush1.msra.mxu0 0.0
        %8474 = vmatprep.subr.mxu0 0.0
        %8475 = vmatpush1.msra.mxu0 0.0
        %8476 = vmatprep.subr.mxu0 0.0
        %8477 = vmatpush1.msra.mxu0 0.0
        %8478 = vmatprep.subr.mxu0 0.0
        %8479 = vmatpush1.msra.mxu0 0.0
        %8480 = vmatprep.subr.mxu0 0.0
        %8481 = vmatpush1.msra.mxu0 0.0
        %8482 = vmatprep.subr.mxu0 0.0
        %8483 = vmatpush1.msra.mxu0 0.0
        %8484 = vmatprep.subr.mxu0 0.0
        %8485 = vmatpush1.msra.mxu0 0.0
        %8486 = vmatprep.subr.mxu0 0.0
        %8487 = vmatpush1.msra.mxu0 0.0
        %8488 = vmatprep.subr.mxu0 0.0
        %8489 = vmatpush1.msra.mxu0 0.0
        %8490 = vmatprep.subr.mxu0 0.0
        %8491 = vmatpush1.msra.mxu0 0.0
        %8492 = vmatprep.subr.mxu0 0.0
        %8493 = vmatpush1.msra.mxu0 0.0
        %8494 = vmatprep.subr.mxu0 0.0
        %8495 = vmatpush1.msra.mxu0 0.0
        %8496 = vmatprep.subr.mxu0 0.0
        %8497 = vmatpush1.msra.mxu0 0.0
        %8498 = vmatprep.subr.mxu0 0.0
        %8499 = vmatpush1.msra.mxu0 0.0
        %8500 = vmatprep.subr.mxu0 0.0
        %8501 = vmatpush1.msra.mxu0 0.0
        %8502 = vmatprep.mubr.f32.mxu0 0.0
        %8503 = vmatmul.mubr.f32.gmra.mrb[0].mxu0 %v8436
        %v8504 = vpop.f32.mrb[0].mxu0
        %v8505 = vadd.f32 %v8434, %v8504
        %v8506 = vpop.f32.mrb[0].mxu0
        %8507 = vdwg.mxu0
        %v8508 = vmax.f32 %v8505, 0.0
        %v8509 = vld [vmem:[%s7] sm:$0x3]
        %v8510 = vld [vmem:[%s8] sm:$0x1]
        %vm8511 = vcmask 15360
        %v8513 = vsel %vm8511, %v8508, 0
        %vm8515 = vcmask 1041408
        %v8517 = vsel %vm8515, %v8509, 0
        %8519 = vmatprep.subr.mxu0 0.0
        %8520 = vmatpush1.msra.mxu0 %v8517
        %8521 = vmatprep.subr.mxu0 0.0
        %8522 = vmatpush1.msra.mxu0 0.0
        %8523 = vmatprep.subr.mxu0 0.0
        %8524 = vmatpush1.msra.mxu0 0.0
        %8525 = vmatprep.subr.mxu0 0.0
        %8526 = vmatpush1.msra.mxu0 0.0
        %8527 = vmatprep.subr.mxu0 0.0
        %8528 = vmatpush1.msra.mxu0 0.0
        %8529 = vmatprep.subr.mxu0 0.0
        %8530 = vmatpush1.msra.mxu0 0.0
        %8531 = vmatprep.subr.mxu0 0.0
        %8532 = vmatpush1.msra.mxu0 0.0
        %8533 = vmatprep.subr.mxu0 0.0
        %8534 = vmatpush1.msra.mxu0 0.0
        %8535 = vmatprep.subr.mxu0 0.0
        %8536 = vmatpush1.msra.mxu0 0.0
        %8537 = vmatprep.subr.mxu0 0.0
        %8538 = vmatpush1.msra.mxu0 0.0
        %8539 = vmatprep.subr.mxu0 0.0
        %8540 = vmatpush1.msra.mxu0 0.0
        %8541 = vmatprep.subr.mxu0 0.0
        %8542 = vmatpush1.msra.mxu0 0.0
        %8543 = vmatprep.subr.mxu0 0.0
        %8544 = vmatpush1.msra.mxu0 0.0
        %8545 = vmatprep.subr.mxu0 0.0
        %8546 = vmatpush1.msra.mxu0 0.0
        %8547 = vmatprep.subr.mxu0 0.0
        %8548 = vmatpush1.msra.mxu0 0.0
        %8549 = vmatprep.subr.mxu0 0.0
        %8550 = vmatpush1.msra.mxu0 0.0
        %8551 = vmatprep.subr.mxu0 0.0
        %8552 = vmatpush1.msra.mxu0 0.0
        %8553 = vmatprep.subr.mxu0 0.0
        %8554 = vmatpush1.msra.mxu0 0.0
        %8555 = vmatprep.subr.mxu0 0.0
        %8556 = vmatpush1.msra.mxu0 0.0
        %8557 = vmatprep.subr.mxu0 0.0
        %8558 = vmatpush1.msra.mxu0 0.0
        %8559 = vmatprep.subr.mxu0 0.0
        %8560 = vmatpush1.msra.mxu0 0.0
        %8561 = vmatprep.subr.mxu0 0.0
        %8562 = vmatpush1.msra.mxu0 0.0
        %8563 = vmatprep.subr.mxu0 0.0
        %8564 = vmatpush1.msra.mxu0 0.0
        %8565 = vmatprep.subr.mxu0 0.0
        %8566 = vmatpush1.msra.mxu0 0.0
        %8567 = vmatprep.subr.mxu0 0.0
        %8568 = vmatpush1.msra.mxu0 0.0
        %8569 = vmatprep.subr.mxu0 0.0
        %8570 = vmatpush1.msra.mxu0 0.0
        %8571 = vmatprep.subr.mxu0 0.0
        %8572 = vmatpush1.msra.mxu0 0.0
        %8573 = vmatprep.subr.mxu0 0.0
        %8574 = vmatpush1.msra.mxu0 0.0
        %8575 = vmatprep.subr.mxu0 0.0
        %8576 = vmatpush1.msra.mxu0 0.0
        %8577 = vmatprep.subr.mxu0 0.0
        %8578 = vmatpush1.msra.mxu0 0.0
        %8579 = vmatprep.subr.mxu0 0.0
        %8580 = vmatpush1.msra.mxu0 0.0
        %8581 = vmatprep.subr.mxu0 0.0
        %8582 = vmatpush1.msra.mxu0 0.0
        %8583 = vmatprep.mubr.f32.mxu0 0.0
        %8584 = vmatmul.mubr.f32.gmra.mrb[0].mxu0 %v8513
        %v8585 = vpop.f32.mrb[0].mxu0
        %v8586 = vadd.f32 %v8510, %v8585
        %v8587 = vpop.f32.mrb[0].mxu0
        %8588 = vdwg.mxu0
        %v8589 = vxor.u32 %v8586, 2147483648
        %v8590 = vmul.f32 %v8589, 1.442695
        %v8591 = vpow.pop %v8590
        %v8592 = vadd.f32 %v8591, 1.0
        %v8593 = vrcp.pop %v8592
        %v8594 = vmul.f32 1.0, %v8593
        %v8595 = vlaneseq
        %v8596 = vshrl.u32 %v8595, 7
        %v8597 = vsub.s32 0, %v8596
        %v8598 = vrot.slane %v8594, %v8597
        %v8599 = vmul.f32 %v8375, %v8598
        %v8600 = vmul.f32 %v8376, %v8598
        %v8601 = vmul.f32 %v8377, %v8598
        %v8602 = vmul.f32 %v8378, %v8598
        %v8603 = vmul.f32 %v8379, %v8598
        %v8604 = vmul.f32 %v8380, %v8598
        %v8605 = vmul.f32 %v8381, %v8598
        %v8606 = vmul.f32 %v8382, %v8598
        %v8607 = vpack.c.bf16 %v8600, %v8599
        %v8608 = vpack.c.bf16 %v8602, %v8601
        %v8609 = vpack.c.bf16 %v8604, %v8603
        %v8610 = vpack.c.bf16 %v8606, %v8605
        %v8611 = vunpack.c.l.bf16 %v8607
        %v8612 = vunpack.c.h.bf16 %v8607
        %v8613 = vunpack.c.l.bf16 %v8608
        %v8614 = vunpack.c.h.bf16 %v8608
        %v8615 = vunpack.c.l.bf16 %v8609
        %v8616 = vunpack.c.h.bf16 %v8609
        %v8617 = vunpack.c.l.bf16 %v8610
        %v8618 = vunpack.c.h.bf16 %v8610
        %v8619 = vsub.f32 %v8599, %v8611
        %v8620 = vsub.f32 %v8600, %v8612
        %v8621 = vsub.f32 %v8601, %v8613
        %v8622 = vsub.f32 %v8602, %v8614
        %v8623 = vsub.f32 %v8603, %v8615
        %v8624 = vsub.f32 %v8604, %v8616
        %v8625 = vsub.f32 %v8605, %v8617
        %v8626 = vsub.f32 %v8606, %v8618
        %v8627 = vpack.c.bf16 %v8620, %v8619
        %v8628 = vpack.c.bf16 %v8622, %v8621
        %v8629 = vpack.c.bf16 %v8624, %v8623
        %v8630 = vpack.c.bf16 %v8626, %v8625
        %v8631 = vsel %vm377, %v373, 0
        %v8633 = vsel %vm377, %v374, 0
        %v8636 = vsel %vm377, %v8627, 0
        %v8639 = vsel %vm377, %v8628, 0
        %v8642 = vsel %vm377, %v8629, 0
        %v8645 = vsel %vm377, %v8630, 0
        %8647 = vmatprep.subr.bf16.mxu0 0
        %8648 = vmatpush1.bf16.xpose.msra.mxu0 %v8636
        %8649 = vmatprep.subr.bf16.mxu0 0
        %8650 = vmatpush1.bf16.xpose.msra.mxu0 %v8639
        %8651 = vmatprep.subr.bf16.mxu0 0
        %8652 = vmatpush1.bf16.xpose.msra.mxu0 %v8642
        %8653 = vmatprep.subr.bf16.mxu0 0
        %8654 = vmatpush1.bf16.xpose.msra.mxu0 %v8645
        %8655 = vmatprep.subr.bf16.mxu0 0
        %8656 = vmatpush1.bf16.xpose.msra.mxu0 0
        %8657 = vmatprep.subr.bf16.mxu0 0
        %8658 = vmatpush1.bf16.xpose.msra.mxu0 0
        %8659 = vmatprep.subr.bf16.mxu0 0
        %8660 = vmatpush1.bf16.xpose.msra.mxu0 0
        %8661 = vmatprep.subr.bf16.mxu0 0
        %8662 = vmatpush1.bf16.xpose.msra.mxu0 0
        %8663 = vmatprep.subr.bf16.mxu0 0
        %8664 = vmatpush1.bf16.xpose.msra.mxu0 0
        %8665 = vmatprep.subr.bf16.mxu0 0
        %8666 = vmatpush1.bf16.xpose.msra.mxu0 0
        %8667 = vmatprep.subr.bf16.mxu0 0
        %8668 = vmatpush1.bf16.xpose.msra.mxu0 0
        %8669 = vmatprep.subr.bf16.mxu0 0
        %8670 = vmatpush1.bf16.xpose.msra.mxu0 0
        %8671 = vmatprep.subr.bf16.mxu0 0
        %8672 = vmatpush1.bf16.xpose.msra.mxu0 0
        %8673 = vmatprep.subr.bf16.mxu0 0
        %8674 = vmatpush1.bf16.xpose.msra.mxu0 0
        %8675 = vmatprep.subr.bf16.mxu0 0
        %8676 = vmatpush1.bf16.xpose.msra.mxu0 0
        %8677 = vmatprep.subr.bf16.mxu0 0
        %8678 = vmatpush1.bf16.xpose.msra.mxu0 0
        %8679 = vmatprep.mubr.bf16.mxu0 0
        %8680 = vmatmul.mubr.bf16.gmra.mrb[0].mxu0 %v8631
        %v8681 = vpop.f32.mrb[0].mxu0
        %v8682 = vadd.f32 0.0, %v8681
        %v8683 = vpop.f32.mrb[0].mxu0
        %v8684 = vpop.f32.mrb[0].mxu0
        %v8685 = vadd.f32 0.0, %v8684
        %v8686 = vpop.f32.mrb[0].mxu0
        %8687 = vmatprep.mubr.bf16.mxu0 0
        %8688 = vmatmul.mubr.bf16.gmra.mrb[0].mxu0 %v8633
        %v8689 = vpop.f32.mrb[0].mxu0
        %v8690 = vadd.f32 0.0, %v8689
        %v8691 = vpop.f32.mrb[0].mxu0
        %v8692 = vpop.f32.mrb[0].mxu0
        %v8693 = vadd.f32 0.0, %v8692
        %v8694 = vpop.f32.mrb[0].mxu0
        %8695 = vdwg.mxu0
        %v8697 = vsel %vm377, %v8607, 0
        %v8700 = vsel %vm377, %v8608, 0
        %v8703 = vsel %vm377, %v8609, 0
        %v8706 = vsel %vm377, %v8610, 0
        %8708 = vmatprep.subr.bf16.mxu0 0
        %8709 = vmatpush1.bf16.xpose.msra.mxu0 %v8697
        %8710 = vmatprep.subr.bf16.mxu0 0
        %8711 = vmatpush1.bf16.xpose.msra.mxu0 %v8700
        %8712 = vmatprep.subr.bf16.mxu0 0
        %8713 = vmatpush1.bf16.xpose.msra.mxu0 %v8703
        %8714 = vmatprep.subr.bf16.mxu0 0
        %8715 = vmatpush1.bf16.xpose.msra.mxu0 %v8706
        %8716 = vmatprep.subr.bf16.mxu0 0
        %8717 = vmatpush1.bf16.xpose.msra.mxu0 0
        %8718 = vmatprep.subr.bf16.mxu0 0
        %8719 = vmatpush1.bf16.xpose.msra.mxu0 0
        %8720 = vmatprep.subr.bf16.mxu0 0
        %8721 = vmatpush1.bf16.xpose.msra.mxu0 0
        %8722 = vmatprep.subr.bf16.mxu0 0
        %8723 = vmatpush1.bf16.xpose.msra.mxu0 0
        %8724 = vmatprep.subr.bf16.mxu0 0
        %8725 = vmatpush1.bf16.xpose.msra.mxu0 0
        %8726 = vmatprep.subr.bf16.mxu0 0
        %8727 = vmatpush1.bf16.xpose.msra.mxu0 0
        %8728 = vmatprep.subr.bf16.mxu0 0
        %8729 = vmatpush1.bf16.xpose.msra.mxu0 0
        %8730 = vmatprep.subr.bf16.mxu0 0
        %8731 = vmatpush1.bf16.xpose.msra.mxu0 0
        %8732 = vmatprep.subr.bf16.mxu0 0
        %8733 = vmatpush1.bf16.xpose.msra.mxu0 0
        %8734 = vmatprep.subr.bf16.mxu0 0
        %8735 = vmatpush1.bf16.xpose.msra.mxu0 0
        %8736 = vmatprep.subr.bf16.mxu0 0
        %8737 = vmatpush1.bf16.xpose.msra.mxu0 0
        %8738 = vmatprep.subr.bf16.mxu0 0
        %8739 = vmatpush1.bf16.xpose.msra.mxu0 0
        %8740 = vmatprep.mubr.bf16.mxu0 0
        %8741 = vmatmul.mubr.bf16.gmra.mrb[0].mxu0 %v8631
        %v8742 = vpop.f32.mrb[0].mxu0
        %v8743 = vadd.f32 %v8682, %v8742
        %v8744 = vpop.f32.mrb[0].mxu0
        %v8745 = vpop.f32.mrb[0].mxu0
        %v8746 = vadd.f32 %v8685, %v8745
        %v8747 = vpop.f32.mrb[0].mxu0
        %8748 = vmatprep.mubr.bf16.mxu0 0
        %8749 = vmatmul.mubr.bf16.gmra.mrb[0].mxu0 %v8633
        %v8750 = vpop.f32.mrb[0].mxu0
        %v8751 = vadd.f32 %v8690, %v8750
        %v8752 = vpop.f32.mrb[0].mxu0
        %v8753 = vpop.f32.mrb[0].mxu0
        %v8754 = vadd.f32 %v8693, %v8753
        %v8755 = vpop.f32.mrb[0].mxu0
        %8756 = vdwg.mxu0
        %v8757 = vld [vmem:[%s334] sm:$0xff]
        %v8758 = vld [vmem:[%s334 + $0x8] sm:$0xff]
        %v8759 = vld [vmem:[%s334 + $0x10] sm:$0xff]
        %v8760 = vld [vmem:[%s334 + $0x18] sm:$0xff]
        %v8761 = vadd.f32 %v8757, %v8743
        %v8762 = vadd.f32 %v8758, %v8746
        %v8763 = vadd.f32 %v8759, %v8751
        %v8764 = vadd.f32 %v8760, %v8754
        %8765 = vst.msk [vmem:[%s328] sm:$0xff] %vm483, %v8761
        %8766 = vst.msk [vmem:[%s328 + $0x8] sm:$0xff] %vm483, %v8762
        %8767 = vst.msk [vmem:[%s328 + $0x10] sm:$0xff] %vm483, %v8763
        %8768 = vst.msk [vmem:[%s328 + $0x18] sm:$0xff] %vm483, %v8764
        %v8769 = vsel %vm377, %v8383, 0.0
        %v8770 = vsel %vm377, %v8384, 0.0
        %v8771 = vadd.f32 %v8769, %v8770
        %v8772 = vsel %vm377, %v8385, 0.0
        %v8773 = vadd.f32 %v8771, %v8772
        %v8774 = vsel %vm377, %v8386, 0.0
        %v8775 = vadd.f32 %v8773, %v8774
        %v8776 = vsel %vm377, %v8387, 0.0
        %v8777 = vadd.f32 %v8775, %v8776
        %v8778 = vsel %vm377, %v8388, 0.0
        %v8779 = vadd.f32 %v8777, %v8778
        %v8780 = vsel %vm377, %v8389, 0.0
        %v8781 = vadd.f32 %v8779, %v8780
        %v8782 = vsel %vm377, %v8390, 0.0
        %v8783 = vadd.f32 %v8781, %v8782
        %v8784 = vrot.slane %v8783, 4
        %v8785 = vadd.f32 %v8783, %v8784
        %v8786 = vrot.slane %v8785, 2
        %v8787 = vadd.f32 %v8785, %v8786
        %v8788 = vrot.slane %v8787, 1
        %v8789 = vadd.f32 %v8787, %v8788
        %v8790 = vmul.f32 %v8789, %v8428
        %v8791 = vld [vmem:[%s5] sm:$0xff]
        %v8792 = vld [vmem:[%s5 + $0x8] sm:$0xff]
        %v8793 = vld [vmem:[%s5 + $0x10] sm:$0xff]
        %v8794 = vld [vmem:[%s5 + $0x18] sm:$0xff]
        %v8795 = vld [vmem:[%s6] sm:$0x1]
        %v8797 = vsel %vm377, %v8790, 0
        %8799 = vmatprep.subr.mxu0 0.0
        %8800 = vmatpush1.msra.mxu0 %v8791
        %8801 = vmatprep.subr.mxu0 0.0
        %8802 = vmatpush1.msra.mxu0 %v8792
        %8803 = vmatprep.subr.mxu0 0.0
        %8804 = vmatpush1.msra.mxu0 %v8793
        %8805 = vmatprep.subr.mxu0 0.0
        %8806 = vmatpush1.msra.mxu0 %v8794
        %8807 = vmatprep.subr.mxu0 0.0
        %8808 = vmatpush1.msra.mxu0 0.0
        %8809 = vmatprep.subr.mxu0 0.0
        %8810 = vmatpush1.msra.mxu0 0.0
        %8811 = vmatprep.subr.mxu0 0.0
        %8812 = vmatpush1.msra.mxu0 0.0
        %8813 = vmatprep.subr.mxu0 0.0
        %8814 = vmatpush1.msra.mxu0 0.0
        %8815 = vmatprep.subr.mxu0 0.0
        %8816 = vmatpush1.msra.mxu0 0.0
        %8817 = vmatprep.subr.mxu0 0.0
        %8818 = vmatpush1.msra.mxu0 0.0
        %8819 = vmatprep.subr.mxu0 0.0
        %8820 = vmatpush1.msra.mxu0 0.0
        %8821 = vmatprep.subr.mxu0 0.0
        %8822 = vmatpush1.msra.mxu0 0.0
        %8823 = vmatprep.subr.mxu0 0.0
        %8824 = vmatpush1.msra.mxu0 0.0
        %8825 = vmatprep.subr.mxu0 0.0
        %8826 = vmatpush1.msra.mxu0 0.0
        %8827 = vmatprep.subr.mxu0 0.0
        %8828 = vmatpush1.msra.mxu0 0.0
        %8829 = vmatprep.subr.mxu0 0.0
        %8830 = vmatpush1.msra.mxu0 0.0
        %8831 = vmatprep.subr.mxu0 0.0
        %8832 = vmatpush1.msra.mxu0 0.0
        %8833 = vmatprep.subr.mxu0 0.0
        %8834 = vmatpush1.msra.mxu0 0.0
        %8835 = vmatprep.subr.mxu0 0.0
        %8836 = vmatpush1.msra.mxu0 0.0
        %8837 = vmatprep.subr.mxu0 0.0
        %8838 = vmatpush1.msra.mxu0 0.0
        %8839 = vmatprep.subr.mxu0 0.0
        %8840 = vmatpush1.msra.mxu0 0.0
        %8841 = vmatprep.subr.mxu0 0.0
        %8842 = vmatpush1.msra.mxu0 0.0
        %8843 = vmatprep.subr.mxu0 0.0
        %8844 = vmatpush1.msra.mxu0 0.0
        %8845 = vmatprep.subr.mxu0 0.0
        %8846 = vmatpush1.msra.mxu0 0.0
        %8847 = vmatprep.subr.mxu0 0.0
        %8848 = vmatpush1.msra.mxu0 0.0
        %8849 = vmatprep.subr.mxu0 0.0
        %8850 = vmatpush1.msra.mxu0 0.0
        %8851 = vmatprep.subr.mxu0 0.0
        %8852 = vmatpush1.msra.mxu0 0.0
        %8853 = vmatprep.subr.mxu0 0.0
        %8854 = vmatpush1.msra.mxu0 0.0
        %8855 = vmatprep.subr.mxu0 0.0
        %8856 = vmatpush1.msra.mxu0 0.0
        %8857 = vmatprep.subr.mxu0 0.0
        %8858 = vmatpush1.msra.mxu0 0.0
        %8859 = vmatprep.subr.mxu0 0.0
        %8860 = vmatpush1.msra.mxu0 0.0
        %8861 = vmatprep.subr.mxu0 0.0
        %8862 = vmatpush1.msra.mxu0 0.0
        %8863 = vmatprep.mubr.f32.mxu0 0.0
        %8864 = vmatmul.mubr.f32.gmra.mrb[0].mxu0 %v8797
        %v8865 = vpop.f32.mrb[0].mxu0
        %v8866 = vadd.f32 %v8795, %v8865
        %v8867 = vpop.f32.mrb[0].mxu0
        %8868 = vdwg.mxu0
        %v8869 = vmax.f32 %v8866, 0.0
        %v8870 = vld [vmem:[%s7] sm:$0x3]
        %v8871 = vld [vmem:[%s8] sm:$0x1]
        %v8873 = vsel %vm8511, %v8869, 0
        %v8876 = vsel %vm8515, %v8870, 0
        %8878 = vmatprep.subr.mxu0 0.0
        %8879 = vmatpush1.msra.mxu0 %v8876
        %8880 = vmatprep.subr.mxu0 0.0
        %8881 = vmatpush1.msra.mxu0 0.0
        %8882 = vmatprep.subr.mxu0 0.0
        %8883 = vmatpush1.msra.mxu0 0.0
        %8884 = vmatprep.subr.mxu0 0.0
        %8885 = vmatpush1.msra.mxu0 0.0
        %8886 = vmatprep.subr.mxu0 0.0
        %8887 = vmatpush1.msra.mxu0 0.0
        %8888 = vmatprep.subr.mxu0 0.0
        %8889 = vmatpush1.msra.mxu0 0.0
        %8890 = vmatprep.subr.mxu0 0.0
        %8891 = vmatpush1.msra.mxu0 0.0
        %8892 = vmatprep.subr.mxu0 0.0
        %8893 = vmatpush1.msra.mxu0 0.0
        %8894 = vmatprep.subr.mxu0 0.0
        %8895 = vmatpush1.msra.mxu0 0.0
        %8896 = vmatprep.subr.mxu0 0.0
        %8897 = vmatpush1.msra.mxu0 0.0
        %8898 = vmatprep.subr.mxu0 0.0
        %8899 = vmatpush1.msra.mxu0 0.0
        %8900 = vmatprep.subr.mxu0 0.0
        %8901 = vmatpush1.msra.mxu0 0.0
        %8902 = vmatprep.subr.mxu0 0.0
        %8903 = vmatpush1.msra.mxu0 0.0
        %8904 = vmatprep.subr.mxu0 0.0
        %8905 = vmatpush1.msra.mxu0 0.0
        %8906 = vmatprep.subr.mxu0 0.0
        %8907 = vmatpush1.msra.mxu0 0.0
        %8908 = vmatprep.subr.mxu0 0.0
        %8909 = vmatpush1.msra.mxu0 0.0
        %8910 = vmatprep.subr.mxu0 0.0
        %8911 = vmatpush1.msra.mxu0 0.0
        %8912 = vmatprep.subr.mxu0 0.0
        %8913 = vmatpush1.msra.mxu0 0.0
        %8914 = vmatprep.subr.mxu0 0.0
        %8915 = vmatpush1.msra.mxu0 0.0
        %8916 = vmatprep.subr.mxu0 0.0
        %8917 = vmatpush1.msra.mxu0 0.0
        %8918 = vmatprep.subr.mxu0 0.0
        %8919 = vmatpush1.msra.mxu0 0.0
        %8920 = vmatprep.subr.mxu0 0.0
        %8921 = vmatpush1.msra.mxu0 0.0
        %8922 = vmatprep.subr.mxu0 0.0
        %8923 = vmatpush1.msra.mxu0 0.0
        %8924 = vmatprep.subr.mxu0 0.0
        %8925 = vmatpush1.msra.mxu0 0.0
        %8926 = vmatprep.subr.mxu0 0.0
        %8927 = vmatpush1.msra.mxu0 0.0
        %8928 = vmatprep.subr.mxu0 0.0
        %8929 = vmatpush1.msra.mxu0 0.0
        %8930 = vmatprep.subr.mxu0 0.0
        %8931 = vmatpush1.msra.mxu0 0.0
        %8932 = vmatprep.subr.mxu0 0.0
        %8933 = vmatpush1.msra.mxu0 0.0
        %8934 = vmatprep.subr.mxu0 0.0
        %8935 = vmatpush1.msra.mxu0 0.0
        %8936 = vmatprep.subr.mxu0 0.0
        %8937 = vmatpush1.msra.mxu0 0.0
        %8938 = vmatprep.subr.mxu0 0.0
        %8939 = vmatpush1.msra.mxu0 0.0
        %8940 = vmatprep.subr.mxu0 0.0
        %8941 = vmatpush1.msra.mxu0 0.0
        %8942 = vmatprep.mubr.f32.mxu0 0.0
        %8943 = vmatmul.mubr.f32.gmra.mrb[0].mxu0 %v8873
        %v8944 = vpop.f32.mrb[0].mxu0
        %v8945 = vadd.f32 %v8871, %v8944
        %v8946 = vpop.f32.mrb[0].mxu0
        %8947 = vdwg.mxu0
        %v8948 = vxor.u32 %v8945, 2147483648
        %v8949 = vmul.f32 %v8948, 1.442695
        %v8950 = vpow.pop %v8949
        %v8951 = vadd.f32 %v8950, 1.0
        %v8952 = vrcp.pop %v8951
        %v8953 = vmul.f32 1.0, %v8952
        %v8954 = vlaneseq
        %v8955 = vshrl.u32 %v8954, 7
        %v8956 = vsub.s32 0, %v8955
        %v8957 = vrot.slane %v8953, %v8956
        %v8958 = vmul.f32 %v8383, %v8957
        %v8959 = vmul.f32 %v8384, %v8957
        %v8960 = vmul.f32 %v8385, %v8957
        %v8961 = vmul.f32 %v8386, %v8957
        %v8962 = vmul.f32 %v8387, %v8957
        %v8963 = vmul.f32 %v8388, %v8957
        %v8964 = vmul.f32 %v8389, %v8957
        %v8965 = vmul.f32 %v8390, %v8957
        %v8966 = vpack.c.bf16 %v8959, %v8958
        %v8967 = vpack.c.bf16 %v8961, %v8960
        %v8968 = vpack.c.bf16 %v8963, %v8962
        %v8969 = vpack.c.bf16 %v8965, %v8964
        %v8970 = vunpack.c.l.bf16 %v8966
        %v8971 = vunpack.c.h.bf16 %v8966
        %v8972 = vunpack.c.l.bf16 %v8967
        %v8973 = vunpack.c.h.bf16 %v8967
        %v8974 = vunpack.c.l.bf16 %v8968
        %v8975 = vunpack.c.h.bf16 %v8968
        %v8976 = vunpack.c.l.bf16 %v8969
        %v8977 = vunpack.c.h.bf16 %v8969
        %v8978 = vsub.f32 %v8958, %v8970
        %v8979 = vsub.f32 %v8959, %v8971
        %v8980 = vsub.f32 %v8960, %v8972
        %v8981 = vsub.f32 %v8961, %v8973
        %v8982 = vsub.f32 %v8962, %v8974
        %v8983 = vsub.f32 %v8963, %v8975
        %v8984 = vsub.f32 %v8964, %v8976
        %v8985 = vsub.f32 %v8965, %v8977
        %v8986 = vpack.c.bf16 %v8979, %v8978
        %v8987 = vpack.c.bf16 %v8981, %v8980
        %v8988 = vpack.c.bf16 %v8983, %v8982
        %v8989 = vpack.c.bf16 %v8985, %v8984
        %v8991 = vsel %vm377, %v8986, 0
        %v8994 = vsel %vm377, %v8987, 0
        %v8997 = vsel %vm377, %v8988, 0
        %v9000 = vsel %vm377, %v8989, 0
        %9002 = vmatprep.subr.bf16.mxu0 0
        %9003 = vmatpush1.bf16.xpose.msra.mxu0 %v8991
        %9004 = vmatprep.subr.bf16.mxu0 0
        %9005 = vmatpush1.bf16.xpose.msra.mxu0 %v8994
        %9006 = vmatprep.subr.bf16.mxu0 0
        %9007 = vmatpush1.bf16.xpose.msra.mxu0 %v8997
        %9008 = vmatprep.subr.bf16.mxu0 0
        %9009 = vmatpush1.bf16.xpose.msra.mxu0 %v9000
        %9010 = vmatprep.subr.bf16.mxu0 0
        %9011 = vmatpush1.bf16.xpose.msra.mxu0 0
        %9012 = vmatprep.subr.bf16.mxu0 0
        %9013 = vmatpush1.bf16.xpose.msra.mxu0 0
        %9014 = vmatprep.subr.bf16.mxu0 0
        %9015 = vmatpush1.bf16.xpose.msra.mxu0 0
        %9016 = vmatprep.subr.bf16.mxu0 0
        %9017 = vmatpush1.bf16.xpose.msra.mxu0 0
        %9018 = vmatprep.subr.bf16.mxu0 0
        %9019 = vmatpush1.bf16.xpose.msra.mxu0 0
        %9020 = vmatprep.subr.bf16.mxu0 0
        %9021 = vmatpush1.bf16.xpose.msra.mxu0 0
        %9022 = vmatprep.subr.bf16.mxu0 0
        %9023 = vmatpush1.bf16.xpose.msra.mxu0 0
        %9024 = vmatprep.subr.bf16.mxu0 0
        %9025 = vmatpush1.bf16.xpose.msra.mxu0 0
        %9026 = vmatprep.subr.bf16.mxu0 0
        %9027 = vmatpush1.bf16.xpose.msra.mxu0 0
        %9028 = vmatprep.subr.bf16.mxu0 0
        %9029 = vmatpush1.bf16.xpose.msra.mxu0 0
        %9030 = vmatprep.subr.bf16.mxu0 0
        %9031 = vmatpush1.bf16.xpose.msra.mxu0 0
        %9032 = vmatprep.subr.bf16.mxu0 0
        %9033 = vmatpush1.bf16.xpose.msra.mxu0 0
        %9034 = vmatprep.mubr.bf16.mxu0 0
        %9035 = vmatmul.mubr.bf16.gmra.mrb[0].mxu0 %v8631
        %v9036 = vpop.f32.mrb[0].mxu0
        %v9037 = vadd.f32 0.0, %v9036
        %v9038 = vpop.f32.mrb[0].mxu0
        %v9039 = vpop.f32.mrb[0].mxu0
        %v9040 = vadd.f32 0.0, %v9039
        %v9041 = vpop.f32.mrb[0].mxu0
        %9042 = vmatprep.mubr.bf16.mxu0 0
        %9043 = vmatmul.mubr.bf16.gmra.mrb[0].mxu0 %v8633
        %v9044 = vpop.f32.mrb[0].mxu0
        %v9045 = vadd.f32 0.0, %v9044
        %v9046 = vpop.f32.mrb[0].mxu0
        %v9047 = vpop.f32.mrb[0].mxu0
        %v9048 = vadd.f32 0.0, %v9047
        %v9049 = vpop.f32.mrb[0].mxu0
        %9050 = vdwg.mxu0
        %v9052 = vsel %vm377, %v8966, 0
        %v9055 = vsel %vm377, %v8967, 0
        %v9058 = vsel %vm377, %v8968, 0
        %v9061 = vsel %vm377, %v8969, 0
        %9063 = vmatprep.subr.bf16.mxu0 0
        %9064 = vmatpush1.bf16.xpose.msra.mxu0 %v9052
        %9065 = vmatprep.subr.bf16.mxu0 0
        %9066 = vmatpush1.bf16.xpose.msra.mxu0 %v9055
        %9067 = vmatprep.subr.bf16.mxu0 0
        %9068 = vmatpush1.bf16.xpose.msra.mxu0 %v9058
        %9069 = vmatprep.subr.bf16.mxu0 0
        %9070 = vmatpush1.bf16.xpose.msra.mxu0 %v9061
        %9071 = vmatprep.subr.bf16.mxu0 0
        %9072 = vmatpush1.bf16.xpose.msra.mxu0 0
        %9073 = vmatprep.subr.bf16.mxu0 0
        %9074 = vmatpush1.bf16.xpose.msra.mxu0 0
        %9075 = vmatprep.subr.bf16.mxu0 0
        %9076 = vmatpush1.bf16.xpose.msra.mxu0 0
        %9077 = vmatprep.subr.bf16.mxu0 0
        %9078 = vmatpush1.bf16.xpose.msra.mxu0 0
        %9079 = vmatprep.subr.bf16.mxu0 0
        %9080 = vmatpush1.bf16.xpose.msra.mxu0 0
        %9081 = vmatprep.subr.bf16.mxu0 0
        %9082 = vmatpush1.bf16.xpose.msra.mxu0 0
        %9083 = vmatprep.subr.bf16.mxu0 0
        %9084 = vmatpush1.bf16.xpose.msra.mxu0 0
        %9085 = vmatprep.subr.bf16.mxu0 0
        %9086 = vmatpush1.bf16.xpose.msra.mxu0 0
        %9087 = vmatprep.subr.bf16.mxu0 0
        %9088 = vmatpush1.bf16.xpose.msra.mxu0 0
        %9089 = vmatprep.subr.bf16.mxu0 0
        %9090 = vmatpush1.bf16.xpose.msra.mxu0 0
        %9091 = vmatprep.subr.bf16.mxu0 0
        %9092 = vmatpush1.bf16.xpose.msra.mxu0 0
        %9093 = vmatprep.subr.bf16.mxu0 0
        %9094 = vmatpush1.bf16.xpose.msra.mxu0 0
        %9095 = vmatprep.mubr.bf16.mxu0 0
        %9096 = vmatmul.mubr.bf16.gmra.mrb[0].mxu0 %v8631
        %v9097 = vpop.f32.mrb[0].mxu0
        %v9098 = vadd.f32 %v9037, %v9097
        %v9099 = vpop.f32.mrb[0].mxu0
        %v9100 = vpop.f32.mrb[0].mxu0
        %v9101 = vadd.f32 %v9040, %v9100
        %v9102 = vpop.f32.mrb[0].mxu0
        %9103 = vmatprep.mubr.bf16.mxu0 0
        %9104 = vmatmul.mubr.bf16.gmra.mrb[0].mxu0 %v8633
        %v9105 = vpop.f32.mrb[0].mxu0
        %v9106 = vadd.f32 %v9045, %v9105
        %v9107 = vpop.f32.mrb[0].mxu0
        %v9108 = vpop.f32.mrb[0].mxu0
        %v9109 = vadd.f32 %v9048, %v9108
        %v9110 = vpop.f32.mrb[0].mxu0
        %9111 = vdwg.mxu0
        %s9112 = scalar_lea.vmem %s334, 32
        %v9113 = vld [vmem:[%s9112] sm:$0xff]
        %v9114 = vld [vmem:[%s9112 + $0x8] sm:$0xff]
        %v9115 = vld [vmem:[%s9112 + $0x10] sm:$0xff]
        %v9116 = vld [vmem:[%s9112 + $0x18] sm:$0xff]
        %v9117 = vadd.f32 %v9113, %v9098
        %v9118 = vadd.f32 %v9114, %v9101
        %v9119 = vadd.f32 %v9115, %v9106
        %v9120 = vadd.f32 %v9116, %v9109
        %s9121 = scalar_lea.vmem %s328, 32 [#allocation3]
        %9122 = vst.msk [vmem:[%s9121] sm:$0xff] %vm483, %v9117
        %9123 = vst.msk [vmem:[%s9121 + $0x8] sm:$0xff] %vm483, %v9118
        %9124 = vst.msk [vmem:[%s9121 + $0x10] sm:$0xff] %vm483, %v9119
        %9125 = vst.msk [vmem:[%s9121 + $0x18] sm:$0xff] %vm483, %v9120
        %v9126 = vsel %vm377, %v8391, 0.0
        %v9127 = vsel %vm377, %v8392, 0.0
        %v9128 = vadd.f32 %v9126, %v9127
        %v9129 = vsel %vm377, %v8393, 0.0
        %v9130 = vadd.f32 %v9128, %v9129
        %v9131 = vsel %vm377, %v8394, 0.0
        %v9132 = vadd.f32 %v9130, %v9131
        %v9133 = vsel %vm377, %v8395, 0.0
        %v9134 = vadd.f32 %v9132, %v9133
        %v9135 = vsel %vm377, %v8396, 0.0
        %v9136 = vadd.f32 %v9134, %v9135
        %v9137 = vsel %vm377, %v8397, 0.0
        %v9138 = vadd.f32 %v9136, %v9137
        %v9139 = vsel %vm377, %v8398, 0.0
        %v9140 = vadd.f32 %v9138, %v9139
        %v9141 = vrot.slane %v9140, 4
        %v9142 = vadd.f32 %v9140, %v9141
        %v9143 = vrot.slane %v9142, 2
        %v9144 = vadd.f32 %v9142, %v9143
        %v9145 = vrot.slane %v9144, 1
        %v9146 = vadd.f32 %v9144, %v9145
        %v9147 = vmul.f32 %v9146, %v8428
        %v9148 = vld [vmem:[%s5] sm:$0xff]
        %v9149 = vld [vmem:[%s5 + $0x8] sm:$0xff]
        %v9150 = vld [vmem:[%s5 + $0x10] sm:$0xff]
        %v9151 = vld [vmem:[%s5 + $0x18] sm:$0xff]
        %v9152 = vld [vmem:[%s6] sm:$0x1]
        %v9154 = vsel %vm377, %v9147, 0
        %9156 = vmatprep.subr.mxu0 0.0
        %9157 = vmatpush1.msra.mxu0 %v9148
        %9158 = vmatprep.subr.mxu0 0.0
        %9159 = vmatpush1.msra.mxu0 %v9149
        %9160 = vmatprep.subr.mxu0 0.0
        %9161 = vmatpush1.msra.mxu0 %v9150
        %9162 = vmatprep.subr.mxu0 0.0
        %9163 = vmatpush1.msra.mxu0 %v9151
        %9164 = vmatprep.subr.mxu0 0.0
        %9165 = vmatpush1.msra.mxu0 0.0
        %9166 = vmatprep.subr.mxu0 0.0
        %9167 = vmatpush1.msra.mxu0 0.0
        %9168 = vmatprep.subr.mxu0 0.0
        %9169 = vmatpush1.msra.mxu0 0.0
        %9170 = vmatprep.subr.mxu0 0.0
        %9171 = vmatpush1.msra.mxu0 0.0
        %9172 = vmatprep.subr.mxu0 0.0
        %9173 = vmatpush1.msra.mxu0 0.0
        %9174 = vmatprep.subr.mxu0 0.0
        %9175 = vmatpush1.msra.mxu0 0.0
        %9176 = vmatprep.subr.mxu0 0.0
        %9177 = vmatpush1.msra.mxu0 0.0
        %9178 = vmatprep.subr.mxu0 0.0
        %9179 = vmatpush1.msra.mxu0 0.0
        %9180 = vmatprep.subr.mxu0 0.0
        %9181 = vmatpush1.msra.mxu0 0.0
        %9182 = vmatprep.subr.mxu0 0.0
        %9183 = vmatpush1.msra.mxu0 0.0
        %9184 = vmatprep.subr.mxu0 0.0
        %9185 = vmatpush1.msra.mxu0 0.0
        %9186 = vmatprep.subr.mxu0 0.0
        %9187 = vmatpush1.msra.mxu0 0.0
        %9188 = vmatprep.subr.mxu0 0.0
        %9189 = vmatpush1.msra.mxu0 0.0
        %9190 = vmatprep.subr.mxu0 0.0
        %9191 = vmatpush1.msra.mxu0 0.0
        %9192 = vmatprep.subr.mxu0 0.0
        %9193 = vmatpush1.msra.mxu0 0.0
        %9194 = vmatprep.subr.mxu0 0.0
        %9195 = vmatpush1.msra.mxu0 0.0
        %9196 = vmatprep.subr.mxu0 0.0
        %9197 = vmatpush1.msra.mxu0 0.0
        %9198 = vmatprep.subr.mxu0 0.0
        %9199 = vmatpush1.msra.mxu0 0.0
        %9200 = vmatprep.subr.mxu0 0.0
        %9201 = vmatpush1.msra.mxu0 0.0
        %9202 = vmatprep.subr.mxu0 0.0
        %9203 = vmatpush1.msra.mxu0 0.0
        %9204 = vmatprep.subr.mxu0 0.0
        %9205 = vmatpush1.msra.mxu0 0.0
        %9206 = vmatprep.subr.mxu0 0.0
        %9207 = vmatpush1.msra.mxu0 0.0
        %9208 = vmatprep.subr.mxu0 0.0
        %9209 = vmatpush1.msra.mxu0 0.0
        %9210 = vmatprep.subr.mxu0 0.0
        %9211 = vmatpush1.msra.mxu0 0.0
        %9212 = vmatprep.subr.mxu0 0.0
        %9213 = vmatpush1.msra.mxu0 0.0
        %9214 = vmatprep.subr.mxu0 0.0
        %9215 = vmatpush1.msra.mxu0 0.0
        %9216 = vmatprep.subr.mxu0 0.0
        %9217 = vmatpush1.msra.mxu0 0.0
        %9218 = vmatprep.subr.mxu0 0.0
        %9219 = vmatpush1.msra.mxu0 0.0
        %9220 = vmatprep.mubr.f32.mxu0 0.0
        %9221 = vmatmul.mubr.f32.gmra.mrb[0].mxu0 %v9154
        %v9222 = vpop.f32.mrb[0].mxu0
        %v9223 = vadd.f32 %v9152, %v9222
        %v9224 = vpop.f32.mrb[0].mxu0
        %9225 = vdwg.mxu0
        %v9226 = vmax.f32 %v9223, 0.0
        %v9227 = vld [vmem:[%s7] sm:$0x3]
        %v9228 = vld [vmem:[%s8] sm:$0x1]
        %v9230 = vsel %vm8511, %v9226, 0
        %v9233 = vsel %vm8515, %v9227, 0
        %9235 = vmatprep.subr.mxu0 0.0
        %9236 = vmatpush1.msra.mxu0 %v9233
        %9237 = vmatprep.subr.mxu0 0.0
        %9238 = vmatpush1.msra.mxu0 0.0
        %9239 = vmatprep.subr.mxu0 0.0
        %9240 = vmatpush1.msra.mxu0 0.0
        %9241 = vmatprep.subr.mxu0 0.0
        %9242 = vmatpush1.msra.mxu0 0.0
        %9243 = vmatprep.subr.mxu0 0.0
        %9244 = vmatpush1.msra.mxu0 0.0
        %9245 = vmatprep.subr.mxu0 0.0
        %9246 = vmatpush1.msra.mxu0 0.0
        %9247 = vmatprep.subr.mxu0 0.0
        %9248 = vmatpush1.msra.mxu0 0.0
        %9249 = vmatprep.subr.mxu0 0.0
        %9250 = vmatpush1.msra.mxu0 0.0
        %9251 = vmatprep.subr.mxu0 0.0
        %9252 = vmatpush1.msra.mxu0 0.0
        %9253 = vmatprep.subr.mxu0 0.0
        %9254 = vmatpush1.msra.mxu0 0.0
        %9255 = vmatprep.subr.mxu0 0.0
        %9256 = vmatpush1.msra.mxu0 0.0
        %9257 = vmatprep.subr.mxu0 0.0
        %9258 = vmatpush1.msra.mxu0 0.0
        %9259 = vmatprep.subr.mxu0 0.0
        %9260 = vmatpush1.msra.mxu0 0.0
        %9261 = vmatprep.subr.mxu0 0.0
        %9262 = vmatpush1.msra.mxu0 0.0
        %9263 = vmatprep.subr.mxu0 0.0
        %9264 = vmatpush1.msra.mxu0 0.0
        %9265 = vmatprep.subr.mxu0 0.0
        %9266 = vmatpush1.msra.mxu0 0.0
        %9267 = vmatprep.subr.mxu0 0.0
        %9268 = vmatpush1.msra.mxu0 0.0
        %9269 = vmatprep.subr.mxu0 0.0
        %9270 = vmatpush1.msra.mxu0 0.0
        %9271 = vmatprep.subr.mxu0 0.0
        %9272 = vmatpush1.msra.mxu0 0.0
        %9273 = vmatprep.subr.mxu0 0.0
        %9274 = vmatpush1.msra.mxu0 0.0
        %9275 = vmatprep.subr.mxu0 0.0
        %9276 = vmatpush1.msra.mxu0 0.0
        %9277 = vmatprep.subr.mxu0 0.0
        %9278 = vmatpush1.msra.mxu0 0.0
        %9279 = vmatprep.subr.mxu0 0.0
        %9280 = vmatpush1.msra.mxu0 0.0
        %9281 = vmatprep.subr.mxu0 0.0
        %9282 = vmatpush1.msra.mxu0 0.0
        %9283 = vmatprep.subr.mxu0 0.0
        %9284 = vmatpush1.msra.mxu0 0.0
        %9285 = vmatprep.subr.mxu0 0.0
        %9286 = vmatpush1.msra.mxu0 0.0
        %9287 = vmatprep.subr.mxu0 0.0
        %9288 = vmatpush1.msra.mxu0 0.0
        %9289 = vmatprep.subr.mxu0 0.0
        %9290 = vmatpush1.msra.mxu0 0.0
        %9291 = vmatprep.subr.mxu0 0.0
        %9292 = vmatpush1.msra.mxu0 0.0
        %9293 = vmatprep.subr.mxu0 0.0
        %9294 = vmatpush1.msra.mxu0 0.0
        %9295 = vmatprep.subr.mxu0 0.0
        %9296 = vmatpush1.msra.mxu0 0.0
        %9297 = vmatprep.subr.mxu0 0.0
        %9298 = vmatpush1.msra.mxu0 0.0
        %9299 = vmatprep.mubr.f32.mxu0 0.0
        %9300 = vmatmul.mubr.f32.gmra.mrb[0].mxu0 %v9230
        %v9301 = vpop.f32.mrb[0].mxu0
        %v9302 = vadd.f32 %v9228, %v9301
        %v9303 = vpop.f32.mrb[0].mxu0
        %9304 = vdwg.mxu0
        %v9305 = vxor.u32 %v9302, 2147483648
        %v9306 = vmul.f32 %v9305, 1.442695
        %v9307 = vpow.pop %v9306
        %v9308 = vadd.f32 %v9307, 1.0
        %v9309 = vrcp.pop %v9308
        %v9310 = vmul.f32 1.0, %v9309
        %v9311 = vlaneseq
        %v9312 = vshrl.u32 %v9311, 7
        %v9313 = vsub.s32 0, %v9312
        %v9314 = vrot.slane %v9310, %v9313
        %v9315 = vmul.f32 %v8391, %v9314
        %v9316 = vmul.f32 %v8392, %v9314
        %v9317 = vmul.f32 %v8393, %v9314
        %v9318 = vmul.f32 %v8394, %v9314
        %v9319 = vmul.f32 %v8395, %v9314
        %v9320 = vmul.f32 %v8396, %v9314
        %v9321 = vmul.f32 %v8397, %v9314
        %v9322 = vmul.f32 %v8398, %v9314
        %v9323 = vpack.c.bf16 %v9316, %v9315
        %v9324 = vpack.c.bf16 %v9318, %v9317
        %v9325 = vpack.c.bf16 %v9320, %v9319
        %v9326 = vpack.c.bf16 %v9322, %v9321
        %v9327 = vunpack.c.l.bf16 %v9323
        %v9328 = vunpack.c.h.bf16 %v9323
        %v9329 = vunpack.c.l.bf16 %v9324
        %v9330 = vunpack.c.h.bf16 %v9324
        %v9331 = vunpack.c.l.bf16 %v9325
        %v9332 = vunpack.c.h.bf16 %v9325
        %v9333 = vunpack.c.l.bf16 %v9326
        %v9334 = vunpack.c.h.bf16 %v9326
        %v9335 = vsub.f32 %v9315, %v9327
        %v9336 = vsub.f32 %v9316, %v9328
        %v9337 = vsub.f32 %v9317, %v9329
        %v9338 = vsub.f32 %v9318, %v9330
        %v9339 = vsub.f32 %v9319, %v9331
        %v9340 = vsub.f32 %v9320, %v9332
        %v9341 = vsub.f32 %v9321, %v9333
        %v9342 = vsub.f32 %v9322, %v9334
        %v9343 = vpack.c.bf16 %v9336, %v9335
        %v9344 = vpack.c.bf16 %v9338, %v9337
        %v9345 = vpack.c.bf16 %v9340, %v9339
        %v9346 = vpack.c.bf16 %v9342, %v9341
        %v9348 = vsel %vm377, %v9343, 0
        %v9351 = vsel %vm377, %v9344, 0
        %v9354 = vsel %vm377, %v9345, 0
        %v9357 = vsel %vm377, %v9346, 0
        %9359 = vmatprep.subr.bf16.mxu0 0
        %9360 = vmatpush1.bf16.xpose.msra.mxu0 %v9348
        %9361 = vmatprep.subr.bf16.mxu0 0
        %9362 = vmatpush1.bf16.xpose.msra.mxu0 %v9351
        %9363 = vmatprep.subr.bf16.mxu0 0
        %9364 = vmatpush1.bf16.xpose.msra.mxu0 %v9354
        %9365 = vmatprep.subr.bf16.mxu0 0
        %9366 = vmatpush1.bf16.xpose.msra.mxu0 %v9357
        %9367 = vmatprep.subr.bf16.mxu0 0
        %9368 = vmatpush1.bf16.xpose.msra.mxu0 0
        %9369 = vmatprep.subr.bf16.mxu0 0
        %9370 = vmatpush1.bf16.xpose.msra.mxu0 0
        %9371 = vmatprep.subr.bf16.mxu0 0
        %9372 = vmatpush1.bf16.xpose.msra.mxu0 0
        %9373 = vmatprep.subr.bf16.mxu0 0
        %9374 = vmatpush1.bf16.xpose.msra.mxu0 0
        %9375 = vmatprep.subr.bf16.mxu0 0
        %9376 = vmatpush1.bf16.xpose.msra.mxu0 0
        %9377 = vmatprep.subr.bf16.mxu0 0
        %9378 = vmatpush1.bf16.xpose.msra.mxu0 0
        %9379 = vmatprep.subr.bf16.mxu0 0
        %9380 = vmatpush1.bf16.xpose.msra.mxu0 0
        %9381 = vmatprep.subr.bf16.mxu0 0
        %9382 = vmatpush1.bf16.xpose.msra.mxu0 0
        %9383 = vmatprep.subr.bf16.mxu0 0
        %9384 = vmatpush1.bf16.xpose.msra.mxu0 0
        %9385 = vmatprep.subr.bf16.mxu0 0
        %9386 = vmatpush1.bf16.xpose.msra.mxu0 0
        %9387 = vmatprep.subr.bf16.mxu0 0
        %9388 = vmatpush1.bf16.xpose.msra.mxu0 0
        %9389 = vmatprep.subr.bf16.mxu0 0
        %9390 = vmatpush1.bf16.xpose.msra.mxu0 0
        %9391 = vmatprep.mubr.bf16.mxu0 0
        %9392 = vmatmul.mubr.bf16.gmra.mrb[0].mxu0 %v8631
        %v9393 = vpop.f32.mrb[0].mxu0
        %v9394 = vadd.f32 0.0, %v9393
        %v9395 = vpop.f32.mrb[0].mxu0
        %v9396 = vpop.f32.mrb[0].mxu0
        %v9397 = vadd.f32 0.0, %v9396
        %v9398 = vpop.f32.mrb[0].mxu0
        %9399 = vmatprep.mubr.bf16.mxu0 0
        %9400 = vmatmul.mubr.bf16.gmra.mrb[0].mxu0 %v8633
        %v9401 = vpop.f32.mrb[0].mxu0
        %v9402 = vadd.f32 0.0, %v9401
        %v9403 = vpop.f32.mrb[0].mxu0
        %v9404 = vpop.f32.mrb[0].mxu0
        %v9405 = vadd.f32 0.0, %v9404
        %v9406 = vpop.f32.mrb[0].mxu0
        %9407 = vdwg.mxu0
        %v9409 = vsel %vm377, %v9323, 0
        %v9412 = vsel %vm377, %v9324, 0
        %v9415 = vsel %vm377, %v9325, 0
        %v9418 = vsel %vm377, %v9326, 0
        %9420 = vmatprep.subr.bf16.mxu0 0
        %9421 = vmatpush1.bf16.xpose.msra.mxu0 %v9409
        %9422 = vmatprep.subr.bf16.mxu0 0
        %9423 = vmatpush1.bf16.xpose.msra.mxu0 %v9412
        %9424 = vmatprep.subr.bf16.mxu0 0
        %9425 = vmatpush1.bf16.xpose.msra.mxu0 %v9415
        %9426 = vmatprep.subr.bf16.mxu0 0
        %9427 = vmatpush1.bf16.xpose.msra.mxu0 %v9418
        %9428 = vmatprep.subr.bf16.mxu0 0
        %9429 = vmatpush1.bf16.xpose.msra.mxu0 0
        %9430 = vmatprep.subr.bf16.mxu0 0
        %9431 = vmatpush1.bf16.xpose.msra.mxu0 0
        %9432 = vmatprep.subr.bf16.mxu0 0
        %9433 = vmatpush1.bf16.xpose.msra.mxu0 0
        %9434 = vmatprep.subr.bf16.mxu0 0
        %9435 = vmatpush1.bf16.xpose.msra.mxu0 0
        %9436 = vmatprep.subr.bf16.mxu0 0
        %9437 = vmatpush1.bf16.xpose.msra.mxu0 0
        %9438 = vmatprep.subr.bf16.mxu0 0
        %9439 = vmatpush1.bf16.xpose.msra.mxu0 0
        %9440 = vmatprep.subr.bf16.mxu0 0
        %9441 = vmatpush1.bf16.xpose.msra.mxu0 0
        %9442 = vmatprep.subr.bf16.mxu0 0
        %9443 = vmatpush1.bf16.xpose.msra.mxu0 0
        %9444 = vmatprep.subr.bf16.mxu0 0
        %9445 = vmatpush1.bf16.xpose.msra.mxu0 0
        %9446 = vmatprep.subr.bf16.mxu0 0
        %9447 = vmatpush1.bf16.xpose.msra.mxu0 0
        %9448 = vmatprep.subr.bf16.mxu0 0
        %9449 = vmatpush1.bf16.xpose.msra.mxu0 0
        %9450 = vmatprep.subr.bf16.mxu0 0
        %9451 = vmatpush1.bf16.xpose.msra.mxu0 0
        %9452 = vmatprep.mubr.bf16.mxu0 0
        %9453 = vmatmul.mubr.bf16.gmra.mrb[0].mxu0 %v8631
        %v9454 = vpop.f32.mrb[0].mxu0
        %v9455 = vadd.f32 %v9394, %v9454
        %v9456 = vpop.f32.mrb[0].mxu0
        %v9457 = vpop.f32.mrb[0].mxu0
        %v9458 = vadd.f32 %v9397, %v9457
        %v9459 = vpop.f32.mrb[0].mxu0
        %9460 = vmatprep.mubr.bf16.mxu0 0
        %9461 = vmatmul.mubr.bf16.gmra.mrb[0].mxu0 %v8633
        %v9462 = vpop.f32.mrb[0].mxu0
        %v9463 = vadd.f32 %v9402, %v9462
        %v9464 = vpop.f32.mrb[0].mxu0
        %v9465 = vpop.f32.mrb[0].mxu0
        %v9466 = vadd.f32 %v9405, %v9465
        %v9467 = vpop.f32.mrb[0].mxu0
        %9468 = vdwg.mxu0
        %s9469 = scalar_lea.vmem %s334, 64
        %v9470 = vld [vmem:[%s9469] sm:$0xff]
        %v9471 = vld [vmem:[%s9469 + $0x8] sm:$0xff]
        %v9472 = vld [vmem:[%s9469 + $0x10] sm:$0xff]
        %v9473 = vld [vmem:[%s9469 + $0x18] sm:$0xff]
        %v9474 = vadd.f32 %v9470, %v9455
        %v9475 = vadd.f32 %v9471, %v9458
        %v9476 = vadd.f32 %v9472, %v9463
        %v9477 = vadd.f32 %v9473, %v9466
        %s9478 = scalar_lea.vmem %s328, 64 [#allocation3]
        %9479 = vst.msk [vmem:[%s9478] sm:$0xff] %vm483, %v9474
        %9480 = vst.msk [vmem:[%s9478 + $0x8] sm:$0xff] %vm483, %v9475
        %9481 = vst.msk [vmem:[%s9478 + $0x10] sm:$0xff] %vm483, %v9476
        %9482 = vst.msk [vmem:[%s9478 + $0x18] sm:$0xff] %vm483, %v9477
        %v9483 = vsel %vm377, %v8399, 0.0
        %v9484 = vsel %vm377, %v8400, 0.0
        %v9485 = vadd.f32 %v9483, %v9484
        %v9486 = vsel %vm377, %v8401, 0.0
        %v9487 = vadd.f32 %v9485, %v9486
        %v9488 = vsel %vm377, %v8402, 0.0
        %v9489 = vadd.f32 %v9487, %v9488
        %v9490 = vsel %vm377, %v8403, 0.0
        %v9491 = vadd.f32 %v9489, %v9490
        %v9492 = vsel %vm377, %v8404, 0.0
        %v9493 = vadd.f32 %v9491, %v9492
        %v9494 = vsel %vm377, %v8405, 0.0
        %v9495 = vadd.f32 %v9493, %v9494
        %v9496 = vsel %vm377, %v8406, 0.0
        %v9497 = vadd.f32 %v9495, %v9496
        %v9498 = vrot.slane %v9497, 4
        %v9499 = vadd.f32 %v9497, %v9498
        %v9500 = vrot.slane %v9499, 2
        %v9501 = vadd.f32 %v9499, %v9500
        %v9502 = vrot.slane %v9501, 1
        %v9503 = vadd.f32 %v9501, %v9502
        %v9504 = vmul.f32 %v9503, %v8428
        %v9505 = vld [vmem:[%s5] sm:$0xff]
        %v9506 = vld [vmem:[%s5 + $0x8] sm:$0xff]
        %v9507 = vld [vmem:[%s5 + $0x10] sm:$0xff]
        %v9508 = vld [vmem:[%s5 + $0x18] sm:$0xff]
        %v9509 = vld [vmem:[%s6] sm:$0x1]
        %v9511 = vsel %vm377, %v9504, 0
        %9513 = vmatprep.subr.mxu0 0.0
        %9514 = vmatpush1.msra.mxu0 %v9505
        %9515 = vmatprep.subr.mxu0 0.0
        %9516 = vmatpush1.msra.mxu0 %v9506
        %9517 = vmatprep.subr.mxu0 0.0
        %9518 = vmatpush1.msra.mxu0 %v9507
        %9519 = vmatprep.subr.mxu0 0.0
        %9520 = vmatpush1.msra.mxu0 %v9508
        %9521 = vmatprep.subr.mxu0 0.0
        %9522 = vmatpush1.msra.mxu0 0.0
        %9523 = vmatprep.subr.mxu0 0.0
        %9524 = vmatpush1.msra.mxu0 0.0
        %9525 = vmatprep.subr.mxu0 0.0
        %9526 = vmatpush1.msra.mxu0 0.0
        %9527 = vmatprep.subr.mxu0 0.0
        %9528 = vmatpush1.msra.mxu0 0.0
        %9529 = vmatprep.subr.mxu0 0.0
        %9530 = vmatpush1.msra.mxu0 0.0
        %9531 = vmatprep.subr.mxu0 0.0
        %9532 = vmatpush1.msra.mxu0 0.0
        %9533 = vmatprep.subr.mxu0 0.0
        %9534 = vmatpush1.msra.mxu0 0.0
        %9535 = vmatprep.subr.mxu0 0.0
        %9536 = vmatpush1.msra.mxu0 0.0
        %9537 = vmatprep.subr.mxu0 0.0
        %9538 = vmatpush1.msra.mxu0 0.0
        %9539 = vmatprep.subr.mxu0 0.0
        %9540 = vmatpush1.msra.mxu0 0.0
        %9541 = vmatprep.subr.mxu0 0.0
        %9542 = vmatpush1.msra.mxu0 0.0
        %9543 = vmatprep.subr.mxu0 0.0
        %9544 = vmatpush1.msra.mxu0 0.0
        %9545 = vmatprep.subr.mxu0 0.0
        %9546 = vmatpush1.msra.mxu0 0.0
        %9547 = vmatprep.subr.mxu0 0.0
        %9548 = vmatpush1.msra.mxu0 0.0
        %9549 = vmatprep.subr.mxu0 0.0
        %9550 = vmatpush1.msra.mxu0 0.0
        %9551 = vmatprep.subr.mxu0 0.0
        %9552 = vmatpush1.msra.mxu0 0.0
        %9553 = vmatprep.subr.mxu0 0.0
        %9554 = vmatpush1.msra.mxu0 0.0
        %9555 = vmatprep.subr.mxu0 0.0
        %9556 = vmatpush1.msra.mxu0 0.0
        %9557 = vmatprep.subr.mxu0 0.0
        %9558 = vmatpush1.msra.mxu0 0.0
        %9559 = vmatprep.subr.mxu0 0.0
        %9560 = vmatpush1.msra.mxu0 0.0
        %9561 = vmatprep.subr.mxu0 0.0
        %9562 = vmatpush1.msra.mxu0 0.0
        %9563 = vmatprep.subr.mxu0 0.0
        %9564 = vmatpush1.msra.mxu0 0.0
        %9565 = vmatprep.subr.mxu0 0.0
        %9566 = vmatpush1.msra.mxu0 0.0
        %9567 = vmatprep.subr.mxu0 0.0
        %9568 = vmatpush1.msra.mxu0 0.0
        %9569 = vmatprep.subr.mxu0 0.0
        %9570 = vmatpush1.msra.mxu0 0.0
        %9571 = vmatprep.subr.mxu0 0.0
        %9572 = vmatpush1.msra.mxu0 0.0
        %9573 = vmatprep.subr.mxu0 0.0
        %9574 = vmatpush1.msra.mxu0 0.0
        %9575 = vmatprep.subr.mxu0 0.0
        %9576 = vmatpush1.msra.mxu0 0.0
        %9577 = vmatprep.mubr.f32.mxu0 0.0
        %9578 = vmatmul.mubr.f32.gmra.mrb[0].mxu0 %v9511
        %v9579 = vpop.f32.mrb[0].mxu0
        %v9580 = vadd.f32 %v9509, %v9579
        %v9581 = vpop.f32.mrb[0].mxu0
        %9582 = vdwg.mxu0
        %v9583 = vmax.f32 %v9580, 0.0
        %v9584 = vld [vmem:[%s7] sm:$0x3]
        %v9585 = vld [vmem:[%s8] sm:$0x1]
        %v9587 = vsel %vm8511, %v9583, 0
        %v9590 = vsel %vm8515, %v9584, 0
        %9592 = vmatprep.subr.mxu0 0.0
        %9593 = vmatpush1.msra.mxu0 %v9590
        %9594 = vmatprep.subr.mxu0 0.0
        %9595 = vmatpush1.msra.mxu0 0.0
        %9596 = vmatprep.subr.mxu0 0.0
        %9597 = vmatpush1.msra.mxu0 0.0
        %9598 = vmatprep.subr.mxu0 0.0
        %9599 = vmatpush1.msra.mxu0 0.0
        %9600 = vmatprep.subr.mxu0 0.0
        %9601 = vmatpush1.msra.mxu0 0.0
        %9602 = vmatprep.subr.mxu0 0.0
        %9603 = vmatpush1.msra.mxu0 0.0
        %9604 = vmatprep.subr.mxu0 0.0
        %9605 = vmatpush1.msra.mxu0 0.0
        %9606 = vmatprep.subr.mxu0 0.0
        %9607 = vmatpush1.msra.mxu0 0.0
        %9608 = vmatprep.subr.mxu0 0.0
        %9609 = vmatpush1.msra.mxu0 0.0
        %9610 = vmatprep.subr.mxu0 0.0
        %9611 = vmatpush1.msra.mxu0 0.0
        %9612 = vmatprep.subr.mxu0 0.0
        %9613 = vmatpush1.msra.mxu0 0.0
        %9614 = vmatprep.subr.mxu0 0.0
        %9615 = vmatpush1.msra.mxu0 0.0
        %9616 = vmatprep.subr.mxu0 0.0
        %9617 = vmatpush1.msra.mxu0 0.0
        %9618 = vmatprep.subr.mxu0 0.0
        %9619 = vmatpush1.msra.mxu0 0.0
        %9620 = vmatprep.subr.mxu0 0.0
        %9621 = vmatpush1.msra.mxu0 0.0
        %9622 = vmatprep.subr.mxu0 0.0
        %9623 = vmatpush1.msra.mxu0 0.0
        %9624 = vmatprep.subr.mxu0 0.0
        %9625 = vmatpush1.msra.mxu0 0.0
        %9626 = vmatprep.subr.mxu0 0.0
        %9627 = vmatpush1.msra.mxu0 0.0
        %9628 = vmatprep.subr.mxu0 0.0
        %9629 = vmatpush1.msra.mxu0 0.0
        %9630 = vmatprep.subr.mxu0 0.0
        %9631 = vmatpush1.msra.mxu0 0.0
        %9632 = vmatprep.subr.mxu0 0.0
        %9633 = vmatpush1.msra.mxu0 0.0
        %9634 = vmatprep.subr.mxu0 0.0
        %9635 = vmatpush1.msra.mxu0 0.0
        %9636 = vmatprep.subr.mxu0 0.0
        %9637 = vmatpush1.msra.mxu0 0.0
        %9638 = vmatprep.subr.mxu0 0.0
        %9639 = vmatpush1.msra.mxu0 0.0
        %9640 = vmatprep.subr.mxu0 0.0
        %9641 = vmatpush1.msra.mxu0 0.0
        %9642 = vmatprep.subr.mxu0 0.0
        %9643 = vmatpush1.msra.mxu0 0.0
        %9644 = vmatprep.subr.mxu0 0.0
        %9645 = vmatpush1.msra.mxu0 0.0
        %9646 = vmatprep.subr.mxu0 0.0
        %9647 = vmatpush1.msra.mxu0 0.0
        %9648 = vmatprep.subr.mxu0 0.0
        %9649 = vmatpush1.msra.mxu0 0.0
        %9650 = vmatprep.subr.mxu0 0.0
        %9651 = vmatpush1.msra.mxu0 0.0
        %9652 = vmatprep.subr.mxu0 0.0
        %9653 = vmatpush1.msra.mxu0 0.0
        %9654 = vmatprep.subr.mxu0 0.0
        %9655 = vmatpush1.msra.mxu0 0.0
        %9656 = vmatprep.mubr.f32.mxu0 0.0
        %9657 = vmatmul.mubr.f32.gmra.mrb[0].mxu0 %v9587
        %v9658 = vpop.f32.mrb[0].mxu0
        %v9659 = vadd.f32 %v9585, %v9658
        %v9660 = vpop.f32.mrb[0].mxu0
        %9661 = vdwg.mxu0
        %v9662 = vxor.u32 %v9659, 2147483648
        %v9663 = vmul.f32 %v9662, 1.442695
        %v9664 = vpow.pop %v9663
        %v9665 = vadd.f32 %v9664, 1.0
        %v9666 = vrcp.pop %v9665
        %v9667 = vmul.f32 1.0, %v9666
        %v9668 = vlaneseq
        %v9669 = vshrl.u32 %v9668, 7
        %v9670 = vsub.s32 0, %v9669
        %v9671 = vrot.slane %v9667, %v9670
        %v9672 = vmul.f32 %v8399, %v9671
        %v9673 = vmul.f32 %v8400, %v9671
        %v9674 = vmul.f32 %v8401, %v9671
        %v9675 = vmul.f32 %v8402, %v9671
        %v9676 = vmul.f32 %v8403, %v9671
        %v9677 = vmul.f32 %v8404, %v9671
        %v9678 = vmul.f32 %v8405, %v9671
        %v9679 = vmul.f32 %v8406, %v9671
        %v9680 = vpack.c.bf16 %v9673, %v9672
        %v9681 = vpack.c.bf16 %v9675, %v9674
        %v9682 = vpack.c.bf16 %v9677, %v9676
        %v9683 = vpack.c.bf16 %v9679, %v9678
        %v9684 = vunpack.c.l.bf16 %v9680
        %v9685 = vunpack.c.h.bf16 %v9680
        %v9686 = vunpack.c.l.bf16 %v9681
        %v9687 = vunpack.c.h.bf16 %v9681
        %v9688 = vunpack.c.l.bf16 %v9682
        %v9689 = vunpack.c.h.bf16 %v9682
        %v9690 = vunpack.c.l.bf16 %v9683
        %v9691 = vunpack.c.h.bf16 %v9683
        %v9692 = vsub.f32 %v9672, %v9684
        %v9693 = vsub.f32 %v9673, %v9685
        %v9694 = vsub.f32 %v9674, %v9686
        %v9695 = vsub.f32 %v9675, %v9687
        %v9696 = vsub.f32 %v9676, %v9688
        %v9697 = vsub.f32 %v9677, %v9689
        %v9698 = vsub.f32 %v9678, %v9690
        %v9699 = vsub.f32 %v9679, %v9691
        %v9700 = vpack.c.bf16 %v9693, %v9692
        %v9701 = vpack.c.bf16 %v9695, %v9694
        %v9702 = vpack.c.bf16 %v9697, %v9696
        %v9703 = vpack.c.bf16 %v9699, %v9698
        %v9705 = vsel %vm377, %v9700, 0
        %v9708 = vsel %vm377, %v9701, 0
        %v9711 = vsel %vm377, %v9702, 0
        %v9714 = vsel %vm377, %v9703, 0
        %9716 = vmatprep.subr.bf16.mxu0 0
        %9717 = vmatpush1.bf16.xpose.msra.mxu0 %v9705
        %9718 = vmatprep.subr.bf16.mxu0 0
        %9719 = vmatpush1.bf16.xpose.msra.mxu0 %v9708
        %9720 = vmatprep.subr.bf16.mxu0 0
        %9721 = vmatpush1.bf16.xpose.msra.mxu0 %v9711
        %9722 = vmatprep.subr.bf16.mxu0 0
        %9723 = vmatpush1.bf16.xpose.msra.mxu0 %v9714
        %9724 = vmatprep.subr.bf16.mxu0 0
        %9725 = vmatpush1.bf16.xpose.msra.mxu0 0
        %9726 = vmatprep.subr.bf16.mxu0 0
        %9727 = vmatpush1.bf16.xpose.msra.mxu0 0
        %9728 = vmatprep.subr.bf16.mxu0 0
        %9729 = vmatpush1.bf16.xpose.msra.mxu0 0
        %9730 = vmatprep.subr.bf16.mxu0 0
        %9731 = vmatpush1.bf16.xpose.msra.mxu0 0
        %9732 = vmatprep.subr.bf16.mxu0 0
        %9733 = vmatpush1.bf16.xpose.msra.mxu0 0
        %9734 = vmatprep.subr.bf16.mxu0 0
        %9735 = vmatpush1.bf16.xpose.msra.mxu0 0
        %9736 = vmatprep.subr.bf16.mxu0 0
        %9737 = vmatpush1.bf16.xpose.msra.mxu0 0
        %9738 = vmatprep.subr.bf16.mxu0 0
        %9739 = vmatpush1.bf16.xpose.msra.mxu0 0
        %9740 = vmatprep.subr.bf16.mxu0 0
        %9741 = vmatpush1.bf16.xpose.msra.mxu0 0
        %9742 = vmatprep.subr.bf16.mxu0 0
        %9743 = vmatpush1.bf16.xpose.msra.mxu0 0
        %9744 = vmatprep.subr.bf16.mxu0 0
        %9745 = vmatpush1.bf16.xpose.msra.mxu0 0
        %9746 = vmatprep.subr.bf16.mxu0 0
        %9747 = vmatpush1.bf16.xpose.msra.mxu0 0
        %9748 = vmatprep.mubr.bf16.mxu0 0
        %9749 = vmatmul.mubr.bf16.gmra.mrb[0].mxu0 %v8631
        %v9750 = vpop.f32.mrb[0].mxu0
        %v9751 = vadd.f32 0.0, %v9750
        %v9752 = vpop.f32.mrb[0].mxu0
        %v9753 = vpop.f32.mrb[0].mxu0
        %v9754 = vadd.f32 0.0, %v9753
        %v9755 = vpop.f32.mrb[0].mxu0
        %9756 = vmatprep.mubr.bf16.mxu0 0
        %9757 = vmatmul.mubr.bf16.gmra.mrb[0].mxu0 %v8633
        %v9758 = vpop.f32.mrb[0].mxu0
        %v9759 = vadd.f32 0.0, %v9758
        %v9760 = vpop.f32.mrb[0].mxu0
        %v9761 = vpop.f32.mrb[0].mxu0
        %v9762 = vadd.f32 0.0, %v9761
        %v9763 = vpop.f32.mrb[0].mxu0
        %9764 = vdwg.mxu0
        %v9766 = vsel %vm377, %v9680, 0
        %v9769 = vsel %vm377, %v9681, 0
        %v9772 = vsel %vm377, %v9682, 0
        %v9775 = vsel %vm377, %v9683, 0
        %9777 = vmatprep.subr.bf16.mxu0 0
        %9778 = vmatpush1.bf16.xpose.msra.mxu0 %v9766
        %9779 = vmatprep.subr.bf16.mxu0 0
        %9780 = vmatpush1.bf16.xpose.msra.mxu0 %v9769
        %9781 = vmatprep.subr.bf16.mxu0 0
        %9782 = vmatpush1.bf16.xpose.msra.mxu0 %v9772
        %9783 = vmatprep.subr.bf16.mxu0 0
        %9784 = vmatpush1.bf16.xpose.msra.mxu0 %v9775
        %9785 = vmatprep.subr.bf16.mxu0 0
        %9786 = vmatpush1.bf16.xpose.msra.mxu0 0
        %9787 = vmatprep.subr.bf16.mxu0 0
        %9788 = vmatpush1.bf16.xpose.msra.mxu0 0
        %9789 = vmatprep.subr.bf16.mxu0 0
        %9790 = vmatpush1.bf16.xpose.msra.mxu0 0
        %9791 = vmatprep.subr.bf16.mxu0 0
        %9792 = vmatpush1.bf16.xpose.msra.mxu0 0
        %9793 = vmatprep.subr.bf16.mxu0 0
        %9794 = vmatpush1.bf16.xpose.msra.mxu0 0
        %9795 = vmatprep.subr.bf16.mxu0 0
        %9796 = vmatpush1.bf16.xpose.msra.mxu0 0
        %9797 = vmatprep.subr.bf16.mxu0 0
        %9798 = vmatpush1.bf16.xpose.msra.mxu0 0
        %9799 = vmatprep.subr.bf16.mxu0 0
        %9800 = vmatpush1.bf16.xpose.msra.mxu0 0
        %9801 = vmatprep.subr.bf16.mxu0 0
        %9802 = vmatpush1.bf16.xpose.msra.mxu0 0
        %9803 = vmatprep.subr.bf16.mxu0 0
        %9804 = vmatpush1.bf16.xpose.msra.mxu0 0
        %9805 = vmatprep.subr.bf16.mxu0 0
        %9806 = vmatpush1.bf16.xpose.msra.mxu0 0
        %9807 = vmatprep.subr.bf16.mxu0 0
        %9808 = vmatpush1.bf16.xpose.msra.mxu0 0
        %9809 = vmatprep.mubr.bf16.mxu0 0
        %9810 = vmatmul.mubr.bf16.gmra.mrb[0].mxu0 %v8631
        %v9811 = vpop.f32.mrb[0].mxu0
        %v9812 = vadd.f32 %v9751, %v9811
        %v9813 = vpop.f32.mrb[0].mxu0
        %v9814 = vpop.f32.mrb[0].mxu0
        %v9815 = vadd.f32 %v9754, %v9814
        %v9816 = vpop.f32.mrb[0].mxu0
        %9817 = vmatprep.mubr.bf16.mxu0 0
        %9818 = vmatmul.mubr.bf16.gmra.mrb[0].mxu0 %v8633
        %v9819 = vpop.f32.mrb[0].mxu0
        %v9820 = vadd.f32 %v9759, %v9819
        %v9821 = vpop.f32.mrb[0].mxu0
        %v9822 = vpop.f32.mrb[0].mxu0
        %v9823 = vadd.f32 %v9762, %v9822
        %v9824 = vpop.f32.mrb[0].mxu0
        %9825 = vdwg.mxu0
        %s9826 = scalar_lea.vmem %s334, 96
        %v9827 = vld [vmem:[%s9826] sm:$0xff]
        %v9828 = vld [vmem:[%s9826 + $0x8] sm:$0xff]
        %v9829 = vld [vmem:[%s9826 + $0x10] sm:$0xff]
        %v9830 = vld [vmem:[%s9826 + $0x18] sm:$0xff]
        %v9831 = vadd.f32 %v9827, %v9812
        %v9832 = vadd.f32 %v9828, %v9815
        %v9833 = vadd.f32 %v9829, %v9820
        %v9834 = vadd.f32 %v9830, %v9823
        %s9835 = scalar_lea.vmem %s328, 96 [#allocation3]
        %9836 = vst.msk [vmem:[%s9835] sm:$0xff] %vm483, %v9831
        %9837 = vst.msk [vmem:[%s9835 + $0x8] sm:$0xff] %vm483, %v9832
        %9838 = vst.msk [vmem:[%s9835 + $0x10] sm:$0xff] %vm483, %v9833
        %9839 = vst.msk [vmem:[%s9835 + $0x18] sm:$0xff] %vm483, %v9834
        %s9840 = sand.u32 %s225, 1
        %s9841 = scalar_lea.sflag [#allocation4], %s9840
        %s9842 = sand.u32 %s225, 1
        %s9843 = smul.addr %s9842, 128
        %s9844 = scalar_lea.vmem [#allocation3], %s9843
        // Predicated region
        $region57: #{tpu_custom_call.1} parent=55 // pred_check
          %p9845 = pneg %p235
        $region58: #{tpu_custom_call.1} parent=55 // pred_check_branch
          %9847 = sbr.rel (%p9845) target = $region60
        $region59: #{tpu_custom_call.1} parent=55 // pred_region
          %s9848 = smul.u32 4, %s23
          %s9850 = ssub.s32 2048, 2048
          %9851 = vsyncadd %s9841, %s9850
          %s9852 = smul.addr %s9848, 4
          %s9853 = smul.addr %s9852, 128
          %s9854 = scalar_lea.hbm %s9, %s9853
          %s9855 = sshll.u32 %s9844, 4
          %s9856 = int_to_ptr.vmem [resolvable:$true] %s9855
          %9861 = dma.vmem_to_hbm [thread:$0]  %s9856, 2048, %s9854, %s9841, 128, 128, 8
        $region60: #{tpu_custom_call.1} parent=55 // pred_fallthru
          _
      $region56: #{tpu_custom_call.1} parent=5 // pred_fallthru
        _
      %p9862 = scmp.le.s32.totalorder 2, %s18
      // Predicated region
      $region61: #{tpu_custom_call.1} parent=5 // pred_check
        %p9863 = pneg %p9862
      $region62: #{tpu_custom_call.1} parent=5 // pred_check_branch
        %9865 = sbr.rel (%p9863) target = $region64
      $region63: #{tpu_custom_call.1} parent=5 // pred_region
        %s9866 = ssub.s32 %s18, 2
        // Predicated region
        $region65: #{tpu_custom_call.1} parent=63 // pred_check
          %p9867 = pneg %p241
        $region66: #{tpu_custom_call.1} parent=63 // pred_check_branch
          %9869 = sbr.rel (%p9867) target = $region68
        $region67: #{tpu_custom_call.1} parent=63 // pred_region
          %s9870 = sand.u32 %s226, 1
          %s9871 = scalar_lea.sflag [#allocation4], %s9870
          %s9872 = sand.u32 %s226, 1
          %s9873 = smul.addr %s9872, 128
          %s9874 = scalar_lea.vmem [#allocation3], %s9873
          %9875 = dma.done %s9871, 2048
        $region68: #{tpu_custom_call.1} parent=63 // pred_fallthru
          _
      $region64: #{tpu_custom_call.1} parent=5 // pred_fallthru
        _
    $region6: #{tpu_custom_call.1} parent=1 // loop_footer
      %s22 = sadd.s32 1, %s18
    $region7: #{tpu_custom_call.1} parent=1 // loop_footer_branch
      %17 = sbr.rel target = $region3
    $region8: #{tpu_custom_call.1} parent=1 // loop_exit
      _
    %9876 = vsyncpa [#allocation4], 1
    %s9877 = scalar_lea.sflag [#allocation4], 1
    %9878 = vsyncpa %s9877, 1

</llo_original>
